<compile_context>
chip_gen: v6e
topology: v6e:2x2x1
jax: 0.10.0
libtpu: 0.0.40
codegen_flags: <defaults>
</compile_context>

<pallas_src>
import functools
import numpy as np
import jax
import jax.numpy as jnp
from jax.experimental import pallas as pl
from jax.experimental.pallas import tpu as pltpu

LOG2 = float(np.log(2.0))
SQRT_2_OVER_PI = float(np.sqrt(2.0 / np.pi))
LANE = 128


def _round_up(x, m):
    return ((x + m - 1) // m) * m


def _shifted_softplus(x):
    # softplus(x) - log(2), numerically stable, exp/log only (TPU-safe)
    return jnp.maximum(x, 0.0) + jnp.log(1.0 + jnp.exp(-jnp.abs(x))) - LOG2


def _gelu(x):
    # TODO(synk): torch nn.GELU default is exact erf; tanh approximation used
    # in-kernel (erf has no guaranteed Mosaic lowering). Reference matches.
    return 0.5 * x * (1.0 + jnp.tanh(SQRT_2_OVER_PI * (x + 0.044715 * x * x * x)))


def _bdot(a, b):
    """MXU matmul on the native bf16 path (v5e/v6e/v7x), f32 accumulation."""
    return jnp.dot(a.astype(jnp.bfloat16), b.astype(jnp.bfloat16),
                   preferred_element_type=jnp.float32)


# ------------------------------- fused kernel -------------------------------

def _pbgnn_fused_kernel(emb_ref, rij_ref, idxj_ref, idxi_ref, off_ref,
                        in1w_ref, in1b_ref, in2w_ref, in2b_ref,
                        out1w_ref, out1b_ref, out2w_ref, out2b_ref,
                        win_ref, wf1_ref, bf1_ref, wf2_ref, bf2_ref,
                        wo1_ref, bo1_ref, wo2_ref, bo2_ref,
                        y_ref, *, coeff, cutoff):
    n_pad = emb_ref.shape[0]      # 128  (atom axis: lane-dense / full-K)
    p_pad = rij_ref.shape[0]      # multiple of 128 (pair axis: lane-dense / full-K)

    # ---- input_fn: Linear -> GELU -> Linear (bf16 @ MXU, f32 accumulate) ----
    h = _bdot(emb_ref[...], in1w_ref[...]) + in1b_ref[...]
    x = _bdot(_gelu(h), in2w_ref[...]) + in2b_ref[...]               # (N, A) f32

    # ---- pair features: d_ij, GaussianRBF, cosine cutoff ----
    rij = rij_ref[...]                                               # (P, 128); cols>=3 are 0
    d = jnp.sqrt(jnp.sum(rij * rij, axis=1, keepdims=True))          # (P, 1)
    diff = d - off_ref[...]                                          # (P, R) lane-dense
    f_ij = jnp.exp(coeff * diff * diff)                              # GaussianRBF (lane-dense exp)
    # TODO(synk): at production pair counts compute sqrt/cos on a (P//128,128)
    # reshape so the EUP waves are lane-dense; negligible at this P.
    rcut = 0.5 * (jnp.cos(d * (np.pi / cutoff)) + 1.0)               # CosineCutoff
    rcut = rcut * (d < cutoff).astype(jnp.float32)                   # padded pairs -> 0

    # ---- gather / scatter one-hots built in VMEM from the index vectors ----
    # (P,128) and (128,P): lane-dense, full-K operands for the MXU. 0/1 values
    # are exactly representable in bf16 so the gather/scatter matmuls are exact.
    col_atom = jax.lax.broadcasted_iota(jnp.int32, (p_pad, n_pad), 1)
    gj = (col_atom == idxj_ref[...]).astype(jnp.float32)             # (P, N) gather
    row_atom = jax.lax.broadcasted_iota(jnp.int32, (n_pad, p_pad), 0)
    si = (row_atom == idxi_ref[...]).astype(jnp.float32)             # (N, P) scatter_add

    # ---- interaction blocks (unrolled; residual carried in-kernel) ----
    # TODO(synk): if n_interactions grows past ~4, switch to lax.fori_loop over
    # the stacked weight refs (or a grid axis) to bound vreg live ranges.
    for l in range(win_ref.shape[0]):
        x_f = _bdot(x, win_ref[l])                                   # in2f       (N, F)
        w = _shifted_softplus(_bdot(f_ij, wf1_ref[l]) + bf1_ref[l])
        w = _bdot(w, wf2_ref[l]) + bf2_ref[l]
        w = w * rcut                                                 # (P, F)
        x_j = _bdot(gj, x_f)                                         # x[idx_j]   (P, F)
        x_ij = x_j * w
        conv = _bdot(si, x_ij)                                       # scatter_add (N, F)
        h2 = _shifted_softplus(_bdot(conv, wo1_ref[l]) + bo1_ref[l])
        v = _bdot(h2, wo2_ref[l]) + bo2_ref[l]
        x = x + v                                                    # residual fused

    # ---- output_fn: Linear -> GELU -> Linear (lane-dense store; col 0 real) ----
    h3 = _bdot(x, out1w_ref[...]) + out1b_ref[...]
    y_ref[...] = _bdot(_gelu(h3), out2w_ref[...]) + out2b_ref[...]


# ------------------------------ parameters ---------------------------------

def _linear_params(key, fan_in, fan_out, bias=True):
    kw, kb = jax.random.split(key)
    bound = 1.0 / np.sqrt(fan_in)
    w = jax.random.uniform(kw, (fan_in, fan_out), jnp.float32, -bound, bound)
    if bias:
        b = jax.random.uniform(kb, (1, fan_out), jnp.float32, -bound, bound)
        return w, b
    return w, None


def init_params(key, input_dim, n_atom_basis, n_filters, n_rbf, n_interactions):
    keys = jax.random.split(key, 4 + n_interactions)
    p = {}
    p["in1_w"], p["in1_b"] = _linear_params(keys[0], input_dim, n_atom_basis)
    p["in2_w"], p["in2_b"] = _linear_params(keys[1], n_atom_basis, n_atom_basis)
    p["out1_w"], p["out1_b"] = _linear_params(keys[2], n_atom_basis, n_atom_basis)
    p["out2_w"], p["out2_b"] = _linear_params(keys[3], n_atom_basis, 1)
    inters = []
    for k in range(n_interactions):        # shared_interactions=False -> own weights
        sub = jax.random.split(keys[4 + k], 5)
        d = {}
        d["w_in"], _ = _linear_params(sub[0], n_atom_basis, n_filters, bias=False)
        d["wf1"], d["bf1"] = _linear_params(sub[1], n_rbf, n_filters)
        d["wf2"], d["bf2"] = _linear_params(sub[2], n_filters, n_filters)
        d["wo1"], d["bo1"] = _linear_params(sub[3], n_filters, n_atom_basis)
        d["wo2"], d["bo2"] = _linear_params(sub[4], n_atom_basis, n_atom_basis)
        inters.append(d)
    p["interactions"] = inters
    return p


def _pad2(a, rows, cols, dtype=jnp.float32):
    a = jnp.asarray(a, jnp.float32)
    return jnp.pad(a, ((0, rows - a.shape[0]), (0, cols - a.shape[1]))).astype(dtype)


def pack_params(p):
    """Zero-pad every weight to lane-dense (multiple-of-128) shapes, stack the
    per-interaction weights along a leading axis, and pre-cast weight MATRICES
    (not biases) to bf16 for the MXU.

    NOTE: zero padding is exact here — GELU(0)=0 and shifted_softplus(0)=0 keep
    padded feature columns identically zero, and the padded RBF lanes of f_ij
    (which are nonzero, exp(coeff*d^2)) are killed by the zero-padded wf1 rows.
    A future repacking must preserve those zero rows."""
    def rup(n):
        return _round_up(n, LANE)

    packed = {}
    for name in ("in1", "in2", "out1", "out2"):
        w, b = p[name + "_w"], p[name + "_b"]
        packed[name + "_w"] = _pad2(w, rup(w.shape[0]), rup(w.shape[1]), jnp.bfloat16)
        packed[name + "_b"] = _pad2(b, 1, rup(b.shape[1]), jnp.float32)

    def stack(name, dtype):
        ws = [jnp.asarray(d[name], jnp.float32) for d in p["interactions"]]
        r, c = ws[0].shape
        rr = 1 if r == 1 else rup(r)
        return jnp.stack([_pad2(w, rr, rup(c), dtype) for w in ws])

    for name in ("w_in", "wf1", "wf2", "wo1", "wo2"):
        packed[name] = stack(name, jnp.bfloat16)
    for name in ("bf1", "bf2", "bo1", "bo2"):
        packed[name] = stack(name, jnp.float32)
    return packed


# ------------------------------ forward pass --------------------------------

def _vmem_limit_bytes():
    # Budget against the actual generation's VMEM (v7x: 64 MiB, v5e/v6e: 128 MiB)
    # instead of a fixed constant; leave headroom below the physical ceiling.
    try:
        info = pltpu.get_tpu_info()
        cap = int(getattr(info, "vmem_capacity_bytes", 64 * 1024 * 1024))
    except Exception:
        cap = 64 * 1024 * 1024
    return max(16 * 1024 * 1024, min(int(0.75 * cap), 100 * 1024 * 1024))


def pbgnn_forward(packed, atom_emb, atom_xyz, idx_i, idx_j, *, n_rbf, cutoff):
    assert n_rbf >= 2, "GaussianRBF width = cutoff/(n_rbf-1) requires n_rbf >= 2"
    n_atoms = atom_emb.shape[0]
    n_pad = max(_round_up(n_atoms, LANE), LANE)   # lane-dense atom axis (full-K gather)
    n_pairs = idx_i.shape[0]
    p_pad = max(_round_up(n_pairs, LANE), LANE)   # lane-dense pair axis (full-K scatter)

    emb = _pad2(atom_emb, n_pad, packed["in1_w"].shape[0])

    # pairwise displacement (index gather is plain-JAX glue; all math in-kernel)
    r_ij = (atom_xyz[idx_j] - atom_xyz[idx_i]).astype(jnp.float32)
    idx_i = idx_i.astype(jnp.int32)
    idx_j = idx_j.astype(jnp.int32)
    if p_pad > n_pairs:
        # sentinel displacement > cutoff -> rcut == 0 -> padded pairs are inert
        r_ij = jnp.concatenate(
            [r_ij, jnp.full((p_pad - n_pairs, 3), 2.0 * float(cutoff), jnp.float32)],
            axis=0)
        pad_idx = jnp.zeros((p_pad - n_pairs,), jnp.int32)
        idx_i = jnp.concatenate([idx_i, pad_idx])
        idx_j = jnp.concatenate([idx_j, pad_idx])
    # lane-pad the 3-vector to 128 columns (zeros) -> lane-dense square/reduce
    r_ij = jnp.pad(r_ij, ((0, 0), (0, LANE - r_ij.shape[1])))
    idx_j_col = idx_j.reshape(p_pad, 1)     # (P, 1) drives the gather one-hot
    idx_i_row = idx_i.reshape(1, p_pad)     # (1, P) drives the scatter one-hot

    r_pad = packed["wf1"].shape[1]
    offsets = jnp.zeros((1, r_pad), jnp.float32).at[0, :n_rbf].set(
        jnp.linspace(0.0, cutoff, n_rbf, dtype=jnp.float32))
    width = cutoff / (n_rbf - 1)            # GaussianRBF width = offset spacing
    coeff = float(-0.5 / (width * width))

    out_pad = packed["out2_w"].shape[1]
    fdim = packed["in2_w"].shape[1]
    n_inter = packed["w_in"].shape[0]

    kern = functools.partial(_pbgnn_fused_kernel, coeff=coeff, cutoff=float(cutoff))
    args = (emb, r_ij, idx_j_col, idx_i_row, offsets,
            packed["in1_w"], packed["in1_b"], packed["in2_w"], packed["in2_b"],
            packed["out1_w"], packed["out1_b"], packed["out2_w"], packed["out2_b"],
            packed["w_in"], packed["wf1"], packed["bf1"], packed["wf2"], packed["bf2"],
            packed["wo1"], packed["bo1"], packed["wo2"], packed["bo2"])

    # Advisory cost estimate (matmul flops dominate; transcendentals from
    # exp/log/tanh/cos/sqrt; bytes = all operands + output).
    mm_atom = 2 * n_pad * fdim * fdim
    mm_pair = 2 * p_pad * fdim * fdim
    mm_gs = 2 * p_pad * n_pad * fdim
    flops = int(2 * mm_atom
                + n_inter * (3 * mm_atom + 2 * mm_pair + 2 * mm_gs)
                + 2 * mm_atom)
    trans = int(p_pad * fdim + 2 * p_pad
                + n_inter * 2 * (p_pad * fdim + n_pad * fdim)
                + 2 * n_pad * fdim)
    bytes_accessed = int(sum(int(np.prod(a.shape)) * a.dtype.itemsize for a in args)
                         + n_pad * out_pad * 4)

    vmem = pl.BlockSpec(memory_space=pltpu.MemorySpace.VMEM)
    y = pl.pallas_call(
        kern,
        out_shape=jax.ShapeDtypeStruct((n_pad, out_pad), jnp.float32),
        in_specs=[vmem] * len(args),
        out_specs=vmem,
        compiler_params=pltpu.CompilerParams(vmem_limit_bytes=_vmem_limit_bytes()),
        cost_estimate=pl.CostEstimate(flops=flops, transcendentals=trans,
                                      bytes_accessed=bytes_accessed),
    )(*args)
    return y[:n_atoms, 0]


# ------------------------------ pure-JAX references --------------------------

def _ref_forward(params, atom_emb, atom_xyz, idx_i, idx_j, *, n_rbf, cutoff,
                 mxu_bf16=False):
    """Reference forward. mxu_bf16=True mirrors the kernel's bf16-at-the-MXU
    rounding (operands cast to bf16, f32 accumulation) for a tight check."""
    if mxu_bf16:
        def dot(a, b):
            return jnp.dot(a.astype(jnp.bfloat16), b.astype(jnp.bfloat16),
                           preferred_element_type=jnp.float32)
        def rnd(a):
            return a.astype(jnp.bfloat16).astype(jnp.float32)
    else:
        def dot(a, b):
            return jnp.dot(a, b, preferred_element_type=jnp.float32)
        def rnd(a):
            return a

    def mlp(x, w1, b1, w2, b2):
        return dot(_gelu(dot(x, w1) + b1), w2) + b2

    x = mlp(atom_emb, params["in1_w"], params["in1_b"], params["in2_w"], params["in2_b"])
    r_ij = atom_xyz[idx_j] - atom_xyz[idx_i]
    d = jnp.linalg.norm(r_ij, axis=1, keepdims=True)
    offsets = jnp.linspace(0.0, cutoff, n_rbf, dtype=jnp.float32).reshape(1, n_rbf)
    width = cutoff / (n_rbf - 1)
    f_ij = jnp.exp(-0.5 / (width * width) * (d - offsets) ** 2)
    rcut = 0.5 * (jnp.cos(d * np.pi / cutoff) + 1.0) * (d < cutoff).astype(jnp.float32)
    for prm in params["interactions"]:
        x_f = dot(x, prm["w_in"])
        w = dot(_shifted_softplus(dot(f_ij, prm["wf1"]) + prm["bf1"]), prm["wf2"]) + prm["bf2"]
        w = w * rcut
        x_ij = rnd(x_f)[idx_j] * w           # kernel gathers bf16-rounded x_f
        conv = jnp.zeros_like(x_f).at[idx_i].add(rnd(x_ij))   # bf16 operands at scatter
        v = dot(_shifted_softplus(dot(conv, prm["wo1"]) + prm["bo1"]), prm["wo2"]) + prm["bo2"]
        x = x + v
    y = mlp(x, params["out1_w"], params["out1_b"], params["out2_w"], params["out2_b"])
    return y.reshape(-1)


# ------------------------------ main ----------------------------------------

if __name__ == "__main__":
    cfg = dict(input_dim=16, n_atom_basis=30, n_filters=30, n_rbf=20,
               n_interactions=3, cutoff=5.0)
    N = 12
    key = jax.random.PRNGKey(0)
    k_emb, k_xyz, k_prm = jax.random.split(key, 3)
    atom_emb = jax.random.normal(k_emb, (N, cfg["input_dim"]), jnp.float32)
    atom_xyz = jax.random.uniform(k_xyz, (N, 3), jnp.float32, 0.0, 4.0)

    # Neighbor list (host-side preprocessing, mirrors LargeScaleTorchNeighborList
    # for a single non-PBC system): all pairs i != j within cutoff.
    pos = np.asarray(atom_xyz)
    dist = np.linalg.norm(pos[:, None, :] - pos[None, :, :], axis=-1)
    mask = (dist < cfg["cutoff"]) & (~np.eye(N, dtype=bool))
    ii, jj = np.nonzero(mask)
    idx_i = jnp.asarray(ii, dtype=jnp.int32)
    idx_j = jnp.asarray(jj, dtype=jnp.int32)

    params = init_params(k_prm, cfg["input_dim"], cfg["n_atom_basis"],
                         cfg["n_filters"], cfg["n_rbf"], cfg["n_interactions"])
    packed = pack_params(params)

    fwd = jax.jit(functools.partial(pbgnn_forward,
                                    n_rbf=cfg["n_rbf"], cutoff=cfg["cutoff"]))
    out = jax.block_until_ready(fwd(packed, atom_emb, atom_xyz, idx_i, idx_j))

    # Tight check: same bf16-at-the-MXU math as the kernel (validates the fused
    # gather/scatter/padding mechanics).
    ref_bf16 = _ref_forward(params, atom_emb, atom_xyz, idx_i, idx_j,
                            n_rbf=cfg["n_rbf"], cutoff=cfg["cutoff"], mxu_bf16=True)
    np.testing.assert_allclose(np.asarray(out), np.asarray(ref_bf16),
                               rtol=5e-3, atol=5e-3)

    # Module-fidelity check vs full-f32 reference (bf16 MXU inputs loosen this
    # to the 1e-2 level, as anticipated in the perf review).
    ref_f32 = _ref_forward(params, atom_emb, atom_xyz, idx_i, idx_j,
                           n_rbf=cfg["n_rbf"], cutoff=cfg["cutoff"], mxu_bf16=False)
    np.testing.assert_allclose(np.asarray(out), np.asarray(ref_f32),
                               rtol=5e-2, atol=5e-2)
    print("KERNEL_OK")
</pallas_src>

<mosaic_0001>
module attributes {stable_mosaic.version = 11 : i64} {
  func.func @_pbgnn_fused_kernel(%arg0: memref<128x128xf32, #tpu.memory_space<vmem>>, %arg1: memref<256x128xf32, #tpu.memory_space<vmem>>, %arg2: memref<256x1xi32, #tpu.memory_space<vmem>>, %arg3: memref<1x256xi32, #tpu.memory_space<vmem>>, %arg4: memref<1x128xf32, #tpu.memory_space<vmem>>, %arg5: memref<128x128xbf16, #tpu.memory_space<vmem>>, %arg6: memref<1x128xf32, #tpu.memory_space<vmem>>, %arg7: memref<128x128xbf16, #tpu.memory_space<vmem>>, %arg8: memref<1x128xf32, #tpu.memory_space<vmem>>, %arg9: memref<128x128xbf16, #tpu.memory_space<vmem>>, %arg10: memref<1x128xf32, #tpu.memory_space<vmem>>, %arg11: memref<128x128xbf16, #tpu.memory_space<vmem>>, %arg12: memref<1x128xf32, #tpu.memory_space<vmem>>, %arg13: memref<3x128x128xbf16, #tpu.memory_space<vmem>>, %arg14: memref<3x128x128xbf16, #tpu.memory_space<vmem>>, %arg15: memref<3x1x128xf32, #tpu.memory_space<vmem>>, %arg16: memref<3x128x128xbf16, #tpu.memory_space<vmem>>, %arg17: memref<3x1x128xf32, #tpu.memory_space<vmem>>, %arg18: memref<3x128x128xbf16, #tpu.memory_space<vmem>>, %arg19: memref<3x1x128xf32, #tpu.memory_space<vmem>>, %arg20: memref<3x128x128xbf16, #tpu.memory_space<vmem>>, %arg21: memref<3x1x128xf32, #tpu.memory_space<vmem>>, %arg22: memref<128x128xf32, #tpu.memory_space<vmem>>) attributes {dimension_semantics = [], scalar_prefetch = 0 : i64, scratch_operands = 0 : i64, tpu.core_type = #tpu.core_type<tc>} {
    %c0 = arith.constant 0 : index
    %c0_0 = arith.constant 0 : index
    %0 = vector.load %arg0[%c0, %c0_0] : memref<128x128xf32, #tpu.memory_space<vmem>>, vector<128x128xf32>
    %c0_1 = arith.constant 0 : index
    %c0_2 = arith.constant 0 : index
    %1 = vector.load %arg5[%c0_1, %c0_2] : memref<128x128xbf16, #tpu.memory_space<vmem>>, vector<128x128xbf16>
    %2 = arith.truncf %0 : vector<128x128xf32> to vector<128x128xbf16>
    %cst = arith.constant dense<0.000000e+00> : vector<128x128xf32>
    %3 = tpu.matmul %2, %1, %cst {dimension_numbers = #tpu.dot_dimension_numbers<[1], [0], [0], [1], [0, 0, 1, 1], [], []>} : vector<128x128xbf16>, vector<128x128xbf16>, vector<128x128xf32> -> vector<128x128xf32>
    %c0_3 = arith.constant 0 : index
    %c0_4 = arith.constant 0 : index
    %4 = vector.load %arg6[%c0_3, %c0_4] : memref<1x128xf32, #tpu.memory_space<vmem>>, vector<1x128xf32>
    %5 = vector.broadcast %4 : vector<1x128xf32> to vector<128x128xf32>
    %6 = arith.addf %3, %5 : vector<128x128xf32>
    %cst_5 = arith.constant 5.000000e-01 : f32
    %7 = vector.broadcast %cst_5 : f32 to vector<128x128xf32>
    %8 = arith.mulf %7, %6 : vector<128x128xf32>
    %cst_6 = arith.constant 4.471500e-02 : f32
    %9 = vector.broadcast %cst_6 : f32 to vector<128x128xf32>
    %10 = arith.mulf %9, %6 : vector<128x128xf32>
    %11 = arith.mulf %10, %6 : vector<128x128xf32>
    %12 = arith.mulf %11, %6 : vector<128x128xf32>
    %13 = arith.addf %6, %12 : vector<128x128xf32>
    %cst_7 = arith.constant 0.797884583 : f32
    %14 = vector.broadcast %cst_7 : f32 to vector<128x128xf32>
    %15 = arith.mulf %14, %13 : vector<128x128xf32>
    %16 = math.tanh %15 : vector<128x128xf32>
    %cst_8 = arith.constant 1.000000e+00 : f32
    %17 = vector.broadcast %cst_8 : f32 to vector<128x128xf32>
    %18 = arith.addf %17, %16 : vector<128x128xf32>
    %19 = arith.mulf %8, %18 : vector<128x128xf32>
    %c0_9 = arith.constant 0 : index
    %c0_10 = arith.constant 0 : index
    %20 = vector.load %arg7[%c0_9, %c0_10] : memref<128x128xbf16, #tpu.memory_space<vmem>>, vector<128x128xbf16>
    %21 = arith.truncf %19 : vector<128x128xf32> to vector<128x128xbf16>
    %cst_11 = arith.constant dense<0.000000e+00> : vector<128x128xf32>
    %22 = tpu.matmul %21, %20, %cst_11 {dimension_numbers = #tpu.dot_dimension_numbers<[1], [0], [0], [1], [0, 0, 1, 1], [], []>} : vector<128x128xbf16>, vector<128x128xbf16>, vector<128x128xf32> -> vector<128x128xf32>
    %c0_12 = arith.constant 0 : index
    %c0_13 = arith.constant 0 : index
    %23 = vector.load %arg8[%c0_12, %c0_13] : memref<1x128xf32, #tpu.memory_space<vmem>>, vector<1x128xf32>
    %24 = vector.broadcast %23 : vector<1x128xf32> to vector<128x128xf32>
    %25 = arith.addf %22, %24 : vector<128x128xf32>
    %c0_14 = arith.constant 0 : index
    %c0_15 = arith.constant 0 : index
    %26 = vector.load %arg1[%c0_14, %c0_15] : memref<256x128xf32, #tpu.memory_space<vmem>>, vector<256x128xf32>
    %27 = arith.mulf %26, %26 : vector<256x128xf32>
    %cst_16 = arith.constant dense<0.000000e+00> : vector<256xf32>
    %28 = vector.multi_reduction <add>, %27, %cst_16 [1] : vector<256x128xf32> to vector<256xf32>
    %29 = vector.shape_cast %28 : vector<256xf32> to vector<256x1xf32>
    %30 = math.sqrt %29 : vector<256x1xf32>
    %c0_17 = arith.constant 0 : index
    %c0_18 = arith.constant 0 : index
    %31 = vector.load %arg4[%c0_17, %c0_18] : memref<1x128xf32, #tpu.memory_space<vmem>>, vector<1x128xf32>
    %32 = vector.broadcast %30 : vector<256x1xf32> to vector<256x128xf32>
    %33 = vector.broadcast %31 : vector<1x128xf32> to vector<256x128xf32>
    %34 = arith.subf %32, %33 : vector<256x128xf32>
    %cst_19 = arith.constant -7.220000e+00 : f32
    %35 = vector.broadcast %cst_19 : f32 to vector<256x128xf32>
    %36 = arith.mulf %35, %34 : vector<256x128xf32>
    %37 = arith.mulf %36, %34 : vector<256x128xf32>
    %38 = math.exp %37 : vector<256x128xf32>
    %cst_20 = arith.constant 0.628318548 : f32
    %39 = vector.broadcast %cst_20 : f32 to vector<256x1xf32>
    %40 = arith.mulf %30, %39 : vector<256x1xf32>
    %41 = math.cos %40 : vector<256x1xf32>
    %cst_21 = arith.constant 1.000000e+00 : f32
    %42 = vector.broadcast %cst_21 : f32 to vector<256x1xf32>
    %43 = arith.addf %41, %42 : vector<256x1xf32>
    %cst_22 = arith.constant 5.000000e-01 : f32
    %44 = vector.broadcast %cst_22 : f32 to vector<256x1xf32>
    %45 = arith.mulf %44, %43 : vector<256x1xf32>
    %cst_23 = arith.constant 5.000000e+00 : f32
    %46 = vector.broadcast %cst_23 : f32 to vector<256x1xf32>
    %47 = arith.cmpf olt, %30, %46 : vector<256x1xf32>
    %48 = arith.extui %47 : vector<256x1xi1> to vector<256x1xi32>
    %49 = arith.sitofp %48 : vector<256x1xi32> to vector<256x1xf32>
    %50 = arith.mulf %45, %49 : vector<256x1xf32>
    %51 = tpu.iota {dimensions = array<i32: 1>} : vector<256x128xi32>
    %c0_24 = arith.constant 0 : index
    %c0_25 = arith.constant 0 : index
    %52 = vector.load %arg2[%c0_24, %c0_25] : memref<256x1xi32, #tpu.memory_space<vmem>>, vector<256x1xi32>
    %53 = vector.broadcast %52 : vector<256x1xi32> to vector<256x128xi32>
    %54 = arith.cmpi eq, %51, %53 : vector<256x128xi32>
    %55 = arith.extui %54 : vector<256x128xi1> to vector<256x128xi32>
    %56 = arith.sitofp %55 : vector<256x128xi32> to vector<256x128xf32>
    %57 = tpu.iota {dimensions = array<i32: 0>} : vector<128x256xi32>
    %c0_26 = arith.constant 0 : index
    %c0_27 = arith.constant 0 : index
    %58 = vector.load %arg3[%c0_26, %c0_27] : memref<1x256xi32, #tpu.memory_space<vmem>>, vector<1x256xi32>
    %59 = vector.broadcast %58 : vector<1x256xi32> to vector<128x256xi32>
    %60 = arith.cmpi eq, %57, %59 : vector<128x256xi32>
    %61 = arith.extui %60 : vector<128x256xi1> to vector<128x256xi32>
    %62 = arith.sitofp %61 : vector<128x256xi32> to vector<128x256xf32>
    %c0_28 = arith.constant 0 : index
    %c0_29 = arith.constant 0 : index
    %c0_30 = arith.constant 0 : index
    %63 = vector.load %arg13[%c0_28, %c0_29, %c0_30] : memref<3x128x128xbf16, #tpu.memory_space<vmem>>, vector<1x128x128xbf16>
    %64 = vector.shape_cast %63 : vector<1x128x128xbf16> to vector<128x128xbf16>
    %65 = arith.truncf %25 : vector<128x128xf32> to vector<128x128xbf16>
    %cst_31 = arith.constant dense<0.000000e+00> : vector<128x128xf32>
    %66 = tpu.matmul %65, %64, %cst_31 {dimension_numbers = #tpu.dot_dimension_numbers<[1], [0], [0], [1], [0, 0, 1, 1], [], []>} : vector<128x128xbf16>, vector<128x128xbf16>, vector<128x128xf32> -> vector<128x128xf32>
    %c0_32 = arith.constant 0 : index
    %c0_33 = arith.constant 0 : index
    %c0_34 = arith.constant 0 : index
    %67 = vector.load %arg14[%c0_32, %c0_33, %c0_34] : memref<3x128x128xbf16, #tpu.memory_space<vmem>>, vector<1x128x128xbf16>
    %68 = vector.shape_cast %67 : vector<1x128x128xbf16> to vector<128x128xbf16>
    %69 = arith.truncf %38 : vector<256x128xf32> to vector<256x128xbf16>
    %cst_35 = arith.constant dense<0.000000e+00> : vector<256x128xf32>
    %70 = tpu.matmul %69, %68, %cst_35 {dimension_numbers = #tpu.dot_dimension_numbers<[1], [0], [0], [1], [0, 0, 1, 1], [], []>} : vector<256x128xbf16>, vector<128x128xbf16>, vector<256x128xf32> -> vector<256x128xf32>
    %c0_36 = arith.constant 0 : index
    %c0_37 = arith.constant 0 : index
    %c0_38 = arith.constant 0 : index
    %71 = vector.load %arg15[%c0_36, %c0_37, %c0_38] : memref<3x1x128xf32, #tpu.memory_space<vmem>>, vector<1x1x128xf32>
    %72 = vector.shape_cast %71 : vector<1x1x128xf32> to vector<1x128xf32>
    %73 = vector.broadcast %72 : vector<1x128xf32> to vector<256x128xf32>
    %74 = arith.addf %70, %73 : vector<256x128xf32>
    %cst_39 = arith.constant 0.000000e+00 : f32
    %75 = vector.broadcast %cst_39 : f32 to vector<256x128xf32>
    %76 = arith.maximumf %74, %75 : vector<256x128xf32>
    %77 = math.absf %74 : vector<256x128xf32>
    %cst_40 = arith.constant 0.000000e+00 : f32
    %78 = vector.broadcast %cst_40 : f32 to vector<256x128xf32>
    %79 = arith.subf %78, %77 : vector<256x128xf32>
    %80 = math.exp %79 : vector<256x128xf32>
    %cst_41 = arith.constant 1.000000e+00 : f32
    %81 = vector.broadcast %cst_41 : f32 to vector<256x128xf32>
    %82 = arith.addf %81, %80 : vector<256x128xf32>
    %83 = math.log %82 : vector<256x128xf32>
    %84 = arith.addf %76, %83 : vector<256x128xf32>
    %cst_42 = arith.constant 0.693147182 : f32
    %85 = vector.broadcast %cst_42 : f32 to vector<256x128xf32>
    %86 = arith.subf %84, %85 : vector<256x128xf32>
    %c0_43 = arith.constant 0 : index
    %c0_44 = arith.constant 0 : index
    %c0_45 = arith.constant 0 : index
    %87 = vector.load %arg16[%c0_43, %c0_44, %c0_45] : memref<3x128x128xbf16, #tpu.memory_space<vmem>>, vector<1x128x128xbf16>
    %88 = vector.shape_cast %87 : vector<1x128x128xbf16> to vector<128x128xbf16>
    %89 = arith.truncf %86 : vector<256x128xf32> to vector<256x128xbf16>
    %cst_46 = arith.constant dense<0.000000e+00> : vector<256x128xf32>
    %90 = tpu.matmul %89, %88, %cst_46 {dimension_numbers = #tpu.dot_dimension_numbers<[1], [0], [0], [1], [0, 0, 1, 1], [], []>} : vector<256x128xbf16>, vector<128x128xbf16>, vector<256x128xf32> -> vector<256x128xf32>
    %c0_47 = arith.constant 0 : index
    %c0_48 = arith.constant 0 : index
    %c0_49 = arith.constant 0 : index
    %91 = vector.load %arg17[%c0_47, %c0_48, %c0_49] : memref<3x1x128xf32, #tpu.memory_space<vmem>>, vector<1x1x128xf32>
    %92 = vector.shape_cast %91 : vector<1x1x128xf32> to vector<1x128xf32>
    %93 = vector.broadcast %92 : vector<1x128xf32> to vector<256x128xf32>
    %94 = arith.addf %90, %93 : vector<256x128xf32>
    %95 = vector.broadcast %50 : vector<256x1xf32> to vector<256x128xf32>
    %96 = arith.mulf %94, %95 : vector<256x128xf32>
    %97 = arith.truncf %56 : vector<256x128xf32> to vector<256x128xbf16>
    %98 = arith.truncf %66 : vector<128x128xf32> to vector<128x128xbf16>
    %cst_50 = arith.constant dense<0.000000e+00> : vector<256x128xf32>
    %99 = tpu.matmul %97, %98, %cst_50 {dimension_numbers = #tpu.dot_dimension_numbers<[1], [0], [0], [1], [0, 0, 1, 1], [], []>} : vector<256x128xbf16>, vector<128x128xbf16>, vector<256x128xf32> -> vector<256x128xf32>
    %100 = arith.mulf %99, %96 : vector<256x128xf32>
    %101 = arith.truncf %62 : vector<128x256xf32> to vector<128x256xbf16>
    %102 = arith.truncf %100 : vector<256x128xf32> to vector<256x128xbf16>
    %cst_51 = arith.constant dense<0.000000e+00> : vector<128x128xf32>
    %103 = tpu.matmul %101, %102, %cst_51 {dimension_numbers = #tpu.dot_dimension_numbers<[1], [0], [0], [1], [0, 0, 1, 1], [], []>} : vector<128x256xbf16>, vector<256x128xbf16>, vector<128x128xf32> -> vector<128x128xf32>
    %c0_52 = arith.constant 0 : index
    %c0_53 = arith.constant 0 : index
    %c0_54 = arith.constant 0 : index
    %104 = vector.load %arg18[%c0_52, %c0_53, %c0_54] : memref<3x128x128xbf16, #tpu.memory_space<vmem>>, vector<1x128x128xbf16>
    %105 = vector.shape_cast %104 : vector<1x128x128xbf16> to vector<128x128xbf16>
    %106 = arith.truncf %103 : vector<128x128xf32> to vector<128x128xbf16>
    %cst_55 = arith.constant dense<0.000000e+00> : vector<128x128xf32>
    %107 = tpu.matmul %106, %105, %cst_55 {dimension_numbers = #tpu.dot_dimension_numbers<[1], [0], [0], [1], [0, 0, 1, 1], [], []>} : vector<128x128xbf16>, vector<128x128xbf16>, vector<128x128xf32> -> vector<128x128xf32>
    %c0_56 = arith.constant 0 : index
    %c0_57 = arith.constant 0 : index
    %c0_58 = arith.constant 0 : index
    %108 = vector.load %arg19[%c0_56, %c0_57, %c0_58] : memref<3x1x128xf32, #tpu.memory_space<vmem>>, vector<1x1x128xf32>
    %109 = vector.shape_cast %108 : vector<1x1x128xf32> to vector<1x128xf32>
    %110 = vector.broadcast %109 : vector<1x128xf32> to vector<128x128xf32>
    %111 = arith.addf %107, %110 : vector<128x128xf32>
    %cst_59 = arith.constant 0.000000e+00 : f32
    %112 = vector.broadcast %cst_59 : f32 to vector<128x128xf32>
    %113 = arith.maximumf %111, %112 : vector<128x128xf32>
    %114 = math.absf %111 : vector<128x128xf32>
    %cst_60 = arith.constant 0.000000e+00 : f32
    %115 = vector.broadcast %cst_60 : f32 to vector<128x128xf32>
    %116 = arith.subf %115, %114 : vector<128x128xf32>
    %117 = math.exp %116 : vector<128x128xf32>
    %cst_61 = arith.constant 1.000000e+00 : f32
    %118 = vector.broadcast %cst_61 : f32 to vector<128x128xf32>
    %119 = arith.addf %118, %117 : vector<128x128xf32>
    %120 = math.log %119 : vector<128x128xf32>
    %121 = arith.addf %113, %120 : vector<128x128xf32>
    %cst_62 = arith.constant 0.693147182 : f32
    %122 = vector.broadcast %cst_62 : f32 to vector<128x128xf32>
    %123 = arith.subf %121, %122 : vector<128x128xf32>
    %c0_63 = arith.constant 0 : index
    %c0_64 = arith.constant 0 : index
    %c0_65 = arith.constant 0 : index
    %124 = vector.load %arg20[%c0_63, %c0_64, %c0_65] : memref<3x128x128xbf16, #tpu.memory_space<vmem>>, vector<1x128x128xbf16>
    %125 = vector.shape_cast %124 : vector<1x128x128xbf16> to vector<128x128xbf16>
    %126 = arith.truncf %123 : vector<128x128xf32> to vector<128x128xbf16>
    %cst_66 = arith.constant dense<0.000000e+00> : vector<128x128xf32>
    %127 = tpu.matmul %126, %125, %cst_66 {dimension_numbers = #tpu.dot_dimension_numbers<[1], [0], [0], [1], [0, 0, 1, 1], [], []>} : vector<128x128xbf16>, vector<128x128xbf16>, vector<128x128xf32> -> vector<128x128xf32>
    %c0_67 = arith.constant 0 : index
    %c0_68 = arith.constant 0 : index
    %c0_69 = arith.constant 0 : index
    %128 = vector.load %arg21[%c0_67, %c0_68, %c0_69] : memref<3x1x128xf32, #tpu.memory_space<vmem>>, vector<1x1x128xf32>
    %129 = vector.shape_cast %128 : vector<1x1x128xf32> to vector<1x128xf32>
    %130 = vector.broadcast %129 : vector<1x128xf32> to vector<128x128xf32>
    %131 = arith.addf %127, %130 : vector<128x128xf32>
    %132 = arith.addf %25, %131 : vector<128x128xf32>
    %c1 = arith.constant 1 : index
    %c0_70 = arith.constant 0 : index
    %c0_71 = arith.constant 0 : index
    %133 = vector.load %arg13[%c1, %c0_70, %c0_71] : memref<3x128x128xbf16, #tpu.memory_space<vmem>>, vector<1x128x128xbf16>
    %134 = vector.shape_cast %133 : vector<1x128x128xbf16> to vector<128x128xbf16>
    %135 = arith.truncf %132 : vector<128x128xf32> to vector<128x128xbf16>
    %cst_72 = arith.constant dense<0.000000e+00> : vector<128x128xf32>
    %136 = tpu.matmul %135, %134, %cst_72 {dimension_numbers = #tpu.dot_dimension_numbers<[1], [0], [0], [1], [0, 0, 1, 1], [], []>} : vector<128x128xbf16>, vector<128x128xbf16>, vector<128x128xf32> -> vector<128x128xf32>
    %c1_73 = arith.constant 1 : index
    %c0_74 = arith.constant 0 : index
    %c0_75 = arith.constant 0 : index
    %137 = vector.load %arg14[%c1_73, %c0_74, %c0_75] : memref<3x128x128xbf16, #tpu.memory_space<vmem>>, vector<1x128x128xbf16>
    %138 = vector.shape_cast %137 : vector<1x128x128xbf16> to vector<128x128xbf16>
    %139 = arith.truncf %38 : vector<256x128xf32> to vector<256x128xbf16>
    %cst_76 = arith.constant dense<0.000000e+00> : vector<256x128xf32>
    %140 = tpu.matmul %139, %138, %cst_76 {dimension_numbers = #tpu.dot_dimension_numbers<[1], [0], [0], [1], [0, 0, 1, 1], [], []>} : vector<256x128xbf16>, vector<128x128xbf16>, vector<256x128xf32> -> vector<256x128xf32>
    %c1_77 = arith.constant 1 : index
    %c0_78 = arith.constant 0 : index
    %c0_79 = arith.constant 0 : index
    %141 = vector.load %arg15[%c1_77, %c0_78, %c0_79] : memref<3x1x128xf32, #tpu.memory_space<vmem>>, vector<1x1x128xf32>
    %142 = vector.shape_cast %141 : vector<1x1x128xf32> to vector<1x128xf32>
    %143 = vector.broadcast %142 : vector<1x128xf32> to vector<256x128xf32>
    %144 = arith.addf %140, %143 : vector<256x128xf32>
    %cst_80 = arith.constant 0.000000e+00 : f32
    %145 = vector.broadcast %cst_80 : f32 to vector<256x128xf32>
    %146 = arith.maximumf %144, %145 : vector<256x128xf32>
    %147 = math.absf %144 : vector<256x128xf32>
    %cst_81 = arith.constant 0.000000e+00 : f32
    %148 = vector.broadcast %cst_81 : f32 to vector<256x128xf32>
    %149 = arith.subf %148, %147 : vector<256x128xf32>
    %150 = math.exp %149 : vector<256x128xf32>
    %cst_82 = arith.constant 1.000000e+00 : f32
    %151 = vector.broadcast %cst_82 : f32 to vector<256x128xf32>
    %152 = arith.addf %151, %150 : vector<256x128xf32>
    %153 = math.log %152 : vector<256x128xf32>
    %154 = arith.addf %146, %153 : vector<256x128xf32>
    %cst_83 = arith.constant 0.693147182 : f32
    %155 = vector.broadcast %cst_83 : f32 to vector<256x128xf32>
    %156 = arith.subf %154, %155 : vector<256x128xf32>
    %c1_84 = arith.constant 1 : index
    %c0_85 = arith.constant 0 : index
    %c0_86 = arith.constant 0 : index
    %157 = vector.load %arg16[%c1_84, %c0_85, %c0_86] : memref<3x128x128xbf16, #tpu.memory_space<vmem>>, vector<1x128x128xbf16>
    %158 = vector.shape_cast %157 : vector<1x128x128xbf16> to vector<128x128xbf16>
    %159 = arith.truncf %156 : vector<256x128xf32> to vector<256x128xbf16>
    %cst_87 = arith.constant dense<0.000000e+00> : vector<256x128xf32>
    %160 = tpu.matmul %159, %158, %cst_87 {dimension_numbers = #tpu.dot_dimension_numbers<[1], [0], [0], [1], [0, 0, 1, 1], [], []>} : vector<256x128xbf16>, vector<128x128xbf16>, vector<256x128xf32> -> vector<256x128xf32>
    %c1_88 = arith.constant 1 : index
    %c0_89 = arith.constant 0 : index
    %c0_90 = arith.constant 0 : index
    %161 = vector.load %arg17[%c1_88, %c0_89, %c0_90] : memref<3x1x128xf32, #tpu.memory_space<vmem>>, vector<1x1x128xf32>
    %162 = vector.shape_cast %161 : vector<1x1x128xf32> to vector<1x128xf32>
    %163 = vector.broadcast %162 : vector<1x128xf32> to vector<256x128xf32>
    %164 = arith.addf %160, %163 : vector<256x128xf32>
    %165 = vector.broadcast %50 : vector<256x1xf32> to vector<256x128xf32>
    %166 = arith.mulf %164, %165 : vector<256x128xf32>
    %167 = arith.truncf %56 : vector<256x128xf32> to vector<256x128xbf16>
    %168 = arith.truncf %136 : vector<128x128xf32> to vector<128x128xbf16>
    %cst_91 = arith.constant dense<0.000000e+00> : vector<256x128xf32>
    %169 = tpu.matmul %167, %168, %cst_91 {dimension_numbers = #tpu.dot_dimension_numbers<[1], [0], [0], [1], [0, 0, 1, 1], [], []>} : vector<256x128xbf16>, vector<128x128xbf16>, vector<256x128xf32> -> vector<256x128xf32>
    %170 = arith.mulf %169, %166 : vector<256x128xf32>
    %171 = arith.truncf %62 : vector<128x256xf32> to vector<128x256xbf16>
    %172 = arith.truncf %170 : vector<256x128xf32> to vector<256x128xbf16>
    %cst_92 = arith.constant dense<0.000000e+00> : vector<128x128xf32>
    %173 = tpu.matmul %171, %172, %cst_92 {dimension_numbers = #tpu.dot_dimension_numbers<[1], [0], [0], [1], [0, 0, 1, 1], [], []>} : vector<128x256xbf16>, vector<256x128xbf16>, vector<128x128xf32> -> vector<128x128xf32>
    %c1_93 = arith.constant 1 : index
    %c0_94 = arith.constant 0 : index
    %c0_95 = arith.constant 0 : index
    %174 = vector.load %arg18[%c1_93, %c0_94, %c0_95] : memref<3x128x128xbf16, #tpu.memory_space<vmem>>, vector<1x128x128xbf16>
    %175 = vector.shape_cast %174 : vector<1x128x128xbf16> to vector<128x128xbf16>
    %176 = arith.truncf %173 : vector<128x128xf32> to vector<128x128xbf16>
    %cst_96 = arith.constant dense<0.000000e+00> : vector<128x128xf32>
    %177 = tpu.matmul %176, %175, %cst_96 {dimension_numbers = #tpu.dot_dimension_numbers<[1], [0], [0], [1], [0, 0, 1, 1], [], []>} : vector<128x128xbf16>, vector<128x128xbf16>, vector<128x128xf32> -> vector<128x128xf32>
    %c1_97 = arith.constant 1 : index
    %c0_98 = arith.constant 0 : index
    %c0_99 = arith.constant 0 : index
    %178 = vector.load %arg19[%c1_97, %c0_98, %c0_99] : memref<3x1x128xf32, #tpu.memory_space<vmem>>, vector<1x1x128xf32>
    %179 = vector.shape_cast %178 : vector<1x1x128xf32> to vector<1x128xf32>
    %180 = vector.broadcast %179 : vector<1x128xf32> to vector<128x128xf32>
    %181 = arith.addf %177, %180 : vector<128x128xf32>
    %cst_100 = arith.constant 0.000000e+00 : f32
    %182 = vector.broadcast %cst_100 : f32 to vector<128x128xf32>
    %183 = arith.maximumf %181, %182 : vector<128x128xf32>
    %184 = math.absf %181 : vector<128x128xf32>
    %cst_101 = arith.constant 0.000000e+00 : f32
    %185 = vector.broadcast %cst_101 : f32 to vector<128x128xf32>
    %186 = arith.subf %185, %184 : vector<128x128xf32>
    %187 = math.exp %186 : vector<128x128xf32>
    %cst_102 = arith.constant 1.000000e+00 : f32
    %188 = vector.broadcast %cst_102 : f32 to vector<128x128xf32>
    %189 = arith.addf %188, %187 : vector<128x128xf32>
    %190 = math.log %189 : vector<128x128xf32>
    %191 = arith.addf %183, %190 : vector<128x128xf32>
    %cst_103 = arith.constant 0.693147182 : f32
    %192 = vector.broadcast %cst_103 : f32 to vector<128x128xf32>
    %193 = arith.subf %191, %192 : vector<128x128xf32>
    %c1_104 = arith.constant 1 : index
    %c0_105 = arith.constant 0 : index
    %c0_106 = arith.constant 0 : index
    %194 = vector.load %arg20[%c1_104, %c0_105, %c0_106] : memref<3x128x128xbf16, #tpu.memory_space<vmem>>, vector<1x128x128xbf16>
    %195 = vector.shape_cast %194 : vector<1x128x128xbf16> to vector<128x128xbf16>
    %196 = arith.truncf %193 : vector<128x128xf32> to vector<128x128xbf16>
    %cst_107 = arith.constant dense<0.000000e+00> : vector<128x128xf32>
    %197 = tpu.matmul %196, %195, %cst_107 {dimension_numbers = #tpu.dot_dimension_numbers<[1], [0], [0], [1], [0, 0, 1, 1], [], []>} : vector<128x128xbf16>, vector<128x128xbf16>, vector<128x128xf32> -> vector<128x128xf32>
    %c1_108 = arith.constant 1 : index
    %c0_109 = arith.constant 0 : index
    %c0_110 = arith.constant 0 : index
    %198 = vector.load %arg21[%c1_108, %c0_109, %c0_110] : memref<3x1x128xf32, #tpu.memory_space<vmem>>, vector<1x1x128xf32>
    %199 = vector.shape_cast %198 : vector<1x1x128xf32> to vector<1x128xf32>
    %200 = vector.broadcast %199 : vector<1x128xf32> to vector<128x128xf32>
    %201 = arith.addf %197, %200 : vector<128x128xf32>
    %202 = arith.addf %132, %201 : vector<128x128xf32>
    %c2 = arith.constant 2 : index
    %c0_111 = arith.constant 0 : index
    %c0_112 = arith.constant 0 : index
    %203 = vector.load %arg13[%c2, %c0_111, %c0_112] : memref<3x128x128xbf16, #tpu.memory_space<vmem>>, vector<1x128x128xbf16>
    %204 = vector.shape_cast %203 : vector<1x128x128xbf16> to vector<128x128xbf16>
    %205 = arith.truncf %202 : vector<128x128xf32> to vector<128x128xbf16>
    %cst_113 = arith.constant dense<0.000000e+00> : vector<128x128xf32>
    %206 = tpu.matmul %205, %204, %cst_113 {dimension_numbers = #tpu.dot_dimension_numbers<[1], [0], [0], [1], [0, 0, 1, 1], [], []>} : vector<128x128xbf16>, vector<128x128xbf16>, vector<128x128xf32> -> vector<128x128xf32>
    %c2_114 = arith.constant 2 : index
    %c0_115 = arith.constant 0 : index
    %c0_116 = arith.constant 0 : index
    %207 = vector.load %arg14[%c2_114, %c0_115, %c0_116] : memref<3x128x128xbf16, #tpu.memory_space<vmem>>, vector<1x128x128xbf16>
    %208 = vector.shape_cast %207 : vector<1x128x128xbf16> to vector<128x128xbf16>
    %209 = arith.truncf %38 : vector<256x128xf32> to vector<256x128xbf16>
    %cst_117 = arith.constant dense<0.000000e+00> : vector<256x128xf32>
    %210 = tpu.matmul %209, %208, %cst_117 {dimension_numbers = #tpu.dot_dimension_numbers<[1], [0], [0], [1], [0, 0, 1, 1], [], []>} : vector<256x128xbf16>, vector<128x128xbf16>, vector<256x128xf32> -> vector<256x128xf32>
    %c2_118 = arith.constant 2 : index
    %c0_119 = arith.constant 0 : index
    %c0_120 = arith.constant 0 : index
    %211 = vector.load %arg15[%c2_118, %c0_119, %c0_120] : memref<3x1x128xf32, #tpu.memory_space<vmem>>, vector<1x1x128xf32>
    %212 = vector.shape_cast %211 : vector<1x1x128xf32> to vector<1x128xf32>
    %213 = vector.broadcast %212 : vector<1x128xf32> to vector<256x128xf32>
    %214 = arith.addf %210, %213 : vector<256x128xf32>
    %cst_121 = arith.constant 0.000000e+00 : f32
    %215 = vector.broadcast %cst_121 : f32 to vector<256x128xf32>
    %216 = arith.maximumf %214, %215 : vector<256x128xf32>
    %217 = math.absf %214 : vector<256x128xf32>
    %cst_122 = arith.constant 0.000000e+00 : f32
    %218 = vector.broadcast %cst_122 : f32 to vector<256x128xf32>
    %219 = arith.subf %218, %217 : vector<256x128xf32>
    %220 = math.exp %219 : vector<256x128xf32>
    %cst_123 = arith.constant 1.000000e+00 : f32
    %221 = vector.broadcast %cst_123 : f32 to vector<256x128xf32>
    %222 = arith.addf %221, %220 : vector<256x128xf32>
    %223 = math.log %222 : vector<256x128xf32>
    %224 = arith.addf %216, %223 : vector<256x128xf32>
    %cst_124 = arith.constant 0.693147182 : f32
    %225 = vector.broadcast %cst_124 : f32 to vector<256x128xf32>
    %226 = arith.subf %224, %225 : vector<256x128xf32>
    %c2_125 = arith.constant 2 : index
    %c0_126 = arith.constant 0 : index
    %c0_127 = arith.constant 0 : index
    %227 = vector.load %arg16[%c2_125, %c0_126, %c0_127] : memref<3x128x128xbf16, #tpu.memory_space<vmem>>, vector<1x128x128xbf16>
    %228 = vector.shape_cast %227 : vector<1x128x128xbf16> to vector<128x128xbf16>
    %229 = arith.truncf %226 : vector<256x128xf32> to vector<256x128xbf16>
    %cst_128 = arith.constant dense<0.000000e+00> : vector<256x128xf32>
    %230 = tpu.matmul %229, %228, %cst_128 {dimension_numbers = #tpu.dot_dimension_numbers<[1], [0], [0], [1], [0, 0, 1, 1], [], []>} : vector<256x128xbf16>, vector<128x128xbf16>, vector<256x128xf32> -> vector<256x128xf32>
    %c2_129 = arith.constant 2 : index
    %c0_130 = arith.constant 0 : index
    %c0_131 = arith.constant 0 : index
    %231 = vector.load %arg17[%c2_129, %c0_130, %c0_131] : memref<3x1x128xf32, #tpu.memory_space<vmem>>, vector<1x1x128xf32>
    %232 = vector.shape_cast %231 : vector<1x1x128xf32> to vector<1x128xf32>
    %233 = vector.broadcast %232 : vector<1x128xf32> to vector<256x128xf32>
    %234 = arith.addf %230, %233 : vector<256x128xf32>
    %235 = vector.broadcast %50 : vector<256x1xf32> to vector<256x128xf32>
    %236 = arith.mulf %234, %235 : vector<256x128xf32>
    %237 = arith.truncf %56 : vector<256x128xf32> to vector<256x128xbf16>
    %238 = arith.truncf %206 : vector<128x128xf32> to vector<128x128xbf16>
    %cst_132 = arith.constant dense<0.000000e+00> : vector<256x128xf32>
    %239 = tpu.matmul %237, %238, %cst_132 {dimension_numbers = #tpu.dot_dimension_numbers<[1], [0], [0], [1], [0, 0, 1, 1], [], []>} : vector<256x128xbf16>, vector<128x128xbf16>, vector<256x128xf32> -> vector<256x128xf32>
    %240 = arith.mulf %239, %236 : vector<256x128xf32>
    %241 = arith.truncf %62 : vector<128x256xf32> to vector<128x256xbf16>
    %242 = arith.truncf %240 : vector<256x128xf32> to vector<256x128xbf16>
    %cst_133 = arith.constant dense<0.000000e+00> : vector<128x128xf32>
    %243 = tpu.matmul %241, %242, %cst_133 {dimension_numbers = #tpu.dot_dimension_numbers<[1], [0], [0], [1], [0, 0, 1, 1], [], []>} : vector<128x256xbf16>, vector<256x128xbf16>, vector<128x128xf32> -> vector<128x128xf32>
    %c2_134 = arith.constant 2 : index
    %c0_135 = arith.constant 0 : index
    %c0_136 = arith.constant 0 : index
    %244 = vector.load %arg18[%c2_134, %c0_135, %c0_136] : memref<3x128x128xbf16, #tpu.memory_space<vmem>>, vector<1x128x128xbf16>
    %245 = vector.shape_cast %244 : vector<1x128x128xbf16> to vector<128x128xbf16>
    %246 = arith.truncf %243 : vector<128x128xf32> to vector<128x128xbf16>
    %cst_137 = arith.constant dense<0.000000e+00> : vector<128x128xf32>
    %247 = tpu.matmul %246, %245, %cst_137 {dimension_numbers = #tpu.dot_dimension_numbers<[1], [0], [0], [1], [0, 0, 1, 1], [], []>} : vector<128x128xbf16>, vector<128x128xbf16>, vector<128x128xf32> -> vector<128x128xf32>
    %c2_138 = arith.constant 2 : index
    %c0_139 = arith.constant 0 : index
    %c0_140 = arith.constant 0 : index
    %248 = vector.load %arg19[%c2_138, %c0_139, %c0_140] : memref<3x1x128xf32, #tpu.memory_space<vmem>>, vector<1x1x128xf32>
    %249 = vector.shape_cast %248 : vector<1x1x128xf32> to vector<1x128xf32>
    %250 = vector.broadcast %249 : vector<1x128xf32> to vector<128x128xf32>
    %251 = arith.addf %247, %250 : vector<128x128xf32>
    %cst_141 = arith.constant 0.000000e+00 : f32
    %252 = vector.broadcast %cst_141 : f32 to vector<128x128xf32>
    %253 = arith.maximumf %251, %252 : vector<128x128xf32>
    %254 = math.absf %251 : vector<128x128xf32>
    %cst_142 = arith.constant 0.000000e+00 : f32
    %255 = vector.broadcast %cst_142 : f32 to vector<128x128xf32>
    %256 = arith.subf %255, %254 : vector<128x128xf32>
    %257 = math.exp %256 : vector<128x128xf32>
    %cst_143 = arith.constant 1.000000e+00 : f32
    %258 = vector.broadcast %cst_143 : f32 to vector<128x128xf32>
    %259 = arith.addf %258, %257 : vector<128x128xf32>
    %260 = math.log %259 : vector<128x128xf32>
    %261 = arith.addf %253, %260 : vector<128x128xf32>
    %cst_144 = arith.constant 0.693147182 : f32
    %262 = vector.broadcast %cst_144 : f32 to vector<128x128xf32>
    %263 = arith.subf %261, %262 : vector<128x128xf32>
    %c2_145 = arith.constant 2 : index
    %c0_146 = arith.constant 0 : index
    %c0_147 = arith.constant 0 : index
    %264 = vector.load %arg20[%c2_145, %c0_146, %c0_147] : memref<3x128x128xbf16, #tpu.memory_space<vmem>>, vector<1x128x128xbf16>
    %265 = vector.shape_cast %264 : vector<1x128x128xbf16> to vector<128x128xbf16>
    %266 = arith.truncf %263 : vector<128x128xf32> to vector<128x128xbf16>
    %cst_148 = arith.constant dense<0.000000e+00> : vector<128x128xf32>
    %267 = tpu.matmul %266, %265, %cst_148 {dimension_numbers = #tpu.dot_dimension_numbers<[1], [0], [0], [1], [0, 0, 1, 1], [], []>} : vector<128x128xbf16>, vector<128x128xbf16>, vector<128x128xf32> -> vector<128x128xf32>
    %c2_149 = arith.constant 2 : index
    %c0_150 = arith.constant 0 : index
    %c0_151 = arith.constant 0 : index
    %268 = vector.load %arg21[%c2_149, %c0_150, %c0_151] : memref<3x1x128xf32, #tpu.memory_space<vmem>>, vector<1x1x128xf32>
    %269 = vector.shape_cast %268 : vector<1x1x128xf32> to vector<1x128xf32>
    %270 = vector.broadcast %269 : vector<1x128xf32> to vector<128x128xf32>
    %271 = arith.addf %267, %270 : vector<128x128xf32>
    %272 = arith.addf %202, %271 : vector<128x128xf32>
    %c0_152 = arith.constant 0 : index
    %c0_153 = arith.constant 0 : index
    %273 = vector.load %arg9[%c0_152, %c0_153] : memref<128x128xbf16, #tpu.memory_space<vmem>>, vector<128x128xbf16>
    %274 = arith.truncf %272 : vector<128x128xf32> to vector<128x128xbf16>
    %cst_154 = arith.constant dense<0.000000e+00> : vector<128x128xf32>
    %275 = tpu.matmul %274, %273, %cst_154 {dimension_numbers = #tpu.dot_dimension_numbers<[1], [0], [0], [1], [0, 0, 1, 1], [], []>} : vector<128x128xbf16>, vector<128x128xbf16>, vector<128x128xf32> -> vector<128x128xf32>
    %c0_155 = arith.constant 0 : index
    %c0_156 = arith.constant 0 : index
    %276 = vector.load %arg10[%c0_155, %c0_156] : memref<1x128xf32, #tpu.memory_space<vmem>>, vector<1x128xf32>
    %277 = vector.broadcast %276 : vector<1x128xf32> to vector<128x128xf32>
    %278 = arith.addf %275, %277 : vector<128x128xf32>
    %cst_157 = arith.constant 5.000000e-01 : f32
    %279 = vector.broadcast %cst_157 : f32 to vector<128x128xf32>
    %280 = arith.mulf %279, %278 : vector<128x128xf32>
    %cst_158 = arith.constant 4.471500e-02 : f32
    %281 = vector.broadcast %cst_158 : f32 to vector<128x128xf32>
    %282 = arith.mulf %281, %278 : vector<128x128xf32>
    %283 = arith.mulf %282, %278 : vector<128x128xf32>
    %284 = arith.mulf %283, %278 : vector<128x128xf32>
    %285 = arith.addf %278, %284 : vector<128x128xf32>
    %cst_159 = arith.constant 0.797884583 : f32
    %286 = vector.broadcast %cst_159 : f32 to vector<128x128xf32>
    %287 = arith.mulf %286, %285 : vector<128x128xf32>
    %288 = math.tanh %287 : vector<128x128xf32>
    %cst_160 = arith.constant 1.000000e+00 : f32
    %289 = vector.broadcast %cst_160 : f32 to vector<128x128xf32>
    %290 = arith.addf %289, %288 : vector<128x128xf32>
    %291 = arith.mulf %280, %290 : vector<128x128xf32>
    %c0_161 = arith.constant 0 : index
    %c0_162 = arith.constant 0 : index
    %292 = vector.load %arg11[%c0_161, %c0_162] : memref<128x128xbf16, #tpu.memory_space<vmem>>, vector<128x128xbf16>
    %293 = arith.truncf %291 : vector<128x128xf32> to vector<128x128xbf16>
    %cst_163 = arith.constant dense<0.000000e+00> : vector<128x128xf32>
    %294 = tpu.matmul %293, %292, %cst_163 {dimension_numbers = #tpu.dot_dimension_numbers<[1], [0], [0], [1], [0, 0, 1, 1], [], []>} : vector<128x128xbf16>, vector<128x128xbf16>, vector<128x128xf32> -> vector<128x128xf32>
    %c0_164 = arith.constant 0 : index
    %c0_165 = arith.constant 0 : index
    %295 = vector.load %arg12[%c0_164, %c0_165] : memref<1x128xf32, #tpu.memory_space<vmem>>, vector<1x128xf32>
    %296 = vector.broadcast %295 : vector<1x128xf32> to vector<128x128xf32>
    %297 = arith.addf %294, %296 : vector<128x128xf32>
    %c0_166 = arith.constant 0 : index
    %c0_167 = arith.constant 0 : index
    %298 = vector.load %arg22[%c0_166, %c0_167] : memref<128x128xf32, #tpu.memory_space<vmem>>, vector<128x128xf32>
    tpu.vector_store %arg22[%c0_166, %c0_167], %297 {strides = array<i32>} : memref<128x128xf32, #tpu.memory_space<vmem>>, vector<128x128xf32>,
    return
  }
}

</mosaic_0001>

<llo_original>
// kernel: sub.3
$region0: #{sub.3}
  #allocation0 [shape = 's32[1]{0}', space=sflag, size = 0x4, scoped, tag = 'scoped memory for sub.3']
  %s0 = inlined_call_operand.vmem [shape: f32[132,3], index: 0, kind: input, shape index: {}]
  %s1 = inlined_call_operand.vmem [shape: f32[132,3], index: 1, kind: input, shape index: {}]
  %s2 = inlined_call_operand.vmem [shape: f32[132,3], index: 2, kind: output, shape index: {}]
  %v3 = vld [vmem:[%s0] sm:$0xff]
  %v4 = vld [vmem:[%s1] sm:$0xff]
  %5 = xla_tuple %v3, %v4
  %6 = xla_tuple %5
  %v7 = vsub.f32 %v3, %v4
  %8 = xla_tuple %v7
  %9 = vst [vmem:[%s2] sm:$0xff] %v7
  %s10 = scalar_lea.vmem %s0, 8
  %v11 = vld [vmem:[%s10] sm:$0xff]
  %s12 = scalar_lea.vmem %s1, 8
  %v13 = vld [vmem:[%s12] sm:$0xff]
  %14 = xla_tuple %v11, %v13
  %15 = xla_tuple %14
  %v16 = vsub.f32 %v11, %v13
  %17 = xla_tuple %v16
  %s18 = scalar_lea.vmem %s2, 8
  %19 = vst [vmem:[%s18] sm:$0xff] %v16
  %s20 = scalar_lea.vmem %s0, 16
  %v21 = vld [vmem:[%s20] sm:$0xff]
  %s22 = scalar_lea.vmem %s1, 16
  %v23 = vld [vmem:[%s22] sm:$0xff]
  %24 = xla_tuple %v21, %v23
  %25 = xla_tuple %24
  %v26 = vsub.f32 %v21, %v23
  %27 = xla_tuple %v26
  %s28 = scalar_lea.vmem %s2, 16
  %29 = vst [vmem:[%s28] sm:$0xff] %v26
  %s30 = scalar_lea.vmem %s0, 24
  %v31 = vld [vmem:[%s30] sm:$0xff]
  %s32 = scalar_lea.vmem %s1, 24
  %v33 = vld [vmem:[%s32] sm:$0xff]
  %34 = xla_tuple %v31, %v33
  %35 = xla_tuple %34
  %v36 = vsub.f32 %v31, %v33
  %37 = xla_tuple %v36
  %s38 = scalar_lea.vmem %s2, 24
  %39 = vst [vmem:[%s38] sm:$0xff] %v36
  %s40 = scalar_lea.vmem %s0, 32
  %v41 = vld [vmem:[%s40] sm:$0xff]
  %s42 = scalar_lea.vmem %s1, 32
  %v43 = vld [vmem:[%s42] sm:$0xff]
  %44 = xla_tuple %v41, %v43
  %45 = xla_tuple %44
  %v46 = vsub.f32 %v41, %v43
  %47 = xla_tuple %v46
  %s48 = scalar_lea.vmem %s2, 32
  %49 = vst [vmem:[%s48] sm:$0xff] %v46
  %s50 = scalar_lea.vmem %s0, 40
  %v51 = vld [vmem:[%s50] sm:$0xff]
  %s52 = scalar_lea.vmem %s1, 40
  %v53 = vld [vmem:[%s52] sm:$0xff]
  %54 = xla_tuple %v51, %v53
  %55 = xla_tuple %54
  %v56 = vsub.f32 %v51, %v53
  %57 = xla_tuple %v56
  %s58 = scalar_lea.vmem %s2, 40
  %59 = vst [vmem:[%s58] sm:$0xff] %v56
  %s60 = scalar_lea.vmem %s0, 48
  %v61 = vld [vmem:[%s60] sm:$0xff]
  %s62 = scalar_lea.vmem %s1, 48
  %v63 = vld [vmem:[%s62] sm:$0xff]
  %64 = xla_tuple %v61, %v63
  %65 = xla_tuple %64
  %v66 = vsub.f32 %v61, %v63
  %67 = xla_tuple %v66
  %s68 = scalar_lea.vmem %s2, 48
  %69 = vst [vmem:[%s68] sm:$0xff] %v66
  %s70 = scalar_lea.vmem %s0, 56
  %v71 = vld [vmem:[%s70] sm:$0xff]
  %s72 = scalar_lea.vmem %s1, 56
  %v73 = vld [vmem:[%s72] sm:$0xff]
  %74 = xla_tuple %v71, %v73
  %75 = xla_tuple %74
  %v76 = vsub.f32 %v71, %v73
  %77 = xla_tuple %v76
  %s78 = scalar_lea.vmem %s2, 56
  %79 = vst [vmem:[%s78] sm:$0xff] %v76
  %s80 = scalar_lea.vmem %s0, 64
  %v81 = vld [vmem:[%s80] sm:$0xff]
  %s82 = scalar_lea.vmem %s1, 64
  %v83 = vld [vmem:[%s82] sm:$0xff]
  %84 = xla_tuple %v81, %v83
  %85 = xla_tuple %84
  %v86 = vsub.f32 %v81, %v83
  %87 = xla_tuple %v86
  %s88 = scalar_lea.vmem %s2, 64
  %89 = vst [vmem:[%s88] sm:$0xff] %v86
  %s90 = scalar_lea.vmem %s0, 72
  %v91 = vld [vmem:[%s90] sm:$0xff]
  %s92 = scalar_lea.vmem %s1, 72
  %v93 = vld [vmem:[%s92] sm:$0xff]
  %94 = xla_tuple %v91, %v93
  %95 = xla_tuple %94
  %v96 = vsub.f32 %v91, %v93
  %97 = xla_tuple %v96
  %s98 = scalar_lea.vmem %s2, 72
  %99 = vst [vmem:[%s98] sm:$0xff] %v96
  %s100 = scalar_lea.vmem %s0, 80
  %v101 = vld [vmem:[%s100] sm:$0xff]
  %s102 = scalar_lea.vmem %s1, 80
  %v103 = vld [vmem:[%s102] sm:$0xff]
  %104 = xla_tuple %v101, %v103
  %105 = xla_tuple %104
  %v106 = vsub.f32 %v101, %v103
  %107 = xla_tuple %v106
  %s108 = scalar_lea.vmem %s2, 80
  %109 = vst [vmem:[%s108] sm:$0xff] %v106
  %s110 = scalar_lea.vmem %s0, 88
  %v111 = vld [vmem:[%s110] sm:$0xff]
  %s112 = scalar_lea.vmem %s1, 88
  %v113 = vld [vmem:[%s112] sm:$0xff]
  %114 = xla_tuple %v111, %v113
  %115 = xla_tuple %114
  %v116 = vsub.f32 %v111, %v113
  %117 = xla_tuple %v116
  %s118 = scalar_lea.vmem %s2, 88
  %119 = vst [vmem:[%s118] sm:$0xff] %v116
  %s120 = scalar_lea.vmem %s0, 96
  %v121 = vld [vmem:[%s120] sm:$0xff]
  %s122 = scalar_lea.vmem %s1, 96
  %v123 = vld [vmem:[%s122] sm:$0xff]
  %124 = xla_tuple %v121, %v123
  %125 = xla_tuple %124
  %v126 = vsub.f32 %v121, %v123
  %127 = xla_tuple %v126
  %s128 = scalar_lea.vmem %s2, 96
  %129 = vst [vmem:[%s128] sm:$0xff] %v126
  %s130 = scalar_lea.vmem %s0, 104
  %v131 = vld [vmem:[%s130] sm:$0xff]
  %s132 = scalar_lea.vmem %s1, 104
  %v133 = vld [vmem:[%s132] sm:$0xff]
  %134 = xla_tuple %v131, %v133
  %135 = xla_tuple %134
  %v136 = vsub.f32 %v131, %v133
  %137 = xla_tuple %v136
  %s138 = scalar_lea.vmem %s2, 104
  %139 = vst [vmem:[%s138] sm:$0xff] %v136
  %s140 = scalar_lea.vmem %s0, 112
  %v141 = vld [vmem:[%s140] sm:$0xff]
  %s142 = scalar_lea.vmem %s1, 112
  %v143 = vld [vmem:[%s142] sm:$0xff]
  %144 = xla_tuple %v141, %v143
  %145 = xla_tuple %144
  %v146 = vsub.f32 %v141, %v143
  %147 = xla_tuple %v146
  %s148 = scalar_lea.vmem %s2, 112
  %149 = vst [vmem:[%s148] sm:$0xff] %v146
  %s150 = scalar_lea.vmem %s0, 120
  %v151 = vld [vmem:[%s150] sm:$0xff]
  %s152 = scalar_lea.vmem %s1, 120
  %v153 = vld [vmem:[%s152] sm:$0xff]
  %154 = xla_tuple %v151, %v153
  %155 = xla_tuple %154
  %v156 = vsub.f32 %v151, %v153
  %157 = xla_tuple %v156
  %s158 = scalar_lea.vmem %s2, 120
  %159 = vst [vmem:[%s158] sm:$0xff] %v156
  %s160 = scalar_lea.vmem %s0, 128
  %v161 = vld [vmem:[%s160] sm:$0xff]
  %s162 = scalar_lea.vmem %s1, 128
  %v163 = vld [vmem:[%s162] sm:$0xff]
  %164 = xla_tuple %v161, %v163
  %165 = xla_tuple %164
  %v166 = vsub.f32 %v161, %v163
  %167 = xla_tuple %v166
  %s168 = scalar_lea.vmem %s2, 128
  %169 = vst [vmem:[%s168] sm:$0xff] %v166

// kernel: pbgnn_forward.1
$region0: #{pbgnn_forward.1}
  #allocation0 [shape = 'u32[]', space=smem, size = 0x4, offset = 0x4, fixed_abs, tag = 'smem constant byte address 0x4 - core index']
  #allocation1 [shape = 'u32[144,128]{1,0:T(1,128)}', space=vmem, size = 0x12000, scoped, tag = 'internal scratch']
  %s0 = inlined_call_operand.vmem [shape: f32[128,128], index: 0, kind: input, shape index: {}]
  %s1 = inlined_call_operand.vmem [shape: f32[256,128], index: 1, kind: input, shape index: {}]
  %s2 = inlined_call_operand.vmem [shape: s32[256,1], index: 2, kind: input, shape index: {}]
  %s3 = inlined_call_operand.vmem [shape: s32[1,256], index: 3, kind: input, shape index: {}]
  %s4 = inlined_call_operand.vmem [shape: f32[1,128], index: 4, kind: input, shape index: {}]
  %s5 = inlined_call_operand.vmem [shape: bf16[128,128], index: 5, kind: input, shape index: {}]
  %s6 = inlined_call_operand.vmem [shape: f32[1,128], index: 6, kind: input, shape index: {}]
  %s7 = inlined_call_operand.vmem [shape: bf16[128,128], index: 7, kind: input, shape index: {}]
  %s8 = inlined_call_operand.vmem [shape: f32[1,128], index: 8, kind: input, shape index: {}]
  %s9 = inlined_call_operand.vmem [shape: bf16[128,128], index: 9, kind: input, shape index: {}]
  %s10 = inlined_call_operand.vmem [shape: f32[1,128], index: 10, kind: input, shape index: {}]
  %s11 = inlined_call_operand.vmem [shape: bf16[128,128], index: 11, kind: input, shape index: {}]
  %s12 = inlined_call_operand.vmem [shape: f32[1,128], index: 12, kind: input, shape index: {}]
  %s13 = inlined_call_operand.vmem [shape: bf16[3,128,128], index: 13, kind: input, shape index: {}]
  %s14 = inlined_call_operand.vmem [shape: bf16[3,128,128], index: 14, kind: input, shape index: {}]
  %s15 = inlined_call_operand.vmem [shape: f32[3,1,128], index: 15, kind: input, shape index: {}]
  %s16 = inlined_call_operand.vmem [shape: bf16[3,128,128], index: 16, kind: input, shape index: {}]
  %s17 = inlined_call_operand.vmem [shape: f32[3,1,128], index: 17, kind: input, shape index: {}]
  %s18 = inlined_call_operand.vmem [shape: bf16[3,128,128], index: 18, kind: input, shape index: {}]
  %s19 = inlined_call_operand.vmem [shape: f32[3,1,128], index: 19, kind: input, shape index: {}]
  %s20 = inlined_call_operand.vmem [shape: bf16[3,128,128], index: 20, kind: input, shape index: {}]
  %s21 = inlined_call_operand.vmem [shape: f32[3,1,128], index: 21, kind: input, shape index: {}]
  %s22 = inlined_call_operand.vmem [shape: f32[128,128], index: 22, kind: output, shape index: {}]
  %s23 = sld [smem:[#allocation0]]
  $region98: #{pbgnn_forward.1} parent=0
    _
  %s25 = ssub.s32 1, %s23
  %s26 = scalar_select 0, %s25, %s23
  // Predicated region
  $region2: #{pbgnn_forward.1} parent=0 // pred_check
    _
  $region3: #{pbgnn_forward.1} parent=0 // pred_check_branch
    %28 = sbr.rel (0) target = $region5
  $region4: #{pbgnn_forward.1} parent=0 // pred_region
    _
  $region5: #{pbgnn_forward.1} parent=0 // pred_fallthru
    _
  // Predicated region
  $region6: #{pbgnn_forward.1} parent=0 // pred_check
    _
  $region7: #{pbgnn_forward.1} parent=0 // pred_check_branch
    %30 = sbr.rel (0) target = $region9
  $region8: #{pbgnn_forward.1} parent=0 // pred_region
    _
  $region9: #{pbgnn_forward.1} parent=0 // pred_fallthru
    _
  // Predicated region
  $region10: #{pbgnn_forward.1} parent=0 // pred_check
    _
  $region11: #{pbgnn_forward.1} parent=0 // pred_check_branch
    %32 = sbr.rel (0) target = $region13
  $region12: #{pbgnn_forward.1} parent=0 // pred_region
    _
  $region13: #{pbgnn_forward.1} parent=0 // pred_fallthru
    _
  // Predicated region
  $region14: #{pbgnn_forward.1} parent=0 // pred_check
    _
  $region15: #{pbgnn_forward.1} parent=0 // pred_check_branch
    %34 = sbr.rel (0) target = $region17
  $region16: #{pbgnn_forward.1} parent=0 // pred_region
    _
  $region17: #{pbgnn_forward.1} parent=0 // pred_fallthru
    _
  // Predicated region
  $region18: #{pbgnn_forward.1} parent=0 // pred_check
    _
  $region19: #{pbgnn_forward.1} parent=0 // pred_check_branch
    %36 = sbr.rel (0) target = $region21
  $region20: #{pbgnn_forward.1} parent=0 // pred_region
    _
  $region21: #{pbgnn_forward.1} parent=0 // pred_fallthru
    _
  // Predicated region
  $region22: #{pbgnn_forward.1} parent=0 // pred_check
    _
  $region23: #{pbgnn_forward.1} parent=0 // pred_check_branch
    %38 = sbr.rel (0) target = $region25
  $region24: #{pbgnn_forward.1} parent=0 // pred_region
    _
  $region25: #{pbgnn_forward.1} parent=0 // pred_fallthru
    _
  // Predicated region
  $region26: #{pbgnn_forward.1} parent=0 // pred_check
    _
  $region27: #{pbgnn_forward.1} parent=0 // pred_check_branch
    %40 = sbr.rel (0) target = $region29
  $region28: #{pbgnn_forward.1} parent=0 // pred_region
    _
  $region29: #{pbgnn_forward.1} parent=0 // pred_fallthru
    _
  // Predicated region
  $region30: #{pbgnn_forward.1} parent=0 // pred_check
    _
  $region31: #{pbgnn_forward.1} parent=0 // pred_check_branch
    %42 = sbr.rel (0) target = $region33
  $region32: #{pbgnn_forward.1} parent=0 // pred_region
    _
  $region33: #{pbgnn_forward.1} parent=0 // pred_fallthru
    _
  // Predicated region
  $region34: #{pbgnn_forward.1} parent=0 // pred_check
    _
  $region35: #{pbgnn_forward.1} parent=0 // pred_check_branch
    %44 = sbr.rel (0) target = $region37
  $region36: #{pbgnn_forward.1} parent=0 // pred_region
    _
  $region37: #{pbgnn_forward.1} parent=0 // pred_fallthru
    _
  // Predicated region
  $region38: #{pbgnn_forward.1} parent=0 // pred_check
    _
  $region39: #{pbgnn_forward.1} parent=0 // pred_check_branch
    %46 = sbr.rel (0) target = $region41
  $region40: #{pbgnn_forward.1} parent=0 // pred_region
    _
  $region41: #{pbgnn_forward.1} parent=0 // pred_fallthru
    _
  // Predicated region
  $region42: #{pbgnn_forward.1} parent=0 // pred_check
    _
  $region43: #{pbgnn_forward.1} parent=0 // pred_check_branch
    %48 = sbr.rel (0) target = $region45
  $region44: #{pbgnn_forward.1} parent=0 // pred_region
    _
  $region45: #{pbgnn_forward.1} parent=0 // pred_fallthru
    _
  // Predicated region
  $region46: #{pbgnn_forward.1} parent=0 // pred_check
    _
  $region47: #{pbgnn_forward.1} parent=0 // pred_check_branch
    %50 = sbr.rel (0) target = $region49
  $region48: #{pbgnn_forward.1} parent=0 // pred_region
    _
  $region49: #{pbgnn_forward.1} parent=0 // pred_fallthru
    _
  // Predicated region
  $region50: #{pbgnn_forward.1} parent=0 // pred_check
    _
  $region51: #{pbgnn_forward.1} parent=0 // pred_check_branch
    %52 = sbr.rel (0) target = $region53
  $region52: #{pbgnn_forward.1} parent=0 // pred_region
    _
  $region53: #{pbgnn_forward.1} parent=0 // pred_fallthru
    _
  // Predicated region
  $region54: #{pbgnn_forward.1} parent=0 // pred_check
    _
  $region55: #{pbgnn_forward.1} parent=0 // pred_check_branch
    %54 = sbr.rel (0) target = $region57
  $region56: #{pbgnn_forward.1} parent=0 // pred_region
    _
  $region57: #{pbgnn_forward.1} parent=0 // pred_fallthru
    _
  // Predicated region
  $region58: #{pbgnn_forward.1} parent=0 // pred_check
    _
  $region59: #{pbgnn_forward.1} parent=0 // pred_check_branch
    %56 = sbr.rel (0) target = $region61
  $region60: #{pbgnn_forward.1} parent=0 // pred_region
    _
  $region61: #{pbgnn_forward.1} parent=0 // pred_fallthru
    _
  // Predicated region
  $region62: #{pbgnn_forward.1} parent=0 // pred_check
    _
  $region63: #{pbgnn_forward.1} parent=0 // pred_check_branch
    %58 = sbr.rel (0) target = $region65
  $region64: #{pbgnn_forward.1} parent=0 // pred_region
    _
  $region65: #{pbgnn_forward.1} parent=0 // pred_fallthru
    _
  // Predicated region
  $region66: #{pbgnn_forward.1} parent=0 // pred_check
    _
  $region67: #{pbgnn_forward.1} parent=0 // pred_check_branch
    %60 = sbr.rel (0) target = $region69
  $region68: #{pbgnn_forward.1} parent=0 // pred_region
    _
  $region69: #{pbgnn_forward.1} parent=0 // pred_fallthru
    _
  // Predicated region
  $region70: #{pbgnn_forward.1} parent=0 // pred_check
    _
  $region71: #{pbgnn_forward.1} parent=0 // pred_check_branch
    %62 = sbr.rel (0) target = $region73
  $region72: #{pbgnn_forward.1} parent=0 // pred_region
    _
  $region73: #{pbgnn_forward.1} parent=0 // pred_fallthru
    _
  // Predicated region
  $region74: #{pbgnn_forward.1} parent=0 // pred_check
    _
  $region75: #{pbgnn_forward.1} parent=0 // pred_check_branch
    %64 = sbr.rel (0) target = $region77
  $region76: #{pbgnn_forward.1} parent=0 // pred_region
    _
  $region77: #{pbgnn_forward.1} parent=0 // pred_fallthru
    _
  // Predicated region
  $region78: #{pbgnn_forward.1} parent=0 // pred_check
    _
  $region79: #{pbgnn_forward.1} parent=0 // pred_check_branch
    %66 = sbr.rel (0) target = $region81
  $region80: #{pbgnn_forward.1} parent=0 // pred_region
    _
  $region81: #{pbgnn_forward.1} parent=0 // pred_fallthru
    _
  // Predicated region
  $region82: #{pbgnn_forward.1} parent=0 // pred_check
    _
  $region83: #{pbgnn_forward.1} parent=0 // pred_check_branch
    %68 = sbr.rel (0) target = $region85
  $region84: #{pbgnn_forward.1} parent=0 // pred_region
    _
  $region85: #{pbgnn_forward.1} parent=0 // pred_fallthru
    _
  // Predicated region
  $region86: #{pbgnn_forward.1} parent=0 // pred_check
    _
  $region87: #{pbgnn_forward.1} parent=0 // pred_check_branch
    %70 = sbr.rel (0) target = $region89
  $region88: #{pbgnn_forward.1} parent=0 // pred_region
    _
  $region89: #{pbgnn_forward.1} parent=0 // pred_fallthru
    _
  %v72 = vld [vmem:[%s0] sm:$0xff]
  %v73 = vld [vmem:[%s0 + $0x8] sm:$0xff]
  %v74 = vld [vmem:[%s0 + $0x10] sm:$0xff]
  %v75 = vld [vmem:[%s0 + $0x18] sm:$0xff]
  %v76 = vld [vmem:[%s0 + $0x20] sm:$0xff]
  %v77 = vld [vmem:[%s0 + $0x28] sm:$0xff]
  %v78 = vld [vmem:[%s0 + $0x30] sm:$0xff]
  %v79 = vld [vmem:[%s0 + $0x38] sm:$0xff]
  %v80 = vld [vmem:[%s0 + $0x40] sm:$0xff]
  %v81 = vld [vmem:[%s0 + $0x48] sm:$0xff]
  %v82 = vld [vmem:[%s0 + $0x50] sm:$0xff]
  %v83 = vld [vmem:[%s0 + $0x58] sm:$0xff]
  %v84 = vld [vmem:[%s0 + $0x60] sm:$0xff]
  %v85 = vld [vmem:[%s0 + $0x68] sm:$0xff]
  %v86 = vld [vmem:[%s0 + $0x70] sm:$0xff]
  %v87 = vld [vmem:[%s0 + $0x78] sm:$0xff]
  %v88 = vld [vmem:[%s5] sm:$0xf]
  %v89 = vld [vmem:[%s5 + $0x4] sm:$0xf]
  %v90 = vld [vmem:[%s5 + $0x8] sm:$0xf]
  %v91 = vld [vmem:[%s5 + $0xc] sm:$0xf]
  %v92 = vld [vmem:[%s5 + $0x10] sm:$0xf]
  %v93 = vld [vmem:[%s5 + $0x14] sm:$0xf]
  %v94 = vld [vmem:[%s5 + $0x18] sm:$0xf]
  %v95 = vld [vmem:[%s5 + $0x1c] sm:$0xf]
  %v96 = vld [vmem:[%s5 + $0x20] sm:$0xf]
  %v97 = vld [vmem:[%s5 + $0x24] sm:$0xf]
  %v98 = vld [vmem:[%s5 + $0x28] sm:$0xf]
  %v99 = vld [vmem:[%s5 + $0x2c] sm:$0xf]
  %v100 = vld [vmem:[%s5 + $0x30] sm:$0xf]
  %v101 = vld [vmem:[%s5 + $0x34] sm:$0xf]
  %v102 = vld [vmem:[%s5 + $0x38] sm:$0xf]
  %v103 = vld [vmem:[%s5 + $0x3c] sm:$0xf]
  %v104 = vpack.c.bf16 %v73, %v72
  %v105 = vpack.c.bf16 %v75, %v74
  %v106 = vpack.c.bf16 %v77, %v76
  %v107 = vpack.c.bf16 %v79, %v78
  %v108 = vpack.c.bf16 %v81, %v80
  %v109 = vpack.c.bf16 %v83, %v82
  %v110 = vpack.c.bf16 %v85, %v84
  %v111 = vpack.c.bf16 %v87, %v86
  %v112 = vld [vmem:[%s6] sm:$0x1]
  %v114 = vlaneseq
  %v115 = vshrl.u32 %v114, 7
  %v116 = vsub.s32 0, %v115
  %v117 = vrot.slane %v112, %v116
  %v135 = vunpack.c.l.b16 %v88
  %v136 = vunpack.c.l.b16 %v89
  %v137 = vunpack.c.l.b16 %v90
  %v138 = vunpack.c.l.b16 %v91
  %v139 = vunpack.c.l.b16 %v92
  %v140 = vunpack.c.l.b16 %v93
  %v141 = vunpack.c.l.b16 %v94
  %v142 = vunpack.c.l.b16 %v95
  %v143 = vunpack.c.l.b16 %v96
  %v144 = vunpack.c.l.b16 %v97
  %v145 = vunpack.c.l.b16 %v98
  %v146 = vunpack.c.l.b16 %v99
  %v147 = vunpack.c.l.b16 %v100
  %v148 = vunpack.c.l.b16 %v101
  %v149 = vunpack.c.l.b16 %v102
  %v150 = vunpack.c.l.b16 %v103
  %v151 = vpack.c.b16 %v136, %v135
  %v152 = vpack.c.b16 %v138, %v137
  %v153 = vpack.c.b16 %v140, %v139
  %v154 = vpack.c.b16 %v142, %v141
  %v155 = vpack.c.b16 %v144, %v143
  %v156 = vpack.c.b16 %v146, %v145
  %v157 = vpack.c.b16 %v148, %v147
  %v158 = vpack.c.b16 %v150, %v149
  %167 = vmatprep.subr.bf16.mxu0 0
  %168 = vmatpush1.bf16.msra.mxu0 %v158
  %169 = vmatprep.subr.bf16.mxu0 0
  %170 = vmatpush1.bf16.msra.mxu0 %v157
  %171 = vmatprep.subr.bf16.mxu0 0
  %172 = vmatpush1.bf16.msra.mxu0 %v156
  %173 = vmatprep.subr.bf16.mxu0 0
  %174 = vmatpush1.bf16.msra.mxu0 %v155
  %175 = vmatprep.subr.bf16.mxu0 0
  %176 = vmatpush1.bf16.msra.mxu0 %v154
  %177 = vmatprep.subr.bf16.mxu0 0
  %178 = vmatpush1.bf16.msra.mxu0 %v153
  %179 = vmatprep.subr.bf16.mxu0 0
  %180 = vmatpush1.bf16.msra.mxu0 %v152
  %181 = vmatprep.subr.bf16.mxu0 0
  %182 = vmatpush1.bf16.msra.mxu0 %v151
  %183 = vmatprep.subr.bf16.mxu0 0
  %184 = vmatpush2.bf16.msra.mxu0 0
  %185 = vmatprep.subr.bf16.mxu0 0
  %186 = vmatpush2.bf16.msra.mxu0 0
  %187 = vmatprep.subr.bf16.mxu0 0
  %188 = vmatpush2.bf16.msra.mxu0 0
  %189 = vmatprep.subr.bf16.mxu0 0
  %190 = vmatpush2.bf16.msra.mxu0 0
  %191 = vmatprep.subr.bf16.mxu0 0
  %192 = vmatpush2.bf16.msra.mxu0 0
  %193 = vmatprep.subr.bf16.mxu0 0
  %194 = vmatpush2.bf16.msra.mxu0 0
  %195 = vmatprep.subr.bf16.mxu0 0
  %196 = vmatpush2.bf16.msra.mxu0 0
  %197 = vmatprep.subr.bf16.mxu0 0
  %198 = vmatpush2.bf16.msra.mxu0 0
  %199 = vmatprep.mubr.bf16.mxu0 0
  %200 = vmatmul.mubr.bf16.gmra.mxu0 %v104
  %v201 = vpop.f32.mrf.mxu0
  %v202 = vadd.f32 %v117, %v201
  %v203 = vpop.f32.mrf.mxu0
  %v204 = vpop.f32.mrf.mxu0
  %v205 = vadd.f32 %v117, %v204
  %v206 = vpop.f32.mrf.mxu0
  %207 = vmatprep.mubr.bf16.mxu0 0
  %208 = vmatmul.mubr.bf16.gmra.mxu0 %v105
  %v209 = vpop.f32.mrf.mxu0
  %v210 = vadd.f32 %v117, %v209
  %v211 = vpop.f32.mrf.mxu0
  %v212 = vpop.f32.mrf.mxu0
  %v213 = vadd.f32 %v117, %v212
  %v214 = vpop.f32.mrf.mxu0
  %215 = vmatprep.mubr.bf16.mxu0 0
  %216 = vmatmul.mubr.bf16.gmra.mxu0 %v106
  %v217 = vpop.f32.mrf.mxu0
  %v218 = vadd.f32 %v117, %v217
  %v219 = vpop.f32.mrf.mxu0
  %v220 = vpop.f32.mrf.mxu0
  %v221 = vadd.f32 %v117, %v220
  %v222 = vpop.f32.mrf.mxu0
  %223 = vmatprep.mubr.bf16.mxu0 0
  %224 = vmatmul.mubr.bf16.gmra.mxu0 %v107
  %v225 = vpop.f32.mrf.mxu0
  %v226 = vadd.f32 %v117, %v225
  %v227 = vpop.f32.mrf.mxu0
  %v228 = vpop.f32.mrf.mxu0
  %v229 = vadd.f32 %v117, %v228
  %v230 = vpop.f32.mrf.mxu0
  %231 = vmatprep.mubr.bf16.mxu0 0
  %232 = vmatmul.mubr.bf16.gmra.mxu0 %v108
  %v233 = vpop.f32.mrf.mxu0
  %v234 = vadd.f32 %v117, %v233
  %v235 = vpop.f32.mrf.mxu0
  %v236 = vpop.f32.mrf.mxu0
  %v237 = vadd.f32 %v117, %v236
  %v238 = vpop.f32.mrf.mxu0
  %239 = vmatprep.mubr.bf16.mxu0 0
  %240 = vmatmul.mubr.bf16.gmra.mxu0 %v109
  %v241 = vpop.f32.mrf.mxu0
  %v242 = vadd.f32 %v117, %v241
  %v243 = vpop.f32.mrf.mxu0
  %v244 = vpop.f32.mrf.mxu0
  %v245 = vadd.f32 %v117, %v244
  %v246 = vpop.f32.mrf.mxu0
  %247 = vmatprep.mubr.bf16.mxu0 0
  %248 = vmatmul.mubr.bf16.gmra.mxu0 %v110
  %v249 = vpop.f32.mrf.mxu0
  %v250 = vadd.f32 %v117, %v249
  %v251 = vpop.f32.mrf.mxu0
  %v252 = vpop.f32.mrf.mxu0
  %v253 = vadd.f32 %v117, %v252
  %v254 = vpop.f32.mrf.mxu0
  %255 = vmatprep.mubr.bf16.mxu0 0
  %256 = vmatmul.mubr.bf16.gmra.mxu0 %v111
  %v257 = vpop.f32.mrf.mxu0
  %v258 = vadd.f32 %v117, %v257
  %v259 = vpop.f32.mrf.mxu0
  %v260 = vpop.f32.mrf.mxu0
  %v261 = vadd.f32 %v117, %v260
  %v262 = vpop.f32.mrf.mxu0
  %263 = vdwg.mxu0
  %v264 = vmul.f32 %v202, 0.5
  %v265 = vmul.f32 %v205, 0.5
  %v266 = vmul.f32 %v210, 0.5
  %v267 = vmul.f32 %v213, 0.5
  %v268 = vmul.f32 %v218, 0.5
  %v269 = vmul.f32 %v221, 0.5
  %v270 = vmul.f32 %v226, 0.5
  %v271 = vmul.f32 %v229, 0.5
  %v272 = vmul.f32 %v234, 0.5
  %v273 = vmul.f32 %v237, 0.5
  %v274 = vmul.f32 %v242, 0.5
  %v275 = vmul.f32 %v245, 0.5
  %v276 = vmul.f32 %v250, 0.5
  %v277 = vmul.f32 %v253, 0.5
  %v278 = vmul.f32 %v258, 0.5
  %v279 = vmul.f32 %v261, 0.5
  %v280 = vmul.f32 %v202, 0.044715
  %v281 = vmul.f32 %v205, 0.044715
  %v282 = vmul.f32 %v210, 0.044715
  %v283 = vmul.f32 %v213, 0.044715
  %v284 = vmul.f32 %v218, 0.044715
  %v285 = vmul.f32 %v221, 0.044715
  %v286 = vmul.f32 %v226, 0.044715
  %v287 = vmul.f32 %v229, 0.044715
  %v288 = vmul.f32 %v234, 0.044715
  %v289 = vmul.f32 %v237, 0.044715
  %v290 = vmul.f32 %v242, 0.044715
  %v291 = vmul.f32 %v245, 0.044715
  %v292 = vmul.f32 %v250, 0.044715
  %v293 = vmul.f32 %v253, 0.044715
  %v294 = vmul.f32 %v258, 0.044715
  %v295 = vmul.f32 %v261, 0.044715
  %v296 = vmul.f32 %v280, %v202
  %v297 = vmul.f32 %v281, %v205
  %v298 = vmul.f32 %v282, %v210
  %v299 = vmul.f32 %v283, %v213
  %v300 = vmul.f32 %v284, %v218
  %v301 = vmul.f32 %v285, %v221
  %v302 = vmul.f32 %v286, %v226
  %v303 = vmul.f32 %v287, %v229
  %v304 = vmul.f32 %v288, %v234
  %v305 = vmul.f32 %v289, %v237
  %v306 = vmul.f32 %v290, %v242
  %v307 = vmul.f32 %v291, %v245
  %v308 = vmul.f32 %v292, %v250
  %v309 = vmul.f32 %v293, %v253
  %v310 = vmul.f32 %v294, %v258
  %v311 = vmul.f32 %v295, %v261
  %v312 = vmul.f32 %v296, %v202
  %v313 = vmul.f32 %v297, %v205
  %v314 = vmul.f32 %v298, %v210
  %v315 = vmul.f32 %v299, %v213
  %v316 = vmul.f32 %v300, %v218
  %v317 = vmul.f32 %v301, %v221
  %v318 = vmul.f32 %v302, %v226
  %v319 = vmul.f32 %v303, %v229
  %v320 = vmul.f32 %v304, %v234
  %v321 = vmul.f32 %v305, %v237
  %v322 = vmul.f32 %v306, %v242
  %v323 = vmul.f32 %v307, %v245
  %v324 = vmul.f32 %v308, %v250
  %v325 = vmul.f32 %v309, %v253
  %v326 = vmul.f32 %v310, %v258
  %v327 = vmul.f32 %v311, %v261
  %v328 = vadd.f32 %v202, %v312
  %v329 = vadd.f32 %v205, %v313
  %v330 = vadd.f32 %v210, %v314
  %v331 = vadd.f32 %v213, %v315
  %v332 = vadd.f32 %v218, %v316
  %v333 = vadd.f32 %v221, %v317
  %v334 = vadd.f32 %v226, %v318
  %v335 = vadd.f32 %v229, %v319
  %v336 = vadd.f32 %v234, %v320
  %v337 = vadd.f32 %v237, %v321
  %v338 = vadd.f32 %v242, %v322
  %v339 = vadd.f32 %v245, %v323
  %v340 = vadd.f32 %v250, %v324
  %v341 = vadd.f32 %v253, %v325
  %v342 = vadd.f32 %v258, %v326
  %v343 = vadd.f32 %v261, %v327
  %v344 = vmul.f32 %v328, 0.7978846
  %v345 = vmul.f32 %v329, 0.7978846
  %v346 = vmul.f32 %v330, 0.7978846
  %v347 = vmul.f32 %v331, 0.7978846
  %v348 = vmul.f32 %v332, 0.7978846
  %v349 = vmul.f32 %v333, 0.7978846
  %v350 = vmul.f32 %v334, 0.7978846
  %v351 = vmul.f32 %v335, 0.7978846
  %v352 = vmul.f32 %v336, 0.7978846
  %v353 = vmul.f32 %v337, 0.7978846
  %v354 = vmul.f32 %v338, 0.7978846
  %v355 = vmul.f32 %v339, 0.7978846
  %v356 = vmul.f32 %v340, 0.7978846
  %v357 = vmul.f32 %v341, 0.7978846
  %v358 = vmul.f32 %v342, 0.7978846
  %v359 = vmul.f32 %v343, 0.7978846
  %v360 = vtanh.pop %v344
  %v361 = vtanh.pop %v345
  %v362 = vtanh.pop %v346
  %v363 = vtanh.pop %v347
  %v364 = vtanh.pop %v348
  %v365 = vtanh.pop %v349
  %v366 = vtanh.pop %v350
  %v367 = vtanh.pop %v351
  %v368 = vtanh.pop %v352
  %v369 = vtanh.pop %v353
  %v370 = vtanh.pop %v354
  %v371 = vtanh.pop %v355
  %v372 = vtanh.pop %v356
  %v373 = vtanh.pop %v357
  %v374 = vtanh.pop %v358
  %v375 = vtanh.pop %v359
  %v376 = vadd.f32 %v360, 1.0
  %v377 = vadd.f32 %v361, 1.0
  %v378 = vadd.f32 %v362, 1.0
  %v379 = vadd.f32 %v363, 1.0
  %v380 = vadd.f32 %v364, 1.0
  %v381 = vadd.f32 %v365, 1.0
  %v382 = vadd.f32 %v366, 1.0
  %v383 = vadd.f32 %v367, 1.0
  %v384 = vadd.f32 %v368, 1.0
  %v385 = vadd.f32 %v369, 1.0
  %v386 = vadd.f32 %v370, 1.0
  %v387 = vadd.f32 %v371, 1.0
  %v388 = vadd.f32 %v372, 1.0
  %v389 = vadd.f32 %v373, 1.0
  %v390 = vadd.f32 %v374, 1.0
  %v391 = vadd.f32 %v375, 1.0
  %v392 = vmul.f32 %v264, %v376
  %v393 = vmul.f32 %v265, %v377
  %v394 = vmul.f32 %v266, %v378
  %v395 = vmul.f32 %v267, %v379
  %v396 = vmul.f32 %v268, %v380
  %v397 = vmul.f32 %v269, %v381
  %v398 = vmul.f32 %v270, %v382
  %v399 = vmul.f32 %v271, %v383
  %v400 = vmul.f32 %v272, %v384
  %v401 = vmul.f32 %v273, %v385
  %v402 = vmul.f32 %v274, %v386
  %v403 = vmul.f32 %v275, %v387
  %v404 = vmul.f32 %v276, %v388
  %v405 = vmul.f32 %v277, %v389
  %v406 = vmul.f32 %v278, %v390
  %v407 = vmul.f32 %v279, %v391
  %v408 = vld [vmem:[%s7] sm:$0xf]
  %v409 = vld [vmem:[%s7 + $0x4] sm:$0xf]
  %v410 = vld [vmem:[%s7 + $0x8] sm:$0xf]
  %v411 = vld [vmem:[%s7 + $0xc] sm:$0xf]
  %v412 = vld [vmem:[%s7 + $0x10] sm:$0xf]
  %v413 = vld [vmem:[%s7 + $0x14] sm:$0xf]
  %v414 = vld [vmem:[%s7 + $0x18] sm:$0xf]
  %v415 = vld [vmem:[%s7 + $0x1c] sm:$0xf]
  %v416 = vld [vmem:[%s7 + $0x20] sm:$0xf]
  %v417 = vld [vmem:[%s7 + $0x24] sm:$0xf]
  %v418 = vld [vmem:[%s7 + $0x28] sm:$0xf]
  %v419 = vld [vmem:[%s7 + $0x2c] sm:$0xf]
  %v420 = vld [vmem:[%s7 + $0x30] sm:$0xf]
  %v421 = vld [vmem:[%s7 + $0x34] sm:$0xf]
  %v422 = vld [vmem:[%s7 + $0x38] sm:$0xf]
  %v423 = vld [vmem:[%s7 + $0x3c] sm:$0xf]
  %v424 = vpack.c.bf16 %v393, %v392
  %v425 = vpack.c.bf16 %v395, %v394
  %v426 = vpack.c.bf16 %v397, %v396
  %v427 = vpack.c.bf16 %v399, %v398
  %v428 = vpack.c.bf16 %v401, %v400
  %v429 = vpack.c.bf16 %v403, %v402
  %v430 = vpack.c.bf16 %v405, %v404
  %v431 = vpack.c.bf16 %v407, %v406
  %v432 = vld [vmem:[%s8] sm:$0x1]
  %v434 = vlaneseq
  %v435 = vshrl.u32 %v434, 7
  %v436 = vsub.s32 0, %v435
  %v437 = vrot.slane %v432, %v436
  %v455 = vunpack.c.l.b16 %v408
  %v456 = vunpack.c.l.b16 %v409
  %v457 = vunpack.c.l.b16 %v410
  %v458 = vunpack.c.l.b16 %v411
  %v459 = vunpack.c.l.b16 %v412
  %v460 = vunpack.c.l.b16 %v413
  %v461 = vunpack.c.l.b16 %v414
  %v462 = vunpack.c.l.b16 %v415
  %v463 = vunpack.c.l.b16 %v416
  %v464 = vunpack.c.l.b16 %v417
  %v465 = vunpack.c.l.b16 %v418
  %v466 = vunpack.c.l.b16 %v419
  %v467 = vunpack.c.l.b16 %v420
  %v468 = vunpack.c.l.b16 %v421
  %v469 = vunpack.c.l.b16 %v422
  %v470 = vunpack.c.l.b16 %v423
  %v471 = vpack.c.b16 %v456, %v455
  %v472 = vpack.c.b16 %v458, %v457
  %v473 = vpack.c.b16 %v460, %v459
  %v474 = vpack.c.b16 %v462, %v461
  %v475 = vpack.c.b16 %v464, %v463
  %v476 = vpack.c.b16 %v466, %v465
  %v477 = vpack.c.b16 %v468, %v467
  %v478 = vpack.c.b16 %v470, %v469
  %487 = vmatprep.subr.bf16.mxu0 0
  %488 = vmatpush1.bf16.msra.mxu0 %v478
  %489 = vmatprep.subr.bf16.mxu0 0
  %490 = vmatpush1.bf16.msra.mxu0 %v477
  %491 = vmatprep.subr.bf16.mxu0 0
  %492 = vmatpush1.bf16.msra.mxu0 %v476
  %493 = vmatprep.subr.bf16.mxu0 0
  %494 = vmatpush1.bf16.msra.mxu0 %v475
  %495 = vmatprep.subr.bf16.mxu0 0
  %496 = vmatpush1.bf16.msra.mxu0 %v474
  %497 = vmatprep.subr.bf16.mxu0 0
  %498 = vmatpush1.bf16.msra.mxu0 %v473
  %499 = vmatprep.subr.bf16.mxu0 0
  %500 = vmatpush1.bf16.msra.mxu0 %v472
  %501 = vmatprep.subr.bf16.mxu0 0
  %502 = vmatpush1.bf16.msra.mxu0 %v471
  %503 = vmatprep.subr.bf16.mxu0 0
  %504 = vmatpush2.bf16.msra.mxu0 0
  %505 = vmatprep.subr.bf16.mxu0 0
  %506 = vmatpush2.bf16.msra.mxu0 0
  %507 = vmatprep.subr.bf16.mxu0 0
  %508 = vmatpush2.bf16.msra.mxu0 0
  %509 = vmatprep.subr.bf16.mxu0 0
  %510 = vmatpush2.bf16.msra.mxu0 0
  %511 = vmatprep.subr.bf16.mxu0 0
  %512 = vmatpush2.bf16.msra.mxu0 0
  %513 = vmatprep.subr.bf16.mxu0 0
  %514 = vmatpush2.bf16.msra.mxu0 0
  %515 = vmatprep.subr.bf16.mxu0 0
  %516 = vmatpush2.bf16.msra.mxu0 0
  %517 = vmatprep.subr.bf16.mxu0 0
  %518 = vmatpush2.bf16.msra.mxu0 0
  %519 = vmatprep.mubr.bf16.mxu0 0
  %520 = vmatmul.mubr.bf16.gmra.mxu0 %v424
  %v521 = vpop.f32.mrf.mxu0
  %v522 = vadd.f32 %v437, %v521
  %v523 = vpop.f32.mrf.mxu0
  %v524 = vpop.f32.mrf.mxu0
  %v525 = vadd.f32 %v437, %v524
  %v526 = vpop.f32.mrf.mxu0
  %527 = vmatprep.mubr.bf16.mxu0 0
  %528 = vmatmul.mubr.bf16.gmra.mxu0 %v425
  %v529 = vpop.f32.mrf.mxu0
  %v530 = vadd.f32 %v437, %v529
  %v531 = vpop.f32.mrf.mxu0
  %v532 = vpop.f32.mrf.mxu0
  %v533 = vadd.f32 %v437, %v532
  %v534 = vpop.f32.mrf.mxu0
  %535 = vmatprep.mubr.bf16.mxu0 0
  %536 = vmatmul.mubr.bf16.gmra.mxu0 %v426
  %v537 = vpop.f32.mrf.mxu0
  %v538 = vadd.f32 %v437, %v537
  %v539 = vpop.f32.mrf.mxu0
  %v540 = vpop.f32.mrf.mxu0
  %v541 = vadd.f32 %v437, %v540
  %v542 = vpop.f32.mrf.mxu0
  %543 = vmatprep.mubr.bf16.mxu0 0
  %544 = vmatmul.mubr.bf16.gmra.mxu0 %v427
  %v545 = vpop.f32.mrf.mxu0
  %v546 = vadd.f32 %v437, %v545
  %v547 = vpop.f32.mrf.mxu0
  %v548 = vpop.f32.mrf.mxu0
  %v549 = vadd.f32 %v437, %v548
  %v550 = vpop.f32.mrf.mxu0
  %551 = vmatprep.mubr.bf16.mxu0 0
  %552 = vmatmul.mubr.bf16.gmra.mxu0 %v428
  %v553 = vpop.f32.mrf.mxu0
  %v554 = vadd.f32 %v437, %v553
  %v555 = vpop.f32.mrf.mxu0
  %v556 = vpop.f32.mrf.mxu0
  %v557 = vadd.f32 %v437, %v556
  %v558 = vpop.f32.mrf.mxu0
  %559 = vmatprep.mubr.bf16.mxu0 0
  %560 = vmatmul.mubr.bf16.gmra.mxu0 %v429
  %v561 = vpop.f32.mrf.mxu0
  %v562 = vadd.f32 %v437, %v561
  %v563 = vpop.f32.mrf.mxu0
  %v564 = vpop.f32.mrf.mxu0
  %v565 = vadd.f32 %v437, %v564
  %v566 = vpop.f32.mrf.mxu0
  %567 = vmatprep.mubr.bf16.mxu0 0
  %568 = vmatmul.mubr.bf16.gmra.mxu0 %v430
  %v569 = vpop.f32.mrf.mxu0
  %v570 = vadd.f32 %v437, %v569
  %v571 = vpop.f32.mrf.mxu0
  %v572 = vpop.f32.mrf.mxu0
  %v573 = vadd.f32 %v437, %v572
  %v574 = vpop.f32.mrf.mxu0
  %575 = vmatprep.mubr.bf16.mxu0 0
  %576 = vmatmul.mubr.bf16.gmra.mxu0 %v431
  %v577 = vpop.f32.mrf.mxu0
  %v578 = vadd.f32 %v437, %v577
  %v579 = vpop.f32.mrf.mxu0
  %v580 = vpop.f32.mrf.mxu0
  %v581 = vadd.f32 %v437, %v580
  %v582 = vpop.f32.mrf.mxu0
  %583 = vdwg.mxu0
  %v584 = vld [vmem:[%s1] sm:$0xff]
  %v585 = vld [vmem:[%s1 + $0x8] sm:$0xff]
  %v586 = vld [vmem:[%s1 + $0x10] sm:$0xff]
  %v587 = vld [vmem:[%s1 + $0x18] sm:$0xff]
  %v588 = vld [vmem:[%s1 + $0x20] sm:$0xff]
  %v589 = vld [vmem:[%s1 + $0x28] sm:$0xff]
  %v590 = vld [vmem:[%s1 + $0x30] sm:$0xff]
  %v591 = vld [vmem:[%s1 + $0x38] sm:$0xff]
  %v592 = vld [vmem:[%s1 + $0x40] sm:$0xff]
  %v593 = vld [vmem:[%s1 + $0x48] sm:$0xff]
  %v594 = vld [vmem:[%s1 + $0x50] sm:$0xff]
  %v595 = vld [vmem:[%s1 + $0x58] sm:$0xff]
  %v596 = vld [vmem:[%s1 + $0x60] sm:$0xff]
  %v597 = vld [vmem:[%s1 + $0x68] sm:$0xff]
  %v598 = vld [vmem:[%s1 + $0x70] sm:$0xff]
  %v599 = vld [vmem:[%s1 + $0x78] sm:$0xff]
  %v600 = vld [vmem:[%s1 + $0x80] sm:$0xff]
  %v601 = vld [vmem:[%s1 + $0x88] sm:$0xff]
  %v602 = vld [vmem:[%s1 + $0x90] sm:$0xff]
  %v603 = vld [vmem:[%s1 + $0x98] sm:$0xff]
  %v604 = vld [vmem:[%s1 + $0xa0] sm:$0xff]
  %v605 = vld [vmem:[%s1 + $0xa8] sm:$0xff]
  %v606 = vld [vmem:[%s1 + $0xb0] sm:$0xff]
  %v607 = vld [vmem:[%s1 + $0xb8] sm:$0xff]
  %v608 = vld [vmem:[%s1 + $0xc0] sm:$0xff]
  %v609 = vld [vmem:[%s1 + $0xc8] sm:$0xff]
  %v610 = vld [vmem:[%s1 + $0xd0] sm:$0xff]
  %v611 = vld [vmem:[%s1 + $0xd8] sm:$0xff]
  %v612 = vld [vmem:[%s1 + $0xe0] sm:$0xff]
  %v613 = vld [vmem:[%s1 + $0xe8] sm:$0xff]
  %v614 = vld [vmem:[%s1 + $0xf0] sm:$0xff]
  %v615 = vld [vmem:[%s1 + $0xf8] sm:$0xff]
  %v616 = vmul.f32 %v584, %v584
  %v617 = vmul.f32 %v585, %v585
  %v618 = vmul.f32 %v586, %v586
  %v619 = vmul.f32 %v587, %v587
  %v620 = vmul.f32 %v588, %v588
  %v621 = vmul.f32 %v589, %v589
  %v622 = vmul.f32 %v590, %v590
  %v623 = vmul.f32 %v591, %v591
  %v624 = vmul.f32 %v592, %v592
  %v625 = vmul.f32 %v593, %v593
  %v626 = vmul.f32 %v594, %v594
  %v627 = vmul.f32 %v595, %v595
  %v628 = vmul.f32 %v596, %v596
  %v629 = vmul.f32 %v597, %v597
  %v630 = vmul.f32 %v598, %v598
  %v631 = vmul.f32 %v599, %v599
  %v632 = vmul.f32 %v600, %v600
  %v633 = vmul.f32 %v601, %v601
  %v634 = vmul.f32 %v602, %v602
  %v635 = vmul.f32 %v603, %v603
  %v636 = vmul.f32 %v604, %v604
  %v637 = vmul.f32 %v605, %v605
  %v638 = vmul.f32 %v606, %v606
  %v639 = vmul.f32 %v607, %v607
  %v640 = vmul.f32 %v608, %v608
  %v641 = vmul.f32 %v609, %v609
  %v642 = vmul.f32 %v610, %v610
  %v643 = vmul.f32 %v611, %v611
  %v644 = vmul.f32 %v612, %v612
  %v645 = vmul.f32 %v613, %v613
  %v646 = vmul.f32 %v614, %v614
  %v647 = vmul.f32 %v615, %v615
  %648 = vadd.xlane.f32.xlu0 %v616
  %v649 = vpop.xlane.xlu0 %648
  %650 = vadd.xlane.f32.xlu0 %v617
  %v651 = vpop.xlane.xlu0 %650
  %652 = vadd.xlane.f32.xlu0 %v618
  %v653 = vpop.xlane.xlu0 %652
  %654 = vadd.xlane.f32.xlu0 %v619
  %v655 = vpop.xlane.xlu0 %654
  %656 = vadd.xlane.f32.xlu0 %v620
  %v657 = vpop.xlane.xlu0 %656
  %658 = vadd.xlane.f32.xlu0 %v621
  %v659 = vpop.xlane.xlu0 %658
  %660 = vadd.xlane.f32.xlu0 %v622
  %v661 = vpop.xlane.xlu0 %660
  %662 = vadd.xlane.f32.xlu0 %v623
  %v663 = vpop.xlane.xlu0 %662
  %664 = vadd.xlane.f32.xlu0 %v624
  %v665 = vpop.xlane.xlu0 %664
  %666 = vadd.xlane.f32.xlu0 %v625
  %v667 = vpop.xlane.xlu0 %666
  %668 = vadd.xlane.f32.xlu0 %v626
  %v669 = vpop.xlane.xlu0 %668
  %670 = vadd.xlane.f32.xlu0 %v627
  %v671 = vpop.xlane.xlu0 %670
  %672 = vadd.xlane.f32.xlu0 %v628
  %v673 = vpop.xlane.xlu0 %672
  %674 = vadd.xlane.f32.xlu0 %v629
  %v675 = vpop.xlane.xlu0 %674
  %676 = vadd.xlane.f32.xlu0 %v630
  %v677 = vpop.xlane.xlu0 %676
  %678 = vadd.xlane.f32.xlu0 %v631
  %v679 = vpop.xlane.xlu0 %678
  %680 = vadd.xlane.f32.xlu0 %v632
  %v681 = vpop.xlane.xlu0 %680
  %682 = vadd.xlane.f32.xlu0 %v633
  %v683 = vpop.xlane.xlu0 %682
  %684 = vadd.xlane.f32.xlu0 %v634
  %v685 = vpop.xlane.xlu0 %684
  %686 = vadd.xlane.f32.xlu0 %v635
  %v687 = vpop.xlane.xlu0 %686
  %688 = vadd.xlane.f32.xlu0 %v636
  %v689 = vpop.xlane.xlu0 %688
  %690 = vadd.xlane.f32.xlu0 %v637
  %v691 = vpop.xlane.xlu0 %690
  %692 = vadd.xlane.f32.xlu0 %v638
  %v693 = vpop.xlane.xlu0 %692
  %694 = vadd.xlane.f32.xlu0 %v639
  %v695 = vpop.xlane.xlu0 %694
  %696 = vadd.xlane.f32.xlu0 %v640
  %v697 = vpop.xlane.xlu0 %696
  %698 = vadd.xlane.f32.xlu0 %v641
  %v699 = vpop.xlane.xlu0 %698
  %700 = vadd.xlane.f32.xlu0 %v642
  %v701 = vpop.xlane.xlu0 %700
  %702 = vadd.xlane.f32.xlu0 %v643
  %v703 = vpop.xlane.xlu0 %702
  %704 = vadd.xlane.f32.xlu0 %v644
  %v705 = vpop.xlane.xlu0 %704
  %706 = vadd.xlane.f32.xlu0 %v645
  %v707 = vpop.xlane.xlu0 %706
  %708 = vadd.xlane.f32.xlu0 %v646
  %v709 = vpop.xlane.xlu0 %708
  %710 = vadd.xlane.f32.xlu0 %v647
  %v711 = vpop.xlane.xlu0 %710
  %v712 = vrsqrt.pop %v649
  %v713 = vmul.f32 %v649, %v712
  %vm714 = vcmp.eq.f32.partialorder %v649, inf
  %v715 = vsel %vm714, %v649, %v713
  %vm716 = vcmp.eq.f32.partialorder %v649, 0.0
  %v717 = vand.u32 %v649, 2147483648
  %v718 = vsel %vm716, %v717, %v715
  %v719 = vrsqrt.pop %v651
  %v720 = vmul.f32 %v651, %v719
  %vm721 = vcmp.eq.f32.partialorder %v651, inf
  %v722 = vsel %vm721, %v651, %v720
  %vm723 = vcmp.eq.f32.partialorder %v651, 0.0
  %v724 = vand.u32 %v651, 2147483648
  %v725 = vsel %vm723, %v724, %v722
  %v726 = vrsqrt.pop %v653
  %v727 = vmul.f32 %v653, %v726
  %vm728 = vcmp.eq.f32.partialorder %v653, inf
  %v729 = vsel %vm728, %v653, %v727
  %vm730 = vcmp.eq.f32.partialorder %v653, 0.0
  %v731 = vand.u32 %v653, 2147483648
  %v732 = vsel %vm730, %v731, %v729
  %v733 = vrsqrt.pop %v655
  %v734 = vmul.f32 %v655, %v733
  %vm735 = vcmp.eq.f32.partialorder %v655, inf
  %v736 = vsel %vm735, %v655, %v734
  %vm737 = vcmp.eq.f32.partialorder %v655, 0.0
  %v738 = vand.u32 %v655, 2147483648
  %v739 = vsel %vm737, %v738, %v736
  %v740 = vrsqrt.pop %v657
  %v741 = vmul.f32 %v657, %v740
  %vm742 = vcmp.eq.f32.partialorder %v657, inf
  %v743 = vsel %vm742, %v657, %v741
  %vm744 = vcmp.eq.f32.partialorder %v657, 0.0
  %v745 = vand.u32 %v657, 2147483648
  %v746 = vsel %vm744, %v745, %v743
  %v747 = vrsqrt.pop %v659
  %v748 = vmul.f32 %v659, %v747
  %vm749 = vcmp.eq.f32.partialorder %v659, inf
  %v750 = vsel %vm749, %v659, %v748
  %vm751 = vcmp.eq.f32.partialorder %v659, 0.0
  %v752 = vand.u32 %v659, 2147483648
  %v753 = vsel %vm751, %v752, %v750
  %v754 = vrsqrt.pop %v661
  %v755 = vmul.f32 %v661, %v754
  %vm756 = vcmp.eq.f32.partialorder %v661, inf
  %v757 = vsel %vm756, %v661, %v755
  %vm758 = vcmp.eq.f32.partialorder %v661, 0.0
  %v759 = vand.u32 %v661, 2147483648
  %v760 = vsel %vm758, %v759, %v757
  %v761 = vrsqrt.pop %v663
  %v762 = vmul.f32 %v663, %v761
  %vm763 = vcmp.eq.f32.partialorder %v663, inf
  %v764 = vsel %vm763, %v663, %v762
  %vm765 = vcmp.eq.f32.partialorder %v663, 0.0
  %v766 = vand.u32 %v663, 2147483648
  %v767 = vsel %vm765, %v766, %v764
  %v768 = vrsqrt.pop %v665
  %v769 = vmul.f32 %v665, %v768
  %vm770 = vcmp.eq.f32.partialorder %v665, inf
  %v771 = vsel %vm770, %v665, %v769
  %vm772 = vcmp.eq.f32.partialorder %v665, 0.0
  %v773 = vand.u32 %v665, 2147483648
  %v774 = vsel %vm772, %v773, %v771
  %v775 = vrsqrt.pop %v667
  %v776 = vmul.f32 %v667, %v775
  %vm777 = vcmp.eq.f32.partialorder %v667, inf
  %v778 = vsel %vm777, %v667, %v776
  %vm779 = vcmp.eq.f32.partialorder %v667, 0.0
  %v780 = vand.u32 %v667, 2147483648
  %v781 = vsel %vm779, %v780, %v778
  %v782 = vrsqrt.pop %v669
  %v783 = vmul.f32 %v669, %v782
  %vm784 = vcmp.eq.f32.partialorder %v669, inf
  %v785 = vsel %vm784, %v669, %v783
  %vm786 = vcmp.eq.f32.partialorder %v669, 0.0
  %v787 = vand.u32 %v669, 2147483648
  %v788 = vsel %vm786, %v787, %v785
  %v789 = vrsqrt.pop %v671
  %v790 = vmul.f32 %v671, %v789
  %vm791 = vcmp.eq.f32.partialorder %v671, inf
  %v792 = vsel %vm791, %v671, %v790
  %vm793 = vcmp.eq.f32.partialorder %v671, 0.0
  %v794 = vand.u32 %v671, 2147483648
  %v795 = vsel %vm793, %v794, %v792
  %v796 = vrsqrt.pop %v673
  %v797 = vmul.f32 %v673, %v796
  %vm798 = vcmp.eq.f32.partialorder %v673, inf
  %v799 = vsel %vm798, %v673, %v797
  %vm800 = vcmp.eq.f32.partialorder %v673, 0.0
  %v801 = vand.u32 %v673, 2147483648
  %v802 = vsel %vm800, %v801, %v799
  %v803 = vrsqrt.pop %v675
  %v804 = vmul.f32 %v675, %v803
  %vm805 = vcmp.eq.f32.partialorder %v675, inf
  %v806 = vsel %vm805, %v675, %v804
  %vm807 = vcmp.eq.f32.partialorder %v675, 0.0
  %v808 = vand.u32 %v675, 2147483648
  %v809 = vsel %vm807, %v808, %v806
  %v810 = vrsqrt.pop %v677
  %v811 = vmul.f32 %v677, %v810
  %vm812 = vcmp.eq.f32.partialorder %v677, inf
  %v813 = vsel %vm812, %v677, %v811
  %vm814 = vcmp.eq.f32.partialorder %v677, 0.0
  %v815 = vand.u32 %v677, 2147483648
  %v816 = vsel %vm814, %v815, %v813
  %v817 = vrsqrt.pop %v679
  %v818 = vmul.f32 %v679, %v817
  %vm819 = vcmp.eq.f32.partialorder %v679, inf
  %v820 = vsel %vm819, %v679, %v818
  %vm821 = vcmp.eq.f32.partialorder %v679, 0.0
  %v822 = vand.u32 %v679, 2147483648
  %v823 = vsel %vm821, %v822, %v820
  %v824 = vrsqrt.pop %v681
  %v825 = vmul.f32 %v681, %v824
  %vm826 = vcmp.eq.f32.partialorder %v681, inf
  %v827 = vsel %vm826, %v681, %v825
  %vm828 = vcmp.eq.f32.partialorder %v681, 0.0
  %v829 = vand.u32 %v681, 2147483648
  %v830 = vsel %vm828, %v829, %v827
  %v831 = vrsqrt.pop %v683
  %v832 = vmul.f32 %v683, %v831
  %vm833 = vcmp.eq.f32.partialorder %v683, inf
  %v834 = vsel %vm833, %v683, %v832
  %vm835 = vcmp.eq.f32.partialorder %v683, 0.0
  %v836 = vand.u32 %v683, 2147483648
  %v837 = vsel %vm835, %v836, %v834
  %v838 = vrsqrt.pop %v685
  %v839 = vmul.f32 %v685, %v838
  %vm840 = vcmp.eq.f32.partialorder %v685, inf
  %v841 = vsel %vm840, %v685, %v839
  %vm842 = vcmp.eq.f32.partialorder %v685, 0.0
  %v843 = vand.u32 %v685, 2147483648
  %v844 = vsel %vm842, %v843, %v841
  %v845 = vrsqrt.pop %v687
  %v846 = vmul.f32 %v687, %v845
  %vm847 = vcmp.eq.f32.partialorder %v687, inf
  %v848 = vsel %vm847, %v687, %v846
  %vm849 = vcmp.eq.f32.partialorder %v687, 0.0
  %v850 = vand.u32 %v687, 2147483648
  %v851 = vsel %vm849, %v850, %v848
  %v852 = vrsqrt.pop %v689
  %v853 = vmul.f32 %v689, %v852
  %vm854 = vcmp.eq.f32.partialorder %v689, inf
  %v855 = vsel %vm854, %v689, %v853
  %vm856 = vcmp.eq.f32.partialorder %v689, 0.0
  %v857 = vand.u32 %v689, 2147483648
  %v858 = vsel %vm856, %v857, %v855
  %v859 = vrsqrt.pop %v691
  %v860 = vmul.f32 %v691, %v859
  %vm861 = vcmp.eq.f32.partialorder %v691, inf
  %v862 = vsel %vm861, %v691, %v860
  %vm863 = vcmp.eq.f32.partialorder %v691, 0.0
  %v864 = vand.u32 %v691, 2147483648
  %v865 = vsel %vm863, %v864, %v862
  %v866 = vrsqrt.pop %v693
  %v867 = vmul.f32 %v693, %v866
  %vm868 = vcmp.eq.f32.partialorder %v693, inf
  %v869 = vsel %vm868, %v693, %v867
  %vm870 = vcmp.eq.f32.partialorder %v693, 0.0
  %v871 = vand.u32 %v693, 2147483648
  %v872 = vsel %vm870, %v871, %v869
  %v873 = vrsqrt.pop %v695
  %v874 = vmul.f32 %v695, %v873
  %vm875 = vcmp.eq.f32.partialorder %v695, inf
  %v876 = vsel %vm875, %v695, %v874
  %vm877 = vcmp.eq.f32.partialorder %v695, 0.0
  %v878 = vand.u32 %v695, 2147483648
  %v879 = vsel %vm877, %v878, %v876
  %v880 = vrsqrt.pop %v697
  %v881 = vmul.f32 %v697, %v880
  %vm882 = vcmp.eq.f32.partialorder %v697, inf
  %v883 = vsel %vm882, %v697, %v881
  %vm884 = vcmp.eq.f32.partialorder %v697, 0.0
  %v885 = vand.u32 %v697, 2147483648
  %v886 = vsel %vm884, %v885, %v883
  %v887 = vrsqrt.pop %v699
  %v888 = vmul.f32 %v699, %v887
  %vm889 = vcmp.eq.f32.partialorder %v699, inf
  %v890 = vsel %vm889, %v699, %v888
  %vm891 = vcmp.eq.f32.partialorder %v699, 0.0
  %v892 = vand.u32 %v699, 2147483648
  %v893 = vsel %vm891, %v892, %v890
  %v894 = vrsqrt.pop %v701
  %v895 = vmul.f32 %v701, %v894
  %vm896 = vcmp.eq.f32.partialorder %v701, inf
  %v897 = vsel %vm896, %v701, %v895
  %vm898 = vcmp.eq.f32.partialorder %v701, 0.0
  %v899 = vand.u32 %v701, 2147483648
  %v900 = vsel %vm898, %v899, %v897
  %v901 = vrsqrt.pop %v703
  %v902 = vmul.f32 %v703, %v901
  %vm903 = vcmp.eq.f32.partialorder %v703, inf
  %v904 = vsel %vm903, %v703, %v902
  %vm905 = vcmp.eq.f32.partialorder %v703, 0.0
  %v906 = vand.u32 %v703, 2147483648
  %v907 = vsel %vm905, %v906, %v904
  %v908 = vrsqrt.pop %v705
  %v909 = vmul.f32 %v705, %v908
  %vm910 = vcmp.eq.f32.partialorder %v705, inf
  %v911 = vsel %vm910, %v705, %v909
  %vm912 = vcmp.eq.f32.partialorder %v705, 0.0
  %v913 = vand.u32 %v705, 2147483648
  %v914 = vsel %vm912, %v913, %v911
  %v915 = vrsqrt.pop %v707
  %v916 = vmul.f32 %v707, %v915
  %vm917 = vcmp.eq.f32.partialorder %v707, inf
  %v918 = vsel %vm917, %v707, %v916
  %vm919 = vcmp.eq.f32.partialorder %v707, 0.0
  %v920 = vand.u32 %v707, 2147483648
  %v921 = vsel %vm919, %v920, %v918
  %v922 = vrsqrt.pop %v709
  %v923 = vmul.f32 %v709, %v922
  %vm924 = vcmp.eq.f32.partialorder %v709, inf
  %v925 = vsel %vm924, %v709, %v923
  %vm926 = vcmp.eq.f32.partialorder %v709, 0.0
  %v927 = vand.u32 %v709, 2147483648
  %v928 = vsel %vm926, %v927, %v925
  %v929 = vrsqrt.pop %v711
  %v930 = vmul.f32 %v711, %v929
  %vm931 = vcmp.eq.f32.partialorder %v711, inf
  %v932 = vsel %vm931, %v711, %v930
  %vm933 = vcmp.eq.f32.partialorder %v711, 0.0
  %v934 = vand.u32 %v711, 2147483648
  %v935 = vsel %vm933, %v934, %v932
  %v936 = vld [vmem:[%s4] sm:$0x1]
  %v938 = vlaneseq
  %v939 = vshrl.u32 %v938, 7
  %v940 = vsub.s32 0, %v939
  %v941 = vrot.slane %v936, %v940
  %v943 = vsub.f32 %v718, %v941
  %v944 = vsub.f32 %v725, %v941
  %v945 = vsub.f32 %v732, %v941
  %v946 = vsub.f32 %v739, %v941
  %v947 = vsub.f32 %v746, %v941
  %v948 = vsub.f32 %v753, %v941
  %v949 = vsub.f32 %v760, %v941
  %v950 = vsub.f32 %v767, %v941
  %v951 = vsub.f32 %v774, %v941
  %v952 = vsub.f32 %v781, %v941
  %v953 = vsub.f32 %v788, %v941
  %v954 = vsub.f32 %v795, %v941
  %v955 = vsub.f32 %v802, %v941
  %v956 = vsub.f32 %v809, %v941
  %v957 = vsub.f32 %v816, %v941
  %v958 = vsub.f32 %v823, %v941
  %v959 = vsub.f32 %v830, %v941
  %v960 = vsub.f32 %v837, %v941
  %v961 = vsub.f32 %v844, %v941
  %v962 = vsub.f32 %v851, %v941
  %v963 = vsub.f32 %v858, %v941
  %v964 = vsub.f32 %v865, %v941
  %v965 = vsub.f32 %v872, %v941
  %v966 = vsub.f32 %v879, %v941
  %v967 = vsub.f32 %v886, %v941
  %v968 = vsub.f32 %v893, %v941
  %v969 = vsub.f32 %v900, %v941
  %v970 = vsub.f32 %v907, %v941
  %v971 = vsub.f32 %v914, %v941
  %v972 = vsub.f32 %v921, %v941
  %v973 = vsub.f32 %v928, %v941
  %v974 = vsub.f32 %v935, %v941
  %v975 = vmul.f32 %v943, -7.22
  %v976 = vmul.f32 %v944, -7.22
  %v977 = vmul.f32 %v945, -7.22
  %v978 = vmul.f32 %v946, -7.22
  %v979 = vmul.f32 %v947, -7.22
  %v980 = vmul.f32 %v948, -7.22
  %v981 = vmul.f32 %v949, -7.22
  %v982 = vmul.f32 %v950, -7.22
  %v983 = vmul.f32 %v951, -7.22
  %v984 = vmul.f32 %v952, -7.22
  %v985 = vmul.f32 %v953, -7.22
  %v986 = vmul.f32 %v954, -7.22
  %v987 = vmul.f32 %v955, -7.22
  %v988 = vmul.f32 %v956, -7.22
  %v989 = vmul.f32 %v957, -7.22
  %v990 = vmul.f32 %v958, -7.22
  %v991 = vmul.f32 %v959, -7.22
  %v992 = vmul.f32 %v960, -7.22
  %v993 = vmul.f32 %v961, -7.22
  %v994 = vmul.f32 %v962, -7.22
  %v995 = vmul.f32 %v963, -7.22
  %v996 = vmul.f32 %v964, -7.22
  %v997 = vmul.f32 %v965, -7.22
  %v998 = vmul.f32 %v966, -7.22
  %v999 = vmul.f32 %v967, -7.22
  %v1000 = vmul.f32 %v968, -7.22
  %v1001 = vmul.f32 %v969, -7.22
  %v1002 = vmul.f32 %v970, -7.22
  %v1003 = vmul.f32 %v971, -7.22
  %v1004 = vmul.f32 %v972, -7.22
  %v1005 = vmul.f32 %v973, -7.22
  %v1006 = vmul.f32 %v974, -7.22
  %v1007 = vmul.f32 %v975, %v943
  %v1008 = vmul.f32 %v976, %v944
  %v1009 = vmul.f32 %v977, %v945
  %v1010 = vmul.f32 %v978, %v946
  %v1011 = vmul.f32 %v979, %v947
  %v1012 = vmul.f32 %v980, %v948
  %v1013 = vmul.f32 %v981, %v949
  %v1014 = vmul.f32 %v982, %v950
  %v1015 = vmul.f32 %v983, %v951
  %v1016 = vmul.f32 %v984, %v952
  %v1017 = vmul.f32 %v985, %v953
  %v1018 = vmul.f32 %v986, %v954
  %v1019 = vmul.f32 %v987, %v955
  %v1020 = vmul.f32 %v988, %v956
  %v1021 = vmul.f32 %v989, %v957
  %v1022 = vmul.f32 %v990, %v958
  %v1023 = vmul.f32 %v991, %v959
  %v1024 = vmul.f32 %v992, %v960
  %v1025 = vmul.f32 %v993, %v961
  %v1026 = vmul.f32 %v994, %v962
  %v1027 = vmul.f32 %v995, %v963
  %v1028 = vmul.f32 %v996, %v964
  %v1029 = vmul.f32 %v997, %v965
  %v1030 = vmul.f32 %v998, %v966
  %v1031 = vmul.f32 %v999, %v967
  %v1032 = vmul.f32 %v1000, %v968
  %v1033 = vmul.f32 %v1001, %v969
  %v1034 = vmul.f32 %v1002, %v970
  %v1035 = vmul.f32 %v1003, %v971
  %v1036 = vmul.f32 %v1004, %v972
  %v1037 = vmul.f32 %v1005, %v973
  %v1038 = vmul.f32 %v1006, %v974
  %v1039 = vmul.f32 %v1007, 1.442695
  %v1040 = vpow.pop %v1039
  %v1041 = vmul.f32 %v1008, 1.442695
  %v1042 = vpow.pop %v1041
  %v1043 = vmul.f32 %v1009, 1.442695
  %v1044 = vpow.pop %v1043
  %v1045 = vmul.f32 %v1010, 1.442695
  %v1046 = vpow.pop %v1045
  %v1047 = vmul.f32 %v1011, 1.442695
  %v1048 = vpow.pop %v1047
  %v1049 = vmul.f32 %v1012, 1.442695
  %v1050 = vpow.pop %v1049
  %v1051 = vmul.f32 %v1013, 1.442695
  %v1052 = vpow.pop %v1051
  %v1053 = vmul.f32 %v1014, 1.442695
  %v1054 = vpow.pop %v1053
  %v1055 = vmul.f32 %v1015, 1.442695
  %v1056 = vpow.pop %v1055
  %v1057 = vmul.f32 %v1016, 1.442695
  %v1058 = vpow.pop %v1057
  %v1059 = vmul.f32 %v1017, 1.442695
  %v1060 = vpow.pop %v1059
  %v1061 = vmul.f32 %v1018, 1.442695
  %v1062 = vpow.pop %v1061
  %v1063 = vmul.f32 %v1019, 1.442695
  %v1064 = vpow.pop %v1063
  %v1065 = vmul.f32 %v1020, 1.442695
  %v1066 = vpow.pop %v1065
  %v1067 = vmul.f32 %v1021, 1.442695
  %v1068 = vpow.pop %v1067
  %v1069 = vmul.f32 %v1022, 1.442695
  %v1070 = vpow.pop %v1069
  %v1071 = vmul.f32 %v1023, 1.442695
  %v1072 = vpow.pop %v1071
  %v1073 = vmul.f32 %v1024, 1.442695
  %v1074 = vpow.pop %v1073
  %v1075 = vmul.f32 %v1025, 1.442695
  %v1076 = vpow.pop %v1075
  %v1077 = vmul.f32 %v1026, 1.442695
  %v1078 = vpow.pop %v1077
  %v1079 = vmul.f32 %v1027, 1.442695
  %v1080 = vpow.pop %v1079
  %v1081 = vmul.f32 %v1028, 1.442695
  %v1082 = vpow.pop %v1081
  %v1083 = vmul.f32 %v1029, 1.442695
  %v1084 = vpow.pop %v1083
  %v1085 = vmul.f32 %v1030, 1.442695
  %v1086 = vpow.pop %v1085
  %v1087 = vmul.f32 %v1031, 1.442695
  %v1088 = vpow.pop %v1087
  %v1089 = vmul.f32 %v1032, 1.442695
  %v1090 = vpow.pop %v1089
  %v1091 = vmul.f32 %v1033, 1.442695
  %v1092 = vpow.pop %v1091
  %v1093 = vmul.f32 %v1034, 1.442695
  %v1094 = vpow.pop %v1093
  %v1095 = vmul.f32 %v1035, 1.442695
  %v1096 = vpow.pop %v1095
  %v1097 = vmul.f32 %v1036, 1.442695
  %v1098 = vpow.pop %v1097
  %v1099 = vmul.f32 %v1037, 1.442695
  %v1100 = vpow.pop %v1099
  %v1101 = vmul.f32 %v1038, 1.442695
  %v1102 = vpow.pop %v1101
  %v1103 = vmul.f32 %v718, 0.62831855
  %v1104 = vmul.f32 %v725, 0.62831855
  %v1105 = vmul.f32 %v732, 0.62831855
  %v1106 = vmul.f32 %v739, 0.62831855
  %v1107 = vmul.f32 %v746, 0.62831855
  %v1108 = vmul.f32 %v753, 0.62831855
  %v1109 = vmul.f32 %v760, 0.62831855
  %v1110 = vmul.f32 %v767, 0.62831855
  %v1111 = vmul.f32 %v774, 0.62831855
  %v1112 = vmul.f32 %v781, 0.62831855
  %v1113 = vmul.f32 %v788, 0.62831855
  %v1114 = vmul.f32 %v795, 0.62831855
  %v1115 = vmul.f32 %v802, 0.62831855
  %v1116 = vmul.f32 %v809, 0.62831855
  %v1117 = vmul.f32 %v816, 0.62831855
  %v1118 = vmul.f32 %v823, 0.62831855
  %v1119 = vmul.f32 %v830, 0.62831855
  %v1120 = vmul.f32 %v837, 0.62831855
  %v1121 = vmul.f32 %v844, 0.62831855
  %v1122 = vmul.f32 %v851, 0.62831855
  %v1123 = vmul.f32 %v858, 0.62831855
  %v1124 = vmul.f32 %v865, 0.62831855
  %v1125 = vmul.f32 %v872, 0.62831855
  %v1126 = vmul.f32 %v879, 0.62831855
  %v1127 = vmul.f32 %v886, 0.62831855
  %v1128 = vmul.f32 %v893, 0.62831855
  %v1129 = vmul.f32 %v900, 0.62831855
  %v1130 = vmul.f32 %v907, 0.62831855
  %v1131 = vmul.f32 %v914, 0.62831855
  %v1132 = vmul.f32 %v921, 0.62831855
  %v1133 = vmul.f32 %v928, 0.62831855
  %v1134 = vmul.f32 %v935, 0.62831855
  %v1135 = vand.u32 2147483647, %v1103
  %vm1136 = vcmp.le.f32.partialorder %v1135, 0.7853982
  %vm1137 = vcmp.lt.s32.totalorder %v1103, 0
  %v1138 = vand.u32 %v1103, 2139095040
  %v1139 = vshrl.u32 %v1138, 23
  %v1140 = vsub.s32 %v1139, 127
  %v1141 = vand.u32 2147483647, %v1103
  %v1142 = vand.u32 %v1141, 8388607
  %v1143 = vor.u32 %v1142, 8388608
  %v1144 = vsub.s32 0, %v1143
  %v1145 = vadd.s32 %v1140, 1
  %vm1146 = vcmp.gt.s32.totalorder %v1145, 0
  %v1147 = vsel %vm1146, %v1145, 0
  %v1148 = vshrl.u32 %v1147, 5
  %v1149 = vand.u32 %v1147, 31
  %v1150 = vsub.s32 32, %v1149
  %v1151 = vshrl.u32 683565275, %v1150
  %v1152 = vshll.u32 683565275, %v1149
  %v1153 = vshrl.u32 2475754826, %v1150
  %v1154 = vor.u32 %v1152, %v1153
  %v1155 = vshll.u32 2475754826, %v1149
  %v1156 = vshrl.u32 2131351028, %v1150
  %v1157 = vor.u32 %v1155, %v1156
  %v1158 = vshll.u32 2131351028, %v1149
  %v1159 = vshrl.u32 2102212464, %v1150
  %v1160 = vor.u32 %v1158, %v1159
  %v1161 = vshll.u32 2102212464, %v1149
  %v1162 = vshrl.u32 920167782, %v1150
  %v1163 = vor.u32 %v1161, %v1162
  %v1164 = vshll.u32 920167782, %v1149
  %v1165 = vshrl.u32 1326507024, %v1150
  %v1166 = vor.u32 %v1164, %v1165
  %vm1167 = vcmp.lt.s32.totalorder %v1148, 1
  %vm1168 = vcmp.lt.s32.totalorder %v1148, 2
  %vm1169 = vcmp.lt.s32.totalorder %v1148, 3
  %vm1170 = vcmp.lt.s32.totalorder %v1148, 4
  %v1171 = vsel %vm1167, %v1151, %v1154
  %v1172 = vsel %vm1170, %v1160, 2102212464
  %v1173 = vsel %vm1169, %v1157, %v1172
  %v1174 = vsel %vm1168, %v1171, %v1173
  %v1175 = vsel %vm1167, %v1154, %v1157
  %v1176 = vsel %vm1170, %v1163, 920167782
  %v1177 = vsel %vm1169, %v1160, %v1176
  %v1178 = vsel %vm1168, %v1175, %v1177
  %v1179 = vsel %vm1167, %v1157, %v1160
  %v1180 = vsel %vm1170, %v1166, 1326507024
  %v1181 = vsel %vm1169, %v1163, %v1180
  %v1182 = vsel %vm1168, %v1179, %v1181
  %v1183 = vshll.u32 %v1143, 8
  %v1184 = vmul.u32.u64.compose %v1183, %v1182
  %v1185 = vextract.low.u32 %v1184
  %v1186 = vextract.high.u32 %v1184
  %v1187 = vmul.u32.u64.compose %v1183, %v1178
  %v1188 = vextract.low.u32 %v1187
  %v1189 = vextract.high.u32 %v1187
  %v1190 = vmul.u32 %v1183, %v1174
  %v1191 = vadd.s32 %v1186, %v1188
  %vm1192 = vc.u32 %v1186, %v1188
  %v1193 = vadd.s32 %v1189, 1
  %v1194 = vsel %vm1192, %v1193, %v1189
  %v1195 = vadd.s32 %v1190, %v1194
  %v1196 = vadd.s32 %v1195, 536870912
  %v1197 = vshrl.u32 %v1196, 30
  %v1198 = vshll.u32 %v1197, 30
  %v1199 = vsub.s32 %v1195, %v1198
  %vm1200 = vcmp.lt.s32.totalorder %v1199, 0
  %v1201 = vsub.s32 0, %v1199
  %v1202 = vsel %vm1200, %v1201, %v1199
  %v1203 = vclz %v1202
  %v1204 = vsub.s32 %v1203, 2
  %vm1205 = vcmp.gt.s32.totalorder 0, %v1204
  %v1206 = vsel %vm1205, 0, %v1204
  %v1207 = vsub.s32 32, %v1206
  %v1208 = vshll.u32 %v1199, %v1206
  %v1209 = vshrl.u32 %v1191, %v1207
  %v1210 = vor.u32 %v1208, %v1209
  %v1211 = vsub.s32 4294967266, %v1206
  %v1212 = vadd.s32 %v1211, 127
  %v1213 = vshll.u32 %v1212, 23
  %v1214 = vor.u32 4788187, %v1213
  %v1215 = vand.u32 2147483647, %v1214
  %v1217 = vcvt.s32.f32 %v1210
  %v1218 = vmul.f32 %v1217, %v1215
  %v1219 = vxor.u32 %v1218, 2147483648
  %v1220 = vsel %vm1137, %v1219, %v1218
  %v1221 = vsub.s32 4, %v1197
  %v1222 = vsel %vm1137, %v1221, %v1197
  %v1223 = vsel %vm1136, %v1103, %v1220
  %v1224 = vsel %vm1136, 0, %v1222
  %v1225 = vcosq.f32.pop %v1223
  %v1226 = vsinq.f32.pop %v1223
  %vm1227 = vweird.f32 %v1103
  %v1228 = vand.u32 %v1224, 3
  %vm1229 = vcmp.lt.s32.totalorder %v1228, 2
  %vm1230 = vcmp.eq.s32.totalorder %v1228, 0
  %v1231 = vxor.u32 %v1226, 2147483648
  %v1232 = vsel %vm1230, %v1225, %v1231
  %vm1233 = vcmp.eq.s32.totalorder %v1228, 2
  %v1234 = vxor.u32 %v1225, 2147483648
  %v1235 = vsel %vm1233, %v1234, %v1226
  %v1236 = vsel %vm1229, %v1232, %v1235
  %v1237 = vsel %vm1227, nan, %v1236
  %v1238 = vand.u32 2147483647, %v1104
  %vm1239 = vcmp.le.f32.partialorder %v1238, 0.7853982
  %vm1240 = vcmp.lt.s32.totalorder %v1104, 0
  %v1241 = vand.u32 %v1104, 2139095040
  %v1242 = vshrl.u32 %v1241, 23
  %v1243 = vsub.s32 %v1242, 127
  %v1244 = vand.u32 2147483647, %v1104
  %v1245 = vand.u32 %v1244, 8388607
  %v1246 = vor.u32 %v1245, 8388608
  %v1247 = vsub.s32 0, %v1246
  %v1248 = vadd.s32 %v1243, 1
  %vm1249 = vcmp.gt.s32.totalorder %v1248, 0
  %v1250 = vsel %vm1249, %v1248, 0
  %v1251 = vshrl.u32 %v1250, 5
  %v1252 = vand.u32 %v1250, 31
  %v1253 = vsub.s32 32, %v1252
  %v1254 = vshrl.u32 683565275, %v1253
  %v1255 = vshll.u32 683565275, %v1252
  %v1256 = vshrl.u32 2475754826, %v1253
  %v1257 = vor.u32 %v1255, %v1256
  %v1258 = vshll.u32 2475754826, %v1252
  %v1259 = vshrl.u32 2131351028, %v1253
  %v1260 = vor.u32 %v1258, %v1259
  %v1261 = vshll.u32 2131351028, %v1252
  %v1262 = vshrl.u32 2102212464, %v1253
  %v1263 = vor.u32 %v1261, %v1262
  %v1264 = vshll.u32 2102212464, %v1252
  %v1265 = vshrl.u32 920167782, %v1253
  %v1266 = vor.u32 %v1264, %v1265
  %v1267 = vshll.u32 920167782, %v1252
  %v1268 = vshrl.u32 1326507024, %v1253
  %v1269 = vor.u32 %v1267, %v1268
  %vm1270 = vcmp.lt.s32.totalorder %v1251, 1
  %vm1271 = vcmp.lt.s32.totalorder %v1251, 2
  %vm1272 = vcmp.lt.s32.totalorder %v1251, 3
  %vm1273 = vcmp.lt.s32.totalorder %v1251, 4
  %v1274 = vsel %vm1270, %v1254, %v1257
  %v1275 = vsel %vm1273, %v1263, 2102212464
  %v1276 = vsel %vm1272, %v1260, %v1275
  %v1277 = vsel %vm1271, %v1274, %v1276
  %v1278 = vsel %vm1270, %v1257, %v1260
  %v1279 = vsel %vm1273, %v1266, 920167782
  %v1280 = vsel %vm1272, %v1263, %v1279
  %v1281 = vsel %vm1271, %v1278, %v1280
  %v1282 = vsel %vm1270, %v1260, %v1263
  %v1283 = vsel %vm1273, %v1269, 1326507024
  %v1284 = vsel %vm1272, %v1266, %v1283
  %v1285 = vsel %vm1271, %v1282, %v1284
  %v1286 = vshll.u32 %v1246, 8
  %v1287 = vmul.u32.u64.compose %v1286, %v1285
  %v1288 = vextract.low.u32 %v1287
  %v1289 = vextract.high.u32 %v1287
  %v1290 = vmul.u32.u64.compose %v1286, %v1281
  %v1291 = vextract.low.u32 %v1290
  %v1292 = vextract.high.u32 %v1290
  %v1293 = vmul.u32 %v1286, %v1277
  %v1294 = vadd.s32 %v1289, %v1291
  %vm1295 = vc.u32 %v1289, %v1291
  %v1296 = vadd.s32 %v1292, 1
  %v1297 = vsel %vm1295, %v1296, %v1292
  %v1298 = vadd.s32 %v1293, %v1297
  %v1299 = vadd.s32 %v1298, 536870912
  %v1300 = vshrl.u32 %v1299, 30
  %v1301 = vshll.u32 %v1300, 30
  %v1302 = vsub.s32 %v1298, %v1301
  %vm1303 = vcmp.lt.s32.totalorder %v1302, 0
  %v1304 = vsub.s32 0, %v1302
  %v1305 = vsel %vm1303, %v1304, %v1302
  %v1306 = vclz %v1305
  %v1307 = vsub.s32 %v1306, 2
  %vm1308 = vcmp.gt.s32.totalorder 0, %v1307
  %v1309 = vsel %vm1308, 0, %v1307
  %v1310 = vsub.s32 32, %v1309
  %v1311 = vshll.u32 %v1302, %v1309
  %v1312 = vshrl.u32 %v1294, %v1310
  %v1313 = vor.u32 %v1311, %v1312
  %v1314 = vsub.s32 4294967266, %v1309
  %v1315 = vadd.s32 %v1314, 127
  %v1316 = vshll.u32 %v1315, 23
  %v1317 = vor.u32 4788187, %v1316
  %v1318 = vand.u32 2147483647, %v1317
  %v1320 = vcvt.s32.f32 %v1313
  %v1321 = vmul.f32 %v1320, %v1318
  %v1322 = vxor.u32 %v1321, 2147483648
  %v1323 = vsel %vm1240, %v1322, %v1321
  %v1324 = vsub.s32 4, %v1300
  %v1325 = vsel %vm1240, %v1324, %v1300
  %v1326 = vsel %vm1239, %v1104, %v1323
  %v1327 = vsel %vm1239, 0, %v1325
  %v1328 = vcosq.f32.pop %v1326
  %v1329 = vsinq.f32.pop %v1326
  %vm1330 = vweird.f32 %v1104
  %v1331 = vand.u32 %v1327, 3
  %vm1332 = vcmp.lt.s32.totalorder %v1331, 2
  %vm1333 = vcmp.eq.s32.totalorder %v1331, 0
  %v1334 = vxor.u32 %v1329, 2147483648
  %v1335 = vsel %vm1333, %v1328, %v1334
  %vm1336 = vcmp.eq.s32.totalorder %v1331, 2
  %v1337 = vxor.u32 %v1328, 2147483648
  %v1338 = vsel %vm1336, %v1337, %v1329
  %v1339 = vsel %vm1332, %v1335, %v1338
  %v1340 = vsel %vm1330, nan, %v1339
  %v1341 = vand.u32 2147483647, %v1105
  %vm1342 = vcmp.le.f32.partialorder %v1341, 0.7853982
  %vm1343 = vcmp.lt.s32.totalorder %v1105, 0
  %v1344 = vand.u32 %v1105, 2139095040
  %v1345 = vshrl.u32 %v1344, 23
  %v1346 = vsub.s32 %v1345, 127
  %v1347 = vand.u32 2147483647, %v1105
  %v1348 = vand.u32 %v1347, 8388607
  %v1349 = vor.u32 %v1348, 8388608
  %v1350 = vsub.s32 0, %v1349
  %v1351 = vadd.s32 %v1346, 1
  %vm1352 = vcmp.gt.s32.totalorder %v1351, 0
  %v1353 = vsel %vm1352, %v1351, 0
  %v1354 = vshrl.u32 %v1353, 5
  %v1355 = vand.u32 %v1353, 31
  %v1356 = vsub.s32 32, %v1355
  %v1357 = vshrl.u32 683565275, %v1356
  %v1358 = vshll.u32 683565275, %v1355
  %v1359 = vshrl.u32 2475754826, %v1356
  %v1360 = vor.u32 %v1358, %v1359
  %v1361 = vshll.u32 2475754826, %v1355
  %v1362 = vshrl.u32 2131351028, %v1356
  %v1363 = vor.u32 %v1361, %v1362
  %v1364 = vshll.u32 2131351028, %v1355
  %v1365 = vshrl.u32 2102212464, %v1356
  %v1366 = vor.u32 %v1364, %v1365
  %v1367 = vshll.u32 2102212464, %v1355
  %v1368 = vshrl.u32 920167782, %v1356
  %v1369 = vor.u32 %v1367, %v1368
  %v1370 = vshll.u32 920167782, %v1355
  %v1371 = vshrl.u32 1326507024, %v1356
  %v1372 = vor.u32 %v1370, %v1371
  %vm1373 = vcmp.lt.s32.totalorder %v1354, 1
  %vm1374 = vcmp.lt.s32.totalorder %v1354, 2
  %vm1375 = vcmp.lt.s32.totalorder %v1354, 3
  %vm1376 = vcmp.lt.s32.totalorder %v1354, 4
  %v1377 = vsel %vm1373, %v1357, %v1360
  %v1378 = vsel %vm1376, %v1366, 2102212464
  %v1379 = vsel %vm1375, %v1363, %v1378
  %v1380 = vsel %vm1374, %v1377, %v1379
  %v1381 = vsel %vm1373, %v1360, %v1363
  %v1382 = vsel %vm1376, %v1369, 920167782
  %v1383 = vsel %vm1375, %v1366, %v1382
  %v1384 = vsel %vm1374, %v1381, %v1383
  %v1385 = vsel %vm1373, %v1363, %v1366
  %v1386 = vsel %vm1376, %v1372, 1326507024
  %v1387 = vsel %vm1375, %v1369, %v1386
  %v1388 = vsel %vm1374, %v1385, %v1387
  %v1389 = vshll.u32 %v1349, 8
  %v1390 = vmul.u32.u64.compose %v1389, %v1388
  %v1391 = vextract.low.u32 %v1390
  %v1392 = vextract.high.u32 %v1390
  %v1393 = vmul.u32.u64.compose %v1389, %v1384
  %v1394 = vextract.low.u32 %v1393
  %v1395 = vextract.high.u32 %v1393
  %v1396 = vmul.u32 %v1389, %v1380
  %v1397 = vadd.s32 %v1392, %v1394
  %vm1398 = vc.u32 %v1392, %v1394
  %v1399 = vadd.s32 %v1395, 1
  %v1400 = vsel %vm1398, %v1399, %v1395
  %v1401 = vadd.s32 %v1396, %v1400
  %v1402 = vadd.s32 %v1401, 536870912
  %v1403 = vshrl.u32 %v1402, 30
  %v1404 = vshll.u32 %v1403, 30
  %v1405 = vsub.s32 %v1401, %v1404
  %vm1406 = vcmp.lt.s32.totalorder %v1405, 0
  %v1407 = vsub.s32 0, %v1405
  %v1408 = vsel %vm1406, %v1407, %v1405
  %v1409 = vclz %v1408
  %v1410 = vsub.s32 %v1409, 2
  %vm1411 = vcmp.gt.s32.totalorder 0, %v1410
  %v1412 = vsel %vm1411, 0, %v1410
  %v1413 = vsub.s32 32, %v1412
  %v1414 = vshll.u32 %v1405, %v1412
  %v1415 = vshrl.u32 %v1397, %v1413
  %v1416 = vor.u32 %v1414, %v1415
  %v1417 = vsub.s32 4294967266, %v1412
  %v1418 = vadd.s32 %v1417, 127
  %v1419 = vshll.u32 %v1418, 23
  %v1420 = vor.u32 4788187, %v1419
  %v1421 = vand.u32 2147483647, %v1420
  %v1423 = vcvt.s32.f32 %v1416
  %v1424 = vmul.f32 %v1423, %v1421
  %v1425 = vxor.u32 %v1424, 2147483648
  %v1426 = vsel %vm1343, %v1425, %v1424
  %v1427 = vsub.s32 4, %v1403
  %v1428 = vsel %vm1343, %v1427, %v1403
  %v1429 = vsel %vm1342, %v1105, %v1426
  %v1430 = vsel %vm1342, 0, %v1428
  %v1431 = vcosq.f32.pop %v1429
  %v1432 = vsinq.f32.pop %v1429
  %vm1433 = vweird.f32 %v1105
  %v1434 = vand.u32 %v1430, 3
  %vm1435 = vcmp.lt.s32.totalorder %v1434, 2
  %vm1436 = vcmp.eq.s32.totalorder %v1434, 0
  %v1437 = vxor.u32 %v1432, 2147483648
  %v1438 = vsel %vm1436, %v1431, %v1437
  %vm1439 = vcmp.eq.s32.totalorder %v1434, 2
  %v1440 = vxor.u32 %v1431, 2147483648
  %v1441 = vsel %vm1439, %v1440, %v1432
  %v1442 = vsel %vm1435, %v1438, %v1441
  %v1443 = vsel %vm1433, nan, %v1442
  %v1444 = vand.u32 2147483647, %v1106
  %vm1445 = vcmp.le.f32.partialorder %v1444, 0.7853982
  %vm1446 = vcmp.lt.s32.totalorder %v1106, 0
  %v1447 = vand.u32 %v1106, 2139095040
  %v1448 = vshrl.u32 %v1447, 23
  %v1449 = vsub.s32 %v1448, 127
  %v1450 = vand.u32 2147483647, %v1106
  %v1451 = vand.u32 %v1450, 8388607
  %v1452 = vor.u32 %v1451, 8388608
  %v1453 = vsub.s32 0, %v1452
  %v1454 = vadd.s32 %v1449, 1
  %vm1455 = vcmp.gt.s32.totalorder %v1454, 0
  %v1456 = vsel %vm1455, %v1454, 0
  %v1457 = vshrl.u32 %v1456, 5
  %v1458 = vand.u32 %v1456, 31
  %v1459 = vsub.s32 32, %v1458
  %v1460 = vshrl.u32 683565275, %v1459
  %v1461 = vshll.u32 683565275, %v1458
  %v1462 = vshrl.u32 2475754826, %v1459
  %v1463 = vor.u32 %v1461, %v1462
  %v1464 = vshll.u32 2475754826, %v1458
  %v1465 = vshrl.u32 2131351028, %v1459
  %v1466 = vor.u32 %v1464, %v1465
  %v1467 = vshll.u32 2131351028, %v1458
  %v1468 = vshrl.u32 2102212464, %v1459
  %v1469 = vor.u32 %v1467, %v1468
  %v1470 = vshll.u32 2102212464, %v1458
  %v1471 = vshrl.u32 920167782, %v1459
  %v1472 = vor.u32 %v1470, %v1471
  %v1473 = vshll.u32 920167782, %v1458
  %v1474 = vshrl.u32 1326507024, %v1459
  %v1475 = vor.u32 %v1473, %v1474
  %vm1476 = vcmp.lt.s32.totalorder %v1457, 1
  %vm1477 = vcmp.lt.s32.totalorder %v1457, 2
  %vm1478 = vcmp.lt.s32.totalorder %v1457, 3
  %vm1479 = vcmp.lt.s32.totalorder %v1457, 4
  %v1480 = vsel %vm1476, %v1460, %v1463
  %v1481 = vsel %vm1479, %v1469, 2102212464
  %v1482 = vsel %vm1478, %v1466, %v1481
  %v1483 = vsel %vm1477, %v1480, %v1482
  %v1484 = vsel %vm1476, %v1463, %v1466
  %v1485 = vsel %vm1479, %v1472, 920167782
  %v1486 = vsel %vm1478, %v1469, %v1485
  %v1487 = vsel %vm1477, %v1484, %v1486
  %v1488 = vsel %vm1476, %v1466, %v1469
  %v1489 = vsel %vm1479, %v1475, 1326507024
  %v1490 = vsel %vm1478, %v1472, %v1489
  %v1491 = vsel %vm1477, %v1488, %v1490
  %v1492 = vshll.u32 %v1452, 8
  %v1493 = vmul.u32.u64.compose %v1492, %v1491
  %v1494 = vextract.low.u32 %v1493
  %v1495 = vextract.high.u32 %v1493
  %v1496 = vmul.u32.u64.compose %v1492, %v1487
  %v1497 = vextract.low.u32 %v1496
  %v1498 = vextract.high.u32 %v1496
  %v1499 = vmul.u32 %v1492, %v1483
  %v1500 = vadd.s32 %v1495, %v1497
  %vm1501 = vc.u32 %v1495, %v1497
  %v1502 = vadd.s32 %v1498, 1
  %v1503 = vsel %vm1501, %v1502, %v1498
  %v1504 = vadd.s32 %v1499, %v1503
  %v1505 = vadd.s32 %v1504, 536870912
  %v1506 = vshrl.u32 %v1505, 30
  %v1507 = vshll.u32 %v1506, 30
  %v1508 = vsub.s32 %v1504, %v1507
  %vm1509 = vcmp.lt.s32.totalorder %v1508, 0
  %v1510 = vsub.s32 0, %v1508
  %v1511 = vsel %vm1509, %v1510, %v1508
  %v1512 = vclz %v1511
  %v1513 = vsub.s32 %v1512, 2
  %vm1514 = vcmp.gt.s32.totalorder 0, %v1513
  %v1515 = vsel %vm1514, 0, %v1513
  %v1516 = vsub.s32 32, %v1515
  %v1517 = vshll.u32 %v1508, %v1515
  %v1518 = vshrl.u32 %v1500, %v1516
  %v1519 = vor.u32 %v1517, %v1518
  %v1520 = vsub.s32 4294967266, %v1515
  %v1521 = vadd.s32 %v1520, 127
  %v1522 = vshll.u32 %v1521, 23
  %v1523 = vor.u32 4788187, %v1522
  %v1524 = vand.u32 2147483647, %v1523
  %v1526 = vcvt.s32.f32 %v1519
  %v1527 = vmul.f32 %v1526, %v1524
  %v1528 = vxor.u32 %v1527, 2147483648
  %v1529 = vsel %vm1446, %v1528, %v1527
  %v1530 = vsub.s32 4, %v1506
  %v1531 = vsel %vm1446, %v1530, %v1506
  %v1532 = vsel %vm1445, %v1106, %v1529
  %v1533 = vsel %vm1445, 0, %v1531
  %v1534 = vcosq.f32.pop %v1532
  %v1535 = vsinq.f32.pop %v1532
  %vm1536 = vweird.f32 %v1106
  %v1537 = vand.u32 %v1533, 3
  %vm1538 = vcmp.lt.s32.totalorder %v1537, 2
  %vm1539 = vcmp.eq.s32.totalorder %v1537, 0
  %v1540 = vxor.u32 %v1535, 2147483648
  %v1541 = vsel %vm1539, %v1534, %v1540
  %vm1542 = vcmp.eq.s32.totalorder %v1537, 2
  %v1543 = vxor.u32 %v1534, 2147483648
  %v1544 = vsel %vm1542, %v1543, %v1535
  %v1545 = vsel %vm1538, %v1541, %v1544
  %v1546 = vsel %vm1536, nan, %v1545
  %v1547 = vand.u32 2147483647, %v1107
  %vm1548 = vcmp.le.f32.partialorder %v1547, 0.7853982
  %vm1549 = vcmp.lt.s32.totalorder %v1107, 0
  %v1550 = vand.u32 %v1107, 2139095040
  %v1551 = vshrl.u32 %v1550, 23
  %v1552 = vsub.s32 %v1551, 127
  %v1553 = vand.u32 2147483647, %v1107
  %v1554 = vand.u32 %v1553, 8388607
  %v1555 = vor.u32 %v1554, 8388608
  %v1556 = vsub.s32 0, %v1555
  %v1557 = vadd.s32 %v1552, 1
  %vm1558 = vcmp.gt.s32.totalorder %v1557, 0
  %v1559 = vsel %vm1558, %v1557, 0
  %v1560 = vshrl.u32 %v1559, 5
  %v1561 = vand.u32 %v1559, 31
  %v1562 = vsub.s32 32, %v1561
  %v1563 = vshrl.u32 683565275, %v1562
  %v1564 = vshll.u32 683565275, %v1561
  %v1565 = vshrl.u32 2475754826, %v1562
  %v1566 = vor.u32 %v1564, %v1565
  %v1567 = vshll.u32 2475754826, %v1561
  %v1568 = vshrl.u32 2131351028, %v1562
  %v1569 = vor.u32 %v1567, %v1568
  %v1570 = vshll.u32 2131351028, %v1561
  %v1571 = vshrl.u32 2102212464, %v1562
  %v1572 = vor.u32 %v1570, %v1571
  %v1573 = vshll.u32 2102212464, %v1561
  %v1574 = vshrl.u32 920167782, %v1562
  %v1575 = vor.u32 %v1573, %v1574
  %v1576 = vshll.u32 920167782, %v1561
  %v1577 = vshrl.u32 1326507024, %v1562
  %v1578 = vor.u32 %v1576, %v1577
  %vm1579 = vcmp.lt.s32.totalorder %v1560, 1
  %vm1580 = vcmp.lt.s32.totalorder %v1560, 2
  %vm1581 = vcmp.lt.s32.totalorder %v1560, 3
  %vm1582 = vcmp.lt.s32.totalorder %v1560, 4
  %v1583 = vsel %vm1579, %v1563, %v1566
  %v1584 = vsel %vm1582, %v1572, 2102212464
  %v1585 = vsel %vm1581, %v1569, %v1584
  %v1586 = vsel %vm1580, %v1583, %v1585
  %v1587 = vsel %vm1579, %v1566, %v1569
  %v1588 = vsel %vm1582, %v1575, 920167782
  %v1589 = vsel %vm1581, %v1572, %v1588
  %v1590 = vsel %vm1580, %v1587, %v1589
  %v1591 = vsel %vm1579, %v1569, %v1572
  %v1592 = vsel %vm1582, %v1578, 1326507024
  %v1593 = vsel %vm1581, %v1575, %v1592
  %v1594 = vsel %vm1580, %v1591, %v1593
  %v1595 = vshll.u32 %v1555, 8
  %v1596 = vmul.u32.u64.compose %v1595, %v1594
  %v1597 = vextract.low.u32 %v1596
  %v1598 = vextract.high.u32 %v1596
  %v1599 = vmul.u32.u64.compose %v1595, %v1590
  %v1600 = vextract.low.u32 %v1599
  %v1601 = vextract.high.u32 %v1599
  %v1602 = vmul.u32 %v1595, %v1586
  %v1603 = vadd.s32 %v1598, %v1600
  %vm1604 = vc.u32 %v1598, %v1600
  %v1605 = vadd.s32 %v1601, 1
  %v1606 = vsel %vm1604, %v1605, %v1601
  %v1607 = vadd.s32 %v1602, %v1606
  %v1608 = vadd.s32 %v1607, 536870912
  %v1609 = vshrl.u32 %v1608, 30
  %v1610 = vshll.u32 %v1609, 30
  %v1611 = vsub.s32 %v1607, %v1610
  %vm1612 = vcmp.lt.s32.totalorder %v1611, 0
  %v1613 = vsub.s32 0, %v1611
  %v1614 = vsel %vm1612, %v1613, %v1611
  %v1615 = vclz %v1614
  %v1616 = vsub.s32 %v1615, 2
  %vm1617 = vcmp.gt.s32.totalorder 0, %v1616
  %v1618 = vsel %vm1617, 0, %v1616
  %v1619 = vsub.s32 32, %v1618
  %v1620 = vshll.u32 %v1611, %v1618
  %v1621 = vshrl.u32 %v1603, %v1619
  %v1622 = vor.u32 %v1620, %v1621
  %v1623 = vsub.s32 4294967266, %v1618
  %v1624 = vadd.s32 %v1623, 127
  %v1625 = vshll.u32 %v1624, 23
  %v1626 = vor.u32 4788187, %v1625
  %v1627 = vand.u32 2147483647, %v1626
  %v1629 = vcvt.s32.f32 %v1622
  %v1630 = vmul.f32 %v1629, %v1627
  %v1631 = vxor.u32 %v1630, 2147483648
  %v1632 = vsel %vm1549, %v1631, %v1630
  %v1633 = vsub.s32 4, %v1609
  %v1634 = vsel %vm1549, %v1633, %v1609
  %v1635 = vsel %vm1548, %v1107, %v1632
  %v1636 = vsel %vm1548, 0, %v1634
  %v1637 = vcosq.f32.pop %v1635
  %v1638 = vsinq.f32.pop %v1635
  %vm1639 = vweird.f32 %v1107
  %v1640 = vand.u32 %v1636, 3
  %vm1641 = vcmp.lt.s32.totalorder %v1640, 2
  %vm1642 = vcmp.eq.s32.totalorder %v1640, 0
  %v1643 = vxor.u32 %v1638, 2147483648
  %v1644 = vsel %vm1642, %v1637, %v1643
  %vm1645 = vcmp.eq.s32.totalorder %v1640, 2
  %v1646 = vxor.u32 %v1637, 2147483648
  %v1647 = vsel %vm1645, %v1646, %v1638
  %v1648 = vsel %vm1641, %v1644, %v1647
  %v1649 = vsel %vm1639, nan, %v1648
  %v1650 = vand.u32 2147483647, %v1108
  %vm1651 = vcmp.le.f32.partialorder %v1650, 0.7853982
  %vm1652 = vcmp.lt.s32.totalorder %v1108, 0
  %v1653 = vand.u32 %v1108, 2139095040
  %v1654 = vshrl.u32 %v1653, 23
  %v1655 = vsub.s32 %v1654, 127
  %v1656 = vand.u32 2147483647, %v1108
  %v1657 = vand.u32 %v1656, 8388607
  %v1658 = vor.u32 %v1657, 8388608
  %v1659 = vsub.s32 0, %v1658
  %v1660 = vadd.s32 %v1655, 1
  %vm1661 = vcmp.gt.s32.totalorder %v1660, 0
  %v1662 = vsel %vm1661, %v1660, 0
  %v1663 = vshrl.u32 %v1662, 5
  %v1664 = vand.u32 %v1662, 31
  %v1665 = vsub.s32 32, %v1664
  %v1666 = vshrl.u32 683565275, %v1665
  %v1667 = vshll.u32 683565275, %v1664
  %v1668 = vshrl.u32 2475754826, %v1665
  %v1669 = vor.u32 %v1667, %v1668
  %v1670 = vshll.u32 2475754826, %v1664
  %v1671 = vshrl.u32 2131351028, %v1665
  %v1672 = vor.u32 %v1670, %v1671
  %v1673 = vshll.u32 2131351028, %v1664
  %v1674 = vshrl.u32 2102212464, %v1665
  %v1675 = vor.u32 %v1673, %v1674
  %v1676 = vshll.u32 2102212464, %v1664
  %v1677 = vshrl.u32 920167782, %v1665
  %v1678 = vor.u32 %v1676, %v1677
  %v1679 = vshll.u32 920167782, %v1664
  %v1680 = vshrl.u32 1326507024, %v1665
  %v1681 = vor.u32 %v1679, %v1680
  %vm1682 = vcmp.lt.s32.totalorder %v1663, 1
  %vm1683 = vcmp.lt.s32.totalorder %v1663, 2
  %vm1684 = vcmp.lt.s32.totalorder %v1663, 3
  %vm1685 = vcmp.lt.s32.totalorder %v1663, 4
  %v1686 = vsel %vm1682, %v1666, %v1669
  %v1687 = vsel %vm1685, %v1675, 2102212464
  %v1688 = vsel %vm1684, %v1672, %v1687
  %v1689 = vsel %vm1683, %v1686, %v1688
  %v1690 = vsel %vm1682, %v1669, %v1672
  %v1691 = vsel %vm1685, %v1678, 920167782
  %v1692 = vsel %vm1684, %v1675, %v1691
  %v1693 = vsel %vm1683, %v1690, %v1692
  %v1694 = vsel %vm1682, %v1672, %v1675
  %v1695 = vsel %vm1685, %v1681, 1326507024
  %v1696 = vsel %vm1684, %v1678, %v1695
  %v1697 = vsel %vm1683, %v1694, %v1696
  %v1698 = vshll.u32 %v1658, 8
  %v1699 = vmul.u32.u64.compose %v1698, %v1697
  %v1700 = vextract.low.u32 %v1699
  %v1701 = vextract.high.u32 %v1699
  %v1702 = vmul.u32.u64.compose %v1698, %v1693
  %v1703 = vextract.low.u32 %v1702
  %v1704 = vextract.high.u32 %v1702
  %v1705 = vmul.u32 %v1698, %v1689
  %v1706 = vadd.s32 %v1701, %v1703
  %vm1707 = vc.u32 %v1701, %v1703
  %v1708 = vadd.s32 %v1704, 1
  %v1709 = vsel %vm1707, %v1708, %v1704
  %v1710 = vadd.s32 %v1705, %v1709
  %v1711 = vadd.s32 %v1710, 536870912
  %v1712 = vshrl.u32 %v1711, 30
  %v1713 = vshll.u32 %v1712, 30
  %v1714 = vsub.s32 %v1710, %v1713
  %vm1715 = vcmp.lt.s32.totalorder %v1714, 0
  %v1716 = vsub.s32 0, %v1714
  %v1717 = vsel %vm1715, %v1716, %v1714
  %v1718 = vclz %v1717
  %v1719 = vsub.s32 %v1718, 2
  %vm1720 = vcmp.gt.s32.totalorder 0, %v1719
  %v1721 = vsel %vm1720, 0, %v1719
  %v1722 = vsub.s32 32, %v1721
  %v1723 = vshll.u32 %v1714, %v1721
  %v1724 = vshrl.u32 %v1706, %v1722
  %v1725 = vor.u32 %v1723, %v1724
  %v1726 = vsub.s32 4294967266, %v1721
  %v1727 = vadd.s32 %v1726, 127
  %v1728 = vshll.u32 %v1727, 23
  %v1729 = vor.u32 4788187, %v1728
  %v1730 = vand.u32 2147483647, %v1729
  %v1732 = vcvt.s32.f32 %v1725
  %v1733 = vmul.f32 %v1732, %v1730
  %v1734 = vxor.u32 %v1733, 2147483648
  %v1735 = vsel %vm1652, %v1734, %v1733
  %v1736 = vsub.s32 4, %v1712
  %v1737 = vsel %vm1652, %v1736, %v1712
  %v1738 = vsel %vm1651, %v1108, %v1735
  %v1739 = vsel %vm1651, 0, %v1737
  %v1740 = vcosq.f32.pop %v1738
  %v1741 = vsinq.f32.pop %v1738
  %vm1742 = vweird.f32 %v1108
  %v1743 = vand.u32 %v1739, 3
  %vm1744 = vcmp.lt.s32.totalorder %v1743, 2
  %vm1745 = vcmp.eq.s32.totalorder %v1743, 0
  %v1746 = vxor.u32 %v1741, 2147483648
  %v1747 = vsel %vm1745, %v1740, %v1746
  %vm1748 = vcmp.eq.s32.totalorder %v1743, 2
  %v1749 = vxor.u32 %v1740, 2147483648
  %v1750 = vsel %vm1748, %v1749, %v1741
  %v1751 = vsel %vm1744, %v1747, %v1750
  %v1752 = vsel %vm1742, nan, %v1751
  %v1753 = vand.u32 2147483647, %v1109
  %vm1754 = vcmp.le.f32.partialorder %v1753, 0.7853982
  %vm1755 = vcmp.lt.s32.totalorder %v1109, 0
  %v1756 = vand.u32 %v1109, 2139095040
  %v1757 = vshrl.u32 %v1756, 23
  %v1758 = vsub.s32 %v1757, 127
  %v1759 = vand.u32 2147483647, %v1109
  %v1760 = vand.u32 %v1759, 8388607
  %v1761 = vor.u32 %v1760, 8388608
  %v1762 = vsub.s32 0, %v1761
  %v1763 = vadd.s32 %v1758, 1
  %vm1764 = vcmp.gt.s32.totalorder %v1763, 0
  %v1765 = vsel %vm1764, %v1763, 0
  %v1766 = vshrl.u32 %v1765, 5
  %v1767 = vand.u32 %v1765, 31
  %v1768 = vsub.s32 32, %v1767
  %v1769 = vshrl.u32 683565275, %v1768
  %v1770 = vshll.u32 683565275, %v1767
  %v1771 = vshrl.u32 2475754826, %v1768
  %v1772 = vor.u32 %v1770, %v1771
  %v1773 = vshll.u32 2475754826, %v1767
  %v1774 = vshrl.u32 2131351028, %v1768
  %v1775 = vor.u32 %v1773, %v1774
  %v1776 = vshll.u32 2131351028, %v1767
  %v1777 = vshrl.u32 2102212464, %v1768
  %v1778 = vor.u32 %v1776, %v1777
  %v1779 = vshll.u32 2102212464, %v1767
  %v1780 = vshrl.u32 920167782, %v1768
  %v1781 = vor.u32 %v1779, %v1780
  %v1782 = vshll.u32 920167782, %v1767
  %v1783 = vshrl.u32 1326507024, %v1768
  %v1784 = vor.u32 %v1782, %v1783
  %vm1785 = vcmp.lt.s32.totalorder %v1766, 1
  %vm1786 = vcmp.lt.s32.totalorder %v1766, 2
  %vm1787 = vcmp.lt.s32.totalorder %v1766, 3
  %vm1788 = vcmp.lt.s32.totalorder %v1766, 4
  %v1789 = vsel %vm1785, %v1769, %v1772
  %v1790 = vsel %vm1788, %v1778, 2102212464
  %v1791 = vsel %vm1787, %v1775, %v1790
  %v1792 = vsel %vm1786, %v1789, %v1791
  %v1793 = vsel %vm1785, %v1772, %v1775
  %v1794 = vsel %vm1788, %v1781, 920167782
  %v1795 = vsel %vm1787, %v1778, %v1794
  %v1796 = vsel %vm1786, %v1793, %v1795
  %v1797 = vsel %vm1785, %v1775, %v1778
  %v1798 = vsel %vm1788, %v1784, 1326507024
  %v1799 = vsel %vm1787, %v1781, %v1798
  %v1800 = vsel %vm1786, %v1797, %v1799
  %v1801 = vshll.u32 %v1761, 8
  %v1802 = vmul.u32.u64.compose %v1801, %v1800
  %v1803 = vextract.low.u32 %v1802
  %v1804 = vextract.high.u32 %v1802
  %v1805 = vmul.u32.u64.compose %v1801, %v1796
  %v1806 = vextract.low.u32 %v1805
  %v1807 = vextract.high.u32 %v1805
  %v1808 = vmul.u32 %v1801, %v1792
  %v1809 = vadd.s32 %v1804, %v1806
  %vm1810 = vc.u32 %v1804, %v1806
  %v1811 = vadd.s32 %v1807, 1
  %v1812 = vsel %vm1810, %v1811, %v1807
  %v1813 = vadd.s32 %v1808, %v1812
  %v1814 = vadd.s32 %v1813, 536870912
  %v1815 = vshrl.u32 %v1814, 30
  %v1816 = vshll.u32 %v1815, 30
  %v1817 = vsub.s32 %v1813, %v1816
  %vm1818 = vcmp.lt.s32.totalorder %v1817, 0
  %v1819 = vsub.s32 0, %v1817
  %v1820 = vsel %vm1818, %v1819, %v1817
  %v1821 = vclz %v1820
  %v1822 = vsub.s32 %v1821, 2
  %vm1823 = vcmp.gt.s32.totalorder 0, %v1822
  %v1824 = vsel %vm1823, 0, %v1822
  %v1825 = vsub.s32 32, %v1824
  %v1826 = vshll.u32 %v1817, %v1824
  %v1827 = vshrl.u32 %v1809, %v1825
  %v1828 = vor.u32 %v1826, %v1827
  %v1829 = vsub.s32 4294967266, %v1824
  %v1830 = vadd.s32 %v1829, 127
  %v1831 = vshll.u32 %v1830, 23
  %v1832 = vor.u32 4788187, %v1831
  %v1833 = vand.u32 2147483647, %v1832
  %v1835 = vcvt.s32.f32 %v1828
  %v1836 = vmul.f32 %v1835, %v1833
  %v1837 = vxor.u32 %v1836, 2147483648
  %v1838 = vsel %vm1755, %v1837, %v1836
  %v1839 = vsub.s32 4, %v1815
  %v1840 = vsel %vm1755, %v1839, %v1815
  %v1841 = vsel %vm1754, %v1109, %v1838
  %v1842 = vsel %vm1754, 0, %v1840
  %v1843 = vcosq.f32.pop %v1841
  %v1844 = vsinq.f32.pop %v1841
  %vm1845 = vweird.f32 %v1109
  %v1846 = vand.u32 %v1842, 3
  %vm1847 = vcmp.lt.s32.totalorder %v1846, 2
  %vm1848 = vcmp.eq.s32.totalorder %v1846, 0
  %v1849 = vxor.u32 %v1844, 2147483648
  %v1850 = vsel %vm1848, %v1843, %v1849
  %vm1851 = vcmp.eq.s32.totalorder %v1846, 2
  %v1852 = vxor.u32 %v1843, 2147483648
  %v1853 = vsel %vm1851, %v1852, %v1844
  %v1854 = vsel %vm1847, %v1850, %v1853
  %v1855 = vsel %vm1845, nan, %v1854
  %v1856 = vand.u32 2147483647, %v1110
  %vm1857 = vcmp.le.f32.partialorder %v1856, 0.7853982
  %vm1858 = vcmp.lt.s32.totalorder %v1110, 0
  %v1859 = vand.u32 %v1110, 2139095040
  %v1860 = vshrl.u32 %v1859, 23
  %v1861 = vsub.s32 %v1860, 127
  %v1862 = vand.u32 2147483647, %v1110
  %v1863 = vand.u32 %v1862, 8388607
  %v1864 = vor.u32 %v1863, 8388608
  %v1865 = vsub.s32 0, %v1864
  %v1866 = vadd.s32 %v1861, 1
  %vm1867 = vcmp.gt.s32.totalorder %v1866, 0
  %v1868 = vsel %vm1867, %v1866, 0
  %v1869 = vshrl.u32 %v1868, 5
  %v1870 = vand.u32 %v1868, 31
  %v1871 = vsub.s32 32, %v1870
  %v1872 = vshrl.u32 683565275, %v1871
  %v1873 = vshll.u32 683565275, %v1870
  %v1874 = vshrl.u32 2475754826, %v1871
  %v1875 = vor.u32 %v1873, %v1874
  %v1876 = vshll.u32 2475754826, %v1870
  %v1877 = vshrl.u32 2131351028, %v1871
  %v1878 = vor.u32 %v1876, %v1877
  %v1879 = vshll.u32 2131351028, %v1870
  %v1880 = vshrl.u32 2102212464, %v1871
  %v1881 = vor.u32 %v1879, %v1880
  %v1882 = vshll.u32 2102212464, %v1870
  %v1883 = vshrl.u32 920167782, %v1871
  %v1884 = vor.u32 %v1882, %v1883
  %v1885 = vshll.u32 920167782, %v1870
  %v1886 = vshrl.u32 1326507024, %v1871
  %v1887 = vor.u32 %v1885, %v1886
  %vm1888 = vcmp.lt.s32.totalorder %v1869, 1
  %vm1889 = vcmp.lt.s32.totalorder %v1869, 2
  %vm1890 = vcmp.lt.s32.totalorder %v1869, 3
  %vm1891 = vcmp.lt.s32.totalorder %v1869, 4
  %v1892 = vsel %vm1888, %v1872, %v1875
  %v1893 = vsel %vm1891, %v1881, 2102212464
  %v1894 = vsel %vm1890, %v1878, %v1893
  %v1895 = vsel %vm1889, %v1892, %v1894
  %v1896 = vsel %vm1888, %v1875, %v1878
  %v1897 = vsel %vm1891, %v1884, 920167782
  %v1898 = vsel %vm1890, %v1881, %v1897
  %v1899 = vsel %vm1889, %v1896, %v1898
  %v1900 = vsel %vm1888, %v1878, %v1881
  %v1901 = vsel %vm1891, %v1887, 1326507024
  %v1902 = vsel %vm1890, %v1884, %v1901
  %v1903 = vsel %vm1889, %v1900, %v1902
  %v1904 = vshll.u32 %v1864, 8
  %v1905 = vmul.u32.u64.compose %v1904, %v1903
  %v1906 = vextract.low.u32 %v1905
  %v1907 = vextract.high.u32 %v1905
  %v1908 = vmul.u32.u64.compose %v1904, %v1899
  %v1909 = vextract.low.u32 %v1908
  %v1910 = vextract.high.u32 %v1908
  %v1911 = vmul.u32 %v1904, %v1895
  %v1912 = vadd.s32 %v1907, %v1909
  %vm1913 = vc.u32 %v1907, %v1909
  %v1914 = vadd.s32 %v1910, 1
  %v1915 = vsel %vm1913, %v1914, %v1910
  %v1916 = vadd.s32 %v1911, %v1915
  %v1917 = vadd.s32 %v1916, 536870912
  %v1918 = vshrl.u32 %v1917, 30
  %v1919 = vshll.u32 %v1918, 30
  %v1920 = vsub.s32 %v1916, %v1919
  %vm1921 = vcmp.lt.s32.totalorder %v1920, 0
  %v1922 = vsub.s32 0, %v1920
  %v1923 = vsel %vm1921, %v1922, %v1920
  %v1924 = vclz %v1923
  %v1925 = vsub.s32 %v1924, 2
  %vm1926 = vcmp.gt.s32.totalorder 0, %v1925
  %v1927 = vsel %vm1926, 0, %v1925
  %v1928 = vsub.s32 32, %v1927
  %v1929 = vshll.u32 %v1920, %v1927
  %v1930 = vshrl.u32 %v1912, %v1928
  %v1931 = vor.u32 %v1929, %v1930
  %v1932 = vsub.s32 4294967266, %v1927
  %v1933 = vadd.s32 %v1932, 127
  %v1934 = vshll.u32 %v1933, 23
  %v1935 = vor.u32 4788187, %v1934
  %v1936 = vand.u32 2147483647, %v1935
  %v1938 = vcvt.s32.f32 %v1931
  %v1939 = vmul.f32 %v1938, %v1936
  %v1940 = vxor.u32 %v1939, 2147483648
  %v1941 = vsel %vm1858, %v1940, %v1939
  %v1942 = vsub.s32 4, %v1918
  %v1943 = vsel %vm1858, %v1942, %v1918
  %v1944 = vsel %vm1857, %v1110, %v1941
  %v1945 = vsel %vm1857, 0, %v1943
  %v1946 = vcosq.f32.pop %v1944
  %v1947 = vsinq.f32.pop %v1944
  %vm1948 = vweird.f32 %v1110
  %v1949 = vand.u32 %v1945, 3
  %vm1950 = vcmp.lt.s32.totalorder %v1949, 2
  %vm1951 = vcmp.eq.s32.totalorder %v1949, 0
  %v1952 = vxor.u32 %v1947, 2147483648
  %v1953 = vsel %vm1951, %v1946, %v1952
  %vm1954 = vcmp.eq.s32.totalorder %v1949, 2
  %v1955 = vxor.u32 %v1946, 2147483648
  %v1956 = vsel %vm1954, %v1955, %v1947
  %v1957 = vsel %vm1950, %v1953, %v1956
  %v1958 = vsel %vm1948, nan, %v1957
  %v1959 = vand.u32 2147483647, %v1111
  %vm1960 = vcmp.le.f32.partialorder %v1959, 0.7853982
  %vm1961 = vcmp.lt.s32.totalorder %v1111, 0
  %v1962 = vand.u32 %v1111, 2139095040
  %v1963 = vshrl.u32 %v1962, 23
  %v1964 = vsub.s32 %v1963, 127
  %v1965 = vand.u32 2147483647, %v1111
  %v1966 = vand.u32 %v1965, 8388607
  %v1967 = vor.u32 %v1966, 8388608
  %v1968 = vsub.s32 0, %v1967
  %v1969 = vadd.s32 %v1964, 1
  %vm1970 = vcmp.gt.s32.totalorder %v1969, 0
  %v1971 = vsel %vm1970, %v1969, 0
  %v1972 = vshrl.u32 %v1971, 5
  %v1973 = vand.u32 %v1971, 31
  %v1974 = vsub.s32 32, %v1973
  %v1975 = vshrl.u32 683565275, %v1974
  %v1976 = vshll.u32 683565275, %v1973
  %v1977 = vshrl.u32 2475754826, %v1974
  %v1978 = vor.u32 %v1976, %v1977
  %v1979 = vshll.u32 2475754826, %v1973
  %v1980 = vshrl.u32 2131351028, %v1974
  %v1981 = vor.u32 %v1979, %v1980
  %v1982 = vshll.u32 2131351028, %v1973
  %v1983 = vshrl.u32 2102212464, %v1974
  %v1984 = vor.u32 %v1982, %v1983
  %v1985 = vshll.u32 2102212464, %v1973
  %v1986 = vshrl.u32 920167782, %v1974
  %v1987 = vor.u32 %v1985, %v1986
  %v1988 = vshll.u32 920167782, %v1973
  %v1989 = vshrl.u32 1326507024, %v1974
  %v1990 = vor.u32 %v1988, %v1989
  %vm1991 = vcmp.lt.s32.totalorder %v1972, 1
  %vm1992 = vcmp.lt.s32.totalorder %v1972, 2
  %vm1993 = vcmp.lt.s32.totalorder %v1972, 3
  %vm1994 = vcmp.lt.s32.totalorder %v1972, 4
  %v1995 = vsel %vm1991, %v1975, %v1978
  %v1996 = vsel %vm1994, %v1984, 2102212464
  %v1997 = vsel %vm1993, %v1981, %v1996
  %v1998 = vsel %vm1992, %v1995, %v1997
  %v1999 = vsel %vm1991, %v1978, %v1981
  %v2000 = vsel %vm1994, %v1987, 920167782
  %v2001 = vsel %vm1993, %v1984, %v2000
  %v2002 = vsel %vm1992, %v1999, %v2001
  %v2003 = vsel %vm1991, %v1981, %v1984
  %v2004 = vsel %vm1994, %v1990, 1326507024
  %v2005 = vsel %vm1993, %v1987, %v2004
  %v2006 = vsel %vm1992, %v2003, %v2005
  %v2007 = vshll.u32 %v1967, 8
  %v2008 = vmul.u32.u64.compose %v2007, %v2006
  %v2009 = vextract.low.u32 %v2008
  %v2010 = vextract.high.u32 %v2008
  %v2011 = vmul.u32.u64.compose %v2007, %v2002
  %v2012 = vextract.low.u32 %v2011
  %v2013 = vextract.high.u32 %v2011
  %v2014 = vmul.u32 %v2007, %v1998
  %v2015 = vadd.s32 %v2010, %v2012
  %vm2016 = vc.u32 %v2010, %v2012
  %v2017 = vadd.s32 %v2013, 1
  %v2018 = vsel %vm2016, %v2017, %v2013
  %v2019 = vadd.s32 %v2014, %v2018
  %v2020 = vadd.s32 %v2019, 536870912
  %v2021 = vshrl.u32 %v2020, 30
  %v2022 = vshll.u32 %v2021, 30
  %v2023 = vsub.s32 %v2019, %v2022
  %vm2024 = vcmp.lt.s32.totalorder %v2023, 0
  %v2025 = vsub.s32 0, %v2023
  %v2026 = vsel %vm2024, %v2025, %v2023
  %v2027 = vclz %v2026
  %v2028 = vsub.s32 %v2027, 2
  %vm2029 = vcmp.gt.s32.totalorder 0, %v2028
  %v2030 = vsel %vm2029, 0, %v2028
  %v2031 = vsub.s32 32, %v2030
  %v2032 = vshll.u32 %v2023, %v2030
  %v2033 = vshrl.u32 %v2015, %v2031
  %v2034 = vor.u32 %v2032, %v2033
  %v2035 = vsub.s32 4294967266, %v2030
  %v2036 = vadd.s32 %v2035, 127
  %v2037 = vshll.u32 %v2036, 23
  %v2038 = vor.u32 4788187, %v2037
  %v2039 = vand.u32 2147483647, %v2038
  %v2041 = vcvt.s32.f32 %v2034
  %v2042 = vmul.f32 %v2041, %v2039
  %v2043 = vxor.u32 %v2042, 2147483648
  %v2044 = vsel %vm1961, %v2043, %v2042
  %v2045 = vsub.s32 4, %v2021
  %v2046 = vsel %vm1961, %v2045, %v2021
  %v2047 = vsel %vm1960, %v1111, %v2044
  %v2048 = vsel %vm1960, 0, %v2046
  %v2049 = vcosq.f32.pop %v2047
  %v2050 = vsinq.f32.pop %v2047
  %vm2051 = vweird.f32 %v1111
  %v2052 = vand.u32 %v2048, 3
  %vm2053 = vcmp.lt.s32.totalorder %v2052, 2
  %vm2054 = vcmp.eq.s32.totalorder %v2052, 0
  %v2055 = vxor.u32 %v2050, 2147483648
  %v2056 = vsel %vm2054, %v2049, %v2055
  %vm2057 = vcmp.eq.s32.totalorder %v2052, 2
  %v2058 = vxor.u32 %v2049, 2147483648
  %v2059 = vsel %vm2057, %v2058, %v2050
  %v2060 = vsel %vm2053, %v2056, %v2059
  %v2061 = vsel %vm2051, nan, %v2060
  %v2062 = vand.u32 2147483647, %v1112
  %vm2063 = vcmp.le.f32.partialorder %v2062, 0.7853982
  %vm2064 = vcmp.lt.s32.totalorder %v1112, 0
  %v2065 = vand.u32 %v1112, 2139095040
  %v2066 = vshrl.u32 %v2065, 23
  %v2067 = vsub.s32 %v2066, 127
  %v2068 = vand.u32 2147483647, %v1112
  %v2069 = vand.u32 %v2068, 8388607
  %v2070 = vor.u32 %v2069, 8388608
  %v2071 = vsub.s32 0, %v2070
  %v2072 = vadd.s32 %v2067, 1
  %vm2073 = vcmp.gt.s32.totalorder %v2072, 0
  %v2074 = vsel %vm2073, %v2072, 0
  %v2075 = vshrl.u32 %v2074, 5
  %v2076 = vand.u32 %v2074, 31
  %v2077 = vsub.s32 32, %v2076
  %v2078 = vshrl.u32 683565275, %v2077
  %v2079 = vshll.u32 683565275, %v2076
  %v2080 = vshrl.u32 2475754826, %v2077
  %v2081 = vor.u32 %v2079, %v2080
  %v2082 = vshll.u32 2475754826, %v2076
  %v2083 = vshrl.u32 2131351028, %v2077
  %v2084 = vor.u32 %v2082, %v2083
  %v2085 = vshll.u32 2131351028, %v2076
  %v2086 = vshrl.u32 2102212464, %v2077
  %v2087 = vor.u32 %v2085, %v2086
  %v2088 = vshll.u32 2102212464, %v2076
  %v2089 = vshrl.u32 920167782, %v2077
  %v2090 = vor.u32 %v2088, %v2089
  %v2091 = vshll.u32 920167782, %v2076
  %v2092 = vshrl.u32 1326507024, %v2077
  %v2093 = vor.u32 %v2091, %v2092
  %vm2094 = vcmp.lt.s32.totalorder %v2075, 1
  %vm2095 = vcmp.lt.s32.totalorder %v2075, 2
  %vm2096 = vcmp.lt.s32.totalorder %v2075, 3
  %vm2097 = vcmp.lt.s32.totalorder %v2075, 4
  %v2098 = vsel %vm2094, %v2078, %v2081
  %v2099 = vsel %vm2097, %v2087, 2102212464
  %v2100 = vsel %vm2096, %v2084, %v2099
  %v2101 = vsel %vm2095, %v2098, %v2100
  %v2102 = vsel %vm2094, %v2081, %v2084
  %v2103 = vsel %vm2097, %v2090, 920167782
  %v2104 = vsel %vm2096, %v2087, %v2103
  %v2105 = vsel %vm2095, %v2102, %v2104
  %v2106 = vsel %vm2094, %v2084, %v2087
  %v2107 = vsel %vm2097, %v2093, 1326507024
  %v2108 = vsel %vm2096, %v2090, %v2107
  %v2109 = vsel %vm2095, %v2106, %v2108
  %v2110 = vshll.u32 %v2070, 8
  %v2111 = vmul.u32.u64.compose %v2110, %v2109
  %v2112 = vextract.low.u32 %v2111
  %v2113 = vextract.high.u32 %v2111
  %v2114 = vmul.u32.u64.compose %v2110, %v2105
  %v2115 = vextract.low.u32 %v2114
  %v2116 = vextract.high.u32 %v2114
  %v2117 = vmul.u32 %v2110, %v2101
  %v2118 = vadd.s32 %v2113, %v2115
  %vm2119 = vc.u32 %v2113, %v2115
  %v2120 = vadd.s32 %v2116, 1
  %v2121 = vsel %vm2119, %v2120, %v2116
  %v2122 = vadd.s32 %v2117, %v2121
  %v2123 = vadd.s32 %v2122, 536870912
  %v2124 = vshrl.u32 %v2123, 30
  %v2125 = vshll.u32 %v2124, 30
  %v2126 = vsub.s32 %v2122, %v2125
  %vm2127 = vcmp.lt.s32.totalorder %v2126, 0
  %v2128 = vsub.s32 0, %v2126
  %v2129 = vsel %vm2127, %v2128, %v2126
  %v2130 = vclz %v2129
  %v2131 = vsub.s32 %v2130, 2
  %vm2132 = vcmp.gt.s32.totalorder 0, %v2131
  %v2133 = vsel %vm2132, 0, %v2131
  %v2134 = vsub.s32 32, %v2133
  %v2135 = vshll.u32 %v2126, %v2133
  %v2136 = vshrl.u32 %v2118, %v2134
  %v2137 = vor.u32 %v2135, %v2136
  %v2138 = vsub.s32 4294967266, %v2133
  %v2139 = vadd.s32 %v2138, 127
  %v2140 = vshll.u32 %v2139, 23
  %v2141 = vor.u32 4788187, %v2140
  %v2142 = vand.u32 2147483647, %v2141
  %v2144 = vcvt.s32.f32 %v2137
  %v2145 = vmul.f32 %v2144, %v2142
  %v2146 = vxor.u32 %v2145, 2147483648
  %v2147 = vsel %vm2064, %v2146, %v2145
  %v2148 = vsub.s32 4, %v2124
  %v2149 = vsel %vm2064, %v2148, %v2124
  %v2150 = vsel %vm2063, %v1112, %v2147
  %v2151 = vsel %vm2063, 0, %v2149
  %v2152 = vcosq.f32.pop %v2150
  %v2153 = vsinq.f32.pop %v2150
  %vm2154 = vweird.f32 %v1112
  %v2155 = vand.u32 %v2151, 3
  %vm2156 = vcmp.lt.s32.totalorder %v2155, 2
  %vm2157 = vcmp.eq.s32.totalorder %v2155, 0
  %v2158 = vxor.u32 %v2153, 2147483648
  %v2159 = vsel %vm2157, %v2152, %v2158
  %vm2160 = vcmp.eq.s32.totalorder %v2155, 2
  %v2161 = vxor.u32 %v2152, 2147483648
  %v2162 = vsel %vm2160, %v2161, %v2153
  %v2163 = vsel %vm2156, %v2159, %v2162
  %v2164 = vsel %vm2154, nan, %v2163
  %v2165 = vand.u32 2147483647, %v1113
  %vm2166 = vcmp.le.f32.partialorder %v2165, 0.7853982
  %vm2167 = vcmp.lt.s32.totalorder %v1113, 0
  %v2168 = vand.u32 %v1113, 2139095040
  %v2169 = vshrl.u32 %v2168, 23
  %v2170 = vsub.s32 %v2169, 127
  %v2171 = vand.u32 2147483647, %v1113
  %v2172 = vand.u32 %v2171, 8388607
  %v2173 = vor.u32 %v2172, 8388608
  %v2174 = vsub.s32 0, %v2173
  %v2175 = vadd.s32 %v2170, 1
  %vm2176 = vcmp.gt.s32.totalorder %v2175, 0
  %v2177 = vsel %vm2176, %v2175, 0
  %v2178 = vshrl.u32 %v2177, 5
  %v2179 = vand.u32 %v2177, 31
  %v2180 = vsub.s32 32, %v2179
  %v2181 = vshrl.u32 683565275, %v2180
  %v2182 = vshll.u32 683565275, %v2179
  %v2183 = vshrl.u32 2475754826, %v2180
  %v2184 = vor.u32 %v2182, %v2183
  %v2185 = vshll.u32 2475754826, %v2179
  %v2186 = vshrl.u32 2131351028, %v2180
  %v2187 = vor.u32 %v2185, %v2186
  %v2188 = vshll.u32 2131351028, %v2179
  %v2189 = vshrl.u32 2102212464, %v2180
  %v2190 = vor.u32 %v2188, %v2189
  %v2191 = vshll.u32 2102212464, %v2179
  %v2192 = vshrl.u32 920167782, %v2180
  %v2193 = vor.u32 %v2191, %v2192
  %v2194 = vshll.u32 920167782, %v2179
  %v2195 = vshrl.u32 1326507024, %v2180
  %v2196 = vor.u32 %v2194, %v2195
  %vm2197 = vcmp.lt.s32.totalorder %v2178, 1
  %vm2198 = vcmp.lt.s32.totalorder %v2178, 2
  %vm2199 = vcmp.lt.s32.totalorder %v2178, 3
  %vm2200 = vcmp.lt.s32.totalorder %v2178, 4
  %v2201 = vsel %vm2197, %v2181, %v2184
  %v2202 = vsel %vm2200, %v2190, 2102212464
  %v2203 = vsel %vm2199, %v2187, %v2202
  %v2204 = vsel %vm2198, %v2201, %v2203
  %v2205 = vsel %vm2197, %v2184, %v2187
  %v2206 = vsel %vm2200, %v2193, 920167782
  %v2207 = vsel %vm2199, %v2190, %v2206
  %v2208 = vsel %vm2198, %v2205, %v2207
  %v2209 = vsel %vm2197, %v2187, %v2190
  %v2210 = vsel %vm2200, %v2196, 1326507024
  %v2211 = vsel %vm2199, %v2193, %v2210
  %v2212 = vsel %vm2198, %v2209, %v2211
  %v2213 = vshll.u32 %v2173, 8
  %v2214 = vmul.u32.u64.compose %v2213, %v2212
  %v2215 = vextract.low.u32 %v2214
  %v2216 = vextract.high.u32 %v2214
  %v2217 = vmul.u32.u64.compose %v2213, %v2208
  %v2218 = vextract.low.u32 %v2217
  %v2219 = vextract.high.u32 %v2217
  %v2220 = vmul.u32 %v2213, %v2204
  %v2221 = vadd.s32 %v2216, %v2218
  %vm2222 = vc.u32 %v2216, %v2218
  %v2223 = vadd.s32 %v2219, 1
  %v2224 = vsel %vm2222, %v2223, %v2219
  %v2225 = vadd.s32 %v2220, %v2224
  %v2226 = vadd.s32 %v2225, 536870912
  %v2227 = vshrl.u32 %v2226, 30
  %v2228 = vshll.u32 %v2227, 30
  %v2229 = vsub.s32 %v2225, %v2228
  %vm2230 = vcmp.lt.s32.totalorder %v2229, 0
  %v2231 = vsub.s32 0, %v2229
  %v2232 = vsel %vm2230, %v2231, %v2229
  %v2233 = vclz %v2232
  %v2234 = vsub.s32 %v2233, 2
  %vm2235 = vcmp.gt.s32.totalorder 0, %v2234
  %v2236 = vsel %vm2235, 0, %v2234
  %v2237 = vsub.s32 32, %v2236
  %v2238 = vshll.u32 %v2229, %v2236
  %v2239 = vshrl.u32 %v2221, %v2237
  %v2240 = vor.u32 %v2238, %v2239
  %v2241 = vsub.s32 4294967266, %v2236
  %v2242 = vadd.s32 %v2241, 127
  %v2243 = vshll.u32 %v2242, 23
  %v2244 = vor.u32 4788187, %v2243
  %v2245 = vand.u32 2147483647, %v2244
  %v2247 = vcvt.s32.f32 %v2240
  %v2248 = vmul.f32 %v2247, %v2245
  %v2249 = vxor.u32 %v2248, 2147483648
  %v2250 = vsel %vm2167, %v2249, %v2248
  %v2251 = vsub.s32 4, %v2227
  %v2252 = vsel %vm2167, %v2251, %v2227
  %v2253 = vsel %vm2166, %v1113, %v2250
  %v2254 = vsel %vm2166, 0, %v2252
  %v2255 = vcosq.f32.pop %v2253
  %v2256 = vsinq.f32.pop %v2253
  %vm2257 = vweird.f32 %v1113
  %v2258 = vand.u32 %v2254, 3
  %vm2259 = vcmp.lt.s32.totalorder %v2258, 2
  %vm2260 = vcmp.eq.s32.totalorder %v2258, 0
  %v2261 = vxor.u32 %v2256, 2147483648
  %v2262 = vsel %vm2260, %v2255, %v2261
  %vm2263 = vcmp.eq.s32.totalorder %v2258, 2
  %v2264 = vxor.u32 %v2255, 2147483648
  %v2265 = vsel %vm2263, %v2264, %v2256
  %v2266 = vsel %vm2259, %v2262, %v2265
  %v2267 = vsel %vm2257, nan, %v2266
  %v2268 = vand.u32 2147483647, %v1114
  %vm2269 = vcmp.le.f32.partialorder %v2268, 0.7853982
  %vm2270 = vcmp.lt.s32.totalorder %v1114, 0
  %v2271 = vand.u32 %v1114, 2139095040
  %v2272 = vshrl.u32 %v2271, 23
  %v2273 = vsub.s32 %v2272, 127
  %v2274 = vand.u32 2147483647, %v1114
  %v2275 = vand.u32 %v2274, 8388607
  %v2276 = vor.u32 %v2275, 8388608
  %v2277 = vsub.s32 0, %v2276
  %v2278 = vadd.s32 %v2273, 1
  %vm2279 = vcmp.gt.s32.totalorder %v2278, 0
  %v2280 = vsel %vm2279, %v2278, 0
  %v2281 = vshrl.u32 %v2280, 5
  %v2282 = vand.u32 %v2280, 31
  %v2283 = vsub.s32 32, %v2282
  %v2284 = vshrl.u32 683565275, %v2283
  %v2285 = vshll.u32 683565275, %v2282
  %v2286 = vshrl.u32 2475754826, %v2283
  %v2287 = vor.u32 %v2285, %v2286
  %v2288 = vshll.u32 2475754826, %v2282
  %v2289 = vshrl.u32 2131351028, %v2283
  %v2290 = vor.u32 %v2288, %v2289
  %v2291 = vshll.u32 2131351028, %v2282
  %v2292 = vshrl.u32 2102212464, %v2283
  %v2293 = vor.u32 %v2291, %v2292
  %v2294 = vshll.u32 2102212464, %v2282
  %v2295 = vshrl.u32 920167782, %v2283
  %v2296 = vor.u32 %v2294, %v2295
  %v2297 = vshll.u32 920167782, %v2282
  %v2298 = vshrl.u32 1326507024, %v2283
  %v2299 = vor.u32 %v2297, %v2298
  %vm2300 = vcmp.lt.s32.totalorder %v2281, 1
  %vm2301 = vcmp.lt.s32.totalorder %v2281, 2
  %vm2302 = vcmp.lt.s32.totalorder %v2281, 3
  %vm2303 = vcmp.lt.s32.totalorder %v2281, 4
  %v2304 = vsel %vm2300, %v2284, %v2287
  %v2305 = vsel %vm2303, %v2293, 2102212464
  %v2306 = vsel %vm2302, %v2290, %v2305
  %v2307 = vsel %vm2301, %v2304, %v2306
  %v2308 = vsel %vm2300, %v2287, %v2290
  %v2309 = vsel %vm2303, %v2296, 920167782
  %v2310 = vsel %vm2302, %v2293, %v2309
  %v2311 = vsel %vm2301, %v2308, %v2310
  %v2312 = vsel %vm2300, %v2290, %v2293
  %v2313 = vsel %vm2303, %v2299, 1326507024
  %v2314 = vsel %vm2302, %v2296, %v2313
  %v2315 = vsel %vm2301, %v2312, %v2314
  %v2316 = vshll.u32 %v2276, 8
  %v2317 = vmul.u32.u64.compose %v2316, %v2315
  %v2318 = vextract.low.u32 %v2317
  %v2319 = vextract.high.u32 %v2317
  %v2320 = vmul.u32.u64.compose %v2316, %v2311
  %v2321 = vextract.low.u32 %v2320
  %v2322 = vextract.high.u32 %v2320
  %v2323 = vmul.u32 %v2316, %v2307
  %v2324 = vadd.s32 %v2319, %v2321
  %vm2325 = vc.u32 %v2319, %v2321
  %v2326 = vadd.s32 %v2322, 1
  %v2327 = vsel %vm2325, %v2326, %v2322
  %v2328 = vadd.s32 %v2323, %v2327
  %v2329 = vadd.s32 %v2328, 536870912
  %v2330 = vshrl.u32 %v2329, 30
  %v2331 = vshll.u32 %v2330, 30
  %v2332 = vsub.s32 %v2328, %v2331
  %vm2333 = vcmp.lt.s32.totalorder %v2332, 0
  %v2334 = vsub.s32 0, %v2332
  %v2335 = vsel %vm2333, %v2334, %v2332
  %v2336 = vclz %v2335
  %v2337 = vsub.s32 %v2336, 2
  %vm2338 = vcmp.gt.s32.totalorder 0, %v2337
  %v2339 = vsel %vm2338, 0, %v2337
  %v2340 = vsub.s32 32, %v2339
  %v2341 = vshll.u32 %v2332, %v2339
  %v2342 = vshrl.u32 %v2324, %v2340
  %v2343 = vor.u32 %v2341, %v2342
  %v2344 = vsub.s32 4294967266, %v2339
  %v2345 = vadd.s32 %v2344, 127
  %v2346 = vshll.u32 %v2345, 23
  %v2347 = vor.u32 4788187, %v2346
  %v2348 = vand.u32 2147483647, %v2347
  %v2350 = vcvt.s32.f32 %v2343
  %v2351 = vmul.f32 %v2350, %v2348
  %v2352 = vxor.u32 %v2351, 2147483648
  %v2353 = vsel %vm2270, %v2352, %v2351
  %v2354 = vsub.s32 4, %v2330
  %v2355 = vsel %vm2270, %v2354, %v2330
  %v2356 = vsel %vm2269, %v1114, %v2353
  %v2357 = vsel %vm2269, 0, %v2355
  %v2358 = vcosq.f32.pop %v2356
  %v2359 = vsinq.f32.pop %v2356
  %vm2360 = vweird.f32 %v1114
  %v2361 = vand.u32 %v2357, 3
  %vm2362 = vcmp.lt.s32.totalorder %v2361, 2
  %vm2363 = vcmp.eq.s32.totalorder %v2361, 0
  %v2364 = vxor.u32 %v2359, 2147483648
  %v2365 = vsel %vm2363, %v2358, %v2364
  %vm2366 = vcmp.eq.s32.totalorder %v2361, 2
  %v2367 = vxor.u32 %v2358, 2147483648
  %v2368 = vsel %vm2366, %v2367, %v2359
  %v2369 = vsel %vm2362, %v2365, %v2368
  %v2370 = vsel %vm2360, nan, %v2369
  %v2371 = vand.u32 2147483647, %v1115
  %vm2372 = vcmp.le.f32.partialorder %v2371, 0.7853982
  %vm2373 = vcmp.lt.s32.totalorder %v1115, 0
  %v2374 = vand.u32 %v1115, 2139095040
  %v2375 = vshrl.u32 %v2374, 23
  %v2376 = vsub.s32 %v2375, 127
  %v2377 = vand.u32 2147483647, %v1115
  %v2378 = vand.u32 %v2377, 8388607
  %v2379 = vor.u32 %v2378, 8388608
  %v2380 = vsub.s32 0, %v2379
  %v2381 = vadd.s32 %v2376, 1
  %vm2382 = vcmp.gt.s32.totalorder %v2381, 0
  %v2383 = vsel %vm2382, %v2381, 0
  %v2384 = vshrl.u32 %v2383, 5
  %v2385 = vand.u32 %v2383, 31
  %v2386 = vsub.s32 32, %v2385
  %v2387 = vshrl.u32 683565275, %v2386
  %v2388 = vshll.u32 683565275, %v2385
  %v2389 = vshrl.u32 2475754826, %v2386
  %v2390 = vor.u32 %v2388, %v2389
  %v2391 = vshll.u32 2475754826, %v2385
  %v2392 = vshrl.u32 2131351028, %v2386
  %v2393 = vor.u32 %v2391, %v2392
  %v2394 = vshll.u32 2131351028, %v2385
  %v2395 = vshrl.u32 2102212464, %v2386
  %v2396 = vor.u32 %v2394, %v2395
  %v2397 = vshll.u32 2102212464, %v2385
  %v2398 = vshrl.u32 920167782, %v2386
  %v2399 = vor.u32 %v2397, %v2398
  %v2400 = vshll.u32 920167782, %v2385
  %v2401 = vshrl.u32 1326507024, %v2386
  %v2402 = vor.u32 %v2400, %v2401
  %vm2403 = vcmp.lt.s32.totalorder %v2384, 1
  %vm2404 = vcmp.lt.s32.totalorder %v2384, 2
  %vm2405 = vcmp.lt.s32.totalorder %v2384, 3
  %vm2406 = vcmp.lt.s32.totalorder %v2384, 4
  %v2407 = vsel %vm2403, %v2387, %v2390
  %v2408 = vsel %vm2406, %v2396, 2102212464
  %v2409 = vsel %vm2405, %v2393, %v2408
  %v2410 = vsel %vm2404, %v2407, %v2409
  %v2411 = vsel %vm2403, %v2390, %v2393
  %v2412 = vsel %vm2406, %v2399, 920167782
  %v2413 = vsel %vm2405, %v2396, %v2412
  %v2414 = vsel %vm2404, %v2411, %v2413
  %v2415 = vsel %vm2403, %v2393, %v2396
  %v2416 = vsel %vm2406, %v2402, 1326507024
  %v2417 = vsel %vm2405, %v2399, %v2416
  %v2418 = vsel %vm2404, %v2415, %v2417
  %v2419 = vshll.u32 %v2379, 8
  %v2420 = vmul.u32.u64.compose %v2419, %v2418
  %v2421 = vextract.low.u32 %v2420
  %v2422 = vextract.high.u32 %v2420
  %v2423 = vmul.u32.u64.compose %v2419, %v2414
  %v2424 = vextract.low.u32 %v2423
  %v2425 = vextract.high.u32 %v2423
  %v2426 = vmul.u32 %v2419, %v2410
  %v2427 = vadd.s32 %v2422, %v2424
  %vm2428 = vc.u32 %v2422, %v2424
  %v2429 = vadd.s32 %v2425, 1
  %v2430 = vsel %vm2428, %v2429, %v2425
  %v2431 = vadd.s32 %v2426, %v2430
  %v2432 = vadd.s32 %v2431, 536870912
  %v2433 = vshrl.u32 %v2432, 30
  %v2434 = vshll.u32 %v2433, 30
  %v2435 = vsub.s32 %v2431, %v2434
  %vm2436 = vcmp.lt.s32.totalorder %v2435, 0
  %v2437 = vsub.s32 0, %v2435
  %v2438 = vsel %vm2436, %v2437, %v2435
  %v2439 = vclz %v2438
  %v2440 = vsub.s32 %v2439, 2
  %vm2441 = vcmp.gt.s32.totalorder 0, %v2440
  %v2442 = vsel %vm2441, 0, %v2440
  %v2443 = vsub.s32 32, %v2442
  %v2444 = vshll.u32 %v2435, %v2442
  %v2445 = vshrl.u32 %v2427, %v2443
  %v2446 = vor.u32 %v2444, %v2445
  %v2447 = vsub.s32 4294967266, %v2442
  %v2448 = vadd.s32 %v2447, 127
  %v2449 = vshll.u32 %v2448, 23
  %v2450 = vor.u32 4788187, %v2449
  %v2451 = vand.u32 2147483647, %v2450
  %v2453 = vcvt.s32.f32 %v2446
  %v2454 = vmul.f32 %v2453, %v2451
  %v2455 = vxor.u32 %v2454, 2147483648
  %v2456 = vsel %vm2373, %v2455, %v2454
  %v2457 = vsub.s32 4, %v2433
  %v2458 = vsel %vm2373, %v2457, %v2433
  %v2459 = vsel %vm2372, %v1115, %v2456
  %v2460 = vsel %vm2372, 0, %v2458
  %v2461 = vcosq.f32.pop %v2459
  %v2462 = vsinq.f32.pop %v2459
  %vm2463 = vweird.f32 %v1115
  %v2464 = vand.u32 %v2460, 3
  %vm2465 = vcmp.lt.s32.totalorder %v2464, 2
  %vm2466 = vcmp.eq.s32.totalorder %v2464, 0
  %v2467 = vxor.u32 %v2462, 2147483648
  %v2468 = vsel %vm2466, %v2461, %v2467
  %vm2469 = vcmp.eq.s32.totalorder %v2464, 2
  %v2470 = vxor.u32 %v2461, 2147483648
  %v2471 = vsel %vm2469, %v2470, %v2462
  %v2472 = vsel %vm2465, %v2468, %v2471
  %v2473 = vsel %vm2463, nan, %v2472
  %v2474 = vand.u32 2147483647, %v1116
  %vm2475 = vcmp.le.f32.partialorder %v2474, 0.7853982
  %vm2476 = vcmp.lt.s32.totalorder %v1116, 0
  %v2477 = vand.u32 %v1116, 2139095040
  %v2478 = vshrl.u32 %v2477, 23
  %v2479 = vsub.s32 %v2478, 127
  %v2480 = vand.u32 2147483647, %v1116
  %v2481 = vand.u32 %v2480, 8388607
  %v2482 = vor.u32 %v2481, 8388608
  %v2483 = vsub.s32 0, %v2482
  %v2484 = vadd.s32 %v2479, 1
  %vm2485 = vcmp.gt.s32.totalorder %v2484, 0
  %v2486 = vsel %vm2485, %v2484, 0
  %v2487 = vshrl.u32 %v2486, 5
  %v2488 = vand.u32 %v2486, 31
  %v2489 = vsub.s32 32, %v2488
  %v2490 = vshrl.u32 683565275, %v2489
  %v2491 = vshll.u32 683565275, %v2488
  %v2492 = vshrl.u32 2475754826, %v2489
  %v2493 = vor.u32 %v2491, %v2492
  %v2494 = vshll.u32 2475754826, %v2488
  %v2495 = vshrl.u32 2131351028, %v2489
  %v2496 = vor.u32 %v2494, %v2495
  %v2497 = vshll.u32 2131351028, %v2488
  %v2498 = vshrl.u32 2102212464, %v2489
  %v2499 = vor.u32 %v2497, %v2498
  %v2500 = vshll.u32 2102212464, %v2488
  %v2501 = vshrl.u32 920167782, %v2489
  %v2502 = vor.u32 %v2500, %v2501
  %v2503 = vshll.u32 920167782, %v2488
  %v2504 = vshrl.u32 1326507024, %v2489
  %v2505 = vor.u32 %v2503, %v2504
  %vm2506 = vcmp.lt.s32.totalorder %v2487, 1
  %vm2507 = vcmp.lt.s32.totalorder %v2487, 2
  %vm2508 = vcmp.lt.s32.totalorder %v2487, 3
  %vm2509 = vcmp.lt.s32.totalorder %v2487, 4
  %v2510 = vsel %vm2506, %v2490, %v2493
  %v2511 = vsel %vm2509, %v2499, 2102212464
  %v2512 = vsel %vm2508, %v2496, %v2511
  %v2513 = vsel %vm2507, %v2510, %v2512
  %v2514 = vsel %vm2506, %v2493, %v2496
  %v2515 = vsel %vm2509, %v2502, 920167782
  %v2516 = vsel %vm2508, %v2499, %v2515
  %v2517 = vsel %vm2507, %v2514, %v2516
  %v2518 = vsel %vm2506, %v2496, %v2499
  %v2519 = vsel %vm2509, %v2505, 1326507024
  %v2520 = vsel %vm2508, %v2502, %v2519
  %v2521 = vsel %vm2507, %v2518, %v2520
  %v2522 = vshll.u32 %v2482, 8
  %v2523 = vmul.u32.u64.compose %v2522, %v2521
  %v2524 = vextract.low.u32 %v2523
  %v2525 = vextract.high.u32 %v2523
  %v2526 = vmul.u32.u64.compose %v2522, %v2517
  %v2527 = vextract.low.u32 %v2526
  %v2528 = vextract.high.u32 %v2526
  %v2529 = vmul.u32 %v2522, %v2513
  %v2530 = vadd.s32 %v2525, %v2527
  %vm2531 = vc.u32 %v2525, %v2527
  %v2532 = vadd.s32 %v2528, 1
  %v2533 = vsel %vm2531, %v2532, %v2528
  %v2534 = vadd.s32 %v2529, %v2533
  %v2535 = vadd.s32 %v2534, 536870912
  %v2536 = vshrl.u32 %v2535, 30
  %v2537 = vshll.u32 %v2536, 30
  %v2538 = vsub.s32 %v2534, %v2537
  %vm2539 = vcmp.lt.s32.totalorder %v2538, 0
  %v2540 = vsub.s32 0, %v2538
  %v2541 = vsel %vm2539, %v2540, %v2538
  %v2542 = vclz %v2541
  %v2543 = vsub.s32 %v2542, 2
  %vm2544 = vcmp.gt.s32.totalorder 0, %v2543
  %v2545 = vsel %vm2544, 0, %v2543
  %v2546 = vsub.s32 32, %v2545
  %v2547 = vshll.u32 %v2538, %v2545
  %v2548 = vshrl.u32 %v2530, %v2546
  %v2549 = vor.u32 %v2547, %v2548
  %v2550 = vsub.s32 4294967266, %v2545
  %v2551 = vadd.s32 %v2550, 127
  %v2552 = vshll.u32 %v2551, 23
  %v2553 = vor.u32 4788187, %v2552
  %v2554 = vand.u32 2147483647, %v2553
  %v2556 = vcvt.s32.f32 %v2549
  %v2557 = vmul.f32 %v2556, %v2554
  %v2558 = vxor.u32 %v2557, 2147483648
  %v2559 = vsel %vm2476, %v2558, %v2557
  %v2560 = vsub.s32 4, %v2536
  %v2561 = vsel %vm2476, %v2560, %v2536
  %v2562 = vsel %vm2475, %v1116, %v2559
  %v2563 = vsel %vm2475, 0, %v2561
  %v2564 = vcosq.f32.pop %v2562
  %v2565 = vsinq.f32.pop %v2562
  %vm2566 = vweird.f32 %v1116
  %v2567 = vand.u32 %v2563, 3
  %vm2568 = vcmp.lt.s32.totalorder %v2567, 2
  %vm2569 = vcmp.eq.s32.totalorder %v2567, 0
  %v2570 = vxor.u32 %v2565, 2147483648
  %v2571 = vsel %vm2569, %v2564, %v2570
  %vm2572 = vcmp.eq.s32.totalorder %v2567, 2
  %v2573 = vxor.u32 %v2564, 2147483648
  %v2574 = vsel %vm2572, %v2573, %v2565
  %v2575 = vsel %vm2568, %v2571, %v2574
  %v2576 = vsel %vm2566, nan, %v2575
  %v2577 = vand.u32 2147483647, %v1117
  %vm2578 = vcmp.le.f32.partialorder %v2577, 0.7853982
  %vm2579 = vcmp.lt.s32.totalorder %v1117, 0
  %v2580 = vand.u32 %v1117, 2139095040
  %v2581 = vshrl.u32 %v2580, 23
  %v2582 = vsub.s32 %v2581, 127
  %v2583 = vand.u32 2147483647, %v1117
  %v2584 = vand.u32 %v2583, 8388607
  %v2585 = vor.u32 %v2584, 8388608
  %v2586 = vsub.s32 0, %v2585
  %v2587 = vadd.s32 %v2582, 1
  %vm2588 = vcmp.gt.s32.totalorder %v2587, 0
  %v2589 = vsel %vm2588, %v2587, 0
  %v2590 = vshrl.u32 %v2589, 5
  %v2591 = vand.u32 %v2589, 31
  %v2592 = vsub.s32 32, %v2591
  %v2593 = vshrl.u32 683565275, %v2592
  %v2594 = vshll.u32 683565275, %v2591
  %v2595 = vshrl.u32 2475754826, %v2592
  %v2596 = vor.u32 %v2594, %v2595
  %v2597 = vshll.u32 2475754826, %v2591
  %v2598 = vshrl.u32 2131351028, %v2592
  %v2599 = vor.u32 %v2597, %v2598
  %v2600 = vshll.u32 2131351028, %v2591
  %v2601 = vshrl.u32 2102212464, %v2592
  %v2602 = vor.u32 %v2600, %v2601
  %v2603 = vshll.u32 2102212464, %v2591
  %v2604 = vshrl.u32 920167782, %v2592
  %v2605 = vor.u32 %v2603, %v2604
  %v2606 = vshll.u32 920167782, %v2591
  %v2607 = vshrl.u32 1326507024, %v2592
  %v2608 = vor.u32 %v2606, %v2607
  %vm2609 = vcmp.lt.s32.totalorder %v2590, 1
  %vm2610 = vcmp.lt.s32.totalorder %v2590, 2
  %vm2611 = vcmp.lt.s32.totalorder %v2590, 3
  %vm2612 = vcmp.lt.s32.totalorder %v2590, 4
  %v2613 = vsel %vm2609, %v2593, %v2596
  %v2614 = vsel %vm2612, %v2602, 2102212464
  %v2615 = vsel %vm2611, %v2599, %v2614
  %v2616 = vsel %vm2610, %v2613, %v2615
  %v2617 = vsel %vm2609, %v2596, %v2599
  %v2618 = vsel %vm2612, %v2605, 920167782
  %v2619 = vsel %vm2611, %v2602, %v2618
  %v2620 = vsel %vm2610, %v2617, %v2619
  %v2621 = vsel %vm2609, %v2599, %v2602
  %v2622 = vsel %vm2612, %v2608, 1326507024
  %v2623 = vsel %vm2611, %v2605, %v2622
  %v2624 = vsel %vm2610, %v2621, %v2623
  %v2625 = vshll.u32 %v2585, 8
  %v2626 = vmul.u32.u64.compose %v2625, %v2624
  %v2627 = vextract.low.u32 %v2626
  %v2628 = vextract.high.u32 %v2626
  %v2629 = vmul.u32.u64.compose %v2625, %v2620
  %v2630 = vextract.low.u32 %v2629
  %v2631 = vextract.high.u32 %v2629
  %v2632 = vmul.u32 %v2625, %v2616
  %v2633 = vadd.s32 %v2628, %v2630
  %vm2634 = vc.u32 %v2628, %v2630
  %v2635 = vadd.s32 %v2631, 1
  %v2636 = vsel %vm2634, %v2635, %v2631
  %v2637 = vadd.s32 %v2632, %v2636
  %v2638 = vadd.s32 %v2637, 536870912
  %v2639 = vshrl.u32 %v2638, 30
  %v2640 = vshll.u32 %v2639, 30
  %v2641 = vsub.s32 %v2637, %v2640
  %vm2642 = vcmp.lt.s32.totalorder %v2641, 0
  %v2643 = vsub.s32 0, %v2641
  %v2644 = vsel %vm2642, %v2643, %v2641
  %v2645 = vclz %v2644
  %v2646 = vsub.s32 %v2645, 2
  %vm2647 = vcmp.gt.s32.totalorder 0, %v2646
  %v2648 = vsel %vm2647, 0, %v2646
  %v2649 = vsub.s32 32, %v2648
  %v2650 = vshll.u32 %v2641, %v2648
  %v2651 = vshrl.u32 %v2633, %v2649
  %v2652 = vor.u32 %v2650, %v2651
  %v2653 = vsub.s32 4294967266, %v2648
  %v2654 = vadd.s32 %v2653, 127
  %v2655 = vshll.u32 %v2654, 23
  %v2656 = vor.u32 4788187, %v2655
  %v2657 = vand.u32 2147483647, %v2656
  %v2659 = vcvt.s32.f32 %v2652
  %v2660 = vmul.f32 %v2659, %v2657
  %v2661 = vxor.u32 %v2660, 2147483648
  %v2662 = vsel %vm2579, %v2661, %v2660
  %v2663 = vsub.s32 4, %v2639
  %v2664 = vsel %vm2579, %v2663, %v2639
  %v2665 = vsel %vm2578, %v1117, %v2662
  %v2666 = vsel %vm2578, 0, %v2664
  %v2667 = vcosq.f32.pop %v2665
  %v2668 = vsinq.f32.pop %v2665
  %vm2669 = vweird.f32 %v1117
  %v2670 = vand.u32 %v2666, 3
  %vm2671 = vcmp.lt.s32.totalorder %v2670, 2
  %vm2672 = vcmp.eq.s32.totalorder %v2670, 0
  %v2673 = vxor.u32 %v2668, 2147483648
  %v2674 = vsel %vm2672, %v2667, %v2673
  %vm2675 = vcmp.eq.s32.totalorder %v2670, 2
  %v2676 = vxor.u32 %v2667, 2147483648
  %v2677 = vsel %vm2675, %v2676, %v2668
  %v2678 = vsel %vm2671, %v2674, %v2677
  %v2679 = vsel %vm2669, nan, %v2678
  %v2680 = vand.u32 2147483647, %v1118
  %vm2681 = vcmp.le.f32.partialorder %v2680, 0.7853982
  %vm2682 = vcmp.lt.s32.totalorder %v1118, 0
  %v2683 = vand.u32 %v1118, 2139095040
  %v2684 = vshrl.u32 %v2683, 23
  %v2685 = vsub.s32 %v2684, 127
  %v2686 = vand.u32 2147483647, %v1118
  %v2687 = vand.u32 %v2686, 8388607
  %v2688 = vor.u32 %v2687, 8388608
  %v2689 = vsub.s32 0, %v2688
  %v2690 = vadd.s32 %v2685, 1
  %vm2691 = vcmp.gt.s32.totalorder %v2690, 0
  %v2692 = vsel %vm2691, %v2690, 0
  %v2693 = vshrl.u32 %v2692, 5
  %v2694 = vand.u32 %v2692, 31
  %v2695 = vsub.s32 32, %v2694
  %v2696 = vshrl.u32 683565275, %v2695
  %v2697 = vshll.u32 683565275, %v2694
  %v2698 = vshrl.u32 2475754826, %v2695
  %v2699 = vor.u32 %v2697, %v2698
  %v2700 = vshll.u32 2475754826, %v2694
  %v2701 = vshrl.u32 2131351028, %v2695
  %v2702 = vor.u32 %v2700, %v2701
  %v2703 = vshll.u32 2131351028, %v2694
  %v2704 = vshrl.u32 2102212464, %v2695
  %v2705 = vor.u32 %v2703, %v2704
  %v2706 = vshll.u32 2102212464, %v2694
  %v2707 = vshrl.u32 920167782, %v2695
  %v2708 = vor.u32 %v2706, %v2707
  %v2709 = vshll.u32 920167782, %v2694
  %v2710 = vshrl.u32 1326507024, %v2695
  %v2711 = vor.u32 %v2709, %v2710
  %vm2712 = vcmp.lt.s32.totalorder %v2693, 1
  %vm2713 = vcmp.lt.s32.totalorder %v2693, 2
  %vm2714 = vcmp.lt.s32.totalorder %v2693, 3
  %vm2715 = vcmp.lt.s32.totalorder %v2693, 4
  %v2716 = vsel %vm2712, %v2696, %v2699
  %v2717 = vsel %vm2715, %v2705, 2102212464
  %v2718 = vsel %vm2714, %v2702, %v2717
  %v2719 = vsel %vm2713, %v2716, %v2718
  %v2720 = vsel %vm2712, %v2699, %v2702
  %v2721 = vsel %vm2715, %v2708, 920167782
  %v2722 = vsel %vm2714, %v2705, %v2721
  %v2723 = vsel %vm2713, %v2720, %v2722
  %v2724 = vsel %vm2712, %v2702, %v2705
  %v2725 = vsel %vm2715, %v2711, 1326507024
  %v2726 = vsel %vm2714, %v2708, %v2725
  %v2727 = vsel %vm2713, %v2724, %v2726
  %v2728 = vshll.u32 %v2688, 8
  %v2729 = vmul.u32.u64.compose %v2728, %v2727
  %v2730 = vextract.low.u32 %v2729
  %v2731 = vextract.high.u32 %v2729
  %v2732 = vmul.u32.u64.compose %v2728, %v2723
  %v2733 = vextract.low.u32 %v2732
  %v2734 = vextract.high.u32 %v2732
  %v2735 = vmul.u32 %v2728, %v2719
  %v2736 = vadd.s32 %v2731, %v2733
  %vm2737 = vc.u32 %v2731, %v2733
  %v2738 = vadd.s32 %v2734, 1
  %v2739 = vsel %vm2737, %v2738, %v2734
  %v2740 = vadd.s32 %v2735, %v2739
  %v2741 = vadd.s32 %v2740, 536870912
  %v2742 = vshrl.u32 %v2741, 30
  %v2743 = vshll.u32 %v2742, 30
  %v2744 = vsub.s32 %v2740, %v2743
  %vm2745 = vcmp.lt.s32.totalorder %v2744, 0
  %v2746 = vsub.s32 0, %v2744
  %v2747 = vsel %vm2745, %v2746, %v2744
  %v2748 = vclz %v2747
  %v2749 = vsub.s32 %v2748, 2
  %vm2750 = vcmp.gt.s32.totalorder 0, %v2749
  %v2751 = vsel %vm2750, 0, %v2749
  %v2752 = vsub.s32 32, %v2751
  %v2753 = vshll.u32 %v2744, %v2751
  %v2754 = vshrl.u32 %v2736, %v2752
  %v2755 = vor.u32 %v2753, %v2754
  %v2756 = vsub.s32 4294967266, %v2751
  %v2757 = vadd.s32 %v2756, 127
  %v2758 = vshll.u32 %v2757, 23
  %v2759 = vor.u32 4788187, %v2758
  %v2760 = vand.u32 2147483647, %v2759
  %v2762 = vcvt.s32.f32 %v2755
  %v2763 = vmul.f32 %v2762, %v2760
  %v2764 = vxor.u32 %v2763, 2147483648
  %v2765 = vsel %vm2682, %v2764, %v2763
  %v2766 = vsub.s32 4, %v2742
  %v2767 = vsel %vm2682, %v2766, %v2742
  %v2768 = vsel %vm2681, %v1118, %v2765
  %v2769 = vsel %vm2681, 0, %v2767
  %v2770 = vcosq.f32.pop %v2768
  %v2771 = vsinq.f32.pop %v2768
  %vm2772 = vweird.f32 %v1118
  %v2773 = vand.u32 %v2769, 3
  %vm2774 = vcmp.lt.s32.totalorder %v2773, 2
  %vm2775 = vcmp.eq.s32.totalorder %v2773, 0
  %v2776 = vxor.u32 %v2771, 2147483648
  %v2777 = vsel %vm2775, %v2770, %v2776
  %vm2778 = vcmp.eq.s32.totalorder %v2773, 2
  %v2779 = vxor.u32 %v2770, 2147483648
  %v2780 = vsel %vm2778, %v2779, %v2771
  %v2781 = vsel %vm2774, %v2777, %v2780
  %v2782 = vsel %vm2772, nan, %v2781
  %v2783 = vand.u32 2147483647, %v1119
  %vm2784 = vcmp.le.f32.partialorder %v2783, 0.7853982
  %vm2785 = vcmp.lt.s32.totalorder %v1119, 0
  %v2786 = vand.u32 %v1119, 2139095040
  %v2787 = vshrl.u32 %v2786, 23
  %v2788 = vsub.s32 %v2787, 127
  %v2789 = vand.u32 2147483647, %v1119
  %v2790 = vand.u32 %v2789, 8388607
  %v2791 = vor.u32 %v2790, 8388608
  %v2792 = vsub.s32 0, %v2791
  %v2793 = vadd.s32 %v2788, 1
  %vm2794 = vcmp.gt.s32.totalorder %v2793, 0
  %v2795 = vsel %vm2794, %v2793, 0
  %v2796 = vshrl.u32 %v2795, 5
  %v2797 = vand.u32 %v2795, 31
  %v2798 = vsub.s32 32, %v2797
  %v2799 = vshrl.u32 683565275, %v2798
  %v2800 = vshll.u32 683565275, %v2797
  %v2801 = vshrl.u32 2475754826, %v2798
  %v2802 = vor.u32 %v2800, %v2801
  %v2803 = vshll.u32 2475754826, %v2797
  %v2804 = vshrl.u32 2131351028, %v2798
  %v2805 = vor.u32 %v2803, %v2804
  %v2806 = vshll.u32 2131351028, %v2797
  %v2807 = vshrl.u32 2102212464, %v2798
  %v2808 = vor.u32 %v2806, %v2807
  %v2809 = vshll.u32 2102212464, %v2797
  %v2810 = vshrl.u32 920167782, %v2798
  %v2811 = vor.u32 %v2809, %v2810
  %v2812 = vshll.u32 920167782, %v2797
  %v2813 = vshrl.u32 1326507024, %v2798
  %v2814 = vor.u32 %v2812, %v2813
  %vm2815 = vcmp.lt.s32.totalorder %v2796, 1
  %vm2816 = vcmp.lt.s32.totalorder %v2796, 2
  %vm2817 = vcmp.lt.s32.totalorder %v2796, 3
  %vm2818 = vcmp.lt.s32.totalorder %v2796, 4
  %v2819 = vsel %vm2815, %v2799, %v2802
  %v2820 = vsel %vm2818, %v2808, 2102212464
  %v2821 = vsel %vm2817, %v2805, %v2820
  %v2822 = vsel %vm2816, %v2819, %v2821
  %v2823 = vsel %vm2815, %v2802, %v2805
  %v2824 = vsel %vm2818, %v2811, 920167782
  %v2825 = vsel %vm2817, %v2808, %v2824
  %v2826 = vsel %vm2816, %v2823, %v2825
  %v2827 = vsel %vm2815, %v2805, %v2808
  %v2828 = vsel %vm2818, %v2814, 1326507024
  %v2829 = vsel %vm2817, %v2811, %v2828
  %v2830 = vsel %vm2816, %v2827, %v2829
  %v2831 = vshll.u32 %v2791, 8
  %v2832 = vmul.u32.u64.compose %v2831, %v2830
  %v2833 = vextract.low.u32 %v2832
  %v2834 = vextract.high.u32 %v2832
  %v2835 = vmul.u32.u64.compose %v2831, %v2826
  %v2836 = vextract.low.u32 %v2835
  %v2837 = vextract.high.u32 %v2835
  %v2838 = vmul.u32 %v2831, %v2822
  %v2839 = vadd.s32 %v2834, %v2836
  %vm2840 = vc.u32 %v2834, %v2836
  %v2841 = vadd.s32 %v2837, 1
  %v2842 = vsel %vm2840, %v2841, %v2837
  %v2843 = vadd.s32 %v2838, %v2842
  %v2844 = vadd.s32 %v2843, 536870912
  %v2845 = vshrl.u32 %v2844, 30
  %v2846 = vshll.u32 %v2845, 30
  %v2847 = vsub.s32 %v2843, %v2846
  %vm2848 = vcmp.lt.s32.totalorder %v2847, 0
  %v2849 = vsub.s32 0, %v2847
  %v2850 = vsel %vm2848, %v2849, %v2847
  %v2851 = vclz %v2850
  %v2852 = vsub.s32 %v2851, 2
  %vm2853 = vcmp.gt.s32.totalorder 0, %v2852
  %v2854 = vsel %vm2853, 0, %v2852
  %v2855 = vsub.s32 32, %v2854
  %v2856 = vshll.u32 %v2847, %v2854
  %v2857 = vshrl.u32 %v2839, %v2855
  %v2858 = vor.u32 %v2856, %v2857
  %v2859 = vsub.s32 4294967266, %v2854
  %v2860 = vadd.s32 %v2859, 127
  %v2861 = vshll.u32 %v2860, 23
  %v2862 = vor.u32 4788187, %v2861
  %v2863 = vand.u32 2147483647, %v2862
  %v2865 = vcvt.s32.f32 %v2858
  %v2866 = vmul.f32 %v2865, %v2863
  %v2867 = vxor.u32 %v2866, 2147483648
  %v2868 = vsel %vm2785, %v2867, %v2866
  %v2869 = vsub.s32 4, %v2845
  %v2870 = vsel %vm2785, %v2869, %v2845
  %v2871 = vsel %vm2784, %v1119, %v2868
  %v2872 = vsel %vm2784, 0, %v2870
  %v2873 = vcosq.f32.pop %v2871
  %v2874 = vsinq.f32.pop %v2871
  %vm2875 = vweird.f32 %v1119
  %v2876 = vand.u32 %v2872, 3
  %vm2877 = vcmp.lt.s32.totalorder %v2876, 2
  %vm2878 = vcmp.eq.s32.totalorder %v2876, 0
  %v2879 = vxor.u32 %v2874, 2147483648
  %v2880 = vsel %vm2878, %v2873, %v2879
  %vm2881 = vcmp.eq.s32.totalorder %v2876, 2
  %v2882 = vxor.u32 %v2873, 2147483648
  %v2883 = vsel %vm2881, %v2882, %v2874
  %v2884 = vsel %vm2877, %v2880, %v2883
  %v2885 = vsel %vm2875, nan, %v2884
  %v2886 = vand.u32 2147483647, %v1120
  %vm2887 = vcmp.le.f32.partialorder %v2886, 0.7853982
  %vm2888 = vcmp.lt.s32.totalorder %v1120, 0
  %v2889 = vand.u32 %v1120, 2139095040
  %v2890 = vshrl.u32 %v2889, 23
  %v2891 = vsub.s32 %v2890, 127
  %v2892 = vand.u32 2147483647, %v1120
  %v2893 = vand.u32 %v2892, 8388607
  %v2894 = vor.u32 %v2893, 8388608
  %v2895 = vsub.s32 0, %v2894
  %v2896 = vadd.s32 %v2891, 1
  %vm2897 = vcmp.gt.s32.totalorder %v2896, 0
  %v2898 = vsel %vm2897, %v2896, 0
  %v2899 = vshrl.u32 %v2898, 5
  %v2900 = vand.u32 %v2898, 31
  %v2901 = vsub.s32 32, %v2900
  %v2902 = vshrl.u32 683565275, %v2901
  %v2903 = vshll.u32 683565275, %v2900
  %v2904 = vshrl.u32 2475754826, %v2901
  %v2905 = vor.u32 %v2903, %v2904
  %v2906 = vshll.u32 2475754826, %v2900
  %v2907 = vshrl.u32 2131351028, %v2901
  %v2908 = vor.u32 %v2906, %v2907
  %v2909 = vshll.u32 2131351028, %v2900
  %v2910 = vshrl.u32 2102212464, %v2901
  %v2911 = vor.u32 %v2909, %v2910
  %v2912 = vshll.u32 2102212464, %v2900
  %v2913 = vshrl.u32 920167782, %v2901
  %v2914 = vor.u32 %v2912, %v2913
  %v2915 = vshll.u32 920167782, %v2900
  %v2916 = vshrl.u32 1326507024, %v2901
  %v2917 = vor.u32 %v2915, %v2916
  %vm2918 = vcmp.lt.s32.totalorder %v2899, 1
  %vm2919 = vcmp.lt.s32.totalorder %v2899, 2
  %vm2920 = vcmp.lt.s32.totalorder %v2899, 3
  %vm2921 = vcmp.lt.s32.totalorder %v2899, 4
  %v2922 = vsel %vm2918, %v2902, %v2905
  %v2923 = vsel %vm2921, %v2911, 2102212464
  %v2924 = vsel %vm2920, %v2908, %v2923
  %v2925 = vsel %vm2919, %v2922, %v2924
  %v2926 = vsel %vm2918, %v2905, %v2908
  %v2927 = vsel %vm2921, %v2914, 920167782
  %v2928 = vsel %vm2920, %v2911, %v2927
  %v2929 = vsel %vm2919, %v2926, %v2928
  %v2930 = vsel %vm2918, %v2908, %v2911
  %v2931 = vsel %vm2921, %v2917, 1326507024
  %v2932 = vsel %vm2920, %v2914, %v2931
  %v2933 = vsel %vm2919, %v2930, %v2932
  %v2934 = vshll.u32 %v2894, 8
  %v2935 = vmul.u32.u64.compose %v2934, %v2933
  %v2936 = vextract.low.u32 %v2935
  %v2937 = vextract.high.u32 %v2935
  %v2938 = vmul.u32.u64.compose %v2934, %v2929
  %v2939 = vextract.low.u32 %v2938
  %v2940 = vextract.high.u32 %v2938
  %v2941 = vmul.u32 %v2934, %v2925
  %v2942 = vadd.s32 %v2937, %v2939
  %vm2943 = vc.u32 %v2937, %v2939
  %v2944 = vadd.s32 %v2940, 1
  %v2945 = vsel %vm2943, %v2944, %v2940
  %v2946 = vadd.s32 %v2941, %v2945
  %v2947 = vadd.s32 %v2946, 536870912
  %v2948 = vshrl.u32 %v2947, 30
  %v2949 = vshll.u32 %v2948, 30
  %v2950 = vsub.s32 %v2946, %v2949
  %vm2951 = vcmp.lt.s32.totalorder %v2950, 0
  %v2952 = vsub.s32 0, %v2950
  %v2953 = vsel %vm2951, %v2952, %v2950
  %v2954 = vclz %v2953
  %v2955 = vsub.s32 %v2954, 2
  %vm2956 = vcmp.gt.s32.totalorder 0, %v2955
  %v2957 = vsel %vm2956, 0, %v2955
  %v2958 = vsub.s32 32, %v2957
  %v2959 = vshll.u32 %v2950, %v2957
  %v2960 = vshrl.u32 %v2942, %v2958
  %v2961 = vor.u32 %v2959, %v2960
  %v2962 = vsub.s32 4294967266, %v2957
  %v2963 = vadd.s32 %v2962, 127
  %v2964 = vshll.u32 %v2963, 23
  %v2965 = vor.u32 4788187, %v2964
  %v2966 = vand.u32 2147483647, %v2965
  %v2968 = vcvt.s32.f32 %v2961
  %v2969 = vmul.f32 %v2968, %v2966
  %v2970 = vxor.u32 %v2969, 2147483648
  %v2971 = vsel %vm2888, %v2970, %v2969
  %v2972 = vsub.s32 4, %v2948
  %v2973 = vsel %vm2888, %v2972, %v2948
  %v2974 = vsel %vm2887, %v1120, %v2971
  %v2975 = vsel %vm2887, 0, %v2973
  %v2976 = vcosq.f32.pop %v2974
  %v2977 = vsinq.f32.pop %v2974
  %vm2978 = vweird.f32 %v1120
  %v2979 = vand.u32 %v2975, 3
  %vm2980 = vcmp.lt.s32.totalorder %v2979, 2
  %vm2981 = vcmp.eq.s32.totalorder %v2979, 0
  %v2982 = vxor.u32 %v2977, 2147483648
  %v2983 = vsel %vm2981, %v2976, %v2982
  %vm2984 = vcmp.eq.s32.totalorder %v2979, 2
  %v2985 = vxor.u32 %v2976, 2147483648
  %v2986 = vsel %vm2984, %v2985, %v2977
  %v2987 = vsel %vm2980, %v2983, %v2986
  %v2988 = vsel %vm2978, nan, %v2987
  %v2989 = vand.u32 2147483647, %v1121
  %vm2990 = vcmp.le.f32.partialorder %v2989, 0.7853982
  %vm2991 = vcmp.lt.s32.totalorder %v1121, 0
  %v2992 = vand.u32 %v1121, 2139095040
  %v2993 = vshrl.u32 %v2992, 23
  %v2994 = vsub.s32 %v2993, 127
  %v2995 = vand.u32 2147483647, %v1121
  %v2996 = vand.u32 %v2995, 8388607
  %v2997 = vor.u32 %v2996, 8388608
  %v2998 = vsub.s32 0, %v2997
  %v2999 = vadd.s32 %v2994, 1
  %vm3000 = vcmp.gt.s32.totalorder %v2999, 0
  %v3001 = vsel %vm3000, %v2999, 0
  %v3002 = vshrl.u32 %v3001, 5
  %v3003 = vand.u32 %v3001, 31
  %v3004 = vsub.s32 32, %v3003
  %v3005 = vshrl.u32 683565275, %v3004
  %v3006 = vshll.u32 683565275, %v3003
  %v3007 = vshrl.u32 2475754826, %v3004
  %v3008 = vor.u32 %v3006, %v3007
  %v3009 = vshll.u32 2475754826, %v3003
  %v3010 = vshrl.u32 2131351028, %v3004
  %v3011 = vor.u32 %v3009, %v3010
  %v3012 = vshll.u32 2131351028, %v3003
  %v3013 = vshrl.u32 2102212464, %v3004
  %v3014 = vor.u32 %v3012, %v3013
  %v3015 = vshll.u32 2102212464, %v3003
  %v3016 = vshrl.u32 920167782, %v3004
  %v3017 = vor.u32 %v3015, %v3016
  %v3018 = vshll.u32 920167782, %v3003
  %v3019 = vshrl.u32 1326507024, %v3004
  %v3020 = vor.u32 %v3018, %v3019
  %vm3021 = vcmp.lt.s32.totalorder %v3002, 1
  %vm3022 = vcmp.lt.s32.totalorder %v3002, 2
  %vm3023 = vcmp.lt.s32.totalorder %v3002, 3
  %vm3024 = vcmp.lt.s32.totalorder %v3002, 4
  %v3025 = vsel %vm3021, %v3005, %v3008
  %v3026 = vsel %vm3024, %v3014, 2102212464
  %v3027 = vsel %vm3023, %v3011, %v3026
  %v3028 = vsel %vm3022, %v3025, %v3027
  %v3029 = vsel %vm3021, %v3008, %v3011
  %v3030 = vsel %vm3024, %v3017, 920167782
  %v3031 = vsel %vm3023, %v3014, %v3030
  %v3032 = vsel %vm3022, %v3029, %v3031
  %v3033 = vsel %vm3021, %v3011, %v3014
  %v3034 = vsel %vm3024, %v3020, 1326507024
  %v3035 = vsel %vm3023, %v3017, %v3034
  %v3036 = vsel %vm3022, %v3033, %v3035
  %v3037 = vshll.u32 %v2997, 8
  %v3038 = vmul.u32.u64.compose %v3037, %v3036
  %v3039 = vextract.low.u32 %v3038
  %v3040 = vextract.high.u32 %v3038
  %v3041 = vmul.u32.u64.compose %v3037, %v3032
  %v3042 = vextract.low.u32 %v3041
  %v3043 = vextract.high.u32 %v3041
  %v3044 = vmul.u32 %v3037, %v3028
  %v3045 = vadd.s32 %v3040, %v3042
  %vm3046 = vc.u32 %v3040, %v3042
  %v3047 = vadd.s32 %v3043, 1
  %v3048 = vsel %vm3046, %v3047, %v3043
  %v3049 = vadd.s32 %v3044, %v3048
  %v3050 = vadd.s32 %v3049, 536870912
  %v3051 = vshrl.u32 %v3050, 30
  %v3052 = vshll.u32 %v3051, 30
  %v3053 = vsub.s32 %v3049, %v3052
  %vm3054 = vcmp.lt.s32.totalorder %v3053, 0
  %v3055 = vsub.s32 0, %v3053
  %v3056 = vsel %vm3054, %v3055, %v3053
  %v3057 = vclz %v3056
  %v3058 = vsub.s32 %v3057, 2
  %vm3059 = vcmp.gt.s32.totalorder 0, %v3058
  %v3060 = vsel %vm3059, 0, %v3058
  %v3061 = vsub.s32 32, %v3060
  %v3062 = vshll.u32 %v3053, %v3060
  %v3063 = vshrl.u32 %v3045, %v3061
  %v3064 = vor.u32 %v3062, %v3063
  %v3065 = vsub.s32 4294967266, %v3060
  %v3066 = vadd.s32 %v3065, 127
  %v3067 = vshll.u32 %v3066, 23
  %v3068 = vor.u32 4788187, %v3067
  %v3069 = vand.u32 2147483647, %v3068
  %v3071 = vcvt.s32.f32 %v3064
  %v3072 = vmul.f32 %v3071, %v3069
  %v3073 = vxor.u32 %v3072, 2147483648
  %v3074 = vsel %vm2991, %v3073, %v3072
  %v3075 = vsub.s32 4, %v3051
  %v3076 = vsel %vm2991, %v3075, %v3051
  %v3077 = vsel %vm2990, %v1121, %v3074
  %v3078 = vsel %vm2990, 0, %v3076
  %v3079 = vcosq.f32.pop %v3077
  %v3080 = vsinq.f32.pop %v3077
  %vm3081 = vweird.f32 %v1121
  %v3082 = vand.u32 %v3078, 3
  %vm3083 = vcmp.lt.s32.totalorder %v3082, 2
  %vm3084 = vcmp.eq.s32.totalorder %v3082, 0
  %v3085 = vxor.u32 %v3080, 2147483648
  %v3086 = vsel %vm3084, %v3079, %v3085
  %vm3087 = vcmp.eq.s32.totalorder %v3082, 2
  %v3088 = vxor.u32 %v3079, 2147483648
  %v3089 = vsel %vm3087, %v3088, %v3080
  %v3090 = vsel %vm3083, %v3086, %v3089
  %v3091 = vsel %vm3081, nan, %v3090
  %v3092 = vand.u32 2147483647, %v1122
  %vm3093 = vcmp.le.f32.partialorder %v3092, 0.7853982
  %vm3094 = vcmp.lt.s32.totalorder %v1122, 0
  %v3095 = vand.u32 %v1122, 2139095040
  %v3096 = vshrl.u32 %v3095, 23
  %v3097 = vsub.s32 %v3096, 127
  %v3098 = vand.u32 2147483647, %v1122
  %v3099 = vand.u32 %v3098, 8388607
  %v3100 = vor.u32 %v3099, 8388608
  %v3101 = vsub.s32 0, %v3100
  %v3102 = vadd.s32 %v3097, 1
  %vm3103 = vcmp.gt.s32.totalorder %v3102, 0
  %v3104 = vsel %vm3103, %v3102, 0
  %v3105 = vshrl.u32 %v3104, 5
  %v3106 = vand.u32 %v3104, 31
  %v3107 = vsub.s32 32, %v3106
  %v3108 = vshrl.u32 683565275, %v3107
  %v3109 = vshll.u32 683565275, %v3106
  %v3110 = vshrl.u32 2475754826, %v3107
  %v3111 = vor.u32 %v3109, %v3110
  %v3112 = vshll.u32 2475754826, %v3106
  %v3113 = vshrl.u32 2131351028, %v3107
  %v3114 = vor.u32 %v3112, %v3113
  %v3115 = vshll.u32 2131351028, %v3106
  %v3116 = vshrl.u32 2102212464, %v3107
  %v3117 = vor.u32 %v3115, %v3116
  %v3118 = vshll.u32 2102212464, %v3106
  %v3119 = vshrl.u32 920167782, %v3107
  %v3120 = vor.u32 %v3118, %v3119
  %v3121 = vshll.u32 920167782, %v3106
  %v3122 = vshrl.u32 1326507024, %v3107
  %v3123 = vor.u32 %v3121, %v3122
  %vm3124 = vcmp.lt.s32.totalorder %v3105, 1
  %vm3125 = vcmp.lt.s32.totalorder %v3105, 2
  %vm3126 = vcmp.lt.s32.totalorder %v3105, 3
  %vm3127 = vcmp.lt.s32.totalorder %v3105, 4
  %v3128 = vsel %vm3124, %v3108, %v3111
  %v3129 = vsel %vm3127, %v3117, 2102212464
  %v3130 = vsel %vm3126, %v3114, %v3129
  %v3131 = vsel %vm3125, %v3128, %v3130
  %v3132 = vsel %vm3124, %v3111, %v3114
  %v3133 = vsel %vm3127, %v3120, 920167782
  %v3134 = vsel %vm3126, %v3117, %v3133
  %v3135 = vsel %vm3125, %v3132, %v3134
  %v3136 = vsel %vm3124, %v3114, %v3117
  %v3137 = vsel %vm3127, %v3123, 1326507024
  %v3138 = vsel %vm3126, %v3120, %v3137
  %v3139 = vsel %vm3125, %v3136, %v3138
  %v3140 = vshll.u32 %v3100, 8
  %v3141 = vmul.u32.u64.compose %v3140, %v3139
  %v3142 = vextract.low.u32 %v3141
  %v3143 = vextract.high.u32 %v3141
  %v3144 = vmul.u32.u64.compose %v3140, %v3135
  %v3145 = vextract.low.u32 %v3144
  %v3146 = vextract.high.u32 %v3144
  %v3147 = vmul.u32 %v3140, %v3131
  %v3148 = vadd.s32 %v3143, %v3145
  %vm3149 = vc.u32 %v3143, %v3145
  %v3150 = vadd.s32 %v3146, 1
  %v3151 = vsel %vm3149, %v3150, %v3146
  %v3152 = vadd.s32 %v3147, %v3151
  %v3153 = vadd.s32 %v3152, 536870912
  %v3154 = vshrl.u32 %v3153, 30
  %v3155 = vshll.u32 %v3154, 30
  %v3156 = vsub.s32 %v3152, %v3155
  %vm3157 = vcmp.lt.s32.totalorder %v3156, 0
  %v3158 = vsub.s32 0, %v3156
  %v3159 = vsel %vm3157, %v3158, %v3156
  %v3160 = vclz %v3159
  %v3161 = vsub.s32 %v3160, 2
  %vm3162 = vcmp.gt.s32.totalorder 0, %v3161
  %v3163 = vsel %vm3162, 0, %v3161
  %v3164 = vsub.s32 32, %v3163
  %v3165 = vshll.u32 %v3156, %v3163
  %v3166 = vshrl.u32 %v3148, %v3164
  %v3167 = vor.u32 %v3165, %v3166
  %v3168 = vsub.s32 4294967266, %v3163
  %v3169 = vadd.s32 %v3168, 127
  %v3170 = vshll.u32 %v3169, 23
  %v3171 = vor.u32 4788187, %v3170
  %v3172 = vand.u32 2147483647, %v3171
  %v3174 = vcvt.s32.f32 %v3167
  %v3175 = vmul.f32 %v3174, %v3172
  %v3176 = vxor.u32 %v3175, 2147483648
  %v3177 = vsel %vm3094, %v3176, %v3175
  %v3178 = vsub.s32 4, %v3154
  %v3179 = vsel %vm3094, %v3178, %v3154
  %v3180 = vsel %vm3093, %v1122, %v3177
  %v3181 = vsel %vm3093, 0, %v3179
  %v3182 = vcosq.f32.pop %v3180
  %v3183 = vsinq.f32.pop %v3180
  %vm3184 = vweird.f32 %v1122
  %v3185 = vand.u32 %v3181, 3
  %vm3186 = vcmp.lt.s32.totalorder %v3185, 2
  %vm3187 = vcmp.eq.s32.totalorder %v3185, 0
  %v3188 = vxor.u32 %v3183, 2147483648
  %v3189 = vsel %vm3187, %v3182, %v3188
  %vm3190 = vcmp.eq.s32.totalorder %v3185, 2
  %v3191 = vxor.u32 %v3182, 2147483648
  %v3192 = vsel %vm3190, %v3191, %v3183
  %v3193 = vsel %vm3186, %v3189, %v3192
  %v3194 = vsel %vm3184, nan, %v3193
  %v3195 = vand.u32 2147483647, %v1123
  %vm3196 = vcmp.le.f32.partialorder %v3195, 0.7853982
  %vm3197 = vcmp.lt.s32.totalorder %v1123, 0
  %v3198 = vand.u32 %v1123, 2139095040
  %v3199 = vshrl.u32 %v3198, 23
  %v3200 = vsub.s32 %v3199, 127
  %v3201 = vand.u32 2147483647, %v1123
  %v3202 = vand.u32 %v3201, 8388607
  %v3203 = vor.u32 %v3202, 8388608
  %v3204 = vsub.s32 0, %v3203
  %v3205 = vadd.s32 %v3200, 1
  %vm3206 = vcmp.gt.s32.totalorder %v3205, 0
  %v3207 = vsel %vm3206, %v3205, 0
  %v3208 = vshrl.u32 %v3207, 5
  %v3209 = vand.u32 %v3207, 31
  %v3210 = vsub.s32 32, %v3209
  %v3211 = vshrl.u32 683565275, %v3210
  %v3212 = vshll.u32 683565275, %v3209
  %v3213 = vshrl.u32 2475754826, %v3210
  %v3214 = vor.u32 %v3212, %v3213
  %v3215 = vshll.u32 2475754826, %v3209
  %v3216 = vshrl.u32 2131351028, %v3210
  %v3217 = vor.u32 %v3215, %v3216
  %v3218 = vshll.u32 2131351028, %v3209
  %v3219 = vshrl.u32 2102212464, %v3210
  %v3220 = vor.u32 %v3218, %v3219
  %v3221 = vshll.u32 2102212464, %v3209
  %v3222 = vshrl.u32 920167782, %v3210
  %v3223 = vor.u32 %v3221, %v3222
  %v3224 = vshll.u32 920167782, %v3209
  %v3225 = vshrl.u32 1326507024, %v3210
  %v3226 = vor.u32 %v3224, %v3225
  %vm3227 = vcmp.lt.s32.totalorder %v3208, 1
  %vm3228 = vcmp.lt.s32.totalorder %v3208, 2
  %vm3229 = vcmp.lt.s32.totalorder %v3208, 3
  %vm3230 = vcmp.lt.s32.totalorder %v3208, 4
  %v3231 = vsel %vm3227, %v3211, %v3214
  %v3232 = vsel %vm3230, %v3220, 2102212464
  %v3233 = vsel %vm3229, %v3217, %v3232
  %v3234 = vsel %vm3228, %v3231, %v3233
  %v3235 = vsel %vm3227, %v3214, %v3217
  %v3236 = vsel %vm3230, %v3223, 920167782
  %v3237 = vsel %vm3229, %v3220, %v3236
  %v3238 = vsel %vm3228, %v3235, %v3237
  %v3239 = vsel %vm3227, %v3217, %v3220
  %v3240 = vsel %vm3230, %v3226, 1326507024
  %v3241 = vsel %vm3229, %v3223, %v3240
  %v3242 = vsel %vm3228, %v3239, %v3241
  %v3243 = vshll.u32 %v3203, 8
  %v3244 = vmul.u32.u64.compose %v3243, %v3242
  %v3245 = vextract.low.u32 %v3244
  %v3246 = vextract.high.u32 %v3244
  %v3247 = vmul.u32.u64.compose %v3243, %v3238
  %v3248 = vextract.low.u32 %v3247
  %v3249 = vextract.high.u32 %v3247
  %v3250 = vmul.u32 %v3243, %v3234
  %v3251 = vadd.s32 %v3246, %v3248
  %vm3252 = vc.u32 %v3246, %v3248
  %v3253 = vadd.s32 %v3249, 1
  %v3254 = vsel %vm3252, %v3253, %v3249
  %v3255 = vadd.s32 %v3250, %v3254
  %v3256 = vadd.s32 %v3255, 536870912
  %v3257 = vshrl.u32 %v3256, 30
  %v3258 = vshll.u32 %v3257, 30
  %v3259 = vsub.s32 %v3255, %v3258
  %vm3260 = vcmp.lt.s32.totalorder %v3259, 0
  %v3261 = vsub.s32 0, %v3259
  %v3262 = vsel %vm3260, %v3261, %v3259
  %v3263 = vclz %v3262
  %v3264 = vsub.s32 %v3263, 2
  %vm3265 = vcmp.gt.s32.totalorder 0, %v3264
  %v3266 = vsel %vm3265, 0, %v3264
  %v3267 = vsub.s32 32, %v3266
  %v3268 = vshll.u32 %v3259, %v3266
  %v3269 = vshrl.u32 %v3251, %v3267
  %v3270 = vor.u32 %v3268, %v3269
  %v3271 = vsub.s32 4294967266, %v3266
  %v3272 = vadd.s32 %v3271, 127
  %v3273 = vshll.u32 %v3272, 23
  %v3274 = vor.u32 4788187, %v3273
  %v3275 = vand.u32 2147483647, %v3274
  %v3277 = vcvt.s32.f32 %v3270
  %v3278 = vmul.f32 %v3277, %v3275
  %v3279 = vxor.u32 %v3278, 2147483648
  %v3280 = vsel %vm3197, %v3279, %v3278
  %v3281 = vsub.s32 4, %v3257
  %v3282 = vsel %vm3197, %v3281, %v3257
  %v3283 = vsel %vm3196, %v1123, %v3280
  %v3284 = vsel %vm3196, 0, %v3282
  %v3285 = vcosq.f32.pop %v3283
  %v3286 = vsinq.f32.pop %v3283
  %vm3287 = vweird.f32 %v1123
  %v3288 = vand.u32 %v3284, 3
  %vm3289 = vcmp.lt.s32.totalorder %v3288, 2
  %vm3290 = vcmp.eq.s32.totalorder %v3288, 0
  %v3291 = vxor.u32 %v3286, 2147483648
  %v3292 = vsel %vm3290, %v3285, %v3291
  %vm3293 = vcmp.eq.s32.totalorder %v3288, 2
  %v3294 = vxor.u32 %v3285, 2147483648
  %v3295 = vsel %vm3293, %v3294, %v3286
  %v3296 = vsel %vm3289, %v3292, %v3295
  %v3297 = vsel %vm3287, nan, %v3296
  %v3298 = vand.u32 2147483647, %v1124
  %vm3299 = vcmp.le.f32.partialorder %v3298, 0.7853982
  %vm3300 = vcmp.lt.s32.totalorder %v1124, 0
  %v3301 = vand.u32 %v1124, 2139095040
  %v3302 = vshrl.u32 %v3301, 23
  %v3303 = vsub.s32 %v3302, 127
  %v3304 = vand.u32 2147483647, %v1124
  %v3305 = vand.u32 %v3304, 8388607
  %v3306 = vor.u32 %v3305, 8388608
  %v3307 = vsub.s32 0, %v3306
  %v3308 = vadd.s32 %v3303, 1
  %vm3309 = vcmp.gt.s32.totalorder %v3308, 0
  %v3310 = vsel %vm3309, %v3308, 0
  %v3311 = vshrl.u32 %v3310, 5
  %v3312 = vand.u32 %v3310, 31
  %v3313 = vsub.s32 32, %v3312
  %v3314 = vshrl.u32 683565275, %v3313
  %v3315 = vshll.u32 683565275, %v3312
  %v3316 = vshrl.u32 2475754826, %v3313
  %v3317 = vor.u32 %v3315, %v3316
  %v3318 = vshll.u32 2475754826, %v3312
  %v3319 = vshrl.u32 2131351028, %v3313
  %v3320 = vor.u32 %v3318, %v3319
  %v3321 = vshll.u32 2131351028, %v3312
  %v3322 = vshrl.u32 2102212464, %v3313
  %v3323 = vor.u32 %v3321, %v3322
  %v3324 = vshll.u32 2102212464, %v3312
  %v3325 = vshrl.u32 920167782, %v3313
  %v3326 = vor.u32 %v3324, %v3325
  %v3327 = vshll.u32 920167782, %v3312
  %v3328 = vshrl.u32 1326507024, %v3313
  %v3329 = vor.u32 %v3327, %v3328
  %vm3330 = vcmp.lt.s32.totalorder %v3311, 1
  %vm3331 = vcmp.lt.s32.totalorder %v3311, 2
  %vm3332 = vcmp.lt.s32.totalorder %v3311, 3
  %vm3333 = vcmp.lt.s32.totalorder %v3311, 4
  %v3334 = vsel %vm3330, %v3314, %v3317
  %v3335 = vsel %vm3333, %v3323, 2102212464
  %v3336 = vsel %vm3332, %v3320, %v3335
  %v3337 = vsel %vm3331, %v3334, %v3336
  %v3338 = vsel %vm3330, %v3317, %v3320
  %v3339 = vsel %vm3333, %v3326, 920167782
  %v3340 = vsel %vm3332, %v3323, %v3339
  %v3341 = vsel %vm3331, %v3338, %v3340
  %v3342 = vsel %vm3330, %v3320, %v3323
  %v3343 = vsel %vm3333, %v3329, 1326507024
  %v3344 = vsel %vm3332, %v3326, %v3343
  %v3345 = vsel %vm3331, %v3342, %v3344
  %v3346 = vshll.u32 %v3306, 8
  %v3347 = vmul.u32.u64.compose %v3346, %v3345
  %v3348 = vextract.low.u32 %v3347
  %v3349 = vextract.high.u32 %v3347
  %v3350 = vmul.u32.u64.compose %v3346, %v3341
  %v3351 = vextract.low.u32 %v3350
  %v3352 = vextract.high.u32 %v3350
  %v3353 = vmul.u32 %v3346, %v3337
  %v3354 = vadd.s32 %v3349, %v3351
  %vm3355 = vc.u32 %v3349, %v3351
  %v3356 = vadd.s32 %v3352, 1
  %v3357 = vsel %vm3355, %v3356, %v3352
  %v3358 = vadd.s32 %v3353, %v3357
  %v3359 = vadd.s32 %v3358, 536870912
  %v3360 = vshrl.u32 %v3359, 30
  %v3361 = vshll.u32 %v3360, 30
  %v3362 = vsub.s32 %v3358, %v3361
  %vm3363 = vcmp.lt.s32.totalorder %v3362, 0
  %v3364 = vsub.s32 0, %v3362
  %v3365 = vsel %vm3363, %v3364, %v3362
  %v3366 = vclz %v3365
  %v3367 = vsub.s32 %v3366, 2
  %vm3368 = vcmp.gt.s32.totalorder 0, %v3367
  %v3369 = vsel %vm3368, 0, %v3367
  %v3370 = vsub.s32 32, %v3369
  %v3371 = vshll.u32 %v3362, %v3369
  %v3372 = vshrl.u32 %v3354, %v3370
  %v3373 = vor.u32 %v3371, %v3372
  %v3374 = vsub.s32 4294967266, %v3369
  %v3375 = vadd.s32 %v3374, 127
  %v3376 = vshll.u32 %v3375, 23
  %v3377 = vor.u32 4788187, %v3376
  %v3378 = vand.u32 2147483647, %v3377
  %v3380 = vcvt.s32.f32 %v3373
  %v3381 = vmul.f32 %v3380, %v3378
  %v3382 = vxor.u32 %v3381, 2147483648
  %v3383 = vsel %vm3300, %v3382, %v3381
  %v3384 = vsub.s32 4, %v3360
  %v3385 = vsel %vm3300, %v3384, %v3360
  %v3386 = vsel %vm3299, %v1124, %v3383
  %v3387 = vsel %vm3299, 0, %v3385
  %v3388 = vcosq.f32.pop %v3386
  %v3389 = vsinq.f32.pop %v3386
  %vm3390 = vweird.f32 %v1124
  %v3391 = vand.u32 %v3387, 3
  %vm3392 = vcmp.lt.s32.totalorder %v3391, 2
  %vm3393 = vcmp.eq.s32.totalorder %v3391, 0
  %v3394 = vxor.u32 %v3389, 2147483648
  %v3395 = vsel %vm3393, %v3388, %v3394
  %vm3396 = vcmp.eq.s32.totalorder %v3391, 2
  %v3397 = vxor.u32 %v3388, 2147483648
  %v3398 = vsel %vm3396, %v3397, %v3389
  %v3399 = vsel %vm3392, %v3395, %v3398
  %v3400 = vsel %vm3390, nan, %v3399
  %v3401 = vand.u32 2147483647, %v1125
  %vm3402 = vcmp.le.f32.partialorder %v3401, 0.7853982
  %vm3403 = vcmp.lt.s32.totalorder %v1125, 0
  %v3404 = vand.u32 %v1125, 2139095040
  %v3405 = vshrl.u32 %v3404, 23
  %v3406 = vsub.s32 %v3405, 127
  %v3407 = vand.u32 2147483647, %v1125
  %v3408 = vand.u32 %v3407, 8388607
  %v3409 = vor.u32 %v3408, 8388608
  %v3410 = vsub.s32 0, %v3409
  %v3411 = vadd.s32 %v3406, 1
  %vm3412 = vcmp.gt.s32.totalorder %v3411, 0
  %v3413 = vsel %vm3412, %v3411, 0
  %v3414 = vshrl.u32 %v3413, 5
  %v3415 = vand.u32 %v3413, 31
  %v3416 = vsub.s32 32, %v3415
  %v3417 = vshrl.u32 683565275, %v3416
  %v3418 = vshll.u32 683565275, %v3415
  %v3419 = vshrl.u32 2475754826, %v3416
  %v3420 = vor.u32 %v3418, %v3419
  %v3421 = vshll.u32 2475754826, %v3415
  %v3422 = vshrl.u32 2131351028, %v3416
  %v3423 = vor.u32 %v3421, %v3422
  %v3424 = vshll.u32 2131351028, %v3415
  %v3425 = vshrl.u32 2102212464, %v3416
  %v3426 = vor.u32 %v3424, %v3425
  %v3427 = vshll.u32 2102212464, %v3415
  %v3428 = vshrl.u32 920167782, %v3416
  %v3429 = vor.u32 %v3427, %v3428
  %v3430 = vshll.u32 920167782, %v3415
  %v3431 = vshrl.u32 1326507024, %v3416
  %v3432 = vor.u32 %v3430, %v3431
  %vm3433 = vcmp.lt.s32.totalorder %v3414, 1
  %vm3434 = vcmp.lt.s32.totalorder %v3414, 2
  %vm3435 = vcmp.lt.s32.totalorder %v3414, 3
  %vm3436 = vcmp.lt.s32.totalorder %v3414, 4
  %v3437 = vsel %vm3433, %v3417, %v3420
  %v3438 = vsel %vm3436, %v3426, 2102212464
  %v3439 = vsel %vm3435, %v3423, %v3438
  %v3440 = vsel %vm3434, %v3437, %v3439
  %v3441 = vsel %vm3433, %v3420, %v3423
  %v3442 = vsel %vm3436, %v3429, 920167782
  %v3443 = vsel %vm3435, %v3426, %v3442
  %v3444 = vsel %vm3434, %v3441, %v3443
  %v3445 = vsel %vm3433, %v3423, %v3426
  %v3446 = vsel %vm3436, %v3432, 1326507024
  %v3447 = vsel %vm3435, %v3429, %v3446
  %v3448 = vsel %vm3434, %v3445, %v3447
  %v3449 = vshll.u32 %v3409, 8
  %v3450 = vmul.u32.u64.compose %v3449, %v3448
  %v3451 = vextract.low.u32 %v3450
  %v3452 = vextract.high.u32 %v3450
  %v3453 = vmul.u32.u64.compose %v3449, %v3444
  %v3454 = vextract.low.u32 %v3453
  %v3455 = vextract.high.u32 %v3453
  %v3456 = vmul.u32 %v3449, %v3440
  %v3457 = vadd.s32 %v3452, %v3454
  %vm3458 = vc.u32 %v3452, %v3454
  %v3459 = vadd.s32 %v3455, 1
  %v3460 = vsel %vm3458, %v3459, %v3455
  %v3461 = vadd.s32 %v3456, %v3460
  %v3462 = vadd.s32 %v3461, 536870912
  %v3463 = vshrl.u32 %v3462, 30
  %v3464 = vshll.u32 %v3463, 30
  %v3465 = vsub.s32 %v3461, %v3464
  %vm3466 = vcmp.lt.s32.totalorder %v3465, 0
  %v3467 = vsub.s32 0, %v3465
  %v3468 = vsel %vm3466, %v3467, %v3465
  %v3469 = vclz %v3468
  %v3470 = vsub.s32 %v3469, 2
  %vm3471 = vcmp.gt.s32.totalorder 0, %v3470
  %v3472 = vsel %vm3471, 0, %v3470
  %v3473 = vsub.s32 32, %v3472
  %v3474 = vshll.u32 %v3465, %v3472
  %v3475 = vshrl.u32 %v3457, %v3473
  %v3476 = vor.u32 %v3474, %v3475
  %v3477 = vsub.s32 4294967266, %v3472
  %v3478 = vadd.s32 %v3477, 127
  %v3479 = vshll.u32 %v3478, 23
  %v3480 = vor.u32 4788187, %v3479
  %v3481 = vand.u32 2147483647, %v3480
  %v3483 = vcvt.s32.f32 %v3476
  %v3484 = vmul.f32 %v3483, %v3481
  %v3485 = vxor.u32 %v3484, 2147483648
  %v3486 = vsel %vm3403, %v3485, %v3484
  %v3487 = vsub.s32 4, %v3463
  %v3488 = vsel %vm3403, %v3487, %v3463
  %v3489 = vsel %vm3402, %v1125, %v3486
  %v3490 = vsel %vm3402, 0, %v3488
  %v3491 = vcosq.f32.pop %v3489
  %v3492 = vsinq.f32.pop %v3489
  %vm3493 = vweird.f32 %v1125
  %v3494 = vand.u32 %v3490, 3
  %vm3495 = vcmp.lt.s32.totalorder %v3494, 2
  %vm3496 = vcmp.eq.s32.totalorder %v3494, 0
  %v3497 = vxor.u32 %v3492, 2147483648
  %v3498 = vsel %vm3496, %v3491, %v3497
  %vm3499 = vcmp.eq.s32.totalorder %v3494, 2
  %v3500 = vxor.u32 %v3491, 2147483648
  %v3501 = vsel %vm3499, %v3500, %v3492
  %v3502 = vsel %vm3495, %v3498, %v3501
  %v3503 = vsel %vm3493, nan, %v3502
  %v3504 = vand.u32 2147483647, %v1126
  %vm3505 = vcmp.le.f32.partialorder %v3504, 0.7853982
  %vm3506 = vcmp.lt.s32.totalorder %v1126, 0
  %v3507 = vand.u32 %v1126, 2139095040
  %v3508 = vshrl.u32 %v3507, 23
  %v3509 = vsub.s32 %v3508, 127
  %v3510 = vand.u32 2147483647, %v1126
  %v3511 = vand.u32 %v3510, 8388607
  %v3512 = vor.u32 %v3511, 8388608
  %v3513 = vsub.s32 0, %v3512
  %v3514 = vadd.s32 %v3509, 1
  %vm3515 = vcmp.gt.s32.totalorder %v3514, 0
  %v3516 = vsel %vm3515, %v3514, 0
  %v3517 = vshrl.u32 %v3516, 5
  %v3518 = vand.u32 %v3516, 31
  %v3519 = vsub.s32 32, %v3518
  %v3520 = vshrl.u32 683565275, %v3519
  %v3521 = vshll.u32 683565275, %v3518
  %v3522 = vshrl.u32 2475754826, %v3519
  %v3523 = vor.u32 %v3521, %v3522
  %v3524 = vshll.u32 2475754826, %v3518
  %v3525 = vshrl.u32 2131351028, %v3519
  %v3526 = vor.u32 %v3524, %v3525
  %v3527 = vshll.u32 2131351028, %v3518
  %v3528 = vshrl.u32 2102212464, %v3519
  %v3529 = vor.u32 %v3527, %v3528
  %v3530 = vshll.u32 2102212464, %v3518
  %v3531 = vshrl.u32 920167782, %v3519
  %v3532 = vor.u32 %v3530, %v3531
  %v3533 = vshll.u32 920167782, %v3518
  %v3534 = vshrl.u32 1326507024, %v3519
  %v3535 = vor.u32 %v3533, %v3534
  %vm3536 = vcmp.lt.s32.totalorder %v3517, 1
  %vm3537 = vcmp.lt.s32.totalorder %v3517, 2
  %vm3538 = vcmp.lt.s32.totalorder %v3517, 3
  %vm3539 = vcmp.lt.s32.totalorder %v3517, 4
  %v3540 = vsel %vm3536, %v3520, %v3523
  %v3541 = vsel %vm3539, %v3529, 2102212464
  %v3542 = vsel %vm3538, %v3526, %v3541
  %v3543 = vsel %vm3537, %v3540, %v3542
  %v3544 = vsel %vm3536, %v3523, %v3526
  %v3545 = vsel %vm3539, %v3532, 920167782
  %v3546 = vsel %vm3538, %v3529, %v3545
  %v3547 = vsel %vm3537, %v3544, %v3546
  %v3548 = vsel %vm3536, %v3526, %v3529
  %v3549 = vsel %vm3539, %v3535, 1326507024
  %v3550 = vsel %vm3538, %v3532, %v3549
  %v3551 = vsel %vm3537, %v3548, %v3550
  %v3552 = vshll.u32 %v3512, 8
  %v3553 = vmul.u32.u64.compose %v3552, %v3551
  %v3554 = vextract.low.u32 %v3553
  %v3555 = vextract.high.u32 %v3553
  %v3556 = vmul.u32.u64.compose %v3552, %v3547
  %v3557 = vextract.low.u32 %v3556
  %v3558 = vextract.high.u32 %v3556
  %v3559 = vmul.u32 %v3552, %v3543
  %v3560 = vadd.s32 %v3555, %v3557
  %vm3561 = vc.u32 %v3555, %v3557
  %v3562 = vadd.s32 %v3558, 1
  %v3563 = vsel %vm3561, %v3562, %v3558
  %v3564 = vadd.s32 %v3559, %v3563
  %v3565 = vadd.s32 %v3564, 536870912
  %v3566 = vshrl.u32 %v3565, 30
  %v3567 = vshll.u32 %v3566, 30
  %v3568 = vsub.s32 %v3564, %v3567
  %vm3569 = vcmp.lt.s32.totalorder %v3568, 0
  %v3570 = vsub.s32 0, %v3568
  %v3571 = vsel %vm3569, %v3570, %v3568
  %v3572 = vclz %v3571
  %v3573 = vsub.s32 %v3572, 2
  %vm3574 = vcmp.gt.s32.totalorder 0, %v3573
  %v3575 = vsel %vm3574, 0, %v3573
  %v3576 = vsub.s32 32, %v3575
  %v3577 = vshll.u32 %v3568, %v3575
  %v3578 = vshrl.u32 %v3560, %v3576
  %v3579 = vor.u32 %v3577, %v3578
  %v3580 = vsub.s32 4294967266, %v3575
  %v3581 = vadd.s32 %v3580, 127
  %v3582 = vshll.u32 %v3581, 23
  %v3583 = vor.u32 4788187, %v3582
  %v3584 = vand.u32 2147483647, %v3583
  %v3586 = vcvt.s32.f32 %v3579
  %v3587 = vmul.f32 %v3586, %v3584
  %v3588 = vxor.u32 %v3587, 2147483648
  %v3589 = vsel %vm3506, %v3588, %v3587
  %v3590 = vsub.s32 4, %v3566
  %v3591 = vsel %vm3506, %v3590, %v3566
  %v3592 = vsel %vm3505, %v1126, %v3589
  %v3593 = vsel %vm3505, 0, %v3591
  %v3594 = vcosq.f32.pop %v3592
  %v3595 = vsinq.f32.pop %v3592
  %vm3596 = vweird.f32 %v1126
  %v3597 = vand.u32 %v3593, 3
  %vm3598 = vcmp.lt.s32.totalorder %v3597, 2
  %vm3599 = vcmp.eq.s32.totalorder %v3597, 0
  %v3600 = vxor.u32 %v3595, 2147483648
  %v3601 = vsel %vm3599, %v3594, %v3600
  %vm3602 = vcmp.eq.s32.totalorder %v3597, 2
  %v3603 = vxor.u32 %v3594, 2147483648
  %v3604 = vsel %vm3602, %v3603, %v3595
  %v3605 = vsel %vm3598, %v3601, %v3604
  %v3606 = vsel %vm3596, nan, %v3605
  %v3607 = vand.u32 2147483647, %v1127
  %vm3608 = vcmp.le.f32.partialorder %v3607, 0.7853982
  %vm3609 = vcmp.lt.s32.totalorder %v1127, 0
  %v3610 = vand.u32 %v1127, 2139095040
  %v3611 = vshrl.u32 %v3610, 23
  %v3612 = vsub.s32 %v3611, 127
  %v3613 = vand.u32 2147483647, %v1127
  %v3614 = vand.u32 %v3613, 8388607
  %v3615 = vor.u32 %v3614, 8388608
  %v3616 = vsub.s32 0, %v3615
  %v3617 = vadd.s32 %v3612, 1
  %vm3618 = vcmp.gt.s32.totalorder %v3617, 0
  %v3619 = vsel %vm3618, %v3617, 0
  %v3620 = vshrl.u32 %v3619, 5
  %v3621 = vand.u32 %v3619, 31
  %v3622 = vsub.s32 32, %v3621
  %v3623 = vshrl.u32 683565275, %v3622
  %v3624 = vshll.u32 683565275, %v3621
  %v3625 = vshrl.u32 2475754826, %v3622
  %v3626 = vor.u32 %v3624, %v3625
  %v3627 = vshll.u32 2475754826, %v3621
  %v3628 = vshrl.u32 2131351028, %v3622
  %v3629 = vor.u32 %v3627, %v3628
  %v3630 = vshll.u32 2131351028, %v3621
  %v3631 = vshrl.u32 2102212464, %v3622
  %v3632 = vor.u32 %v3630, %v3631
  %v3633 = vshll.u32 2102212464, %v3621
  %v3634 = vshrl.u32 920167782, %v3622
  %v3635 = vor.u32 %v3633, %v3634
  %v3636 = vshll.u32 920167782, %v3621
  %v3637 = vshrl.u32 1326507024, %v3622
  %v3638 = vor.u32 %v3636, %v3637
  %vm3639 = vcmp.lt.s32.totalorder %v3620, 1
  %vm3640 = vcmp.lt.s32.totalorder %v3620, 2
  %vm3641 = vcmp.lt.s32.totalorder %v3620, 3
  %vm3642 = vcmp.lt.s32.totalorder %v3620, 4
  %v3643 = vsel %vm3639, %v3623, %v3626
  %v3644 = vsel %vm3642, %v3632, 2102212464
  %v3645 = vsel %vm3641, %v3629, %v3644
  %v3646 = vsel %vm3640, %v3643, %v3645
  %v3647 = vsel %vm3639, %v3626, %v3629
  %v3648 = vsel %vm3642, %v3635, 920167782
  %v3649 = vsel %vm3641, %v3632, %v3648
  %v3650 = vsel %vm3640, %v3647, %v3649
  %v3651 = vsel %vm3639, %v3629, %v3632
  %v3652 = vsel %vm3642, %v3638, 1326507024
  %v3653 = vsel %vm3641, %v3635, %v3652
  %v3654 = vsel %vm3640, %v3651, %v3653
  %v3655 = vshll.u32 %v3615, 8
  %v3656 = vmul.u32.u64.compose %v3655, %v3654
  %v3657 = vextract.low.u32 %v3656
  %v3658 = vextract.high.u32 %v3656
  %v3659 = vmul.u32.u64.compose %v3655, %v3650
  %v3660 = vextract.low.u32 %v3659
  %v3661 = vextract.high.u32 %v3659
  %v3662 = vmul.u32 %v3655, %v3646
  %v3663 = vadd.s32 %v3658, %v3660
  %vm3664 = vc.u32 %v3658, %v3660
  %v3665 = vadd.s32 %v3661, 1
  %v3666 = vsel %vm3664, %v3665, %v3661
  %v3667 = vadd.s32 %v3662, %v3666
  %v3668 = vadd.s32 %v3667, 536870912
  %v3669 = vshrl.u32 %v3668, 30
  %v3670 = vshll.u32 %v3669, 30
  %v3671 = vsub.s32 %v3667, %v3670
  %vm3672 = vcmp.lt.s32.totalorder %v3671, 0
  %v3673 = vsub.s32 0, %v3671
  %v3674 = vsel %vm3672, %v3673, %v3671
  %v3675 = vclz %v3674
  %v3676 = vsub.s32 %v3675, 2
  %vm3677 = vcmp.gt.s32.totalorder 0, %v3676
  %v3678 = vsel %vm3677, 0, %v3676
  %v3679 = vsub.s32 32, %v3678
  %v3680 = vshll.u32 %v3671, %v3678
  %v3681 = vshrl.u32 %v3663, %v3679
  %v3682 = vor.u32 %v3680, %v3681
  %v3683 = vsub.s32 4294967266, %v3678
  %v3684 = vadd.s32 %v3683, 127
  %v3685 = vshll.u32 %v3684, 23
  %v3686 = vor.u32 4788187, %v3685
  %v3687 = vand.u32 2147483647, %v3686
  %v3689 = vcvt.s32.f32 %v3682
  %v3690 = vmul.f32 %v3689, %v3687
  %v3691 = vxor.u32 %v3690, 2147483648
  %v3692 = vsel %vm3609, %v3691, %v3690
  %v3693 = vsub.s32 4, %v3669
  %v3694 = vsel %vm3609, %v3693, %v3669
  %v3695 = vsel %vm3608, %v1127, %v3692
  %v3696 = vsel %vm3608, 0, %v3694
  %v3697 = vcosq.f32.pop %v3695
  %v3698 = vsinq.f32.pop %v3695
  %vm3699 = vweird.f32 %v1127
  %v3700 = vand.u32 %v3696, 3
  %vm3701 = vcmp.lt.s32.totalorder %v3700, 2
  %vm3702 = vcmp.eq.s32.totalorder %v3700, 0
  %v3703 = vxor.u32 %v3698, 2147483648
  %v3704 = vsel %vm3702, %v3697, %v3703
  %vm3705 = vcmp.eq.s32.totalorder %v3700, 2
  %v3706 = vxor.u32 %v3697, 2147483648
  %v3707 = vsel %vm3705, %v3706, %v3698
  %v3708 = vsel %vm3701, %v3704, %v3707
  %v3709 = vsel %vm3699, nan, %v3708
  %v3710 = vand.u32 2147483647, %v1128
  %vm3711 = vcmp.le.f32.partialorder %v3710, 0.7853982
  %vm3712 = vcmp.lt.s32.totalorder %v1128, 0
  %v3713 = vand.u32 %v1128, 2139095040
  %v3714 = vshrl.u32 %v3713, 23
  %v3715 = vsub.s32 %v3714, 127
  %v3716 = vand.u32 2147483647, %v1128
  %v3717 = vand.u32 %v3716, 8388607
  %v3718 = vor.u32 %v3717, 8388608
  %v3719 = vsub.s32 0, %v3718
  %v3720 = vadd.s32 %v3715, 1
  %vm3721 = vcmp.gt.s32.totalorder %v3720, 0
  %v3722 = vsel %vm3721, %v3720, 0
  %v3723 = vshrl.u32 %v3722, 5
  %v3724 = vand.u32 %v3722, 31
  %v3725 = vsub.s32 32, %v3724
  %v3726 = vshrl.u32 683565275, %v3725
  %v3727 = vshll.u32 683565275, %v3724
  %v3728 = vshrl.u32 2475754826, %v3725
  %v3729 = vor.u32 %v3727, %v3728
  %v3730 = vshll.u32 2475754826, %v3724
  %v3731 = vshrl.u32 2131351028, %v3725
  %v3732 = vor.u32 %v3730, %v3731
  %v3733 = vshll.u32 2131351028, %v3724
  %v3734 = vshrl.u32 2102212464, %v3725
  %v3735 = vor.u32 %v3733, %v3734
  %v3736 = vshll.u32 2102212464, %v3724
  %v3737 = vshrl.u32 920167782, %v3725
  %v3738 = vor.u32 %v3736, %v3737
  %v3739 = vshll.u32 920167782, %v3724
  %v3740 = vshrl.u32 1326507024, %v3725
  %v3741 = vor.u32 %v3739, %v3740
  %vm3742 = vcmp.lt.s32.totalorder %v3723, 1
  %vm3743 = vcmp.lt.s32.totalorder %v3723, 2
  %vm3744 = vcmp.lt.s32.totalorder %v3723, 3
  %vm3745 = vcmp.lt.s32.totalorder %v3723, 4
  %v3746 = vsel %vm3742, %v3726, %v3729
  %v3747 = vsel %vm3745, %v3735, 2102212464
  %v3748 = vsel %vm3744, %v3732, %v3747
  %v3749 = vsel %vm3743, %v3746, %v3748
  %v3750 = vsel %vm3742, %v3729, %v3732
  %v3751 = vsel %vm3745, %v3738, 920167782
  %v3752 = vsel %vm3744, %v3735, %v3751
  %v3753 = vsel %vm3743, %v3750, %v3752
  %v3754 = vsel %vm3742, %v3732, %v3735
  %v3755 = vsel %vm3745, %v3741, 1326507024
  %v3756 = vsel %vm3744, %v3738, %v3755
  %v3757 = vsel %vm3743, %v3754, %v3756
  %v3758 = vshll.u32 %v3718, 8
  %v3759 = vmul.u32.u64.compose %v3758, %v3757
  %v3760 = vextract.low.u32 %v3759
  %v3761 = vextract.high.u32 %v3759
  %v3762 = vmul.u32.u64.compose %v3758, %v3753
  %v3763 = vextract.low.u32 %v3762
  %v3764 = vextract.high.u32 %v3762
  %v3765 = vmul.u32 %v3758, %v3749
  %v3766 = vadd.s32 %v3761, %v3763
  %vm3767 = vc.u32 %v3761, %v3763
  %v3768 = vadd.s32 %v3764, 1
  %v3769 = vsel %vm3767, %v3768, %v3764
  %v3770 = vadd.s32 %v3765, %v3769
  %v3771 = vadd.s32 %v3770, 536870912
  %v3772 = vshrl.u32 %v3771, 30
  %v3773 = vshll.u32 %v3772, 30
  %v3774 = vsub.s32 %v3770, %v3773
  %vm3775 = vcmp.lt.s32.totalorder %v3774, 0
  %v3776 = vsub.s32 0, %v3774
  %v3777 = vsel %vm3775, %v3776, %v3774
  %v3778 = vclz %v3777
  %v3779 = vsub.s32 %v3778, 2
  %vm3780 = vcmp.gt.s32.totalorder 0, %v3779
  %v3781 = vsel %vm3780, 0, %v3779
  %v3782 = vsub.s32 32, %v3781
  %v3783 = vshll.u32 %v3774, %v3781
  %v3784 = vshrl.u32 %v3766, %v3782
  %v3785 = vor.u32 %v3783, %v3784
  %v3786 = vsub.s32 4294967266, %v3781
  %v3787 = vadd.s32 %v3786, 127
  %v3788 = vshll.u32 %v3787, 23
  %v3789 = vor.u32 4788187, %v3788
  %v3790 = vand.u32 2147483647, %v3789
  %v3792 = vcvt.s32.f32 %v3785
  %v3793 = vmul.f32 %v3792, %v3790
  %v3794 = vxor.u32 %v3793, 2147483648
  %v3795 = vsel %vm3712, %v3794, %v3793
  %v3796 = vsub.s32 4, %v3772
  %v3797 = vsel %vm3712, %v3796, %v3772
  %v3798 = vsel %vm3711, %v1128, %v3795
  %v3799 = vsel %vm3711, 0, %v3797
  %v3800 = vcosq.f32.pop %v3798
  %v3801 = vsinq.f32.pop %v3798
  %vm3802 = vweird.f32 %v1128
  %v3803 = vand.u32 %v3799, 3
  %vm3804 = vcmp.lt.s32.totalorder %v3803, 2
  %vm3805 = vcmp.eq.s32.totalorder %v3803, 0
  %v3806 = vxor.u32 %v3801, 2147483648
  %v3807 = vsel %vm3805, %v3800, %v3806
  %vm3808 = vcmp.eq.s32.totalorder %v3803, 2
  %v3809 = vxor.u32 %v3800, 2147483648
  %v3810 = vsel %vm3808, %v3809, %v3801
  %v3811 = vsel %vm3804, %v3807, %v3810
  %v3812 = vsel %vm3802, nan, %v3811
  %v3813 = vand.u32 2147483647, %v1129
  %vm3814 = vcmp.le.f32.partialorder %v3813, 0.7853982
  %vm3815 = vcmp.lt.s32.totalorder %v1129, 0
  %v3816 = vand.u32 %v1129, 2139095040
  %v3817 = vshrl.u32 %v3816, 23
  %v3818 = vsub.s32 %v3817, 127
  %v3819 = vand.u32 2147483647, %v1129
  %v3820 = vand.u32 %v3819, 8388607
  %v3821 = vor.u32 %v3820, 8388608
  %v3822 = vsub.s32 0, %v3821
  %v3823 = vadd.s32 %v3818, 1
  %vm3824 = vcmp.gt.s32.totalorder %v3823, 0
  %v3825 = vsel %vm3824, %v3823, 0
  %v3826 = vshrl.u32 %v3825, 5
  %v3827 = vand.u32 %v3825, 31
  %v3828 = vsub.s32 32, %v3827
  %v3829 = vshrl.u32 683565275, %v3828
  %v3830 = vshll.u32 683565275, %v3827
  %v3831 = vshrl.u32 2475754826, %v3828
  %v3832 = vor.u32 %v3830, %v3831
  %v3833 = vshll.u32 2475754826, %v3827
  %v3834 = vshrl.u32 2131351028, %v3828
  %v3835 = vor.u32 %v3833, %v3834
  %v3836 = vshll.u32 2131351028, %v3827
  %v3837 = vshrl.u32 2102212464, %v3828
  %v3838 = vor.u32 %v3836, %v3837
  %v3839 = vshll.u32 2102212464, %v3827
  %v3840 = vshrl.u32 920167782, %v3828
  %v3841 = vor.u32 %v3839, %v3840
  %v3842 = vshll.u32 920167782, %v3827
  %v3843 = vshrl.u32 1326507024, %v3828
  %v3844 = vor.u32 %v3842, %v3843
  %vm3845 = vcmp.lt.s32.totalorder %v3826, 1
  %vm3846 = vcmp.lt.s32.totalorder %v3826, 2
  %vm3847 = vcmp.lt.s32.totalorder %v3826, 3
  %vm3848 = vcmp.lt.s32.totalorder %v3826, 4
  %v3849 = vsel %vm3845, %v3829, %v3832
  %v3850 = vsel %vm3848, %v3838, 2102212464
  %v3851 = vsel %vm3847, %v3835, %v3850
  %v3852 = vsel %vm3846, %v3849, %v3851
  %v3853 = vsel %vm3845, %v3832, %v3835
  %v3854 = vsel %vm3848, %v3841, 920167782
  %v3855 = vsel %vm3847, %v3838, %v3854
  %v3856 = vsel %vm3846, %v3853, %v3855
  %v3857 = vsel %vm3845, %v3835, %v3838
  %v3858 = vsel %vm3848, %v3844, 1326507024
  %v3859 = vsel %vm3847, %v3841, %v3858
  %v3860 = vsel %vm3846, %v3857, %v3859
  %v3861 = vshll.u32 %v3821, 8
  %v3862 = vmul.u32.u64.compose %v3861, %v3860
  %v3863 = vextract.low.u32 %v3862
  %v3864 = vextract.high.u32 %v3862
  %v3865 = vmul.u32.u64.compose %v3861, %v3856
  %v3866 = vextract.low.u32 %v3865
  %v3867 = vextract.high.u32 %v3865
  %v3868 = vmul.u32 %v3861, %v3852
  %v3869 = vadd.s32 %v3864, %v3866
  %vm3870 = vc.u32 %v3864, %v3866
  %v3871 = vadd.s32 %v3867, 1
  %v3872 = vsel %vm3870, %v3871, %v3867
  %v3873 = vadd.s32 %v3868, %v3872
  %v3874 = vadd.s32 %v3873, 536870912
  %v3875 = vshrl.u32 %v3874, 30
  %v3876 = vshll.u32 %v3875, 30
  %v3877 = vsub.s32 %v3873, %v3876
  %vm3878 = vcmp.lt.s32.totalorder %v3877, 0
  %v3879 = vsub.s32 0, %v3877
  %v3880 = vsel %vm3878, %v3879, %v3877
  %v3881 = vclz %v3880
  %v3882 = vsub.s32 %v3881, 2
  %vm3883 = vcmp.gt.s32.totalorder 0, %v3882
  %v3884 = vsel %vm3883, 0, %v3882
  %v3885 = vsub.s32 32, %v3884
  %v3886 = vshll.u32 %v3877, %v3884
  %v3887 = vshrl.u32 %v3869, %v3885
  %v3888 = vor.u32 %v3886, %v3887
  %v3889 = vsub.s32 4294967266, %v3884
  %v3890 = vadd.s32 %v3889, 127
  %v3891 = vshll.u32 %v3890, 23
  %v3892 = vor.u32 4788187, %v3891
  %v3893 = vand.u32 2147483647, %v3892
  %v3895 = vcvt.s32.f32 %v3888
  %v3896 = vmul.f32 %v3895, %v3893
  %v3897 = vxor.u32 %v3896, 2147483648
  %v3898 = vsel %vm3815, %v3897, %v3896
  %v3899 = vsub.s32 4, %v3875
  %v3900 = vsel %vm3815, %v3899, %v3875
  %v3901 = vsel %vm3814, %v1129, %v3898
  %v3902 = vsel %vm3814, 0, %v3900
  %v3903 = vcosq.f32.pop %v3901
  %v3904 = vsinq.f32.pop %v3901
  %vm3905 = vweird.f32 %v1129
  %v3906 = vand.u32 %v3902, 3
  %vm3907 = vcmp.lt.s32.totalorder %v3906, 2
  %vm3908 = vcmp.eq.s32.totalorder %v3906, 0
  %v3909 = vxor.u32 %v3904, 2147483648
  %v3910 = vsel %vm3908, %v3903, %v3909
  %vm3911 = vcmp.eq.s32.totalorder %v3906, 2
  %v3912 = vxor.u32 %v3903, 2147483648
  %v3913 = vsel %vm3911, %v3912, %v3904
  %v3914 = vsel %vm3907, %v3910, %v3913
  %v3915 = vsel %vm3905, nan, %v3914
  %v3916 = vand.u32 2147483647, %v1130
  %vm3917 = vcmp.le.f32.partialorder %v3916, 0.7853982
  %vm3918 = vcmp.lt.s32.totalorder %v1130, 0
  %v3919 = vand.u32 %v1130, 2139095040
  %v3920 = vshrl.u32 %v3919, 23
  %v3921 = vsub.s32 %v3920, 127
  %v3922 = vand.u32 2147483647, %v1130
  %v3923 = vand.u32 %v3922, 8388607
  %v3924 = vor.u32 %v3923, 8388608
  %v3925 = vsub.s32 0, %v3924
  %v3926 = vadd.s32 %v3921, 1
  %vm3927 = vcmp.gt.s32.totalorder %v3926, 0
  %v3928 = vsel %vm3927, %v3926, 0
  %v3929 = vshrl.u32 %v3928, 5
  %v3930 = vand.u32 %v3928, 31
  %v3931 = vsub.s32 32, %v3930
  %v3932 = vshrl.u32 683565275, %v3931
  %v3933 = vshll.u32 683565275, %v3930
  %v3934 = vshrl.u32 2475754826, %v3931
  %v3935 = vor.u32 %v3933, %v3934
  %v3936 = vshll.u32 2475754826, %v3930
  %v3937 = vshrl.u32 2131351028, %v3931
  %v3938 = vor.u32 %v3936, %v3937
  %v3939 = vshll.u32 2131351028, %v3930
  %v3940 = vshrl.u32 2102212464, %v3931
  %v3941 = vor.u32 %v3939, %v3940
  %v3942 = vshll.u32 2102212464, %v3930
  %v3943 = vshrl.u32 920167782, %v3931
  %v3944 = vor.u32 %v3942, %v3943
  %v3945 = vshll.u32 920167782, %v3930
  %v3946 = vshrl.u32 1326507024, %v3931
  %v3947 = vor.u32 %v3945, %v3946
  %vm3948 = vcmp.lt.s32.totalorder %v3929, 1
  %vm3949 = vcmp.lt.s32.totalorder %v3929, 2
  %vm3950 = vcmp.lt.s32.totalorder %v3929, 3
  %vm3951 = vcmp.lt.s32.totalorder %v3929, 4
  %v3952 = vsel %vm3948, %v3932, %v3935
  %v3953 = vsel %vm3951, %v3941, 2102212464
  %v3954 = vsel %vm3950, %v3938, %v3953
  %v3955 = vsel %vm3949, %v3952, %v3954
  %v3956 = vsel %vm3948, %v3935, %v3938
  %v3957 = vsel %vm3951, %v3944, 920167782
  %v3958 = vsel %vm3950, %v3941, %v3957
  %v3959 = vsel %vm3949, %v3956, %v3958
  %v3960 = vsel %vm3948, %v3938, %v3941
  %v3961 = vsel %vm3951, %v3947, 1326507024
  %v3962 = vsel %vm3950, %v3944, %v3961
  %v3963 = vsel %vm3949, %v3960, %v3962
  %v3964 = vshll.u32 %v3924, 8
  %v3965 = vmul.u32.u64.compose %v3964, %v3963
  %v3966 = vextract.low.u32 %v3965
  %v3967 = vextract.high.u32 %v3965
  %v3968 = vmul.u32.u64.compose %v3964, %v3959
  %v3969 = vextract.low.u32 %v3968
  %v3970 = vextract.high.u32 %v3968
  %v3971 = vmul.u32 %v3964, %v3955
  %v3972 = vadd.s32 %v3967, %v3969
  %vm3973 = vc.u32 %v3967, %v3969
  %v3974 = vadd.s32 %v3970, 1
  %v3975 = vsel %vm3973, %v3974, %v3970
  %v3976 = vadd.s32 %v3971, %v3975
  %v3977 = vadd.s32 %v3976, 536870912
  %v3978 = vshrl.u32 %v3977, 30
  %v3979 = vshll.u32 %v3978, 30
  %v3980 = vsub.s32 %v3976, %v3979
  %vm3981 = vcmp.lt.s32.totalorder %v3980, 0
  %v3982 = vsub.s32 0, %v3980
  %v3983 = vsel %vm3981, %v3982, %v3980
  %v3984 = vclz %v3983
  %v3985 = vsub.s32 %v3984, 2
  %vm3986 = vcmp.gt.s32.totalorder 0, %v3985
  %v3987 = vsel %vm3986, 0, %v3985
  %v3988 = vsub.s32 32, %v3987
  %v3989 = vshll.u32 %v3980, %v3987
  %v3990 = vshrl.u32 %v3972, %v3988
  %v3991 = vor.u32 %v3989, %v3990
  %v3992 = vsub.s32 4294967266, %v3987
  %v3993 = vadd.s32 %v3992, 127
  %v3994 = vshll.u32 %v3993, 23
  %v3995 = vor.u32 4788187, %v3994
  %v3996 = vand.u32 2147483647, %v3995
  %v3998 = vcvt.s32.f32 %v3991
  %v3999 = vmul.f32 %v3998, %v3996
  %v4000 = vxor.u32 %v3999, 2147483648
  %v4001 = vsel %vm3918, %v4000, %v3999
  %v4002 = vsub.s32 4, %v3978
  %v4003 = vsel %vm3918, %v4002, %v3978
  %v4004 = vsel %vm3917, %v1130, %v4001
  %v4005 = vsel %vm3917, 0, %v4003
  %v4006 = vcosq.f32.pop %v4004
  %v4007 = vsinq.f32.pop %v4004
  %vm4008 = vweird.f32 %v1130
  %v4009 = vand.u32 %v4005, 3
  %vm4010 = vcmp.lt.s32.totalorder %v4009, 2
  %vm4011 = vcmp.eq.s32.totalorder %v4009, 0
  %v4012 = vxor.u32 %v4007, 2147483648
  %v4013 = vsel %vm4011, %v4006, %v4012
  %vm4014 = vcmp.eq.s32.totalorder %v4009, 2
  %v4015 = vxor.u32 %v4006, 2147483648
  %v4016 = vsel %vm4014, %v4015, %v4007
  %v4017 = vsel %vm4010, %v4013, %v4016
  %v4018 = vsel %vm4008, nan, %v4017
  %v4019 = vand.u32 2147483647, %v1131
  %vm4020 = vcmp.le.f32.partialorder %v4019, 0.7853982
  %vm4021 = vcmp.lt.s32.totalorder %v1131, 0
  %v4022 = vand.u32 %v1131, 2139095040
  %v4023 = vshrl.u32 %v4022, 23
  %v4024 = vsub.s32 %v4023, 127
  %v4025 = vand.u32 2147483647, %v1131
  %v4026 = vand.u32 %v4025, 8388607
  %v4027 = vor.u32 %v4026, 8388608
  %v4028 = vsub.s32 0, %v4027
  %v4029 = vadd.s32 %v4024, 1
  %vm4030 = vcmp.gt.s32.totalorder %v4029, 0
  %v4031 = vsel %vm4030, %v4029, 0
  %v4032 = vshrl.u32 %v4031, 5
  %v4033 = vand.u32 %v4031, 31
  %v4034 = vsub.s32 32, %v4033
  %v4035 = vshrl.u32 683565275, %v4034
  %v4036 = vshll.u32 683565275, %v4033
  %v4037 = vshrl.u32 2475754826, %v4034
  %v4038 = vor.u32 %v4036, %v4037
  %v4039 = vshll.u32 2475754826, %v4033
  %v4040 = vshrl.u32 2131351028, %v4034
  %v4041 = vor.u32 %v4039, %v4040
  %v4042 = vshll.u32 2131351028, %v4033
  %v4043 = vshrl.u32 2102212464, %v4034
  %v4044 = vor.u32 %v4042, %v4043
  %v4045 = vshll.u32 2102212464, %v4033
  %v4046 = vshrl.u32 920167782, %v4034
  %v4047 = vor.u32 %v4045, %v4046
  %v4048 = vshll.u32 920167782, %v4033
  %v4049 = vshrl.u32 1326507024, %v4034
  %v4050 = vor.u32 %v4048, %v4049
  %vm4051 = vcmp.lt.s32.totalorder %v4032, 1
  %vm4052 = vcmp.lt.s32.totalorder %v4032, 2
  %vm4053 = vcmp.lt.s32.totalorder %v4032, 3
  %vm4054 = vcmp.lt.s32.totalorder %v4032, 4
  %v4055 = vsel %vm4051, %v4035, %v4038
  %v4056 = vsel %vm4054, %v4044, 2102212464
  %v4057 = vsel %vm4053, %v4041, %v4056
  %v4058 = vsel %vm4052, %v4055, %v4057
  %v4059 = vsel %vm4051, %v4038, %v4041
  %v4060 = vsel %vm4054, %v4047, 920167782
  %v4061 = vsel %vm4053, %v4044, %v4060
  %v4062 = vsel %vm4052, %v4059, %v4061
  %v4063 = vsel %vm4051, %v4041, %v4044
  %v4064 = vsel %vm4054, %v4050, 1326507024
  %v4065 = vsel %vm4053, %v4047, %v4064
  %v4066 = vsel %vm4052, %v4063, %v4065
  %v4067 = vshll.u32 %v4027, 8
  %v4068 = vmul.u32.u64.compose %v4067, %v4066
  %v4069 = vextract.low.u32 %v4068
  %v4070 = vextract.high.u32 %v4068
  %v4071 = vmul.u32.u64.compose %v4067, %v4062
  %v4072 = vextract.low.u32 %v4071
  %v4073 = vextract.high.u32 %v4071
  %v4074 = vmul.u32 %v4067, %v4058
  %v4075 = vadd.s32 %v4070, %v4072
  %vm4076 = vc.u32 %v4070, %v4072
  %v4077 = vadd.s32 %v4073, 1
  %v4078 = vsel %vm4076, %v4077, %v4073
  %v4079 = vadd.s32 %v4074, %v4078
  %v4080 = vadd.s32 %v4079, 536870912
  %v4081 = vshrl.u32 %v4080, 30
  %v4082 = vshll.u32 %v4081, 30
  %v4083 = vsub.s32 %v4079, %v4082
  %vm4084 = vcmp.lt.s32.totalorder %v4083, 0
  %v4085 = vsub.s32 0, %v4083
  %v4086 = vsel %vm4084, %v4085, %v4083
  %v4087 = vclz %v4086
  %v4088 = vsub.s32 %v4087, 2
  %vm4089 = vcmp.gt.s32.totalorder 0, %v4088
  %v4090 = vsel %vm4089, 0, %v4088
  %v4091 = vsub.s32 32, %v4090
  %v4092 = vshll.u32 %v4083, %v4090
  %v4093 = vshrl.u32 %v4075, %v4091
  %v4094 = vor.u32 %v4092, %v4093
  %v4095 = vsub.s32 4294967266, %v4090
  %v4096 = vadd.s32 %v4095, 127
  %v4097 = vshll.u32 %v4096, 23
  %v4098 = vor.u32 4788187, %v4097
  %v4099 = vand.u32 2147483647, %v4098
  %v4101 = vcvt.s32.f32 %v4094
  %v4102 = vmul.f32 %v4101, %v4099
  %v4103 = vxor.u32 %v4102, 2147483648
  %v4104 = vsel %vm4021, %v4103, %v4102
  %v4105 = vsub.s32 4, %v4081
  %v4106 = vsel %vm4021, %v4105, %v4081
  %v4107 = vsel %vm4020, %v1131, %v4104
  %v4108 = vsel %vm4020, 0, %v4106
  %v4109 = vcosq.f32.pop %v4107
  %v4110 = vsinq.f32.pop %v4107
  %vm4111 = vweird.f32 %v1131
  %v4112 = vand.u32 %v4108, 3
  %vm4113 = vcmp.lt.s32.totalorder %v4112, 2
  %vm4114 = vcmp.eq.s32.totalorder %v4112, 0
  %v4115 = vxor.u32 %v4110, 2147483648
  %v4116 = vsel %vm4114, %v4109, %v4115
  %vm4117 = vcmp.eq.s32.totalorder %v4112, 2
  %v4118 = vxor.u32 %v4109, 2147483648
  %v4119 = vsel %vm4117, %v4118, %v4110
  %v4120 = vsel %vm4113, %v4116, %v4119
  %v4121 = vsel %vm4111, nan, %v4120
  %v4122 = vand.u32 2147483647, %v1132
  %vm4123 = vcmp.le.f32.partialorder %v4122, 0.7853982
  %vm4124 = vcmp.lt.s32.totalorder %v1132, 0
  %v4125 = vand.u32 %v1132, 2139095040
  %v4126 = vshrl.u32 %v4125, 23
  %v4127 = vsub.s32 %v4126, 127
  %v4128 = vand.u32 2147483647, %v1132
  %v4129 = vand.u32 %v4128, 8388607
  %v4130 = vor.u32 %v4129, 8388608
  %v4131 = vsub.s32 0, %v4130
  %v4132 = vadd.s32 %v4127, 1
  %vm4133 = vcmp.gt.s32.totalorder %v4132, 0
  %v4134 = vsel %vm4133, %v4132, 0
  %v4135 = vshrl.u32 %v4134, 5
  %v4136 = vand.u32 %v4134, 31
  %v4137 = vsub.s32 32, %v4136
  %v4138 = vshrl.u32 683565275, %v4137
  %v4139 = vshll.u32 683565275, %v4136
  %v4140 = vshrl.u32 2475754826, %v4137
  %v4141 = vor.u32 %v4139, %v4140
  %v4142 = vshll.u32 2475754826, %v4136
  %v4143 = vshrl.u32 2131351028, %v4137
  %v4144 = vor.u32 %v4142, %v4143
  %v4145 = vshll.u32 2131351028, %v4136
  %v4146 = vshrl.u32 2102212464, %v4137
  %v4147 = vor.u32 %v4145, %v4146
  %v4148 = vshll.u32 2102212464, %v4136
  %v4149 = vshrl.u32 920167782, %v4137
  %v4150 = vor.u32 %v4148, %v4149
  %v4151 = vshll.u32 920167782, %v4136
  %v4152 = vshrl.u32 1326507024, %v4137
  %v4153 = vor.u32 %v4151, %v4152
  %vm4154 = vcmp.lt.s32.totalorder %v4135, 1
  %vm4155 = vcmp.lt.s32.totalorder %v4135, 2
  %vm4156 = vcmp.lt.s32.totalorder %v4135, 3
  %vm4157 = vcmp.lt.s32.totalorder %v4135, 4
  %v4158 = vsel %vm4154, %v4138, %v4141
  %v4159 = vsel %vm4157, %v4147, 2102212464
  %v4160 = vsel %vm4156, %v4144, %v4159
  %v4161 = vsel %vm4155, %v4158, %v4160
  %v4162 = vsel %vm4154, %v4141, %v4144
  %v4163 = vsel %vm4157, %v4150, 920167782
  %v4164 = vsel %vm4156, %v4147, %v4163
  %v4165 = vsel %vm4155, %v4162, %v4164
  %v4166 = vsel %vm4154, %v4144, %v4147
  %v4167 = vsel %vm4157, %v4153, 1326507024
  %v4168 = vsel %vm4156, %v4150, %v4167
  %v4169 = vsel %vm4155, %v4166, %v4168
  %v4170 = vshll.u32 %v4130, 8
  %v4171 = vmul.u32.u64.compose %v4170, %v4169
  %v4172 = vextract.low.u32 %v4171
  %v4173 = vextract.high.u32 %v4171
  %v4174 = vmul.u32.u64.compose %v4170, %v4165
  %v4175 = vextract.low.u32 %v4174
  %v4176 = vextract.high.u32 %v4174
  %v4177 = vmul.u32 %v4170, %v4161
  %v4178 = vadd.s32 %v4173, %v4175
  %vm4179 = vc.u32 %v4173, %v4175
  %v4180 = vadd.s32 %v4176, 1
  %v4181 = vsel %vm4179, %v4180, %v4176
  %v4182 = vadd.s32 %v4177, %v4181
  %v4183 = vadd.s32 %v4182, 536870912
  %v4184 = vshrl.u32 %v4183, 30
  %v4185 = vshll.u32 %v4184, 30
  %v4186 = vsub.s32 %v4182, %v4185
  %vm4187 = vcmp.lt.s32.totalorder %v4186, 0
  %v4188 = vsub.s32 0, %v4186
  %v4189 = vsel %vm4187, %v4188, %v4186
  %v4190 = vclz %v4189
  %v4191 = vsub.s32 %v4190, 2
  %vm4192 = vcmp.gt.s32.totalorder 0, %v4191
  %v4193 = vsel %vm4192, 0, %v4191
  %v4194 = vsub.s32 32, %v4193
  %v4195 = vshll.u32 %v4186, %v4193
  %v4196 = vshrl.u32 %v4178, %v4194
  %v4197 = vor.u32 %v4195, %v4196
  %v4198 = vsub.s32 4294967266, %v4193
  %v4199 = vadd.s32 %v4198, 127
  %v4200 = vshll.u32 %v4199, 23
  %v4201 = vor.u32 4788187, %v4200
  %v4202 = vand.u32 2147483647, %v4201
  %v4204 = vcvt.s32.f32 %v4197
  %v4205 = vmul.f32 %v4204, %v4202
  %v4206 = vxor.u32 %v4205, 2147483648
  %v4207 = vsel %vm4124, %v4206, %v4205
  %v4208 = vsub.s32 4, %v4184
  %v4209 = vsel %vm4124, %v4208, %v4184
  %v4210 = vsel %vm4123, %v1132, %v4207
  %v4211 = vsel %vm4123, 0, %v4209
  %v4212 = vcosq.f32.pop %v4210
  %v4213 = vsinq.f32.pop %v4210
  %vm4214 = vweird.f32 %v1132
  %v4215 = vand.u32 %v4211, 3
  %vm4216 = vcmp.lt.s32.totalorder %v4215, 2
  %vm4217 = vcmp.eq.s32.totalorder %v4215, 0
  %v4218 = vxor.u32 %v4213, 2147483648
  %v4219 = vsel %vm4217, %v4212, %v4218
  %vm4220 = vcmp.eq.s32.totalorder %v4215, 2
  %v4221 = vxor.u32 %v4212, 2147483648
  %v4222 = vsel %vm4220, %v4221, %v4213
  %v4223 = vsel %vm4216, %v4219, %v4222
  %v4224 = vsel %vm4214, nan, %v4223
  %v4225 = vand.u32 2147483647, %v1133
  %vm4226 = vcmp.le.f32.partialorder %v4225, 0.7853982
  %vm4227 = vcmp.lt.s32.totalorder %v1133, 0
  %v4228 = vand.u32 %v1133, 2139095040
  %v4229 = vshrl.u32 %v4228, 23
  %v4230 = vsub.s32 %v4229, 127
  %v4231 = vand.u32 2147483647, %v1133
  %v4232 = vand.u32 %v4231, 8388607
  %v4233 = vor.u32 %v4232, 8388608
  %v4234 = vsub.s32 0, %v4233
  %v4235 = vadd.s32 %v4230, 1
  %vm4236 = vcmp.gt.s32.totalorder %v4235, 0
  %v4237 = vsel %vm4236, %v4235, 0
  %v4238 = vshrl.u32 %v4237, 5
  %v4239 = vand.u32 %v4237, 31
  %v4240 = vsub.s32 32, %v4239
  %v4241 = vshrl.u32 683565275, %v4240
  %v4242 = vshll.u32 683565275, %v4239
  %v4243 = vshrl.u32 2475754826, %v4240
  %v4244 = vor.u32 %v4242, %v4243
  %v4245 = vshll.u32 2475754826, %v4239
  %v4246 = vshrl.u32 2131351028, %v4240
  %v4247 = vor.u32 %v4245, %v4246
  %v4248 = vshll.u32 2131351028, %v4239
  %v4249 = vshrl.u32 2102212464, %v4240
  %v4250 = vor.u32 %v4248, %v4249
  %v4251 = vshll.u32 2102212464, %v4239
  %v4252 = vshrl.u32 920167782, %v4240
  %v4253 = vor.u32 %v4251, %v4252
  %v4254 = vshll.u32 920167782, %v4239
  %v4255 = vshrl.u32 1326507024, %v4240
  %v4256 = vor.u32 %v4254, %v4255
  %vm4257 = vcmp.lt.s32.totalorder %v4238, 1
  %vm4258 = vcmp.lt.s32.totalorder %v4238, 2
  %vm4259 = vcmp.lt.s32.totalorder %v4238, 3
  %vm4260 = vcmp.lt.s32.totalorder %v4238, 4
  %v4261 = vsel %vm4257, %v4241, %v4244
  %v4262 = vsel %vm4260, %v4250, 2102212464
  %v4263 = vsel %vm4259, %v4247, %v4262
  %v4264 = vsel %vm4258, %v4261, %v4263
  %v4265 = vsel %vm4257, %v4244, %v4247
  %v4266 = vsel %vm4260, %v4253, 920167782
  %v4267 = vsel %vm4259, %v4250, %v4266
  %v4268 = vsel %vm4258, %v4265, %v4267
  %v4269 = vsel %vm4257, %v4247, %v4250
  %v4270 = vsel %vm4260, %v4256, 1326507024
  %v4271 = vsel %vm4259, %v4253, %v4270
  %v4272 = vsel %vm4258, %v4269, %v4271
  %v4273 = vshll.u32 %v4233, 8
  %v4274 = vmul.u32.u64.compose %v4273, %v4272
  %v4275 = vextract.low.u32 %v4274
  %v4276 = vextract.high.u32 %v4274
  %v4277 = vmul.u32.u64.compose %v4273, %v4268
  %v4278 = vextract.low.u32 %v4277
  %v4279 = vextract.high.u32 %v4277
  %v4280 = vmul.u32 %v4273, %v4264
  %v4281 = vadd.s32 %v4276, %v4278
  %vm4282 = vc.u32 %v4276, %v4278
  %v4283 = vadd.s32 %v4279, 1
  %v4284 = vsel %vm4282, %v4283, %v4279
  %v4285 = vadd.s32 %v4280, %v4284
  %v4286 = vadd.s32 %v4285, 536870912
  %v4287 = vshrl.u32 %v4286, 30
  %v4288 = vshll.u32 %v4287, 30
  %v4289 = vsub.s32 %v4285, %v4288
  %vm4290 = vcmp.lt.s32.totalorder %v4289, 0
  %v4291 = vsub.s32 0, %v4289
  %v4292 = vsel %vm4290, %v4291, %v4289
  %v4293 = vclz %v4292
  %v4294 = vsub.s32 %v4293, 2
  %vm4295 = vcmp.gt.s32.totalorder 0, %v4294
  %v4296 = vsel %vm4295, 0, %v4294
  %v4297 = vsub.s32 32, %v4296
  %v4298 = vshll.u32 %v4289, %v4296
  %v4299 = vshrl.u32 %v4281, %v4297
  %v4300 = vor.u32 %v4298, %v4299
  %v4301 = vsub.s32 4294967266, %v4296
  %v4302 = vadd.s32 %v4301, 127
  %v4303 = vshll.u32 %v4302, 23
  %v4304 = vor.u32 4788187, %v4303
  %v4305 = vand.u32 2147483647, %v4304
  %v4307 = vcvt.s32.f32 %v4300
  %v4308 = vmul.f32 %v4307, %v4305
  %v4309 = vxor.u32 %v4308, 2147483648
  %v4310 = vsel %vm4227, %v4309, %v4308
  %v4311 = vsub.s32 4, %v4287
  %v4312 = vsel %vm4227, %v4311, %v4287
  %v4313 = vsel %vm4226, %v1133, %v4310
  %v4314 = vsel %vm4226, 0, %v4312
  %v4315 = vcosq.f32.pop %v4313
  %v4316 = vsinq.f32.pop %v4313
  %vm4317 = vweird.f32 %v1133
  %v4318 = vand.u32 %v4314, 3
  %vm4319 = vcmp.lt.s32.totalorder %v4318, 2
  %vm4320 = vcmp.eq.s32.totalorder %v4318, 0
  %v4321 = vxor.u32 %v4316, 2147483648
  %v4322 = vsel %vm4320, %v4315, %v4321
  %vm4323 = vcmp.eq.s32.totalorder %v4318, 2
  %v4324 = vxor.u32 %v4315, 2147483648
  %v4325 = vsel %vm4323, %v4324, %v4316
  %v4326 = vsel %vm4319, %v4322, %v4325
  %v4327 = vsel %vm4317, nan, %v4326
  %v4328 = vand.u32 2147483647, %v1134
  %vm4329 = vcmp.le.f32.partialorder %v4328, 0.7853982
  %vm4330 = vcmp.lt.s32.totalorder %v1134, 0
  %v4331 = vand.u32 %v1134, 2139095040
  %v4332 = vshrl.u32 %v4331, 23
  %v4333 = vsub.s32 %v4332, 127
  %v4334 = vand.u32 2147483647, %v1134
  %v4335 = vand.u32 %v4334, 8388607
  %v4336 = vor.u32 %v4335, 8388608
  %v4337 = vsub.s32 0, %v4336
  %v4338 = vadd.s32 %v4333, 1
  %vm4339 = vcmp.gt.s32.totalorder %v4338, 0
  %v4340 = vsel %vm4339, %v4338, 0
  %v4341 = vshrl.u32 %v4340, 5
  %v4342 = vand.u32 %v4340, 31
  %v4343 = vsub.s32 32, %v4342
  %v4344 = vshrl.u32 683565275, %v4343
  %v4345 = vshll.u32 683565275, %v4342
  %v4346 = vshrl.u32 2475754826, %v4343
  %v4347 = vor.u32 %v4345, %v4346
  %v4348 = vshll.u32 2475754826, %v4342
  %v4349 = vshrl.u32 2131351028, %v4343
  %v4350 = vor.u32 %v4348, %v4349
  %v4351 = vshll.u32 2131351028, %v4342
  %v4352 = vshrl.u32 2102212464, %v4343
  %v4353 = vor.u32 %v4351, %v4352
  %v4354 = vshll.u32 2102212464, %v4342
  %v4355 = vshrl.u32 920167782, %v4343
  %v4356 = vor.u32 %v4354, %v4355
  %v4357 = vshll.u32 920167782, %v4342
  %v4358 = vshrl.u32 1326507024, %v4343
  %v4359 = vor.u32 %v4357, %v4358
  %vm4360 = vcmp.lt.s32.totalorder %v4341, 1
  %vm4361 = vcmp.lt.s32.totalorder %v4341, 2
  %vm4362 = vcmp.lt.s32.totalorder %v4341, 3
  %vm4363 = vcmp.lt.s32.totalorder %v4341, 4
  %v4364 = vsel %vm4360, %v4344, %v4347
  %v4365 = vsel %vm4363, %v4353, 2102212464
  %v4366 = vsel %vm4362, %v4350, %v4365
  %v4367 = vsel %vm4361, %v4364, %v4366
  %v4368 = vsel %vm4360, %v4347, %v4350
  %v4369 = vsel %vm4363, %v4356, 920167782
  %v4370 = vsel %vm4362, %v4353, %v4369
  %v4371 = vsel %vm4361, %v4368, %v4370
  %v4372 = vsel %vm4360, %v4350, %v4353
  %v4373 = vsel %vm4363, %v4359, 1326507024
  %v4374 = vsel %vm4362, %v4356, %v4373
  %v4375 = vsel %vm4361, %v4372, %v4374
  %v4376 = vshll.u32 %v4336, 8
  %v4377 = vmul.u32.u64.compose %v4376, %v4375
  %v4378 = vextract.low.u32 %v4377
  %v4379 = vextract.high.u32 %v4377
  %v4380 = vmul.u32.u64.compose %v4376, %v4371
  %v4381 = vextract.low.u32 %v4380
  %v4382 = vextract.high.u32 %v4380
  %v4383 = vmul.u32 %v4376, %v4367
  %v4384 = vadd.s32 %v4379, %v4381
  %vm4385 = vc.u32 %v4379, %v4381
  %v4386 = vadd.s32 %v4382, 1
  %v4387 = vsel %vm4385, %v4386, %v4382
  %v4388 = vadd.s32 %v4383, %v4387
  %v4389 = vadd.s32 %v4388, 536870912
  %v4390 = vshrl.u32 %v4389, 30
  %v4391 = vshll.u32 %v4390, 30
  %v4392 = vsub.s32 %v4388, %v4391
  %vm4393 = vcmp.lt.s32.totalorder %v4392, 0
  %v4394 = vsub.s32 0, %v4392
  %v4395 = vsel %vm4393, %v4394, %v4392
  %v4396 = vclz %v4395
  %v4397 = vsub.s32 %v4396, 2
  %vm4398 = vcmp.gt.s32.totalorder 0, %v4397
  %v4399 = vsel %vm4398, 0, %v4397
  %v4400 = vsub.s32 32, %v4399
  %v4401 = vshll.u32 %v4392, %v4399
  %v4402 = vshrl.u32 %v4384, %v4400
  %v4403 = vor.u32 %v4401, %v4402
  %v4404 = vsub.s32 4294967266, %v4399
  %v4405 = vadd.s32 %v4404, 127
  %v4406 = vshll.u32 %v4405, 23
  %v4407 = vor.u32 4788187, %v4406
  %v4408 = vand.u32 2147483647, %v4407
  %v4410 = vcvt.s32.f32 %v4403
  %v4411 = vmul.f32 %v4410, %v4408
  %v4412 = vxor.u32 %v4411, 2147483648
  %v4413 = vsel %vm4330, %v4412, %v4411
  %v4414 = vsub.s32 4, %v4390
  %v4415 = vsel %vm4330, %v4414, %v4390
  %v4416 = vsel %vm4329, %v1134, %v4413
  %v4417 = vsel %vm4329, 0, %v4415
  %v4418 = vcosq.f32.pop %v4416
  %v4419 = vsinq.f32.pop %v4416
  %vm4420 = vweird.f32 %v1134
  %v4421 = vand.u32 %v4417, 3
  %vm4422 = vcmp.lt.s32.totalorder %v4421, 2
  %vm4423 = vcmp.eq.s32.totalorder %v4421, 0
  %v4424 = vxor.u32 %v4419, 2147483648
  %v4425 = vsel %vm4423, %v4418, %v4424
  %vm4426 = vcmp.eq.s32.totalorder %v4421, 2
  %v4427 = vxor.u32 %v4418, 2147483648
  %v4428 = vsel %vm4426, %v4427, %v4419
  %v4429 = vsel %vm4422, %v4425, %v4428
  %v4430 = vsel %vm4420, nan, %v4429
  %v4431 = vadd.f32 %v1237, 1.0
  %v4432 = vadd.f32 %v1340, 1.0
  %v4433 = vadd.f32 %v1443, 1.0
  %v4434 = vadd.f32 %v1546, 1.0
  %v4435 = vadd.f32 %v1649, 1.0
  %v4436 = vadd.f32 %v1752, 1.0
  %v4437 = vadd.f32 %v1855, 1.0
  %v4438 = vadd.f32 %v1958, 1.0
  %v4439 = vadd.f32 %v2061, 1.0
  %v4440 = vadd.f32 %v2164, 1.0
  %v4441 = vadd.f32 %v2267, 1.0
  %v4442 = vadd.f32 %v2370, 1.0
  %v4443 = vadd.f32 %v2473, 1.0
  %v4444 = vadd.f32 %v2576, 1.0
  %v4445 = vadd.f32 %v2679, 1.0
  %v4446 = vadd.f32 %v2782, 1.0
  %v4447 = vadd.f32 %v2885, 1.0
  %v4448 = vadd.f32 %v2988, 1.0
  %v4449 = vadd.f32 %v3091, 1.0
  %v4450 = vadd.f32 %v3194, 1.0
  %v4451 = vadd.f32 %v3297, 1.0
  %v4452 = vadd.f32 %v3400, 1.0
  %v4453 = vadd.f32 %v3503, 1.0
  %v4454 = vadd.f32 %v3606, 1.0
  %v4455 = vadd.f32 %v3709, 1.0
  %v4456 = vadd.f32 %v3812, 1.0
  %v4457 = vadd.f32 %v3915, 1.0
  %v4458 = vadd.f32 %v4018, 1.0
  %v4459 = vadd.f32 %v4121, 1.0
  %v4460 = vadd.f32 %v4224, 1.0
  %v4461 = vadd.f32 %v4327, 1.0
  %v4462 = vadd.f32 %v4430, 1.0
  %v4463 = vmul.f32 %v4431, 0.5
  %v4464 = vmul.f32 %v4432, 0.5
  %v4465 = vmul.f32 %v4433, 0.5
  %v4466 = vmul.f32 %v4434, 0.5
  %v4467 = vmul.f32 %v4435, 0.5
  %v4468 = vmul.f32 %v4436, 0.5
  %v4469 = vmul.f32 %v4437, 0.5
  %v4470 = vmul.f32 %v4438, 0.5
  %v4471 = vmul.f32 %v4439, 0.5
  %v4472 = vmul.f32 %v4440, 0.5
  %v4473 = vmul.f32 %v4441, 0.5
  %v4474 = vmul.f32 %v4442, 0.5
  %v4475 = vmul.f32 %v4443, 0.5
  %v4476 = vmul.f32 %v4444, 0.5
  %v4477 = vmul.f32 %v4445, 0.5
  %v4478 = vmul.f32 %v4446, 0.5
  %v4479 = vmul.f32 %v4447, 0.5
  %v4480 = vmul.f32 %v4448, 0.5
  %v4481 = vmul.f32 %v4449, 0.5
  %v4482 = vmul.f32 %v4450, 0.5
  %v4483 = vmul.f32 %v4451, 0.5
  %v4484 = vmul.f32 %v4452, 0.5
  %v4485 = vmul.f32 %v4453, 0.5
  %v4486 = vmul.f32 %v4454, 0.5
  %v4487 = vmul.f32 %v4455, 0.5
  %v4488 = vmul.f32 %v4456, 0.5
  %v4489 = vmul.f32 %v4457, 0.5
  %v4490 = vmul.f32 %v4458, 0.5
  %v4491 = vmul.f32 %v4459, 0.5
  %v4492 = vmul.f32 %v4460, 0.5
  %v4493 = vmul.f32 %v4461, 0.5
  %v4494 = vmul.f32 %v4462, 0.5
  %vm4495 = vcmp.lt.f32.partialorder %v718, 5.0
  %vm4496 = vcmp.lt.f32.partialorder %v725, 5.0
  %vm4497 = vcmp.lt.f32.partialorder %v732, 5.0
  %vm4498 = vcmp.lt.f32.partialorder %v739, 5.0
  %vm4499 = vcmp.lt.f32.partialorder %v746, 5.0
  %vm4500 = vcmp.lt.f32.partialorder %v753, 5.0
  %vm4501 = vcmp.lt.f32.partialorder %v760, 5.0
  %vm4502 = vcmp.lt.f32.partialorder %v767, 5.0
  %vm4503 = vcmp.lt.f32.partialorder %v774, 5.0
  %vm4504 = vcmp.lt.f32.partialorder %v781, 5.0
  %vm4505 = vcmp.lt.f32.partialorder %v788, 5.0
  %vm4506 = vcmp.lt.f32.partialorder %v795, 5.0
  %vm4507 = vcmp.lt.f32.partialorder %v802, 5.0
  %vm4508 = vcmp.lt.f32.partialorder %v809, 5.0
  %vm4509 = vcmp.lt.f32.partialorder %v816, 5.0
  %vm4510 = vcmp.lt.f32.partialorder %v823, 5.0
  %vm4511 = vcmp.lt.f32.partialorder %v830, 5.0
  %vm4512 = vcmp.lt.f32.partialorder %v837, 5.0
  %vm4513 = vcmp.lt.f32.partialorder %v844, 5.0
  %vm4514 = vcmp.lt.f32.partialorder %v851, 5.0
  %vm4515 = vcmp.lt.f32.partialorder %v858, 5.0
  %vm4516 = vcmp.lt.f32.partialorder %v865, 5.0
  %vm4517 = vcmp.lt.f32.partialorder %v872, 5.0
  %vm4518 = vcmp.lt.f32.partialorder %v879, 5.0
  %vm4519 = vcmp.lt.f32.partialorder %v886, 5.0
  %vm4520 = vcmp.lt.f32.partialorder %v893, 5.0
  %vm4521 = vcmp.lt.f32.partialorder %v900, 5.0
  %vm4522 = vcmp.lt.f32.partialorder %v907, 5.0
  %vm4523 = vcmp.lt.f32.partialorder %v914, 5.0
  %vm4524 = vcmp.lt.f32.partialorder %v921, 5.0
  %vm4525 = vcmp.lt.f32.partialorder %v928, 5.0
  %vm4526 = vcmp.lt.f32.partialorder %v935, 5.0
  %v4527 = vsel %vm4495, 1, 0
  %v4528 = vsel %vm4496, 1, 0
  %v4529 = vsel %vm4497, 1, 0
  %v4530 = vsel %vm4498, 1, 0
  %v4531 = vsel %vm4499, 1, 0
  %v4532 = vsel %vm4500, 1, 0
  %v4533 = vsel %vm4501, 1, 0
  %v4534 = vsel %vm4502, 1, 0
  %v4535 = vsel %vm4503, 1, 0
  %v4536 = vsel %vm4504, 1, 0
  %v4537 = vsel %vm4505, 1, 0
  %v4538 = vsel %vm4506, 1, 0
  %v4539 = vsel %vm4507, 1, 0
  %v4540 = vsel %vm4508, 1, 0
  %v4541 = vsel %vm4509, 1, 0
  %v4542 = vsel %vm4510, 1, 0
  %v4543 = vsel %vm4511, 1, 0
  %v4544 = vsel %vm4512, 1, 0
  %v4545 = vsel %vm4513, 1, 0
  %v4546 = vsel %vm4514, 1, 0
  %v4547 = vsel %vm4515, 1, 0
  %v4548 = vsel %vm4516, 1, 0
  %v4549 = vsel %vm4517, 1, 0
  %v4550 = vsel %vm4518, 1, 0
  %v4551 = vsel %vm4519, 1, 0
  %v4552 = vsel %vm4520, 1, 0
  %v4553 = vsel %vm4521, 1, 0
  %v4554 = vsel %vm4522, 1, 0
  %v4555 = vsel %vm4523, 1, 0
  %v4556 = vsel %vm4524, 1, 0
  %v4557 = vsel %vm4525, 1, 0
  %v4558 = vsel %vm4526, 1, 0
  %v4559 = vcvt.s32.f32 %v4527
  %v4560 = vcvt.s32.f32 %v4528
  %v4561 = vcvt.s32.f32 %v4529
  %v4562 = vcvt.s32.f32 %v4530
  %v4563 = vcvt.s32.f32 %v4531
  %v4564 = vcvt.s32.f32 %v4532
  %v4565 = vcvt.s32.f32 %v4533
  %v4566 = vcvt.s32.f32 %v4534
  %v4567 = vcvt.s32.f32 %v4535
  %v4568 = vcvt.s32.f32 %v4536
  %v4569 = vcvt.s32.f32 %v4537
  %v4570 = vcvt.s32.f32 %v4538
  %v4571 = vcvt.s32.f32 %v4539
  %v4572 = vcvt.s32.f32 %v4540
  %v4573 = vcvt.s32.f32 %v4541
  %v4574 = vcvt.s32.f32 %v4542
  %v4575 = vcvt.s32.f32 %v4543
  %v4576 = vcvt.s32.f32 %v4544
  %v4577 = vcvt.s32.f32 %v4545
  %v4578 = vcvt.s32.f32 %v4546
  %v4579 = vcvt.s32.f32 %v4547
  %v4580 = vcvt.s32.f32 %v4548
  %v4581 = vcvt.s32.f32 %v4549
  %v4582 = vcvt.s32.f32 %v4550
  %v4583 = vcvt.s32.f32 %v4551
  %v4584 = vcvt.s32.f32 %v4552
  %v4585 = vcvt.s32.f32 %v4553
  %v4586 = vcvt.s32.f32 %v4554
  %v4587 = vcvt.s32.f32 %v4555
  %v4588 = vcvt.s32.f32 %v4556
  %v4589 = vcvt.s32.f32 %v4557
  %v4590 = vcvt.s32.f32 %v4558
  %v4591 = vmul.f32 %v4463, %v4559
  %v4592 = vmul.f32 %v4464, %v4560
  %v4593 = vmul.f32 %v4465, %v4561
  %v4594 = vmul.f32 %v4466, %v4562
  %v4595 = vmul.f32 %v4467, %v4563
  %v4596 = vmul.f32 %v4468, %v4564
  %v4597 = vmul.f32 %v4469, %v4565
  %v4598 = vmul.f32 %v4470, %v4566
  %v4599 = vmul.f32 %v4471, %v4567
  %v4600 = vmul.f32 %v4472, %v4568
  %v4601 = vmul.f32 %v4473, %v4569
  %v4602 = vmul.f32 %v4474, %v4570
  %v4603 = vmul.f32 %v4475, %v4571
  %v4604 = vmul.f32 %v4476, %v4572
  %v4605 = vmul.f32 %v4477, %v4573
  %v4606 = vmul.f32 %v4478, %v4574
  %v4607 = vmul.f32 %v4479, %v4575
  %v4608 = vmul.f32 %v4480, %v4576
  %v4609 = vmul.f32 %v4481, %v4577
  %v4610 = vmul.f32 %v4482, %v4578
  %v4611 = vmul.f32 %v4483, %v4579
  %v4612 = vmul.f32 %v4484, %v4580
  %v4613 = vmul.f32 %v4485, %v4581
  %v4614 = vmul.f32 %v4486, %v4582
  %v4615 = vmul.f32 %v4487, %v4583
  %v4616 = vmul.f32 %v4488, %v4584
  %v4617 = vmul.f32 %v4489, %v4585
  %v4618 = vmul.f32 %v4490, %v4586
  %v4619 = vmul.f32 %v4491, %v4587
  %v4620 = vmul.f32 %v4492, %v4588
  %v4621 = vmul.f32 %v4493, %v4589
  %v4622 = vmul.f32 %v4494, %v4590
  %v4623 = vlaneseq
  %v4624 = vand.u32 %v4623, 127
  %v4625 = vld [vmem:[%s2] sm:$0xff]
  %v4626 = vld [vmem:[%s2 + $0x8] sm:$0xff]
  %v4627 = vld [vmem:[%s2 + $0x10] sm:$0xff]
  %v4628 = vld [vmem:[%s2 + $0x18] sm:$0xff]
  %v4629 = vld [vmem:[%s2 + $0x20] sm:$0xff]
  %v4630 = vld [vmem:[%s2 + $0x28] sm:$0xff]
  %v4631 = vld [vmem:[%s2 + $0x30] sm:$0xff]
  %v4632 = vld [vmem:[%s2 + $0x38] sm:$0xff]
  %v4633 = vld [vmem:[%s2 + $0x40] sm:$0xff]
  %v4634 = vld [vmem:[%s2 + $0x48] sm:$0xff]
  %v4635 = vld [vmem:[%s2 + $0x50] sm:$0xff]
  %v4636 = vld [vmem:[%s2 + $0x58] sm:$0xff]
  %v4637 = vld [vmem:[%s2 + $0x60] sm:$0xff]
  %v4638 = vld [vmem:[%s2 + $0x68] sm:$0xff]
  %v4639 = vld [vmem:[%s2 + $0x70] sm:$0xff]
  %v4640 = vld [vmem:[%s2 + $0x78] sm:$0xff]
  %v4641 = vld [vmem:[%s2 + $0x80] sm:$0xff]
  %v4642 = vld [vmem:[%s2 + $0x88] sm:$0xff]
  %v4643 = vld [vmem:[%s2 + $0x90] sm:$0xff]
  %v4644 = vld [vmem:[%s2 + $0x98] sm:$0xff]
  %v4645 = vld [vmem:[%s2 + $0xa0] sm:$0xff]
  %v4646 = vld [vmem:[%s2 + $0xa8] sm:$0xff]
  %v4647 = vld [vmem:[%s2 + $0xb0] sm:$0xff]
  %v4648 = vld [vmem:[%s2 + $0xb8] sm:$0xff]
  %v4649 = vld [vmem:[%s2 + $0xc0] sm:$0xff]
  %v4650 = vld [vmem:[%s2 + $0xc8] sm:$0xff]
  %v4651 = vld [vmem:[%s2 + $0xd0] sm:$0xff]
  %v4652 = vld [vmem:[%s2 + $0xd8] sm:$0xff]
  %v4653 = vld [vmem:[%s2 + $0xe0] sm:$0xff]
  %v4654 = vld [vmem:[%s2 + $0xe8] sm:$0xff]
  %v4655 = vld [vmem:[%s2 + $0xf0] sm:$0xff]
  %v4656 = vld [vmem:[%s2 + $0xf8] sm:$0xff]
  %4657 = vset.pattern.permute.xlu0 0
  %4658 = vperm.xlu0 %4657, %v4625
  %v4659 = vpop.permute.xlu0 %4658
  %4660 = vset.pattern.permute.xlu0 0
  %4661 = vperm.xlu0 %4660, %v4626
  %v4662 = vpop.permute.xlu0 %4661
  %4663 = vset.pattern.permute.xlu0 0
  %4664 = vperm.xlu0 %4663, %v4627
  %v4665 = vpop.permute.xlu0 %4664
  %4666 = vset.pattern.permute.xlu0 0
  %4667 = vperm.xlu0 %4666, %v4628
  %v4668 = vpop.permute.xlu0 %4667
  %4669 = vset.pattern.permute.xlu0 0
  %4670 = vperm.xlu0 %4669, %v4629
  %v4671 = vpop.permute.xlu0 %4670
  %4672 = vset.pattern.permute.xlu0 0
  %4673 = vperm.xlu0 %4672, %v4630
  %v4674 = vpop.permute.xlu0 %4673
  %4675 = vset.pattern.permute.xlu0 0
  %4676 = vperm.xlu0 %4675, %v4631
  %v4677 = vpop.permute.xlu0 %4676
  %4678 = vset.pattern.permute.xlu0 0
  %4679 = vperm.xlu0 %4678, %v4632
  %v4680 = vpop.permute.xlu0 %4679
  %4681 = vset.pattern.permute.xlu0 0
  %4682 = vperm.xlu0 %4681, %v4633
  %v4683 = vpop.permute.xlu0 %4682
  %4684 = vset.pattern.permute.xlu0 0
  %4685 = vperm.xlu0 %4684, %v4634
  %v4686 = vpop.permute.xlu0 %4685
  %4687 = vset.pattern.permute.xlu0 0
  %4688 = vperm.xlu0 %4687, %v4635
  %v4689 = vpop.permute.xlu0 %4688
  %4690 = vset.pattern.permute.xlu0 0
  %4691 = vperm.xlu0 %4690, %v4636
  %v4692 = vpop.permute.xlu0 %4691
  %4693 = vset.pattern.permute.xlu0 0
  %4694 = vperm.xlu0 %4693, %v4637
  %v4695 = vpop.permute.xlu0 %4694
  %4696 = vset.pattern.permute.xlu0 0
  %4697 = vperm.xlu0 %4696, %v4638
  %v4698 = vpop.permute.xlu0 %4697
  %4699 = vset.pattern.permute.xlu0 0
  %4700 = vperm.xlu0 %4699, %v4639
  %v4701 = vpop.permute.xlu0 %4700
  %4702 = vset.pattern.permute.xlu0 0
  %4703 = vperm.xlu0 %4702, %v4640
  %v4704 = vpop.permute.xlu0 %4703
  %4705 = vset.pattern.permute.xlu0 0
  %4706 = vperm.xlu0 %4705, %v4641
  %v4707 = vpop.permute.xlu0 %4706
  %4708 = vset.pattern.permute.xlu0 0
  %4709 = vperm.xlu0 %4708, %v4642
  %v4710 = vpop.permute.xlu0 %4709
  %4711 = vset.pattern.permute.xlu0 0
  %4712 = vperm.xlu0 %4711, %v4643
  %v4713 = vpop.permute.xlu0 %4712
  %4714 = vset.pattern.permute.xlu0 0
  %4715 = vperm.xlu0 %4714, %v4644
  %v4716 = vpop.permute.xlu0 %4715
  %4717 = vset.pattern.permute.xlu0 0
  %4718 = vperm.xlu0 %4717, %v4645
  %v4719 = vpop.permute.xlu0 %4718
  %4720 = vset.pattern.permute.xlu0 0
  %4721 = vperm.xlu0 %4720, %v4646
  %v4722 = vpop.permute.xlu0 %4721
  %4723 = vset.pattern.permute.xlu0 0
  %4724 = vperm.xlu0 %4723, %v4647
  %v4725 = vpop.permute.xlu0 %4724
  %4726 = vset.pattern.permute.xlu0 0
  %4727 = vperm.xlu0 %4726, %v4648
  %v4728 = vpop.permute.xlu0 %4727
  %4729 = vset.pattern.permute.xlu0 0
  %4730 = vperm.xlu0 %4729, %v4649
  %v4731 = vpop.permute.xlu0 %4730
  %4732 = vset.pattern.permute.xlu0 0
  %4733 = vperm.xlu0 %4732, %v4650
  %v4734 = vpop.permute.xlu0 %4733
  %4735 = vset.pattern.permute.xlu0 0
  %4736 = vperm.xlu0 %4735, %v4651
  %v4737 = vpop.permute.xlu0 %4736
  %4738 = vset.pattern.permute.xlu0 0
  %4739 = vperm.xlu0 %4738, %v4652
  %v4740 = vpop.permute.xlu0 %4739
  %4741 = vset.pattern.permute.xlu0 0
  %4742 = vperm.xlu0 %4741, %v4653
  %v4743 = vpop.permute.xlu0 %4742
  %4744 = vset.pattern.permute.xlu0 0
  %4745 = vperm.xlu0 %4744, %v4654
  %v4746 = vpop.permute.xlu0 %4745
  %4747 = vset.pattern.permute.xlu0 0
  %4748 = vperm.xlu0 %4747, %v4655
  %v4749 = vpop.permute.xlu0 %4748
  %4750 = vset.pattern.permute.xlu0 0
  %4751 = vperm.xlu0 %4750, %v4656
  %v4752 = vpop.permute.xlu0 %4751
  %vm4753 = vcmp.eq.s32.totalorder %v4624, %v4659
  %vm4754 = vcmp.eq.s32.totalorder %v4624, %v4662
  %vm4755 = vcmp.eq.s32.totalorder %v4624, %v4665
  %vm4756 = vcmp.eq.s32.totalorder %v4624, %v4668
  %vm4757 = vcmp.eq.s32.totalorder %v4624, %v4671
  %vm4758 = vcmp.eq.s32.totalorder %v4624, %v4674
  %vm4759 = vcmp.eq.s32.totalorder %v4624, %v4677
  %vm4760 = vcmp.eq.s32.totalorder %v4624, %v4680
  %vm4761 = vcmp.eq.s32.totalorder %v4624, %v4683
  %vm4762 = vcmp.eq.s32.totalorder %v4624, %v4686
  %vm4763 = vcmp.eq.s32.totalorder %v4624, %v4689
  %vm4764 = vcmp.eq.s32.totalorder %v4624, %v4692
  %vm4765 = vcmp.eq.s32.totalorder %v4624, %v4695
  %vm4766 = vcmp.eq.s32.totalorder %v4624, %v4698
  %vm4767 = vcmp.eq.s32.totalorder %v4624, %v4701
  %vm4768 = vcmp.eq.s32.totalorder %v4624, %v4704
  %vm4769 = vcmp.eq.s32.totalorder %v4624, %v4707
  %vm4770 = vcmp.eq.s32.totalorder %v4624, %v4710
  %vm4771 = vcmp.eq.s32.totalorder %v4624, %v4713
  %vm4772 = vcmp.eq.s32.totalorder %v4624, %v4716
  %vm4773 = vcmp.eq.s32.totalorder %v4624, %v4719
  %vm4774 = vcmp.eq.s32.totalorder %v4624, %v4722
  %vm4775 = vcmp.eq.s32.totalorder %v4624, %v4725
  %vm4776 = vcmp.eq.s32.totalorder %v4624, %v4728
  %vm4777 = vcmp.eq.s32.totalorder %v4624, %v4731
  %vm4778 = vcmp.eq.s32.totalorder %v4624, %v4734
  %vm4779 = vcmp.eq.s32.totalorder %v4624, %v4737
  %vm4780 = vcmp.eq.s32.totalorder %v4624, %v4740
  %vm4781 = vcmp.eq.s32.totalorder %v4624, %v4743
  %vm4782 = vcmp.eq.s32.totalorder %v4624, %v4746
  %vm4783 = vcmp.eq.s32.totalorder %v4624, %v4749
  %vm4784 = vcmp.eq.s32.totalorder %v4624, %v4752
  %v4785 = vlaneseq
  %v4786 = vshrl.u32 %v4785, 7
  %v4787 = vadd.s32 %v4786, 8
  %v4788 = vadd.s32 %v4786, 16
  %v4789 = vadd.s32 %v4786, 24
  %v4790 = vadd.s32 %v4786, 32
  %v4791 = vadd.s32 %v4786, 40
  %v4792 = vadd.s32 %v4786, 48
  %v4793 = vadd.s32 %v4786, 56
  %v4794 = vadd.s32 %v4786, 64
  %v4795 = vadd.s32 %v4786, 72
  %v4796 = vadd.s32 %v4786, 80
  %v4797 = vadd.s32 %v4786, 88
  %v4798 = vadd.s32 %v4786, 96
  %v4799 = vadd.s32 %v4786, 104
  %v4800 = vadd.s32 %v4786, 112
  %v4801 = vadd.s32 %v4786, 120
  %v4802 = vld [vmem:[%s3] sm:$0x3]
  %v4803 = vlaneseq
  %v4804 = vshrl.u32 %v4803, 7
  %v4805 = vsub.s32 0, %v4804
  %v4806 = vrot.slane %v4802, %v4805
  %v4807 = vlaneseq
  %v4808 = vshrl.u32 %v4807, 7
  %v4809 = vsub.s32 1, %v4808
  %v4810 = vrot.slane %v4802, %v4809
  %vm4811 = vcmp.eq.s32.totalorder %v4786, %v4806
  %vm4812 = vcmp.eq.s32.totalorder %v4786, %v4810
  %vm4813 = vcmp.eq.s32.totalorder %v4787, %v4806
  %vm4814 = vcmp.eq.s32.totalorder %v4787, %v4810
  %vm4815 = vcmp.eq.s32.totalorder %v4788, %v4806
  %vm4816 = vcmp.eq.s32.totalorder %v4788, %v4810
  %vm4817 = vcmp.eq.s32.totalorder %v4789, %v4806
  %vm4818 = vcmp.eq.s32.totalorder %v4789, %v4810
  %vm4819 = vcmp.eq.s32.totalorder %v4790, %v4806
  %vm4820 = vcmp.eq.s32.totalorder %v4790, %v4810
  %vm4821 = vcmp.eq.s32.totalorder %v4791, %v4806
  %vm4822 = vcmp.eq.s32.totalorder %v4791, %v4810
  %vm4823 = vcmp.eq.s32.totalorder %v4792, %v4806
  %vm4824 = vcmp.eq.s32.totalorder %v4792, %v4810
  %vm4825 = vcmp.eq.s32.totalorder %v4793, %v4806
  %vm4826 = vcmp.eq.s32.totalorder %v4793, %v4810
  %vm4827 = vcmp.eq.s32.totalorder %v4794, %v4806
  %vm4828 = vcmp.eq.s32.totalorder %v4794, %v4810
  %vm4829 = vcmp.eq.s32.totalorder %v4795, %v4806
  %vm4830 = vcmp.eq.s32.totalorder %v4795, %v4810
  %vm4831 = vcmp.eq.s32.totalorder %v4796, %v4806
  %vm4832 = vcmp.eq.s32.totalorder %v4796, %v4810
  %vm4833 = vcmp.eq.s32.totalorder %v4797, %v4806
  %vm4834 = vcmp.eq.s32.totalorder %v4797, %v4810
  %vm4835 = vcmp.eq.s32.totalorder %v4798, %v4806
  %vm4836 = vcmp.eq.s32.totalorder %v4798, %v4810
  %vm4837 = vcmp.eq.s32.totalorder %v4799, %v4806
  %vm4838 = vcmp.eq.s32.totalorder %v4799, %v4810
  %vm4839 = vcmp.eq.s32.totalorder %v4800, %v4806
  %vm4840 = vcmp.eq.s32.totalorder %v4800, %v4810
  %vm4841 = vcmp.eq.s32.totalorder %v4801, %v4806
  %vm4842 = vcmp.eq.s32.totalorder %v4801, %v4810
  %v4843 = vld [vmem:[%s13] sm:$0xf]
  %v4844 = vld [vmem:[%s13 + $0x4] sm:$0xf]
  %v4845 = vld [vmem:[%s13 + $0x8] sm:$0xf]
  %v4846 = vld [vmem:[%s13 + $0xc] sm:$0xf]
  %v4847 = vld [vmem:[%s13 + $0x10] sm:$0xf]
  %v4848 = vld [vmem:[%s13 + $0x14] sm:$0xf]
  %v4849 = vld [vmem:[%s13 + $0x18] sm:$0xf]
  %v4850 = vld [vmem:[%s13 + $0x1c] sm:$0xf]
  %v4851 = vld [vmem:[%s13 + $0x20] sm:$0xf]
  %v4852 = vld [vmem:[%s13 + $0x24] sm:$0xf]
  %v4853 = vld [vmem:[%s13 + $0x28] sm:$0xf]
  %v4854 = vld [vmem:[%s13 + $0x2c] sm:$0xf]
  %v4855 = vld [vmem:[%s13 + $0x30] sm:$0xf]
  %v4856 = vld [vmem:[%s13 + $0x34] sm:$0xf]
  %v4857 = vld [vmem:[%s13 + $0x38] sm:$0xf]
  %v4858 = vld [vmem:[%s13 + $0x3c] sm:$0xf]
  %v4859 = vpack.c.bf16 %v525, %v522
  %v4860 = vpack.c.bf16 %v533, %v530
  %v4861 = vpack.c.bf16 %v541, %v538
  %v4862 = vpack.c.bf16 %v549, %v546
  %v4863 = vpack.c.bf16 %v557, %v554
  %v4864 = vpack.c.bf16 %v565, %v562
  %v4865 = vpack.c.bf16 %v573, %v570
  %v4866 = vpack.c.bf16 %v581, %v578
  %v4883 = vunpack.c.l.b16 %v4843
  %v4884 = vunpack.c.l.b16 %v4844
  %v4885 = vunpack.c.l.b16 %v4845
  %v4886 = vunpack.c.l.b16 %v4846
  %v4887 = vunpack.c.l.b16 %v4847
  %v4888 = vunpack.c.l.b16 %v4848
  %v4889 = vunpack.c.l.b16 %v4849
  %v4890 = vunpack.c.l.b16 %v4850
  %v4891 = vunpack.c.l.b16 %v4851
  %v4892 = vunpack.c.l.b16 %v4852
  %v4893 = vunpack.c.l.b16 %v4853
  %v4894 = vunpack.c.l.b16 %v4854
  %v4895 = vunpack.c.l.b16 %v4855
  %v4896 = vunpack.c.l.b16 %v4856
  %v4897 = vunpack.c.l.b16 %v4857
  %v4898 = vunpack.c.l.b16 %v4858
  %v4899 = vpack.c.b16 %v4884, %v4883
  %v4900 = vpack.c.b16 %v4886, %v4885
  %v4901 = vpack.c.b16 %v4888, %v4887
  %v4902 = vpack.c.b16 %v4890, %v4889
  %v4903 = vpack.c.b16 %v4892, %v4891
  %v4904 = vpack.c.b16 %v4894, %v4893
  %v4905 = vpack.c.b16 %v4896, %v4895
  %v4906 = vpack.c.b16 %v4898, %v4897
  %4915 = vmatprep.subr.bf16.mxu0 0
  %4916 = vmatpush1.bf16.msra.mxu0 %v4906
  %4917 = vmatprep.subr.bf16.mxu0 0
  %4918 = vmatpush1.bf16.msra.mxu0 %v4905
  %4919 = vmatprep.subr.bf16.mxu0 0
  %4920 = vmatpush1.bf16.msra.mxu0 %v4904
  %4921 = vmatprep.subr.bf16.mxu0 0
  %4922 = vmatpush1.bf16.msra.mxu0 %v4903
  %4923 = vmatprep.subr.bf16.mxu0 0
  %4924 = vmatpush1.bf16.msra.mxu0 %v4902
  %4925 = vmatprep.subr.bf16.mxu0 0
  %4926 = vmatpush1.bf16.msra.mxu0 %v4901
  %4927 = vmatprep.subr.bf16.mxu0 0
  %4928 = vmatpush1.bf16.msra.mxu0 %v4900
  %4929 = vmatprep.subr.bf16.mxu0 0
  %4930 = vmatpush1.bf16.msra.mxu0 %v4899
  %4931 = vmatprep.subr.bf16.mxu0 0
  %4932 = vmatpush2.bf16.msra.mxu0 0
  %4933 = vmatprep.subr.bf16.mxu0 0
  %4934 = vmatpush2.bf16.msra.mxu0 0
  %4935 = vmatprep.subr.bf16.mxu0 0
  %4936 = vmatpush2.bf16.msra.mxu0 0
  %4937 = vmatprep.subr.bf16.mxu0 0
  %4938 = vmatpush2.bf16.msra.mxu0 0
  %4939 = vmatprep.subr.bf16.mxu0 0
  %4940 = vmatpush2.bf16.msra.mxu0 0
  %4941 = vmatprep.subr.bf16.mxu0 0
  %4942 = vmatpush2.bf16.msra.mxu0 0
  %4943 = vmatprep.subr.bf16.mxu0 0
  %4944 = vmatpush2.bf16.msra.mxu0 0
  %4945 = vmatprep.subr.bf16.mxu0 0
  %4946 = vmatpush2.bf16.msra.mxu0 0
  %4947 = vmatprep.mubr.bf16.mxu0 0
  %4948 = vmatmul.mubr.bf16.gmra.mxu0 %v4859
  %v4949 = vpop.f32.mrf.mxu0
  %v4950 = vadd.f32 0.0, %v4949
  %v4951 = vpop.f32.mrf.mxu0
  %v4952 = vpop.f32.mrf.mxu0
  %v4953 = vadd.f32 0.0, %v4952
  %v4954 = vpop.f32.mrf.mxu0
  %4955 = vmatprep.mubr.bf16.mxu0 0
  %4956 = vmatmul.mubr.bf16.gmra.mxu0 %v4860
  %v4957 = vpop.f32.mrf.mxu0
  %v4958 = vadd.f32 0.0, %v4957
  %v4959 = vpop.f32.mrf.mxu0
  %v4960 = vpop.f32.mrf.mxu0
  %v4961 = vadd.f32 0.0, %v4960
  %v4962 = vpop.f32.mrf.mxu0
  %4963 = vmatprep.mubr.bf16.mxu0 0
  %4964 = vmatmul.mubr.bf16.gmra.mxu0 %v4861
  %v4965 = vpop.f32.mrf.mxu0
  %v4966 = vadd.f32 0.0, %v4965
  %v4967 = vpop.f32.mrf.mxu0
  %v4968 = vpop.f32.mrf.mxu0
  %v4969 = vadd.f32 0.0, %v4968
  %v4970 = vpop.f32.mrf.mxu0
  %4971 = vmatprep.mubr.bf16.mxu0 0
  %4972 = vmatmul.mubr.bf16.gmra.mxu0 %v4862
  %v4973 = vpop.f32.mrf.mxu0
  %v4974 = vadd.f32 0.0, %v4973
  %v4975 = vpop.f32.mrf.mxu0
  %v4976 = vpop.f32.mrf.mxu0
  %v4977 = vadd.f32 0.0, %v4976
  %v4978 = vpop.f32.mrf.mxu0
  %4979 = vmatprep.mubr.bf16.mxu0 0
  %4980 = vmatmul.mubr.bf16.gmra.mxu0 %v4863
  %v4981 = vpop.f32.mrf.mxu0
  %v4982 = vadd.f32 0.0, %v4981
  %v4983 = vpop.f32.mrf.mxu0
  %v4984 = vpop.f32.mrf.mxu0
  %v4985 = vadd.f32 0.0, %v4984
  %v4986 = vpop.f32.mrf.mxu0
  %4987 = vmatprep.mubr.bf16.mxu0 0
  %4988 = vmatmul.mubr.bf16.gmra.mxu0 %v4864
  %v4989 = vpop.f32.mrf.mxu0
  %v4990 = vadd.f32 0.0, %v4989
  %v4991 = vpop.f32.mrf.mxu0
  %v4992 = vpop.f32.mrf.mxu0
  %v4993 = vadd.f32 0.0, %v4992
  %v4994 = vpop.f32.mrf.mxu0
  %4995 = vmatprep.mubr.bf16.mxu0 0
  %4996 = vmatmul.mubr.bf16.gmra.mxu0 %v4865
  %v4997 = vpop.f32.mrf.mxu0
  %v4998 = vadd.f32 0.0, %v4997
  %v4999 = vpop.f32.mrf.mxu0
  %v5000 = vpop.f32.mrf.mxu0
  %v5001 = vadd.f32 0.0, %v5000
  %v5002 = vpop.f32.mrf.mxu0
  %5003 = vmatprep.mubr.bf16.mxu0 0
  %5004 = vmatmul.mubr.bf16.gmra.mxu0 %v4866
  %v5005 = vpop.f32.mrf.mxu0
  %v5006 = vadd.f32 0.0, %v5005
  %v5007 = vpop.f32.mrf.mxu0
  %v5008 = vpop.f32.mrf.mxu0
  %v5009 = vadd.f32 0.0, %v5008
  %v5010 = vpop.f32.mrf.mxu0
  %5011 = vdwg.mxu0
  %v5012 = vld [vmem:[%s14] sm:$0xf]
  %v5013 = vld [vmem:[%s14 + $0x4] sm:$0xf]
  %v5014 = vld [vmem:[%s14 + $0x8] sm:$0xf]
  %v5015 = vld [vmem:[%s14 + $0xc] sm:$0xf]
  %v5016 = vld [vmem:[%s14 + $0x10] sm:$0xf]
  %v5017 = vld [vmem:[%s14 + $0x14] sm:$0xf]
  %v5018 = vld [vmem:[%s14 + $0x18] sm:$0xf]
  %v5019 = vld [vmem:[%s14 + $0x1c] sm:$0xf]
  %v5020 = vld [vmem:[%s14 + $0x20] sm:$0xf]
  %v5021 = vld [vmem:[%s14 + $0x24] sm:$0xf]
  %v5022 = vld [vmem:[%s14 + $0x28] sm:$0xf]
  %v5023 = vld [vmem:[%s14 + $0x2c] sm:$0xf]
  %v5024 = vld [vmem:[%s14 + $0x30] sm:$0xf]
  %v5025 = vld [vmem:[%s14 + $0x34] sm:$0xf]
  %v5026 = vld [vmem:[%s14 + $0x38] sm:$0xf]
  %v5027 = vld [vmem:[%s14 + $0x3c] sm:$0xf]
  %v5028 = vpack.c.bf16 %v1042, %v1040
  %v5029 = vpack.c.bf16 %v1046, %v1044
  %v5030 = vpack.c.bf16 %v1050, %v1048
  %v5031 = vpack.c.bf16 %v1054, %v1052
  %v5032 = vpack.c.bf16 %v1058, %v1056
  %v5033 = vpack.c.bf16 %v1062, %v1060
  %v5034 = vpack.c.bf16 %v1066, %v1064
  %v5035 = vpack.c.bf16 %v1070, %v1068
  %v5036 = vpack.c.bf16 %v1074, %v1072
  %v5037 = vpack.c.bf16 %v1078, %v1076
  %v5038 = vpack.c.bf16 %v1082, %v1080
  %v5039 = vpack.c.bf16 %v1086, %v1084
  %v5040 = vpack.c.bf16 %v1090, %v1088
  %v5041 = vpack.c.bf16 %v1094, %v1092
  %v5042 = vpack.c.bf16 %v1098, %v1096
  %v5043 = vpack.c.bf16 %v1102, %v1100
  %v5044 = vld [vmem:[%s15] sm:$0x1]
  %v5046 = vlaneseq
  %v5047 = vshrl.u32 %v5046, 7
  %v5048 = vsub.s32 0, %v5047
  %v5049 = vrot.slane %v5044, %v5048
  %v5067 = vunpack.c.l.b16 %v5012
  %v5068 = vunpack.c.l.b16 %v5013
  %v5069 = vunpack.c.l.b16 %v5014
  %v5070 = vunpack.c.l.b16 %v5015
  %v5071 = vunpack.c.l.b16 %v5016
  %v5072 = vunpack.c.l.b16 %v5017
  %v5073 = vunpack.c.l.b16 %v5018
  %v5074 = vunpack.c.l.b16 %v5019
  %v5075 = vunpack.c.l.b16 %v5020
  %v5076 = vunpack.c.l.b16 %v5021
  %v5077 = vunpack.c.l.b16 %v5022
  %v5078 = vunpack.c.l.b16 %v5023
  %v5079 = vunpack.c.l.b16 %v5024
  %v5080 = vunpack.c.l.b16 %v5025
  %v5081 = vunpack.c.l.b16 %v5026
  %v5082 = vunpack.c.l.b16 %v5027
  %v5083 = vpack.c.b16 %v5068, %v5067
  %v5084 = vpack.c.b16 %v5070, %v5069
  %v5085 = vpack.c.b16 %v5072, %v5071
  %v5086 = vpack.c.b16 %v5074, %v5073
  %v5087 = vpack.c.b16 %v5076, %v5075
  %v5088 = vpack.c.b16 %v5078, %v5077
  %v5089 = vpack.c.b16 %v5080, %v5079
  %v5090 = vpack.c.b16 %v5082, %v5081
  %5099 = vmatprep.subr.bf16.mxu0 0
  %5100 = vmatpush1.bf16.msra.mxu0 %v5090
  %5101 = vmatprep.subr.bf16.mxu0 0
  %5102 = vmatpush1.bf16.msra.mxu0 %v5089
  %5103 = vmatprep.subr.bf16.mxu0 0
  %5104 = vmatpush1.bf16.msra.mxu0 %v5088
  %5105 = vmatprep.subr.bf16.mxu0 0
  %5106 = vmatpush1.bf16.msra.mxu0 %v5087
  %5107 = vmatprep.subr.bf16.mxu0 0
  %5108 = vmatpush1.bf16.msra.mxu0 %v5086
  %5109 = vmatprep.subr.bf16.mxu0 0
  %5110 = vmatpush1.bf16.msra.mxu0 %v5085
  %5111 = vmatprep.subr.bf16.mxu0 0
  %5112 = vmatpush1.bf16.msra.mxu0 %v5084
  %5113 = vmatprep.subr.bf16.mxu0 0
  %5114 = vmatpush1.bf16.msra.mxu0 %v5083
  %5115 = vmatprep.subr.bf16.mxu0 0
  %5116 = vmatpush2.bf16.msra.mxu0 0
  %5117 = vmatprep.subr.bf16.mxu0 0
  %5118 = vmatpush2.bf16.msra.mxu0 0
  %5119 = vmatprep.subr.bf16.mxu0 0
  %5120 = vmatpush2.bf16.msra.mxu0 0
  %5121 = vmatprep.subr.bf16.mxu0 0
  %5122 = vmatpush2.bf16.msra.mxu0 0
  %5123 = vmatprep.subr.bf16.mxu0 0
  %5124 = vmatpush2.bf16.msra.mxu0 0
  %5125 = vmatprep.subr.bf16.mxu0 0
  %5126 = vmatpush2.bf16.msra.mxu0 0
  %5127 = vmatprep.subr.bf16.mxu0 0
  %5128 = vmatpush2.bf16.msra.mxu0 0
  %5129 = vmatprep.subr.bf16.mxu0 0
  %5130 = vmatpush2.bf16.msra.mxu0 0
  %5131 = vmatprep.mubr.bf16.mxu0 0
  %5132 = vmatmul.mubr.bf16.gmra.mxu0 %v5028
  %v5133 = vpop.f32.mrf.mxu0
  %v5134 = vadd.f32 %v5049, %v5133
  %v5135 = vpop.f32.mrf.mxu0
  %v5136 = vpop.f32.mrf.mxu0
  %v5137 = vadd.f32 %v5049, %v5136
  %v5138 = vpop.f32.mrf.mxu0
  %5139 = vmatprep.mubr.bf16.mxu0 0
  %5140 = vmatmul.mubr.bf16.gmra.mxu0 %v5029
  %v5141 = vpop.f32.mrf.mxu0
  %v5142 = vadd.f32 %v5049, %v5141
  %v5143 = vpop.f32.mrf.mxu0
  %v5144 = vpop.f32.mrf.mxu0
  %v5145 = vadd.f32 %v5049, %v5144
  %v5146 = vpop.f32.mrf.mxu0
  %5147 = vmatprep.mubr.bf16.mxu0 0
  %5148 = vmatmul.mubr.bf16.gmra.mxu0 %v5030
  %v5149 = vpop.f32.mrf.mxu0
  %v5150 = vadd.f32 %v5049, %v5149
  %v5151 = vpop.f32.mrf.mxu0
  %v5152 = vpop.f32.mrf.mxu0
  %v5153 = vadd.f32 %v5049, %v5152
  %v5154 = vpop.f32.mrf.mxu0
  %5155 = vmatprep.mubr.bf16.mxu0 0
  %5156 = vmatmul.mubr.bf16.gmra.mxu0 %v5031
  %v5157 = vpop.f32.mrf.mxu0
  %v5158 = vadd.f32 %v5049, %v5157
  %v5159 = vpop.f32.mrf.mxu0
  %v5160 = vpop.f32.mrf.mxu0
  %v5161 = vadd.f32 %v5049, %v5160
  %v5162 = vpop.f32.mrf.mxu0
  %5163 = vmatprep.mubr.bf16.mxu0 0
  %5164 = vmatmul.mubr.bf16.gmra.mxu0 %v5032
  %v5165 = vpop.f32.mrf.mxu0
  %v5166 = vadd.f32 %v5049, %v5165
  %v5167 = vpop.f32.mrf.mxu0
  %v5168 = vpop.f32.mrf.mxu0
  %v5169 = vadd.f32 %v5049, %v5168
  %v5170 = vpop.f32.mrf.mxu0
  %5171 = vmatprep.mubr.bf16.mxu0 0
  %5172 = vmatmul.mubr.bf16.gmra.mxu0 %v5033
  %v5173 = vpop.f32.mrf.mxu0
  %v5174 = vadd.f32 %v5049, %v5173
  %v5175 = vpop.f32.mrf.mxu0
  %v5176 = vpop.f32.mrf.mxu0
  %v5177 = vadd.f32 %v5049, %v5176
  %v5178 = vpop.f32.mrf.mxu0
  %5179 = vmatprep.mubr.bf16.mxu0 0
  %5180 = vmatmul.mubr.bf16.gmra.mxu0 %v5034
  %v5181 = vpop.f32.mrf.mxu0
  %v5182 = vadd.f32 %v5049, %v5181
  %v5183 = vpop.f32.mrf.mxu0
  %v5184 = vpop.f32.mrf.mxu0
  %v5185 = vadd.f32 %v5049, %v5184
  %v5186 = vpop.f32.mrf.mxu0
  %5187 = vmatprep.mubr.bf16.mxu0 0
  %5188 = vmatmul.mubr.bf16.gmra.mxu0 %v5035
  %v5189 = vpop.f32.mrf.mxu0
  %v5190 = vadd.f32 %v5049, %v5189
  %v5191 = vpop.f32.mrf.mxu0
  %v5192 = vpop.f32.mrf.mxu0
  %v5193 = vadd.f32 %v5049, %v5192
  %v5194 = vpop.f32.mrf.mxu0
  %5195 = vmatprep.mubr.bf16.mxu0 0
  %5196 = vmatmul.mubr.bf16.gmra.mxu0 %v5036
  %v5197 = vpop.f32.mrf.mxu0
  %v5198 = vadd.f32 %v5049, %v5197
  %v5199 = vpop.f32.mrf.mxu0
  %v5200 = vpop.f32.mrf.mxu0
  %v5201 = vadd.f32 %v5049, %v5200
  %v5202 = vpop.f32.mrf.mxu0
  %5203 = vmatprep.mubr.bf16.mxu0 0
  %5204 = vmatmul.mubr.bf16.gmra.mxu0 %v5037
  %v5205 = vpop.f32.mrf.mxu0
  %v5206 = vadd.f32 %v5049, %v5205
  %v5207 = vpop.f32.mrf.mxu0
  %v5208 = vpop.f32.mrf.mxu0
  %v5209 = vadd.f32 %v5049, %v5208
  %v5210 = vpop.f32.mrf.mxu0
  %5211 = vmatprep.mubr.bf16.mxu0 0
  %5212 = vmatmul.mubr.bf16.gmra.mxu0 %v5038
  %v5213 = vpop.f32.mrf.mxu0
  %v5214 = vadd.f32 %v5049, %v5213
  %v5215 = vpop.f32.mrf.mxu0
  %v5216 = vpop.f32.mrf.mxu0
  %v5217 = vadd.f32 %v5049, %v5216
  %v5218 = vpop.f32.mrf.mxu0
  %5219 = vmatprep.mubr.bf16.mxu0 0
  %5220 = vmatmul.mubr.bf16.gmra.mxu0 %v5039
  %v5221 = vpop.f32.mrf.mxu0
  %v5222 = vadd.f32 %v5049, %v5221
  %v5223 = vpop.f32.mrf.mxu0
  %v5224 = vpop.f32.mrf.mxu0
  %v5225 = vadd.f32 %v5049, %v5224
  %v5226 = vpop.f32.mrf.mxu0
  %5227 = vmatprep.mubr.bf16.mxu0 0
  %5228 = vmatmul.mubr.bf16.gmra.mxu0 %v5040
  %v5229 = vpop.f32.mrf.mxu0
  %v5230 = vadd.f32 %v5049, %v5229
  %v5231 = vpop.f32.mrf.mxu0
  %v5232 = vpop.f32.mrf.mxu0
  %v5233 = vadd.f32 %v5049, %v5232
  %v5234 = vpop.f32.mrf.mxu0
  %5235 = vmatprep.mubr.bf16.mxu0 0
  %5236 = vmatmul.mubr.bf16.gmra.mxu0 %v5041
  %v5237 = vpop.f32.mrf.mxu0
  %v5238 = vadd.f32 %v5049, %v5237
  %v5239 = vpop.f32.mrf.mxu0
  %v5240 = vpop.f32.mrf.mxu0
  %v5241 = vadd.f32 %v5049, %v5240
  %v5242 = vpop.f32.mrf.mxu0
  %5243 = vmatprep.mubr.bf16.mxu0 0
  %5244 = vmatmul.mubr.bf16.gmra.mxu0 %v5042
  %v5245 = vpop.f32.mrf.mxu0
  %v5246 = vadd.f32 %v5049, %v5245
  %v5247 = vpop.f32.mrf.mxu0
  %v5248 = vpop.f32.mrf.mxu0
  %v5249 = vadd.f32 %v5049, %v5248
  %v5250 = vpop.f32.mrf.mxu0
  %5251 = vmatprep.mubr.bf16.mxu0 0
  %5252 = vmatmul.mubr.bf16.gmra.mxu0 %v5043
  %v5253 = vpop.f32.mrf.mxu0
  %v5254 = vadd.f32 %v5049, %v5253
  %v5255 = vpop.f32.mrf.mxu0
  %v5256 = vpop.f32.mrf.mxu0
  %v5257 = vadd.f32 %v5049, %v5256
  %v5258 = vpop.f32.mrf.mxu0
  %5259 = vdwg.mxu0
  %v5260 = vmax.f32 %v5134, 0.0
  %v5261 = vmax.f32 %v5137, 0.0
  %v5262 = vmax.f32 %v5142, 0.0
  %v5263 = vmax.f32 %v5145, 0.0
  %v5264 = vmax.f32 %v5150, 0.0
  %v5265 = vmax.f32 %v5153, 0.0
  %v5266 = vmax.f32 %v5158, 0.0
  %v5267 = vmax.f32 %v5161, 0.0
  %v5268 = vmax.f32 %v5166, 0.0
  %v5269 = vmax.f32 %v5169, 0.0
  %v5270 = vmax.f32 %v5174, 0.0
  %v5271 = vmax.f32 %v5177, 0.0
  %v5272 = vmax.f32 %v5182, 0.0
  %v5273 = vmax.f32 %v5185, 0.0
  %v5274 = vmax.f32 %v5190, 0.0
  %v5275 = vmax.f32 %v5193, 0.0
  %v5276 = vmax.f32 %v5198, 0.0
  %v5277 = vmax.f32 %v5201, 0.0
  %v5278 = vmax.f32 %v5206, 0.0
  %v5279 = vmax.f32 %v5209, 0.0
  %v5280 = vmax.f32 %v5214, 0.0
  %v5281 = vmax.f32 %v5217, 0.0
  %v5282 = vmax.f32 %v5222, 0.0
  %v5283 = vmax.f32 %v5225, 0.0
  %v5284 = vmax.f32 %v5230, 0.0
  %v5285 = vmax.f32 %v5233, 0.0
  %v5286 = vmax.f32 %v5238, 0.0
  %v5287 = vmax.f32 %v5241, 0.0
  %v5288 = vmax.f32 %v5246, 0.0
  %v5289 = vmax.f32 %v5249, 0.0
  %v5290 = vmax.f32 %v5254, 0.0
  %v5291 = vmax.f32 %v5257, 0.0
  %v5292 = vand.u32 2147483647, %v5134
  %v5293 = vand.u32 2147483647, %v5137
  %v5294 = vand.u32 2147483647, %v5142
  %v5295 = vand.u32 2147483647, %v5145
  %v5296 = vand.u32 2147483647, %v5150
  %v5297 = vand.u32 2147483647, %v5153
  %v5298 = vand.u32 2147483647, %v5158
  %v5299 = vand.u32 2147483647, %v5161
  %v5300 = vand.u32 2147483647, %v5166
  %v5301 = vand.u32 2147483647, %v5169
  %v5302 = vand.u32 2147483647, %v5174
  %v5303 = vand.u32 2147483647, %v5177
  %v5304 = vand.u32 2147483647, %v5182
  %v5305 = vand.u32 2147483647, %v5185
  %v5306 = vand.u32 2147483647, %v5190
  %v5307 = vand.u32 2147483647, %v5193
  %v5308 = vand.u32 2147483647, %v5198
  %v5309 = vand.u32 2147483647, %v5201
  %v5310 = vand.u32 2147483647, %v5206
  %v5311 = vand.u32 2147483647, %v5209
  %v5312 = vand.u32 2147483647, %v5214
  %v5313 = vand.u32 2147483647, %v5217
  %v5314 = vand.u32 2147483647, %v5222
  %v5315 = vand.u32 2147483647, %v5225
  %v5316 = vand.u32 2147483647, %v5230
  %v5317 = vand.u32 2147483647, %v5233
  %v5318 = vand.u32 2147483647, %v5238
  %v5319 = vand.u32 2147483647, %v5241
  %v5320 = vand.u32 2147483647, %v5246
  %v5321 = vand.u32 2147483647, %v5249
  %v5322 = vand.u32 2147483647, %v5254
  %v5323 = vand.u32 2147483647, %v5257
  %v5324 = vsub.f32 0.0, %v5292
  %v5325 = vsub.f32 0.0, %v5293
  %v5326 = vsub.f32 0.0, %v5294
  %v5327 = vsub.f32 0.0, %v5295
  %v5328 = vsub.f32 0.0, %v5296
  %v5329 = vsub.f32 0.0, %v5297
  %v5330 = vsub.f32 0.0, %v5298
  %v5331 = vsub.f32 0.0, %v5299
  %v5332 = vsub.f32 0.0, %v5300
  %v5333 = vsub.f32 0.0, %v5301
  %v5334 = vsub.f32 0.0, %v5302
  %v5335 = vsub.f32 0.0, %v5303
  %v5336 = vsub.f32 0.0, %v5304
  %v5337 = vsub.f32 0.0, %v5305
  %v5338 = vsub.f32 0.0, %v5306
  %v5339 = vsub.f32 0.0, %v5307
  %v5340 = vsub.f32 0.0, %v5308
  %v5341 = vsub.f32 0.0, %v5309
  %v5342 = vsub.f32 0.0, %v5310
  %v5343 = vsub.f32 0.0, %v5311
  %v5344 = vsub.f32 0.0, %v5312
  %v5345 = vsub.f32 0.0, %v5313
  %v5346 = vsub.f32 0.0, %v5314
  %v5347 = vsub.f32 0.0, %v5315
  %v5348 = vsub.f32 0.0, %v5316
  %v5349 = vsub.f32 0.0, %v5317
  %v5350 = vsub.f32 0.0, %v5318
  %v5351 = vsub.f32 0.0, %v5319
  %v5352 = vsub.f32 0.0, %v5320
  %v5353 = vsub.f32 0.0, %v5321
  %v5354 = vsub.f32 0.0, %v5322
  %v5355 = vsub.f32 0.0, %v5323
  %v5356 = vmul.f32 %v5324, 1.442695
  %v5357 = vpow.pop %v5356
  %v5358 = vmul.f32 %v5325, 1.442695
  %v5359 = vpow.pop %v5358
  %v5360 = vmul.f32 %v5326, 1.442695
  %v5361 = vpow.pop %v5360
  %v5362 = vmul.f32 %v5327, 1.442695
  %v5363 = vpow.pop %v5362
  %v5364 = vmul.f32 %v5328, 1.442695
  %v5365 = vpow.pop %v5364
  %v5366 = vmul.f32 %v5329, 1.442695
  %v5367 = vpow.pop %v5366
  %v5368 = vmul.f32 %v5330, 1.442695
  %v5369 = vpow.pop %v5368
  %v5370 = vmul.f32 %v5331, 1.442695
  %v5371 = vpow.pop %v5370
  %v5372 = vmul.f32 %v5332, 1.442695
  %v5373 = vpow.pop %v5372
  %v5374 = vmul.f32 %v5333, 1.442695
  %v5375 = vpow.pop %v5374
  %v5376 = vmul.f32 %v5334, 1.442695
  %v5377 = vpow.pop %v5376
  %v5378 = vmul.f32 %v5335, 1.442695
  %v5379 = vpow.pop %v5378
  %v5380 = vmul.f32 %v5336, 1.442695
  %v5381 = vpow.pop %v5380
  %v5382 = vmul.f32 %v5337, 1.442695
  %v5383 = vpow.pop %v5382
  %v5384 = vmul.f32 %v5338, 1.442695
  %v5385 = vpow.pop %v5384
  %v5386 = vmul.f32 %v5339, 1.442695
  %v5387 = vpow.pop %v5386
  %v5388 = vmul.f32 %v5340, 1.442695
  %v5389 = vpow.pop %v5388
  %v5390 = vmul.f32 %v5341, 1.442695
  %v5391 = vpow.pop %v5390
  %v5392 = vmul.f32 %v5342, 1.442695
  %v5393 = vpow.pop %v5392
  %v5394 = vmul.f32 %v5343, 1.442695
  %v5395 = vpow.pop %v5394
  %v5396 = vmul.f32 %v5344, 1.442695
  %v5397 = vpow.pop %v5396
  %v5398 = vmul.f32 %v5345, 1.442695
  %v5399 = vpow.pop %v5398
  %v5400 = vmul.f32 %v5346, 1.442695
  %v5401 = vpow.pop %v5400
  %v5402 = vmul.f32 %v5347, 1.442695
  %v5403 = vpow.pop %v5402
  %v5404 = vmul.f32 %v5348, 1.442695
  %v5405 = vpow.pop %v5404
  %v5406 = vmul.f32 %v5349, 1.442695
  %v5407 = vpow.pop %v5406
  %v5408 = vmul.f32 %v5350, 1.442695
  %v5409 = vpow.pop %v5408
  %v5410 = vmul.f32 %v5351, 1.442695
  %v5411 = vpow.pop %v5410
  %v5412 = vmul.f32 %v5352, 1.442695
  %v5413 = vpow.pop %v5412
  %v5414 = vmul.f32 %v5353, 1.442695
  %v5415 = vpow.pop %v5414
  %v5416 = vmul.f32 %v5354, 1.442695
  %v5417 = vpow.pop %v5416
  %v5418 = vmul.f32 %v5355, 1.442695
  %v5419 = vpow.pop %v5418
  %v5420 = vadd.f32 %v5357, 1.0
  %v5421 = vadd.f32 %v5359, 1.0
  %v5422 = vadd.f32 %v5361, 1.0
  %v5423 = vadd.f32 %v5363, 1.0
  %v5424 = vadd.f32 %v5365, 1.0
  %v5425 = vadd.f32 %v5367, 1.0
  %v5426 = vadd.f32 %v5369, 1.0
  %v5427 = vadd.f32 %v5371, 1.0
  %v5428 = vadd.f32 %v5373, 1.0
  %v5429 = vadd.f32 %v5375, 1.0
  %v5430 = vadd.f32 %v5377, 1.0
  %v5431 = vadd.f32 %v5379, 1.0
  %v5432 = vadd.f32 %v5381, 1.0
  %v5433 = vadd.f32 %v5383, 1.0
  %v5434 = vadd.f32 %v5385, 1.0
  %v5435 = vadd.f32 %v5387, 1.0
  %v5436 = vadd.f32 %v5389, 1.0
  %v5437 = vadd.f32 %v5391, 1.0
  %v5438 = vadd.f32 %v5393, 1.0
  %v5439 = vadd.f32 %v5395, 1.0
  %v5440 = vadd.f32 %v5397, 1.0
  %v5441 = vadd.f32 %v5399, 1.0
  %v5442 = vadd.f32 %v5401, 1.0
  %v5443 = vadd.f32 %v5403, 1.0
  %v5444 = vadd.f32 %v5405, 1.0
  %v5445 = vadd.f32 %v5407, 1.0
  %v5446 = vadd.f32 %v5409, 1.0
  %v5447 = vadd.f32 %v5411, 1.0
  %v5448 = vadd.f32 %v5413, 1.0
  %v5449 = vadd.f32 %v5415, 1.0
  %v5450 = vadd.f32 %v5417, 1.0
  %v5451 = vadd.f32 %v5419, 1.0
  %v5452 = vlog2.pop %v5420
  %v5453 = vmul.f32 %v5452, 0.6931472
  %v5454 = vlog2.pop %v5421
  %v5455 = vmul.f32 %v5454, 0.6931472
  %v5456 = vlog2.pop %v5422
  %v5457 = vmul.f32 %v5456, 0.6931472
  %v5458 = vlog2.pop %v5423
  %v5459 = vmul.f32 %v5458, 0.6931472
  %v5460 = vlog2.pop %v5424
  %v5461 = vmul.f32 %v5460, 0.6931472
  %v5462 = vlog2.pop %v5425
  %v5463 = vmul.f32 %v5462, 0.6931472
  %v5464 = vlog2.pop %v5426
  %v5465 = vmul.f32 %v5464, 0.6931472
  %v5466 = vlog2.pop %v5427
  %v5467 = vmul.f32 %v5466, 0.6931472
  %v5468 = vlog2.pop %v5428
  %v5469 = vmul.f32 %v5468, 0.6931472
  %v5470 = vlog2.pop %v5429
  %v5471 = vmul.f32 %v5470, 0.6931472
  %v5472 = vlog2.pop %v5430
  %v5473 = vmul.f32 %v5472, 0.6931472
  %v5474 = vlog2.pop %v5431
  %v5475 = vmul.f32 %v5474, 0.6931472
  %v5476 = vlog2.pop %v5432
  %v5477 = vmul.f32 %v5476, 0.6931472
  %v5478 = vlog2.pop %v5433
  %v5479 = vmul.f32 %v5478, 0.6931472
  %v5480 = vlog2.pop %v5434
  %v5481 = vmul.f32 %v5480, 0.6931472
  %v5482 = vlog2.pop %v5435
  %v5483 = vmul.f32 %v5482, 0.6931472
  %v5484 = vlog2.pop %v5436
  %v5485 = vmul.f32 %v5484, 0.6931472
  %v5486 = vlog2.pop %v5437
  %v5487 = vmul.f32 %v5486, 0.6931472
  %v5488 = vlog2.pop %v5438
  %v5489 = vmul.f32 %v5488, 0.6931472
  %v5490 = vlog2.pop %v5439
  %v5491 = vmul.f32 %v5490, 0.6931472
  %v5492 = vlog2.pop %v5440
  %v5493 = vmul.f32 %v5492, 0.6931472
  %v5494 = vlog2.pop %v5441
  %v5495 = vmul.f32 %v5494, 0.6931472
  %v5496 = vlog2.pop %v5442
  %v5497 = vmul.f32 %v5496, 0.6931472
  %v5498 = vlog2.pop %v5443
  %v5499 = vmul.f32 %v5498, 0.6931472
  %v5500 = vlog2.pop %v5444
  %v5501 = vmul.f32 %v5500, 0.6931472
  %v5502 = vlog2.pop %v5445
  %v5503 = vmul.f32 %v5502, 0.6931472
  %v5504 = vlog2.pop %v5446
  %v5505 = vmul.f32 %v5504, 0.6931472
  %v5506 = vlog2.pop %v5447
  %v5507 = vmul.f32 %v5506, 0.6931472
  %v5508 = vlog2.pop %v5448
  %v5509 = vmul.f32 %v5508, 0.6931472
  %v5510 = vlog2.pop %v5449
  %v5511 = vmul.f32 %v5510, 0.6931472
  %v5512 = vlog2.pop %v5450
  %v5513 = vmul.f32 %v5512, 0.6931472
  %v5514 = vlog2.pop %v5451
  %v5515 = vmul.f32 %v5514, 0.6931472
  %v5516 = vadd.f32 %v5260, %v5453
  %v5517 = vadd.f32 %v5261, %v5455
  %v5518 = vadd.f32 %v5262, %v5457
  %v5519 = vadd.f32 %v5263, %v5459
  %v5520 = vadd.f32 %v5264, %v5461
  %v5521 = vadd.f32 %v5265, %v5463
  %v5522 = vadd.f32 %v5266, %v5465
  %v5523 = vadd.f32 %v5267, %v5467
  %v5524 = vadd.f32 %v5268, %v5469
  %v5525 = vadd.f32 %v5269, %v5471
  %v5526 = vadd.f32 %v5270, %v5473
  %v5527 = vadd.f32 %v5271, %v5475
  %v5528 = vadd.f32 %v5272, %v5477
  %v5529 = vadd.f32 %v5273, %v5479
  %v5530 = vadd.f32 %v5274, %v5481
  %v5531 = vadd.f32 %v5275, %v5483
  %v5532 = vadd.f32 %v5276, %v5485
  %v5533 = vadd.f32 %v5277, %v5487
  %v5534 = vadd.f32 %v5278, %v5489
  %v5535 = vadd.f32 %v5279, %v5491
  %v5536 = vadd.f32 %v5280, %v5493
  %v5537 = vadd.f32 %v5281, %v5495
  %v5538 = vadd.f32 %v5282, %v5497
  %v5539 = vadd.f32 %v5283, %v5499
  %v5540 = vadd.f32 %v5284, %v5501
  %v5541 = vadd.f32 %v5285, %v5503
  %v5542 = vadd.f32 %v5286, %v5505
  %v5543 = vadd.f32 %v5287, %v5507
  %v5544 = vadd.f32 %v5288, %v5509
  %v5545 = vadd.f32 %v5289, %v5511
  %v5546 = vadd.f32 %v5290, %v5513
  %v5547 = vadd.f32 %v5291, %v5515
  %v5548 = vsub.f32 %v5516, 0.6931472
  %v5549 = vsub.f32 %v5517, 0.6931472
  %v5550 = vsub.f32 %v5518, 0.6931472
  %v5551 = vsub.f32 %v5519, 0.6931472
  %v5552 = vsub.f32 %v5520, 0.6931472
  %v5553 = vsub.f32 %v5521, 0.6931472
  %v5554 = vsub.f32 %v5522, 0.6931472
  %v5555 = vsub.f32 %v5523, 0.6931472
  %v5556 = vsub.f32 %v5524, 0.6931472
  %v5557 = vsub.f32 %v5525, 0.6931472
  %v5558 = vsub.f32 %v5526, 0.6931472
  %v5559 = vsub.f32 %v5527, 0.6931472
  %v5560 = vsub.f32 %v5528, 0.6931472
  %v5561 = vsub.f32 %v5529, 0.6931472
  %v5562 = vsub.f32 %v5530, 0.6931472
  %v5563 = vsub.f32 %v5531, 0.6931472
  %v5564 = vsub.f32 %v5532, 0.6931472
  %v5565 = vsub.f32 %v5533, 0.6931472
  %v5566 = vsub.f32 %v5534, 0.6931472
  %v5567 = vsub.f32 %v5535, 0.6931472
  %v5568 = vsub.f32 %v5536, 0.6931472
  %v5569 = vsub.f32 %v5537, 0.6931472
  %v5570 = vsub.f32 %v5538, 0.6931472
  %v5571 = vsub.f32 %v5539, 0.6931472
  %v5572 = vsub.f32 %v5540, 0.6931472
  %v5573 = vsub.f32 %v5541, 0.6931472
  %v5574 = vsub.f32 %v5542, 0.6931472
  %v5575 = vsub.f32 %v5543, 0.6931472
  %v5576 = vsub.f32 %v5544, 0.6931472
  %v5577 = vsub.f32 %v5545, 0.6931472
  %v5578 = vsub.f32 %v5546, 0.6931472
  %v5579 = vsub.f32 %v5547, 0.6931472
  %v5580 = vld [vmem:[%s16] sm:$0xf]
  %v5581 = vld [vmem:[%s16 + $0x4] sm:$0xf]
  %v5582 = vld [vmem:[%s16 + $0x8] sm:$0xf]
  %v5583 = vld [vmem:[%s16 + $0xc] sm:$0xf]
  %v5584 = vld [vmem:[%s16 + $0x10] sm:$0xf]
  %v5585 = vld [vmem:[%s16 + $0x14] sm:$0xf]
  %v5586 = vld [vmem:[%s16 + $0x18] sm:$0xf]
  %v5587 = vld [vmem:[%s16 + $0x1c] sm:$0xf]
  %v5588 = vld [vmem:[%s16 + $0x20] sm:$0xf]
  %v5589 = vld [vmem:[%s16 + $0x24] sm:$0xf]
  %v5590 = vld [vmem:[%s16 + $0x28] sm:$0xf]
  %v5591 = vld [vmem:[%s16 + $0x2c] sm:$0xf]
  %v5592 = vld [vmem:[%s16 + $0x30] sm:$0xf]
  %v5593 = vld [vmem:[%s16 + $0x34] sm:$0xf]
  %v5594 = vld [vmem:[%s16 + $0x38] sm:$0xf]
  %v5595 = vld [vmem:[%s16 + $0x3c] sm:$0xf]
  %v5596 = vpack.c.bf16 %v5549, %v5548
  %v5597 = vpack.c.bf16 %v5551, %v5550
  %v5598 = vpack.c.bf16 %v5553, %v5552
  %v5599 = vpack.c.bf16 %v5555, %v5554
  %v5600 = vpack.c.bf16 %v5557, %v5556
  %v5601 = vpack.c.bf16 %v5559, %v5558
  %v5602 = vpack.c.bf16 %v5561, %v5560
  %v5603 = vpack.c.bf16 %v5563, %v5562
  %v5604 = vpack.c.bf16 %v5565, %v5564
  %v5605 = vpack.c.bf16 %v5567, %v5566
  %v5606 = vpack.c.bf16 %v5569, %v5568
  %v5607 = vpack.c.bf16 %v5571, %v5570
  %v5608 = vpack.c.bf16 %v5573, %v5572
  %v5609 = vpack.c.bf16 %v5575, %v5574
  %v5610 = vpack.c.bf16 %v5577, %v5576
  %v5611 = vpack.c.bf16 %v5579, %v5578
  %v5612 = vld [vmem:[%s17] sm:$0x1]
  %v5614 = vlaneseq
  %v5615 = vshrl.u32 %v5614, 7
  %v5616 = vsub.s32 0, %v5615
  %v5617 = vrot.slane %v5612, %v5616
  %v5635 = vunpack.c.l.b16 %v5580
  %v5636 = vunpack.c.l.b16 %v5581
  %v5637 = vunpack.c.l.b16 %v5582
  %v5638 = vunpack.c.l.b16 %v5583
  %v5639 = vunpack.c.l.b16 %v5584
  %v5640 = vunpack.c.l.b16 %v5585
  %v5641 = vunpack.c.l.b16 %v5586
  %v5642 = vunpack.c.l.b16 %v5587
  %v5643 = vunpack.c.l.b16 %v5588
  %v5644 = vunpack.c.l.b16 %v5589
  %v5645 = vunpack.c.l.b16 %v5590
  %v5646 = vunpack.c.l.b16 %v5591
  %v5647 = vunpack.c.l.b16 %v5592
  %v5648 = vunpack.c.l.b16 %v5593
  %v5649 = vunpack.c.l.b16 %v5594
  %v5650 = vunpack.c.l.b16 %v5595
  %v5651 = vpack.c.b16 %v5636, %v5635
  %v5652 = vpack.c.b16 %v5638, %v5637
  %v5653 = vpack.c.b16 %v5640, %v5639
  %v5654 = vpack.c.b16 %v5642, %v5641
  %v5655 = vpack.c.b16 %v5644, %v5643
  %v5656 = vpack.c.b16 %v5646, %v5645
  %v5657 = vpack.c.b16 %v5648, %v5647
  %v5658 = vpack.c.b16 %v5650, %v5649
  %5667 = vmatprep.subr.bf16.mxu0 0
  %5668 = vmatpush1.bf16.msra.mxu0 %v5658
  %5669 = vmatprep.subr.bf16.mxu0 0
  %5670 = vmatpush1.bf16.msra.mxu0 %v5657
  %5671 = vmatprep.subr.bf16.mxu0 0
  %5672 = vmatpush1.bf16.msra.mxu0 %v5656
  %5673 = vmatprep.subr.bf16.mxu0 0
  %5674 = vmatpush1.bf16.msra.mxu0 %v5655
  %5675 = vmatprep.subr.bf16.mxu0 0
  %5676 = vmatpush1.bf16.msra.mxu0 %v5654
  %5677 = vmatprep.subr.bf16.mxu0 0
  %5678 = vmatpush1.bf16.msra.mxu0 %v5653
  %5679 = vmatprep.subr.bf16.mxu0 0
  %5680 = vmatpush1.bf16.msra.mxu0 %v5652
  %5681 = vmatprep.subr.bf16.mxu0 0
  %5682 = vmatpush1.bf16.msra.mxu0 %v5651
  %5683 = vmatprep.subr.bf16.mxu0 0
  %5684 = vmatpush2.bf16.msra.mxu0 0
  %5685 = vmatprep.subr.bf16.mxu0 0
  %5686 = vmatpush2.bf16.msra.mxu0 0
  %5687 = vmatprep.subr.bf16.mxu0 0
  %5688 = vmatpush2.bf16.msra.mxu0 0
  %5689 = vmatprep.subr.bf16.mxu0 0
  %5690 = vmatpush2.bf16.msra.mxu0 0
  %5691 = vmatprep.subr.bf16.mxu0 0
  %5692 = vmatpush2.bf16.msra.mxu0 0
  %5693 = vmatprep.subr.bf16.mxu0 0
  %5694 = vmatpush2.bf16.msra.mxu0 0
  %5695 = vmatprep.subr.bf16.mxu0 0
  %5696 = vmatpush2.bf16.msra.mxu0 0
  %5697 = vmatprep.subr.bf16.mxu0 0
  %5698 = vmatpush2.bf16.msra.mxu0 0
  %5699 = vmatprep.mubr.bf16.mxu0 0
  %5700 = vmatmul.mubr.bf16.gmra.mxu0 %v5596
  %v5701 = vpop.f32.mrf.mxu0
  %v5702 = vadd.f32 %v5617, %v5701
  %v5703 = vpop.f32.mrf.mxu0
  %v5704 = vpop.f32.mrf.mxu0
  %v5705 = vadd.f32 %v5617, %v5704
  %v5706 = vpop.f32.mrf.mxu0
  %5707 = vmatprep.mubr.bf16.mxu0 0
  %5708 = vmatmul.mubr.bf16.gmra.mxu0 %v5597
  %v5709 = vpop.f32.mrf.mxu0
  %v5710 = vadd.f32 %v5617, %v5709
  %v5711 = vpop.f32.mrf.mxu0
  %v5712 = vpop.f32.mrf.mxu0
  %v5713 = vadd.f32 %v5617, %v5712
  %v5714 = vpop.f32.mrf.mxu0
  %5715 = vmatprep.mubr.bf16.mxu0 0
  %5716 = vmatmul.mubr.bf16.gmra.mxu0 %v5598
  %v5717 = vpop.f32.mrf.mxu0
  %v5718 = vadd.f32 %v5617, %v5717
  %v5719 = vpop.f32.mrf.mxu0
  %v5720 = vpop.f32.mrf.mxu0
  %v5721 = vadd.f32 %v5617, %v5720
  %v5722 = vpop.f32.mrf.mxu0
  %5723 = vmatprep.mubr.bf16.mxu0 0
  %5724 = vmatmul.mubr.bf16.gmra.mxu0 %v5599
  %v5725 = vpop.f32.mrf.mxu0
  %v5726 = vadd.f32 %v5617, %v5725
  %v5727 = vpop.f32.mrf.mxu0
  %v5728 = vpop.f32.mrf.mxu0
  %v5729 = vadd.f32 %v5617, %v5728
  %v5730 = vpop.f32.mrf.mxu0
  %5731 = vmatprep.mubr.bf16.mxu0 0
  %5732 = vmatmul.mubr.bf16.gmra.mxu0 %v5600
  %v5733 = vpop.f32.mrf.mxu0
  %v5734 = vadd.f32 %v5617, %v5733
  %v5735 = vpop.f32.mrf.mxu0
  %v5736 = vpop.f32.mrf.mxu0
  %v5737 = vadd.f32 %v5617, %v5736
  %v5738 = vpop.f32.mrf.mxu0
  %5739 = vmatprep.mubr.bf16.mxu0 0
  %5740 = vmatmul.mubr.bf16.gmra.mxu0 %v5601
  %v5741 = vpop.f32.mrf.mxu0
  %v5742 = vadd.f32 %v5617, %v5741
  %v5743 = vpop.f32.mrf.mxu0
  %v5744 = vpop.f32.mrf.mxu0
  %v5745 = vadd.f32 %v5617, %v5744
  %v5746 = vpop.f32.mrf.mxu0
  %5747 = vmatprep.mubr.bf16.mxu0 0
  %5748 = vmatmul.mubr.bf16.gmra.mxu0 %v5602
  %v5749 = vpop.f32.mrf.mxu0
  %v5750 = vadd.f32 %v5617, %v5749
  %v5751 = vpop.f32.mrf.mxu0
  %v5752 = vpop.f32.mrf.mxu0
  %v5753 = vadd.f32 %v5617, %v5752
  %v5754 = vpop.f32.mrf.mxu0
  %5755 = vmatprep.mubr.bf16.mxu0 0
  %5756 = vmatmul.mubr.bf16.gmra.mxu0 %v5603
  %v5757 = vpop.f32.mrf.mxu0
  %v5758 = vadd.f32 %v5617, %v5757
  %v5759 = vpop.f32.mrf.mxu0
  %v5760 = vpop.f32.mrf.mxu0
  %v5761 = vadd.f32 %v5617, %v5760
  %v5762 = vpop.f32.mrf.mxu0
  %5763 = vmatprep.mubr.bf16.mxu0 0
  %5764 = vmatmul.mubr.bf16.gmra.mxu0 %v5604
  %v5765 = vpop.f32.mrf.mxu0
  %v5766 = vadd.f32 %v5617, %v5765
  %v5767 = vpop.f32.mrf.mxu0
  %v5768 = vpop.f32.mrf.mxu0
  %v5769 = vadd.f32 %v5617, %v5768
  %v5770 = vpop.f32.mrf.mxu0
  %5771 = vmatprep.mubr.bf16.mxu0 0
  %5772 = vmatmul.mubr.bf16.gmra.mxu0 %v5605
  %v5773 = vpop.f32.mrf.mxu0
  %v5774 = vadd.f32 %v5617, %v5773
  %v5775 = vpop.f32.mrf.mxu0
  %v5776 = vpop.f32.mrf.mxu0
  %v5777 = vadd.f32 %v5617, %v5776
  %v5778 = vpop.f32.mrf.mxu0
  %5779 = vmatprep.mubr.bf16.mxu0 0
  %5780 = vmatmul.mubr.bf16.gmra.mxu0 %v5606
  %v5781 = vpop.f32.mrf.mxu0
  %v5782 = vadd.f32 %v5617, %v5781
  %v5783 = vpop.f32.mrf.mxu0
  %v5784 = vpop.f32.mrf.mxu0
  %v5785 = vadd.f32 %v5617, %v5784
  %v5786 = vpop.f32.mrf.mxu0
  %5787 = vmatprep.mubr.bf16.mxu0 0
  %5788 = vmatmul.mubr.bf16.gmra.mxu0 %v5607
  %v5789 = vpop.f32.mrf.mxu0
  %v5790 = vadd.f32 %v5617, %v5789
  %v5791 = vpop.f32.mrf.mxu0
  %v5792 = vpop.f32.mrf.mxu0
  %v5793 = vadd.f32 %v5617, %v5792
  %v5794 = vpop.f32.mrf.mxu0
  %5795 = vmatprep.mubr.bf16.mxu0 0
  %5796 = vmatmul.mubr.bf16.gmra.mxu0 %v5608
  %v5797 = vpop.f32.mrf.mxu0
  %v5798 = vadd.f32 %v5617, %v5797
  %v5799 = vpop.f32.mrf.mxu0
  %v5800 = vpop.f32.mrf.mxu0
  %v5801 = vadd.f32 %v5617, %v5800
  %v5802 = vpop.f32.mrf.mxu0
  %5803 = vmatprep.mubr.bf16.mxu0 0
  %5804 = vmatmul.mubr.bf16.gmra.mxu0 %v5609
  %v5805 = vpop.f32.mrf.mxu0
  %v5806 = vadd.f32 %v5617, %v5805
  %v5807 = vpop.f32.mrf.mxu0
  %v5808 = vpop.f32.mrf.mxu0
  %v5809 = vadd.f32 %v5617, %v5808
  %v5810 = vpop.f32.mrf.mxu0
  %5811 = vmatprep.mubr.bf16.mxu0 0
  %5812 = vmatmul.mubr.bf16.gmra.mxu0 %v5610
  %v5813 = vpop.f32.mrf.mxu0
  %v5814 = vadd.f32 %v5617, %v5813
  %v5815 = vpop.f32.mrf.mxu0
  %v5816 = vpop.f32.mrf.mxu0
  %v5817 = vadd.f32 %v5617, %v5816
  %v5818 = vpop.f32.mrf.mxu0
  %5819 = vmatprep.mubr.bf16.mxu0 0
  %5820 = vmatmul.mubr.bf16.gmra.mxu0 %v5611
  %v5821 = vpop.f32.mrf.mxu0
  %v5822 = vadd.f32 %v5617, %v5821
  %v5823 = vpop.f32.mrf.mxu0
  %v5824 = vpop.f32.mrf.mxu0
  %v5825 = vadd.f32 %v5617, %v5824
  %v5826 = vpop.f32.mrf.mxu0
  %5827 = vdwg.mxu0
  %v5828 = vmul.f32 %v5702, %v4591
  %v5829 = vmul.f32 %v5705, %v4592
  %v5830 = vmul.f32 %v5710, %v4593
  %v5831 = vmul.f32 %v5713, %v4594
  %v5832 = vmul.f32 %v5718, %v4595
  %v5833 = vmul.f32 %v5721, %v4596
  %v5834 = vmul.f32 %v5726, %v4597
  %v5835 = vmul.f32 %v5729, %v4598
  %v5836 = vmul.f32 %v5734, %v4599
  %v5837 = vmul.f32 %v5737, %v4600
  %v5838 = vmul.f32 %v5742, %v4601
  %v5839 = vmul.f32 %v5745, %v4602
  %v5840 = vmul.f32 %v5750, %v4603
  %v5841 = vmul.f32 %v5753, %v4604
  %v5842 = vmul.f32 %v5758, %v4605
  %v5843 = vmul.f32 %v5761, %v4606
  %v5844 = vmul.f32 %v5766, %v4607
  %v5845 = vmul.f32 %v5769, %v4608
  %v5846 = vmul.f32 %v5774, %v4609
  %v5847 = vmul.f32 %v5777, %v4610
  %v5848 = vmul.f32 %v5782, %v4611
  %v5849 = vmul.f32 %v5785, %v4612
  %v5850 = vmul.f32 %v5790, %v4613
  %v5851 = vmul.f32 %v5793, %v4614
  %v5852 = vmul.f32 %v5798, %v4615
  %v5853 = vmul.f32 %v5801, %v4616
  %v5854 = vmul.f32 %v5806, %v4617
  %v5855 = vmul.f32 %v5809, %v4618
  %v5856 = vmul.f32 %v5814, %v4619
  %v5857 = vmul.f32 %v5817, %v4620
  %v5858 = vmul.f32 %v5822, %v4621
  %v5859 = vmul.f32 %v5825, %v4622
  %v5860 = vsel %vm4753, 1, 0
  %v5861 = vsel %vm4754, 1, 0
  %v5862 = vsel %vm4755, 1, 0
  %v5863 = vsel %vm4756, 1, 0
  %v5864 = vsel %vm4757, 1, 0
  %v5865 = vsel %vm4758, 1, 0
  %v5866 = vsel %vm4759, 1, 0
  %v5867 = vsel %vm4760, 1, 0
  %v5868 = vsel %vm4761, 1, 0
  %v5869 = vsel %vm4762, 1, 0
  %v5870 = vsel %vm4763, 1, 0
  %v5871 = vsel %vm4764, 1, 0
  %v5872 = vsel %vm4765, 1, 0
  %v5873 = vsel %vm4766, 1, 0
  %v5874 = vsel %vm4767, 1, 0
  %v5875 = vsel %vm4768, 1, 0
  %v5876 = vsel %vm4769, 1, 0
  %v5877 = vsel %vm4770, 1, 0
  %v5878 = vsel %vm4771, 1, 0
  %v5879 = vsel %vm4772, 1, 0
  %v5880 = vsel %vm4773, 1, 0
  %v5881 = vsel %vm4774, 1, 0
  %v5882 = vsel %vm4775, 1, 0
  %v5883 = vsel %vm4776, 1, 0
  %v5884 = vsel %vm4777, 1, 0
  %v5885 = vsel %vm4778, 1, 0
  %v5886 = vsel %vm4779, 1, 0
  %v5887 = vsel %vm4780, 1, 0
  %v5888 = vsel %vm4781, 1, 0
  %v5889 = vsel %vm4782, 1, 0
  %v5890 = vsel %vm4783, 1, 0
  %v5891 = vsel %vm4784, 1, 0
  %v5892 = vcvt.s32.f32 %v5860
  %v5893 = vcvt.s32.f32 %v5861
  %v5894 = vcvt.s32.f32 %v5862
  %v5895 = vcvt.s32.f32 %v5863
  %v5896 = vcvt.s32.f32 %v5864
  %v5897 = vcvt.s32.f32 %v5865
  %v5898 = vcvt.s32.f32 %v5866
  %v5899 = vcvt.s32.f32 %v5867
  %v5900 = vcvt.s32.f32 %v5868
  %v5901 = vcvt.s32.f32 %v5869
  %v5902 = vcvt.s32.f32 %v5870
  %v5903 = vcvt.s32.f32 %v5871
  %v5904 = vcvt.s32.f32 %v5872
  %v5905 = vcvt.s32.f32 %v5873
  %v5906 = vcvt.s32.f32 %v5874
  %v5907 = vcvt.s32.f32 %v5875
  %v5908 = vcvt.s32.f32 %v5876
  %v5909 = vcvt.s32.f32 %v5877
  %v5910 = vcvt.s32.f32 %v5878
  %v5911 = vcvt.s32.f32 %v5879
  %v5912 = vcvt.s32.f32 %v5880
  %v5913 = vcvt.s32.f32 %v5881
  %v5914 = vcvt.s32.f32 %v5882
  %v5915 = vcvt.s32.f32 %v5883
  %v5916 = vcvt.s32.f32 %v5884
  %v5917 = vcvt.s32.f32 %v5885
  %v5918 = vcvt.s32.f32 %v5886
  %v5919 = vcvt.s32.f32 %v5887
  %v5920 = vcvt.s32.f32 %v5888
  %v5921 = vcvt.s32.f32 %v5889
  %v5922 = vcvt.s32.f32 %v5890
  %v5923 = vcvt.s32.f32 %v5891
  %v5924 = vpack.c.bf16 %v5893, %v5892
  %v5925 = vpack.c.bf16 %v5895, %v5894
  %v5926 = vpack.c.bf16 %v5897, %v5896
  %v5927 = vpack.c.bf16 %v5899, %v5898
  %v5928 = vpack.c.bf16 %v5901, %v5900
  %v5929 = vpack.c.bf16 %v5903, %v5902
  %v5930 = vpack.c.bf16 %v5905, %v5904
  %v5931 = vpack.c.bf16 %v5907, %v5906
  %v5932 = vpack.c.bf16 %v5909, %v5908
  %v5933 = vpack.c.bf16 %v5911, %v5910
  %v5934 = vpack.c.bf16 %v5913, %v5912
  %v5935 = vpack.c.bf16 %v5915, %v5914
  %v5936 = vpack.c.bf16 %v5917, %v5916
  %v5937 = vpack.c.bf16 %v5919, %v5918
  %v5938 = vpack.c.bf16 %v5921, %v5920
  %v5939 = vpack.c.bf16 %v5923, %v5922
  %v5940 = vpack.c.bf16 %v4953, %v4950
  %v5941 = vpack.c.bf16 %v4961, %v4958
  %v5942 = vpack.c.bf16 %v4969, %v4966
  %v5943 = vpack.c.bf16 %v4977, %v4974
  %v5944 = vpack.c.bf16 %v4985, %v4982
  %v5945 = vpack.c.bf16 %v4993, %v4990
  %v5946 = vpack.c.bf16 %v5001, %v4998
  %v5947 = vpack.c.bf16 %v5009, %v5006
  %5948 = vmatprep.subr.bf16.mxu0 0
  %5949 = vmatpush1.bf16.msra.mxu0 %v5947
  %5950 = vmatprep.subr.bf16.mxu0 0
  %5951 = vmatpush1.bf16.msra.mxu0 %v5946
  %5952 = vmatprep.subr.bf16.mxu0 0
  %5953 = vmatpush1.bf16.msra.mxu0 %v5945
  %5954 = vmatprep.subr.bf16.mxu0 0
  %5955 = vmatpush1.bf16.msra.mxu0 %v5944
  %5956 = vmatprep.subr.bf16.mxu0 0
  %5957 = vmatpush1.bf16.msra.mxu0 %v5943
  %5958 = vmatprep.subr.bf16.mxu0 0
  %5959 = vmatpush1.bf16.msra.mxu0 %v5942
  %5960 = vmatprep.subr.bf16.mxu0 0
  %5961 = vmatpush1.bf16.msra.mxu0 %v5941
  %5962 = vmatprep.subr.bf16.mxu0 0
  %5963 = vmatpush1.bf16.msra.mxu0 %v5940
  %5964 = vmatprep.subr.bf16.mxu0 0
  %5965 = vmatpush2.bf16.msra.mxu0 0
  %5966 = vmatprep.subr.bf16.mxu0 0
  %5967 = vmatpush2.bf16.msra.mxu0 0
  %5968 = vmatprep.subr.bf16.mxu0 0
  %5969 = vmatpush2.bf16.msra.mxu0 0
  %5970 = vmatprep.subr.bf16.mxu0 0
  %5971 = vmatpush2.bf16.msra.mxu0 0
  %5972 = vmatprep.subr.bf16.mxu0 0
  %5973 = vmatpush2.bf16.msra.mxu0 0
  %5974 = vmatprep.subr.bf16.mxu0 0
  %5975 = vmatpush2.bf16.msra.mxu0 0
  %5976 = vmatprep.subr.bf16.mxu0 0
  %5977 = vmatpush2.bf16.msra.mxu0 0
  %5978 = vmatprep.subr.bf16.mxu0 0
  %5979 = vmatpush2.bf16.msra.mxu0 0
  %5980 = vmatprep.mubr.bf16.mxu0 0
  %5981 = vmatmul.mubr.bf16.gmra.mxu0 %v5924
  %v5982 = vpop.f32.mrf.mxu0
  %v5983 = vadd.f32 0.0, %v5982
  %v5984 = vpop.f32.mrf.mxu0
  %v5985 = vpop.f32.mrf.mxu0
  %v5986 = vadd.f32 0.0, %v5985
  %v5987 = vpop.f32.mrf.mxu0
  %5988 = vmatprep.mubr.bf16.mxu0 0
  %5989 = vmatmul.mubr.bf16.gmra.mxu0 %v5925
  %v5990 = vpop.f32.mrf.mxu0
  %v5991 = vadd.f32 0.0, %v5990
  %v5992 = vpop.f32.mrf.mxu0
  %v5993 = vpop.f32.mrf.mxu0
  %v5994 = vadd.f32 0.0, %v5993
  %v5995 = vpop.f32.mrf.mxu0
  %5996 = vmatprep.mubr.bf16.mxu0 0
  %5997 = vmatmul.mubr.bf16.gmra.mxu0 %v5926
  %v5998 = vpop.f32.mrf.mxu0
  %v5999 = vadd.f32 0.0, %v5998
  %v6000 = vpop.f32.mrf.mxu0
  %v6001 = vpop.f32.mrf.mxu0
  %v6002 = vadd.f32 0.0, %v6001
  %v6003 = vpop.f32.mrf.mxu0
  %6004 = vmatprep.mubr.bf16.mxu0 0
  %6005 = vmatmul.mubr.bf16.gmra.mxu0 %v5927
  %v6006 = vpop.f32.mrf.mxu0
  %v6007 = vadd.f32 0.0, %v6006
  %v6008 = vpop.f32.mrf.mxu0
  %v6009 = vpop.f32.mrf.mxu0
  %v6010 = vadd.f32 0.0, %v6009
  %v6011 = vpop.f32.mrf.mxu0
  %6012 = vmatprep.mubr.bf16.mxu0 0
  %6013 = vmatmul.mubr.bf16.gmra.mxu0 %v5928
  %v6014 = vpop.f32.mrf.mxu0
  %v6015 = vadd.f32 0.0, %v6014
  %v6016 = vpop.f32.mrf.mxu0
  %v6017 = vpop.f32.mrf.mxu0
  %v6018 = vadd.f32 0.0, %v6017
  %v6019 = vpop.f32.mrf.mxu0
  %6020 = vmatprep.mubr.bf16.mxu0 0
  %6021 = vmatmul.mubr.bf16.gmra.mxu0 %v5929
  %v6022 = vpop.f32.mrf.mxu0
  %v6023 = vadd.f32 0.0, %v6022
  %v6024 = vpop.f32.mrf.mxu0
  %v6025 = vpop.f32.mrf.mxu0
  %v6026 = vadd.f32 0.0, %v6025
  %v6027 = vpop.f32.mrf.mxu0
  %6028 = vmatprep.mubr.bf16.mxu0 0
  %6029 = vmatmul.mubr.bf16.gmra.mxu0 %v5930
  %v6030 = vpop.f32.mrf.mxu0
  %v6031 = vadd.f32 0.0, %v6030
  %v6032 = vpop.f32.mrf.mxu0
  %v6033 = vpop.f32.mrf.mxu0
  %v6034 = vadd.f32 0.0, %v6033
  %v6035 = vpop.f32.mrf.mxu0
  %6036 = vmatprep.mubr.bf16.mxu0 0
  %6037 = vmatmul.mubr.bf16.gmra.mxu0 %v5931
  %v6038 = vpop.f32.mrf.mxu0
  %v6039 = vadd.f32 0.0, %v6038
  %v6040 = vpop.f32.mrf.mxu0
  %v6041 = vpop.f32.mrf.mxu0
  %v6042 = vadd.f32 0.0, %v6041
  %v6043 = vpop.f32.mrf.mxu0
  %6044 = vmatprep.mubr.bf16.mxu0 0
  %6045 = vmatmul.mubr.bf16.gmra.mxu0 %v5932
  %v6046 = vpop.f32.mrf.mxu0
  %v6047 = vadd.f32 0.0, %v6046
  %v6048 = vpop.f32.mrf.mxu0
  %v6049 = vpop.f32.mrf.mxu0
  %v6050 = vadd.f32 0.0, %v6049
  %v6051 = vpop.f32.mrf.mxu0
  %6052 = vmatprep.mubr.bf16.mxu0 0
  %6053 = vmatmul.mubr.bf16.gmra.mxu0 %v5933
  %v6054 = vpop.f32.mrf.mxu0
  %v6055 = vadd.f32 0.0, %v6054
  %v6056 = vpop.f32.mrf.mxu0
  %v6057 = vpop.f32.mrf.mxu0
  %v6058 = vadd.f32 0.0, %v6057
  %v6059 = vpop.f32.mrf.mxu0
  %6060 = vmatprep.mubr.bf16.mxu0 0
  %6061 = vmatmul.mubr.bf16.gmra.mxu0 %v5934
  %v6062 = vpop.f32.mrf.mxu0
  %v6063 = vadd.f32 0.0, %v6062
  %v6064 = vpop.f32.mrf.mxu0
  %v6065 = vpop.f32.mrf.mxu0
  %v6066 = vadd.f32 0.0, %v6065
  %v6067 = vpop.f32.mrf.mxu0
  %6068 = vmatprep.mubr.bf16.mxu0 0
  %6069 = vmatmul.mubr.bf16.gmra.mxu0 %v5935
  %v6070 = vpop.f32.mrf.mxu0
  %v6071 = vadd.f32 0.0, %v6070
  %v6072 = vpop.f32.mrf.mxu0
  %v6073 = vpop.f32.mrf.mxu0
  %v6074 = vadd.f32 0.0, %v6073
  %v6075 = vpop.f32.mrf.mxu0
  %6076 = vmatprep.mubr.bf16.mxu0 0
  %6077 = vmatmul.mubr.bf16.gmra.mxu0 %v5936
  %v6078 = vpop.f32.mrf.mxu0
  %v6079 = vadd.f32 0.0, %v6078
  %v6080 = vpop.f32.mrf.mxu0
  %v6081 = vpop.f32.mrf.mxu0
  %v6082 = vadd.f32 0.0, %v6081
  %v6083 = vpop.f32.mrf.mxu0
  %6084 = vmatprep.mubr.bf16.mxu0 0
  %6085 = vmatmul.mubr.bf16.gmra.mxu0 %v5937
  %v6086 = vpop.f32.mrf.mxu0
  %v6087 = vadd.f32 0.0, %v6086
  %v6088 = vpop.f32.mrf.mxu0
  %v6089 = vpop.f32.mrf.mxu0
  %v6090 = vadd.f32 0.0, %v6089
  %v6091 = vpop.f32.mrf.mxu0
  %6092 = vmatprep.mubr.bf16.mxu0 0
  %6093 = vmatmul.mubr.bf16.gmra.mxu0 %v5938
  %v6094 = vpop.f32.mrf.mxu0
  %v6095 = vadd.f32 0.0, %v6094
  %v6096 = vpop.f32.mrf.mxu0
  %v6097 = vpop.f32.mrf.mxu0
  %v6098 = vadd.f32 0.0, %v6097
  %v6099 = vpop.f32.mrf.mxu0
  %6100 = vmatprep.mubr.bf16.mxu0 0
  %6101 = vmatmul.mubr.bf16.gmra.mxu0 %v5939
  %v6102 = vpop.f32.mrf.mxu0
  %v6103 = vadd.f32 0.0, %v6102
  %v6104 = vpop.f32.mrf.mxu0
  %v6105 = vpop.f32.mrf.mxu0
  %v6106 = vadd.f32 0.0, %v6105
  %v6107 = vpop.f32.mrf.mxu0
  %6108 = vdwg.mxu0
  %v6109 = vmul.f32 %v5983, %v5828
  %v6110 = vmul.f32 %v5986, %v5829
  %v6111 = vmul.f32 %v5991, %v5830
  %v6112 = vmul.f32 %v5994, %v5831
  %v6113 = vmul.f32 %v5999, %v5832
  %v6114 = vmul.f32 %v6002, %v5833
  %v6115 = vmul.f32 %v6007, %v5834
  %v6116 = vmul.f32 %v6010, %v5835
  %v6117 = vmul.f32 %v6015, %v5836
  %v6118 = vmul.f32 %v6018, %v5837
  %v6119 = vmul.f32 %v6023, %v5838
  %v6120 = vmul.f32 %v6026, %v5839
  %v6121 = vmul.f32 %v6031, %v5840
  %v6122 = vmul.f32 %v6034, %v5841
  %v6123 = vmul.f32 %v6039, %v5842
  %v6124 = vmul.f32 %v6042, %v5843
  %v6125 = vmul.f32 %v6047, %v5844
  %v6126 = vmul.f32 %v6050, %v5845
  %v6127 = vmul.f32 %v6055, %v5846
  %v6128 = vmul.f32 %v6058, %v5847
  %v6129 = vmul.f32 %v6063, %v5848
  %v6130 = vmul.f32 %v6066, %v5849
  %v6131 = vmul.f32 %v6071, %v5850
  %v6132 = vmul.f32 %v6074, %v5851
  %v6133 = vmul.f32 %v6079, %v5852
  %v6134 = vmul.f32 %v6082, %v5853
  %v6135 = vmul.f32 %v6087, %v5854
  %v6136 = vmul.f32 %v6090, %v5855
  %v6137 = vmul.f32 %v6095, %v5856
  %v6138 = vmul.f32 %v6098, %v5857
  %v6139 = vmul.f32 %v6103, %v5858
  %v6140 = vmul.f32 %v6106, %v5859
  %v6141 = vsel %vm4811, 1, 0
  %v6142 = vsel %vm4812, 1, 0
  %v6143 = vsel %vm4813, 1, 0
  %v6144 = vsel %vm4814, 1, 0
  %v6145 = vsel %vm4815, 1, 0
  %v6146 = vsel %vm4816, 1, 0
  %v6147 = vsel %vm4817, 1, 0
  %v6148 = vsel %vm4818, 1, 0
  %v6149 = vsel %vm4819, 1, 0
  %v6150 = vsel %vm4820, 1, 0
  %v6151 = vsel %vm4821, 1, 0
  %v6152 = vsel %vm4822, 1, 0
  %v6153 = vsel %vm4823, 1, 0
  %v6154 = vsel %vm4824, 1, 0
  %v6155 = vsel %vm4825, 1, 0
  %v6156 = vsel %vm4826, 1, 0
  %v6157 = vsel %vm4827, 1, 0
  %v6158 = vsel %vm4828, 1, 0
  %v6159 = vsel %vm4829, 1, 0
  %v6160 = vsel %vm4830, 1, 0
  %v6161 = vsel %vm4831, 1, 0
  %v6162 = vsel %vm4832, 1, 0
  %v6163 = vsel %vm4833, 1, 0
  %v6164 = vsel %vm4834, 1, 0
  %v6165 = vsel %vm4835, 1, 0
  %v6166 = vsel %vm4836, 1, 0
  %v6167 = vsel %vm4837, 1, 0
  %v6168 = vsel %vm4838, 1, 0
  %v6169 = vsel %vm4839, 1, 0
  %v6170 = vsel %vm4840, 1, 0
  %v6171 = vsel %vm4841, 1, 0
  %v6172 = vsel %vm4842, 1, 0
  %v6173 = vcvt.s32.f32 %v6141
  %v6174 = vcvt.s32.f32 %v6142
  %v6175 = vcvt.s32.f32 %v6143
  %v6176 = vcvt.s32.f32 %v6144
  %v6177 = vcvt.s32.f32 %v6145
  %v6178 = vcvt.s32.f32 %v6146
  %v6179 = vcvt.s32.f32 %v6147
  %v6180 = vcvt.s32.f32 %v6148
  %v6181 = vcvt.s32.f32 %v6149
  %v6182 = vcvt.s32.f32 %v6150
  %v6183 = vcvt.s32.f32 %v6151
  %v6184 = vcvt.s32.f32 %v6152
  %v6185 = vcvt.s32.f32 %v6153
  %v6186 = vcvt.s32.f32 %v6154
  %v6187 = vcvt.s32.f32 %v6155
  %v6188 = vcvt.s32.f32 %v6156
  %v6189 = vcvt.s32.f32 %v6157
  %v6190 = vcvt.s32.f32 %v6158
  %v6191 = vcvt.s32.f32 %v6159
  %v6192 = vcvt.s32.f32 %v6160
  %v6193 = vcvt.s32.f32 %v6161
  %v6194 = vcvt.s32.f32 %v6162
  %v6195 = vcvt.s32.f32 %v6163
  %v6196 = vcvt.s32.f32 %v6164
  %v6197 = vcvt.s32.f32 %v6165
  %v6198 = vcvt.s32.f32 %v6166
  %v6199 = vcvt.s32.f32 %v6167
  %v6200 = vcvt.s32.f32 %v6168
  %v6201 = vcvt.s32.f32 %v6169
  %v6202 = vcvt.s32.f32 %v6170
  %v6203 = vcvt.s32.f32 %v6171
  %v6204 = vcvt.s32.f32 %v6172
  %v6205 = vpack.c.bf16 %v6175, %v6173
  %v6206 = vpack.c.bf16 %v6176, %v6174
  %v6207 = vpack.c.bf16 %v6179, %v6177
  %v6208 = vpack.c.bf16 %v6180, %v6178
  %v6209 = vpack.c.bf16 %v6183, %v6181
  %v6210 = vpack.c.bf16 %v6184, %v6182
  %v6211 = vpack.c.bf16 %v6187, %v6185
  %v6212 = vpack.c.bf16 %v6188, %v6186
  %v6213 = vpack.c.bf16 %v6191, %v6189
  %v6214 = vpack.c.bf16 %v6192, %v6190
  %v6215 = vpack.c.bf16 %v6195, %v6193
  %v6216 = vpack.c.bf16 %v6196, %v6194
  %v6217 = vpack.c.bf16 %v6199, %v6197
  %v6218 = vpack.c.bf16 %v6200, %v6198
  %v6219 = vpack.c.bf16 %v6203, %v6201
  %v6220 = vpack.c.bf16 %v6204, %v6202
  %v6221 = vpack.c.bf16 %v6110, %v6109
  %v6222 = vpack.c.bf16 %v6112, %v6111
  %v6223 = vpack.c.bf16 %v6114, %v6113
  %v6224 = vpack.c.bf16 %v6116, %v6115
  %v6225 = vpack.c.bf16 %v6118, %v6117
  %v6226 = vpack.c.bf16 %v6120, %v6119
  %v6227 = vpack.c.bf16 %v6122, %v6121
  %v6228 = vpack.c.bf16 %v6124, %v6123
  %v6229 = vpack.c.bf16 %v6126, %v6125
  %v6230 = vpack.c.bf16 %v6128, %v6127
  %v6231 = vpack.c.bf16 %v6130, %v6129
  %v6232 = vpack.c.bf16 %v6132, %v6131
  %v6233 = vpack.c.bf16 %v6134, %v6133
  %v6234 = vpack.c.bf16 %v6136, %v6135
  %v6235 = vpack.c.bf16 %v6138, %v6137
  %v6236 = vpack.c.bf16 %v6140, %v6139
  %6237 = vmatprep.subr.bf16.mxu0 0
  %6238 = vmatpush1.bf16.msra.mxu0 %v6228
  %6239 = vmatprep.subr.bf16.mxu0 0
  %6240 = vmatpush1.bf16.msra.mxu0 %v6227
  %6241 = vmatprep.subr.bf16.mxu0 0
  %6242 = vmatpush1.bf16.msra.mxu0 %v6226
  %6243 = vmatprep.subr.bf16.mxu0 0
  %6244 = vmatpush1.bf16.msra.mxu0 %v6225
  %6245 = vmatprep.subr.bf16.mxu0 0
  %6246 = vmatpush1.bf16.msra.mxu0 %v6224
  %6247 = vmatprep.subr.bf16.mxu0 0
  %6248 = vmatpush1.bf16.msra.mxu0 %v6223
  %6249 = vmatprep.subr.bf16.mxu0 0
  %6250 = vmatpush1.bf16.msra.mxu0 %v6222
  %6251 = vmatprep.subr.bf16.mxu0 0
  %6252 = vmatpush1.bf16.msra.mxu0 %v6221
  %6253 = vmatprep.subr.bf16.mxu0 0
  %6254 = vmatpush2.bf16.msra.mxu0 %v6236
  %6255 = vmatprep.subr.bf16.mxu0 0
  %6256 = vmatpush2.bf16.msra.mxu0 %v6235
  %6257 = vmatprep.subr.bf16.mxu0 0
  %6258 = vmatpush2.bf16.msra.mxu0 %v6234
  %6259 = vmatprep.subr.bf16.mxu0 0
  %6260 = vmatpush2.bf16.msra.mxu0 %v6233
  %6261 = vmatprep.subr.bf16.mxu0 0
  %6262 = vmatpush2.bf16.msra.mxu0 %v6232
  %6263 = vmatprep.subr.bf16.mxu0 0
  %6264 = vmatpush2.bf16.msra.mxu0 %v6231
  %6265 = vmatprep.subr.bf16.mxu0 0
  %6266 = vmatpush2.bf16.msra.mxu0 %v6230
  %6267 = vmatprep.subr.bf16.mxu0 0
  %6268 = vmatpush2.bf16.msra.mxu0 %v6229
  %6269 = vmatprep.mubr.bf16.mxu0 %v6206
  %6270 = vmatmul.mubr.bf16.gmra.mxu0 %v6205
  %v6271 = vpop.f32.mrf.mxu0
  %v6272 = vadd.f32 0.0, %v6271
  %v6273 = vpop.f32.mrf.mxu0
  %v6274 = vpop.f32.mrf.mxu0
  %v6275 = vadd.f32 0.0, %v6274
  %v6276 = vpop.f32.mrf.mxu0
  %6277 = vmatprep.mubr.bf16.mxu0 %v6208
  %6278 = vmatmul.mubr.bf16.gmra.mxu0 %v6207
  %v6279 = vpop.f32.mrf.mxu0
  %v6280 = vadd.f32 0.0, %v6279
  %v6281 = vpop.f32.mrf.mxu0
  %v6282 = vpop.f32.mrf.mxu0
  %v6283 = vadd.f32 0.0, %v6282
  %v6284 = vpop.f32.mrf.mxu0
  %6285 = vmatprep.mubr.bf16.mxu0 %v6210
  %6286 = vmatmul.mubr.bf16.gmra.mxu0 %v6209
  %v6287 = vpop.f32.mrf.mxu0
  %v6288 = vadd.f32 0.0, %v6287
  %v6289 = vpop.f32.mrf.mxu0
  %v6290 = vpop.f32.mrf.mxu0
  %v6291 = vadd.f32 0.0, %v6290
  %v6292 = vpop.f32.mrf.mxu0
  %6293 = vmatprep.mubr.bf16.mxu0 %v6212
  %6294 = vmatmul.mubr.bf16.gmra.mxu0 %v6211
  %v6295 = vpop.f32.mrf.mxu0
  %v6296 = vadd.f32 0.0, %v6295
  %v6297 = vpop.f32.mrf.mxu0
  %v6298 = vpop.f32.mrf.mxu0
  %v6299 = vadd.f32 0.0, %v6298
  %v6300 = vpop.f32.mrf.mxu0
  %6301 = vmatprep.mubr.bf16.mxu0 %v6214
  %6302 = vmatmul.mubr.bf16.gmra.mxu0 %v6213
  %v6303 = vpop.f32.mrf.mxu0
  %v6304 = vadd.f32 0.0, %v6303
  %v6305 = vpop.f32.mrf.mxu0
  %v6306 = vpop.f32.mrf.mxu0
  %v6307 = vadd.f32 0.0, %v6306
  %v6308 = vpop.f32.mrf.mxu0
  %6309 = vmatprep.mubr.bf16.mxu0 %v6216
  %6310 = vmatmul.mubr.bf16.gmra.mxu0 %v6215
  %v6311 = vpop.f32.mrf.mxu0
  %v6312 = vadd.f32 0.0, %v6311
  %v6313 = vpop.f32.mrf.mxu0
  %v6314 = vpop.f32.mrf.mxu0
  %v6315 = vadd.f32 0.0, %v6314
  %v6316 = vpop.f32.mrf.mxu0
  %6317 = vmatprep.mubr.bf16.mxu0 %v6218
  %6318 = vmatmul.mubr.bf16.gmra.mxu0 %v6217
  %v6319 = vpop.f32.mrf.mxu0
  %v6320 = vadd.f32 0.0, %v6319
  %v6321 = vpop.f32.mrf.mxu0
  %v6322 = vpop.f32.mrf.mxu0
  %v6323 = vadd.f32 0.0, %v6322
  %v6324 = vpop.f32.mrf.mxu0
  %6325 = vmatprep.mubr.bf16.mxu0 %v6220
  %6326 = vmatmul.mubr.bf16.gmra.mxu0 %v6219
  %v6327 = vpop.f32.mrf.mxu0
  %v6328 = vadd.f32 0.0, %v6327
  %v6329 = vpop.f32.mrf.mxu0
  %v6330 = vpop.f32.mrf.mxu0
  %v6331 = vadd.f32 0.0, %v6330
  %v6332 = vpop.f32.mrf.mxu0
  %6333 = vdwg.mxu0
  %v6334 = vld [vmem:[%s18] sm:$0xf]
  %v6335 = vld [vmem:[%s18 + $0x4] sm:$0xf]
  %v6336 = vld [vmem:[%s18 + $0x8] sm:$0xf]
  %v6337 = vld [vmem:[%s18 + $0xc] sm:$0xf]
  %v6338 = vld [vmem:[%s18 + $0x10] sm:$0xf]
  %v6339 = vld [vmem:[%s18 + $0x14] sm:$0xf]
  %v6340 = vld [vmem:[%s18 + $0x18] sm:$0xf]
  %v6341 = vld [vmem:[%s18 + $0x1c] sm:$0xf]
  %v6342 = vld [vmem:[%s18 + $0x20] sm:$0xf]
  %v6343 = vld [vmem:[%s18 + $0x24] sm:$0xf]
  %v6344 = vld [vmem:[%s18 + $0x28] sm:$0xf]
  %v6345 = vld [vmem:[%s18 + $0x2c] sm:$0xf]
  %v6346 = vld [vmem:[%s18 + $0x30] sm:$0xf]
  %v6347 = vld [vmem:[%s18 + $0x34] sm:$0xf]
  %v6348 = vld [vmem:[%s18 + $0x38] sm:$0xf]
  %v6349 = vld [vmem:[%s18 + $0x3c] sm:$0xf]
  %v6350 = vpack.c.bf16 %v6275, %v6272
  %v6351 = vpack.c.bf16 %v6283, %v6280
  %v6352 = vpack.c.bf16 %v6291, %v6288
  %v6353 = vpack.c.bf16 %v6299, %v6296
  %v6354 = vpack.c.bf16 %v6307, %v6304
  %v6355 = vpack.c.bf16 %v6315, %v6312
  %v6356 = vpack.c.bf16 %v6323, %v6320
  %v6357 = vpack.c.bf16 %v6331, %v6328
  %v6358 = vld [vmem:[%s19] sm:$0x1]
  %v6360 = vlaneseq
  %v6361 = vshrl.u32 %v6360, 7
  %v6362 = vsub.s32 0, %v6361
  %v6363 = vrot.slane %v6358, %v6362
  %v6381 = vunpack.c.l.b16 %v6334
  %v6382 = vunpack.c.l.b16 %v6335
  %v6383 = vunpack.c.l.b16 %v6336
  %v6384 = vunpack.c.l.b16 %v6337
  %v6385 = vunpack.c.l.b16 %v6338
  %v6386 = vunpack.c.l.b16 %v6339
  %v6387 = vunpack.c.l.b16 %v6340
  %v6388 = vunpack.c.l.b16 %v6341
  %v6389 = vunpack.c.l.b16 %v6342
  %v6390 = vunpack.c.l.b16 %v6343
  %v6391 = vunpack.c.l.b16 %v6344
  %v6392 = vunpack.c.l.b16 %v6345
  %v6393 = vunpack.c.l.b16 %v6346
  %v6394 = vunpack.c.l.b16 %v6347
  %v6395 = vunpack.c.l.b16 %v6348
  %v6396 = vunpack.c.l.b16 %v6349
  %v6397 = vpack.c.b16 %v6382, %v6381
  %v6398 = vpack.c.b16 %v6384, %v6383
  %v6399 = vpack.c.b16 %v6386, %v6385
  %v6400 = vpack.c.b16 %v6388, %v6387
  %v6401 = vpack.c.b16 %v6390, %v6389
  %v6402 = vpack.c.b16 %v6392, %v6391
  %v6403 = vpack.c.b16 %v6394, %v6393
  %v6404 = vpack.c.b16 %v6396, %v6395
  %6413 = vmatprep.subr.bf16.mxu0 0
  %6414 = vmatpush1.bf16.msra.mxu0 %v6404
  %6415 = vmatprep.subr.bf16.mxu0 0
  %6416 = vmatpush1.bf16.msra.mxu0 %v6403
  %6417 = vmatprep.subr.bf16.mxu0 0
  %6418 = vmatpush1.bf16.msra.mxu0 %v6402
  %6419 = vmatprep.subr.bf16.mxu0 0
  %6420 = vmatpush1.bf16.msra.mxu0 %v6401
  %6421 = vmatprep.subr.bf16.mxu0 0
  %6422 = vmatpush1.bf16.msra.mxu0 %v6400
  %6423 = vmatprep.subr.bf16.mxu0 0
  %6424 = vmatpush1.bf16.msra.mxu0 %v6399
  %6425 = vmatprep.subr.bf16.mxu0 0
  %6426 = vmatpush1.bf16.msra.mxu0 %v6398
  %6427 = vmatprep.subr.bf16.mxu0 0
  %6428 = vmatpush1.bf16.msra.mxu0 %v6397
  %6429 = vmatprep.subr.bf16.mxu0 0
  %6430 = vmatpush2.bf16.msra.mxu0 0
  %6431 = vmatprep.subr.bf16.mxu0 0
  %6432 = vmatpush2.bf16.msra.mxu0 0
  %6433 = vmatprep.subr.bf16.mxu0 0
  %6434 = vmatpush2.bf16.msra.mxu0 0
  %6435 = vmatprep.subr.bf16.mxu0 0
  %6436 = vmatpush2.bf16.msra.mxu0 0
  %6437 = vmatprep.subr.bf16.mxu0 0
  %6438 = vmatpush2.bf16.msra.mxu0 0
  %6439 = vmatprep.subr.bf16.mxu0 0
  %6440 = vmatpush2.bf16.msra.mxu0 0
  %6441 = vmatprep.subr.bf16.mxu0 0
  %6442 = vmatpush2.bf16.msra.mxu0 0
  %6443 = vmatprep.subr.bf16.mxu0 0
  %6444 = vmatpush2.bf16.msra.mxu0 0
  %6445 = vmatprep.mubr.bf16.mxu0 0
  %6446 = vmatmul.mubr.bf16.gmra.mxu0 %v6350
  %v6447 = vpop.f32.mrf.mxu0
  %v6448 = vadd.f32 %v6363, %v6447
  %v6449 = vpop.f32.mrf.mxu0
  %v6450 = vpop.f32.mrf.mxu0
  %v6451 = vadd.f32 %v6363, %v6450
  %v6452 = vpop.f32.mrf.mxu0
  %6453 = vmatprep.mubr.bf16.mxu0 0
  %6454 = vmatmul.mubr.bf16.gmra.mxu0 %v6351
  %v6455 = vpop.f32.mrf.mxu0
  %v6456 = vadd.f32 %v6363, %v6455
  %v6457 = vpop.f32.mrf.mxu0
  %v6458 = vpop.f32.mrf.mxu0
  %v6459 = vadd.f32 %v6363, %v6458
  %v6460 = vpop.f32.mrf.mxu0
  %6461 = vmatprep.mubr.bf16.mxu0 0
  %6462 = vmatmul.mubr.bf16.gmra.mxu0 %v6352
  %v6463 = vpop.f32.mrf.mxu0
  %v6464 = vadd.f32 %v6363, %v6463
  %v6465 = vpop.f32.mrf.mxu0
  %v6466 = vpop.f32.mrf.mxu0
  %v6467 = vadd.f32 %v6363, %v6466
  %v6468 = vpop.f32.mrf.mxu0
  %6469 = vmatprep.mubr.bf16.mxu0 0
  %6470 = vmatmul.mubr.bf16.gmra.mxu0 %v6353
  %v6471 = vpop.f32.mrf.mxu0
  %v6472 = vadd.f32 %v6363, %v6471
  %v6473 = vpop.f32.mrf.mxu0
  %v6474 = vpop.f32.mrf.mxu0
  %v6475 = vadd.f32 %v6363, %v6474
  %v6476 = vpop.f32.mrf.mxu0
  %6477 = vmatprep.mubr.bf16.mxu0 0
  %6478 = vmatmul.mubr.bf16.gmra.mxu0 %v6354
  %v6479 = vpop.f32.mrf.mxu0
  %v6480 = vadd.f32 %v6363, %v6479
  %v6481 = vpop.f32.mrf.mxu0
  %v6482 = vpop.f32.mrf.mxu0
  %v6483 = vadd.f32 %v6363, %v6482
  %v6484 = vpop.f32.mrf.mxu0
  %6485 = vmatprep.mubr.bf16.mxu0 0
  %6486 = vmatmul.mubr.bf16.gmra.mxu0 %v6355
  %v6487 = vpop.f32.mrf.mxu0
  %v6488 = vadd.f32 %v6363, %v6487
  %v6489 = vpop.f32.mrf.mxu0
  %v6490 = vpop.f32.mrf.mxu0
  %v6491 = vadd.f32 %v6363, %v6490
  %v6492 = vpop.f32.mrf.mxu0
  %6493 = vmatprep.mubr.bf16.mxu0 0
  %6494 = vmatmul.mubr.bf16.gmra.mxu0 %v6356
  %v6495 = vpop.f32.mrf.mxu0
  %v6496 = vadd.f32 %v6363, %v6495
  %v6497 = vpop.f32.mrf.mxu0
  %v6498 = vpop.f32.mrf.mxu0
  %v6499 = vadd.f32 %v6363, %v6498
  %v6500 = vpop.f32.mrf.mxu0
  %6501 = vmatprep.mubr.bf16.mxu0 0
  %6502 = vmatmul.mubr.bf16.gmra.mxu0 %v6357
  %v6503 = vpop.f32.mrf.mxu0
  %v6504 = vadd.f32 %v6363, %v6503
  %v6505 = vpop.f32.mrf.mxu0
  %v6506 = vpop.f32.mrf.mxu0
  %v6507 = vadd.f32 %v6363, %v6506
  %v6508 = vpop.f32.mrf.mxu0
  %6509 = vdwg.mxu0
  %v6510 = vmax.f32 %v6448, 0.0
  %v6511 = vmax.f32 %v6451, 0.0
  %v6512 = vmax.f32 %v6456, 0.0
  %v6513 = vmax.f32 %v6459, 0.0
  %v6514 = vmax.f32 %v6464, 0.0
  %v6515 = vmax.f32 %v6467, 0.0
  %v6516 = vmax.f32 %v6472, 0.0
  %v6517 = vmax.f32 %v6475, 0.0
  %v6518 = vmax.f32 %v6480, 0.0
  %v6519 = vmax.f32 %v6483, 0.0
  %v6520 = vmax.f32 %v6488, 0.0
  %v6521 = vmax.f32 %v6491, 0.0
  %v6522 = vmax.f32 %v6496, 0.0
  %v6523 = vmax.f32 %v6499, 0.0
  %v6524 = vmax.f32 %v6504, 0.0
  %v6525 = vmax.f32 %v6507, 0.0
  %v6526 = vand.u32 2147483647, %v6448
  %v6527 = vand.u32 2147483647, %v6451
  %v6528 = vand.u32 2147483647, %v6456
  %v6529 = vand.u32 2147483647, %v6459
  %v6530 = vand.u32 2147483647, %v6464
  %v6531 = vand.u32 2147483647, %v6467
  %v6532 = vand.u32 2147483647, %v6472
  %v6533 = vand.u32 2147483647, %v6475
  %v6534 = vand.u32 2147483647, %v6480
  %v6535 = vand.u32 2147483647, %v6483
  %v6536 = vand.u32 2147483647, %v6488
  %v6537 = vand.u32 2147483647, %v6491
  %v6538 = vand.u32 2147483647, %v6496
  %v6539 = vand.u32 2147483647, %v6499
  %v6540 = vand.u32 2147483647, %v6504
  %v6541 = vand.u32 2147483647, %v6507
  %v6542 = vsub.f32 0.0, %v6526
  %v6543 = vsub.f32 0.0, %v6527
  %v6544 = vsub.f32 0.0, %v6528
  %v6545 = vsub.f32 0.0, %v6529
  %v6546 = vsub.f32 0.0, %v6530
  %v6547 = vsub.f32 0.0, %v6531
  %v6548 = vsub.f32 0.0, %v6532
  %v6549 = vsub.f32 0.0, %v6533
  %v6550 = vsub.f32 0.0, %v6534
  %v6551 = vsub.f32 0.0, %v6535
  %v6552 = vsub.f32 0.0, %v6536
  %v6553 = vsub.f32 0.0, %v6537
  %v6554 = vsub.f32 0.0, %v6538
  %v6555 = vsub.f32 0.0, %v6539
  %v6556 = vsub.f32 0.0, %v6540
  %v6557 = vsub.f32 0.0, %v6541
  %v6558 = vmul.f32 %v6542, 1.442695
  %v6559 = vpow.pop %v6558
  %v6560 = vmul.f32 %v6543, 1.442695
  %v6561 = vpow.pop %v6560
  %v6562 = vmul.f32 %v6544, 1.442695
  %v6563 = vpow.pop %v6562
  %v6564 = vmul.f32 %v6545, 1.442695
  %v6565 = vpow.pop %v6564
  %v6566 = vmul.f32 %v6546, 1.442695
  %v6567 = vpow.pop %v6566
  %v6568 = vmul.f32 %v6547, 1.442695
  %v6569 = vpow.pop %v6568
  %v6570 = vmul.f32 %v6548, 1.442695
  %v6571 = vpow.pop %v6570
  %v6572 = vmul.f32 %v6549, 1.442695
  %v6573 = vpow.pop %v6572
  %v6574 = vmul.f32 %v6550, 1.442695
  %v6575 = vpow.pop %v6574
  %v6576 = vmul.f32 %v6551, 1.442695
  %v6577 = vpow.pop %v6576
  %v6578 = vmul.f32 %v6552, 1.442695
  %v6579 = vpow.pop %v6578
  %v6580 = vmul.f32 %v6553, 1.442695
  %v6581 = vpow.pop %v6580
  %v6582 = vmul.f32 %v6554, 1.442695
  %v6583 = vpow.pop %v6582
  %v6584 = vmul.f32 %v6555, 1.442695
  %v6585 = vpow.pop %v6584
  %v6586 = vmul.f32 %v6556, 1.442695
  %v6587 = vpow.pop %v6586
  %v6588 = vmul.f32 %v6557, 1.442695
  %v6589 = vpow.pop %v6588
  %v6590 = vadd.f32 %v6559, 1.0
  %v6591 = vadd.f32 %v6561, 1.0
  %v6592 = vadd.f32 %v6563, 1.0
  %v6593 = vadd.f32 %v6565, 1.0
  %v6594 = vadd.f32 %v6567, 1.0
  %v6595 = vadd.f32 %v6569, 1.0
  %v6596 = vadd.f32 %v6571, 1.0
  %v6597 = vadd.f32 %v6573, 1.0
  %v6598 = vadd.f32 %v6575, 1.0
  %v6599 = vadd.f32 %v6577, 1.0
  %v6600 = vadd.f32 %v6579, 1.0
  %v6601 = vadd.f32 %v6581, 1.0
  %v6602 = vadd.f32 %v6583, 1.0
  %v6603 = vadd.f32 %v6585, 1.0
  %v6604 = vadd.f32 %v6587, 1.0
  %v6605 = vadd.f32 %v6589, 1.0
  %v6606 = vlog2.pop %v6590
  %v6607 = vmul.f32 %v6606, 0.6931472
  %v6608 = vlog2.pop %v6591
  %v6609 = vmul.f32 %v6608, 0.6931472
  %v6610 = vlog2.pop %v6592
  %v6611 = vmul.f32 %v6610, 0.6931472
  %v6612 = vlog2.pop %v6593
  %v6613 = vmul.f32 %v6612, 0.6931472
  %v6614 = vlog2.pop %v6594
  %v6615 = vmul.f32 %v6614, 0.6931472
  %v6616 = vlog2.pop %v6595
  %v6617 = vmul.f32 %v6616, 0.6931472
  %v6618 = vlog2.pop %v6596
  %v6619 = vmul.f32 %v6618, 0.6931472
  %v6620 = vlog2.pop %v6597
  %v6621 = vmul.f32 %v6620, 0.6931472
  %v6622 = vlog2.pop %v6598
  %v6623 = vmul.f32 %v6622, 0.6931472
  %v6624 = vlog2.pop %v6599
  %v6625 = vmul.f32 %v6624, 0.6931472
  %v6626 = vlog2.pop %v6600
  %v6627 = vmul.f32 %v6626, 0.6931472
  %v6628 = vlog2.pop %v6601
  %v6629 = vmul.f32 %v6628, 0.6931472
  %v6630 = vlog2.pop %v6602
  %v6631 = vmul.f32 %v6630, 0.6931472
  %v6632 = vlog2.pop %v6603
  %v6633 = vmul.f32 %v6632, 0.6931472
  %v6634 = vlog2.pop %v6604
  %v6635 = vmul.f32 %v6634, 0.6931472
  %v6636 = vlog2.pop %v6605
  %v6637 = vmul.f32 %v6636, 0.6931472
  %v6638 = vadd.f32 %v6510, %v6607
  %v6639 = vadd.f32 %v6511, %v6609
  %v6640 = vadd.f32 %v6512, %v6611
  %v6641 = vadd.f32 %v6513, %v6613
  %v6642 = vadd.f32 %v6514, %v6615
  %v6643 = vadd.f32 %v6515, %v6617
  %v6644 = vadd.f32 %v6516, %v6619
  %v6645 = vadd.f32 %v6517, %v6621
  %v6646 = vadd.f32 %v6518, %v6623
  %v6647 = vadd.f32 %v6519, %v6625
  %v6648 = vadd.f32 %v6520, %v6627
  %v6649 = vadd.f32 %v6521, %v6629
  %v6650 = vadd.f32 %v6522, %v6631
  %v6651 = vadd.f32 %v6523, %v6633
  %v6652 = vadd.f32 %v6524, %v6635
  %v6653 = vadd.f32 %v6525, %v6637
  %v6654 = vsub.f32 %v6638, 0.6931472
  %v6655 = vsub.f32 %v6639, 0.6931472
  %v6656 = vsub.f32 %v6640, 0.6931472
  %v6657 = vsub.f32 %v6641, 0.6931472
  %v6658 = vsub.f32 %v6642, 0.6931472
  %v6659 = vsub.f32 %v6643, 0.6931472
  %v6660 = vsub.f32 %v6644, 0.6931472
  %v6661 = vsub.f32 %v6645, 0.6931472
  %v6662 = vsub.f32 %v6646, 0.6931472
  %v6663 = vsub.f32 %v6647, 0.6931472
  %v6664 = vsub.f32 %v6648, 0.6931472
  %v6665 = vsub.f32 %v6649, 0.6931472
  %v6666 = vsub.f32 %v6650, 0.6931472
  %v6667 = vsub.f32 %v6651, 0.6931472
  %v6668 = vsub.f32 %v6652, 0.6931472
  %v6669 = vsub.f32 %v6653, 0.6931472
  %v6670 = vld [vmem:[%s20] sm:$0xf]
  %v6671 = vld [vmem:[%s20 + $0x4] sm:$0xf]
  %v6672 = vld [vmem:[%s20 + $0x8] sm:$0xf]
  %v6673 = vld [vmem:[%s20 + $0xc] sm:$0xf]
  %v6674 = vld [vmem:[%s20 + $0x10] sm:$0xf]
  %v6675 = vld [vmem:[%s20 + $0x14] sm:$0xf]
  %v6676 = vld [vmem:[%s20 + $0x18] sm:$0xf]
  %v6677 = vld [vmem:[%s20 + $0x1c] sm:$0xf]
  %v6678 = vld [vmem:[%s20 + $0x20] sm:$0xf]
  %v6679 = vld [vmem:[%s20 + $0x24] sm:$0xf]
  %v6680 = vld [vmem:[%s20 + $0x28] sm:$0xf]
  %v6681 = vld [vmem:[%s20 + $0x2c] sm:$0xf]
  %v6682 = vld [vmem:[%s20 + $0x30] sm:$0xf]
  %v6683 = vld [vmem:[%s20 + $0x34] sm:$0xf]
  %v6684 = vld [vmem:[%s20 + $0x38] sm:$0xf]
  %v6685 = vld [vmem:[%s20 + $0x3c] sm:$0xf]
  %v6686 = vpack.c.bf16 %v6655, %v6654
  %v6687 = vpack.c.bf16 %v6657, %v6656
  %v6688 = vpack.c.bf16 %v6659, %v6658
  %v6689 = vpack.c.bf16 %v6661, %v6660
  %v6690 = vpack.c.bf16 %v6663, %v6662
  %v6691 = vpack.c.bf16 %v6665, %v6664
  %v6692 = vpack.c.bf16 %v6667, %v6666
  %v6693 = vpack.c.bf16 %v6669, %v6668
  %v6694 = vld [vmem:[%s21] sm:$0x1]
  %v6696 = vlaneseq
  %v6697 = vshrl.u32 %v6696, 7
  %v6698 = vsub.s32 0, %v6697
  %v6699 = vrot.slane %v6694, %v6698
  %v6717 = vunpack.c.l.b16 %v6670
  %v6718 = vunpack.c.l.b16 %v6671
  %v6719 = vunpack.c.l.b16 %v6672
  %v6720 = vunpack.c.l.b16 %v6673
  %v6721 = vunpack.c.l.b16 %v6674
  %v6722 = vunpack.c.l.b16 %v6675
  %v6723 = vunpack.c.l.b16 %v6676
  %v6724 = vunpack.c.l.b16 %v6677
  %v6725 = vunpack.c.l.b16 %v6678
  %v6726 = vunpack.c.l.b16 %v6679
  %v6727 = vunpack.c.l.b16 %v6680
  %v6728 = vunpack.c.l.b16 %v6681
  %v6729 = vunpack.c.l.b16 %v6682
  %v6730 = vunpack.c.l.b16 %v6683
  %v6731 = vunpack.c.l.b16 %v6684
  %v6732 = vunpack.c.l.b16 %v6685
  %v6733 = vpack.c.b16 %v6718, %v6717
  %v6734 = vpack.c.b16 %v6720, %v6719
  %v6735 = vpack.c.b16 %v6722, %v6721
  %v6736 = vpack.c.b16 %v6724, %v6723
  %v6737 = vpack.c.b16 %v6726, %v6725
  %v6738 = vpack.c.b16 %v6728, %v6727
  %v6739 = vpack.c.b16 %v6730, %v6729
  %v6740 = vpack.c.b16 %v6732, %v6731
  %6749 = vmatprep.subr.bf16.mxu0 0
  %6750 = vmatpush1.bf16.msra.mxu0 %v6740
  %6751 = vmatprep.subr.bf16.mxu0 0
  %6752 = vmatpush1.bf16.msra.mxu0 %v6739
  %6753 = vmatprep.subr.bf16.mxu0 0
  %6754 = vmatpush1.bf16.msra.mxu0 %v6738
  %6755 = vmatprep.subr.bf16.mxu0 0
  %6756 = vmatpush1.bf16.msra.mxu0 %v6737
  %6757 = vmatprep.subr.bf16.mxu0 0
  %6758 = vmatpush1.bf16.msra.mxu0 %v6736
  %6759 = vmatprep.subr.bf16.mxu0 0
  %6760 = vmatpush1.bf16.msra.mxu0 %v6735
  %6761 = vmatprep.subr.bf16.mxu0 0
  %6762 = vmatpush1.bf16.msra.mxu0 %v6734
  %6763 = vmatprep.subr.bf16.mxu0 0
  %6764 = vmatpush1.bf16.msra.mxu0 %v6733
  %6765 = vmatprep.subr.bf16.mxu0 0
  %6766 = vmatpush2.bf16.msra.mxu0 0
  %6767 = vmatprep.subr.bf16.mxu0 0
  %6768 = vmatpush2.bf16.msra.mxu0 0
  %6769 = vmatprep.subr.bf16.mxu0 0
  %6770 = vmatpush2.bf16.msra.mxu0 0
  %6771 = vmatprep.subr.bf16.mxu0 0
  %6772 = vmatpush2.bf16.msra.mxu0 0
  %6773 = vmatprep.subr.bf16.mxu0 0
  %6774 = vmatpush2.bf16.msra.mxu0 0
  %6775 = vmatprep.subr.bf16.mxu0 0
  %6776 = vmatpush2.bf16.msra.mxu0 0
  %6777 = vmatprep.subr.bf16.mxu0 0
  %6778 = vmatpush2.bf16.msra.mxu0 0
  %6779 = vmatprep.subr.bf16.mxu0 0
  %6780 = vmatpush2.bf16.msra.mxu0 0
  %6781 = vmatprep.mubr.bf16.mxu0 0
  %6782 = vmatmul.mubr.bf16.gmra.mxu0 %v6686
  %v6783 = vpop.f32.mrf.mxu0
  %v6784 = vadd.f32 %v6699, %v6783
  %v6785 = vpop.f32.mrf.mxu0
  %v6786 = vpop.f32.mrf.mxu0
  %v6787 = vadd.f32 %v6699, %v6786
  %v6788 = vpop.f32.mrf.mxu0
  %6789 = vmatprep.mubr.bf16.mxu0 0
  %6790 = vmatmul.mubr.bf16.gmra.mxu0 %v6687
  %v6791 = vpop.f32.mrf.mxu0
  %v6792 = vadd.f32 %v6699, %v6791
  %v6793 = vpop.f32.mrf.mxu0
  %v6794 = vpop.f32.mrf.mxu0
  %v6795 = vadd.f32 %v6699, %v6794
  %v6796 = vpop.f32.mrf.mxu0
  %6797 = vmatprep.mubr.bf16.mxu0 0
  %6798 = vmatmul.mubr.bf16.gmra.mxu0 %v6688
  %v6799 = vpop.f32.mrf.mxu0
  %v6800 = vadd.f32 %v6699, %v6799
  %v6801 = vpop.f32.mrf.mxu0
  %v6802 = vpop.f32.mrf.mxu0
  %v6803 = vadd.f32 %v6699, %v6802
  %v6804 = vpop.f32.mrf.mxu0
  %6805 = vmatprep.mubr.bf16.mxu0 0
  %6806 = vmatmul.mubr.bf16.gmra.mxu0 %v6689
  %v6807 = vpop.f32.mrf.mxu0
  %v6808 = vadd.f32 %v6699, %v6807
  %v6809 = vpop.f32.mrf.mxu0
  %v6810 = vpop.f32.mrf.mxu0
  %v6811 = vadd.f32 %v6699, %v6810
  %v6812 = vpop.f32.mrf.mxu0
  %6813 = vmatprep.mubr.bf16.mxu0 0
  %6814 = vmatmul.mubr.bf16.gmra.mxu0 %v6690
  %v6815 = vpop.f32.mrf.mxu0
  %v6816 = vadd.f32 %v6699, %v6815
  %v6817 = vpop.f32.mrf.mxu0
  %v6818 = vpop.f32.mrf.mxu0
  %v6819 = vadd.f32 %v6699, %v6818
  %v6820 = vpop.f32.mrf.mxu0
  %6821 = vmatprep.mubr.bf16.mxu0 0
  %6822 = vmatmul.mubr.bf16.gmra.mxu0 %v6691
  %v6823 = vpop.f32.mrf.mxu0
  %v6824 = vadd.f32 %v6699, %v6823
  %v6825 = vpop.f32.mrf.mxu0
  %v6826 = vpop.f32.mrf.mxu0
  %v6827 = vadd.f32 %v6699, %v6826
  %v6828 = vpop.f32.mrf.mxu0
  %6829 = vmatprep.mubr.bf16.mxu0 0
  %6830 = vmatmul.mubr.bf16.gmra.mxu0 %v6692
  %v6831 = vpop.f32.mrf.mxu0
  %v6832 = vadd.f32 %v6699, %v6831
  %v6833 = vpop.f32.mrf.mxu0
  %v6834 = vpop.f32.mrf.mxu0
  %v6835 = vadd.f32 %v6699, %v6834
  %v6836 = vpop.f32.mrf.mxu0
  %6837 = vmatprep.mubr.bf16.mxu0 0
  %6838 = vmatmul.mubr.bf16.gmra.mxu0 %v6693
  %v6839 = vpop.f32.mrf.mxu0
  %v6840 = vadd.f32 %v6699, %v6839
  %v6841 = vpop.f32.mrf.mxu0
  %v6842 = vpop.f32.mrf.mxu0
  %v6843 = vadd.f32 %v6699, %v6842
  %v6844 = vpop.f32.mrf.mxu0
  %6845 = vdwg.mxu0
  %v6846 = vadd.f32 %v522, %v6784
  %v6847 = vadd.f32 %v525, %v6787
  %v6848 = vadd.f32 %v530, %v6792
  %v6849 = vadd.f32 %v533, %v6795
  %v6850 = vadd.f32 %v538, %v6800
  %v6851 = vadd.f32 %v541, %v6803
  %v6852 = vadd.f32 %v546, %v6808
  %v6853 = vadd.f32 %v549, %v6811
  %v6854 = vadd.f32 %v554, %v6816
  %v6855 = vadd.f32 %v557, %v6819
  %v6856 = vadd.f32 %v562, %v6824
  %v6857 = vadd.f32 %v565, %v6827
  %v6858 = vadd.f32 %v570, %v6832
  %v6859 = vadd.f32 %v573, %v6835
  %v6860 = vadd.f32 %v578, %v6840
  %v6861 = vadd.f32 %v581, %v6843
  %s6862 = scalar_lea.vmem %s13, 64
  %v6863 = vld [vmem:[%s6862] sm:$0xf]
  %v6864 = vld [vmem:[%s6862 + $0x4] sm:$0xf]
  %v6865 = vld [vmem:[%s6862 + $0x8] sm:$0xf]
  %v6866 = vld [vmem:[%s6862 + $0xc] sm:$0xf]
  %v6867 = vld [vmem:[%s6862 + $0x10] sm:$0xf]
  %v6868 = vld [vmem:[%s6862 + $0x14] sm:$0xf]
  %v6869 = vld [vmem:[%s6862 + $0x18] sm:$0xf]
  %v6870 = vld [vmem:[%s6862 + $0x1c] sm:$0xf]
  %v6871 = vld [vmem:[%s6862 + $0x20] sm:$0xf]
  %v6872 = vld [vmem:[%s6862 + $0x24] sm:$0xf]
  %v6873 = vld [vmem:[%s6862 + $0x28] sm:$0xf]
  %v6874 = vld [vmem:[%s6862 + $0x2c] sm:$0xf]
  %v6875 = vld [vmem:[%s6862 + $0x30] sm:$0xf]
  %v6876 = vld [vmem:[%s6862 + $0x34] sm:$0xf]
  %v6877 = vld [vmem:[%s6862 + $0x38] sm:$0xf]
  %v6878 = vld [vmem:[%s6862 + $0x3c] sm:$0xf]
  %v6879 = vpack.c.bf16 %v6847, %v6846
  %v6880 = vpack.c.bf16 %v6849, %v6848
  %v6881 = vpack.c.bf16 %v6851, %v6850
  %v6882 = vpack.c.bf16 %v6853, %v6852
  %v6883 = vpack.c.bf16 %v6855, %v6854
  %v6884 = vpack.c.bf16 %v6857, %v6856
  %v6885 = vpack.c.bf16 %v6859, %v6858
  %v6886 = vpack.c.bf16 %v6861, %v6860
  %v6903 = vunpack.c.l.b16 %v6863
  %v6904 = vunpack.c.l.b16 %v6864
  %v6905 = vunpack.c.l.b16 %v6865
  %v6906 = vunpack.c.l.b16 %v6866
  %v6907 = vunpack.c.l.b16 %v6867
  %v6908 = vunpack.c.l.b16 %v6868
  %v6909 = vunpack.c.l.b16 %v6869
  %v6910 = vunpack.c.l.b16 %v6870
  %v6911 = vunpack.c.l.b16 %v6871
  %v6912 = vunpack.c.l.b16 %v6872
  %v6913 = vunpack.c.l.b16 %v6873
  %v6914 = vunpack.c.l.b16 %v6874
  %v6915 = vunpack.c.l.b16 %v6875
  %v6916 = vunpack.c.l.b16 %v6876
  %v6917 = vunpack.c.l.b16 %v6877
  %v6918 = vunpack.c.l.b16 %v6878
  %v6919 = vpack.c.b16 %v6904, %v6903
  %v6920 = vpack.c.b16 %v6906, %v6905
  %v6921 = vpack.c.b16 %v6908, %v6907
  %v6922 = vpack.c.b16 %v6910, %v6909
  %v6923 = vpack.c.b16 %v6912, %v6911
  %v6924 = vpack.c.b16 %v6914, %v6913
  %v6925 = vpack.c.b16 %v6916, %v6915
  %v6926 = vpack.c.b16 %v6918, %v6917
  %6935 = vmatprep.subr.bf16.mxu0 0
  %6936 = vmatpush1.bf16.msra.mxu0 %v6926
  %6937 = vmatprep.subr.bf16.mxu0 0
  %6938 = vmatpush1.bf16.msra.mxu0 %v6925
  %6939 = vmatprep.subr.bf16.mxu0 0
  %6940 = vmatpush1.bf16.msra.mxu0 %v6924
  %6941 = vmatprep.subr.bf16.mxu0 0
  %6942 = vmatpush1.bf16.msra.mxu0 %v6923
  %6943 = vmatprep.subr.bf16.mxu0 0
  %6944 = vmatpush1.bf16.msra.mxu0 %v6922
  %6945 = vmatprep.subr.bf16.mxu0 0
  %6946 = vmatpush1.bf16.msra.mxu0 %v6921
  %6947 = vmatprep.subr.bf16.mxu0 0
  %6948 = vmatpush1.bf16.msra.mxu0 %v6920
  %6949 = vmatprep.subr.bf16.mxu0 0
  %6950 = vmatpush1.bf16.msra.mxu0 %v6919
  %6951 = vmatprep.subr.bf16.mxu0 0
  %6952 = vmatpush2.bf16.msra.mxu0 0
  %6953 = vmatprep.subr.bf16.mxu0 0
  %6954 = vmatpush2.bf16.msra.mxu0 0
  %6955 = vmatprep.subr.bf16.mxu0 0
  %6956 = vmatpush2.bf16.msra.mxu0 0
  %6957 = vmatprep.subr.bf16.mxu0 0
  %6958 = vmatpush2.bf16.msra.mxu0 0
  %6959 = vmatprep.subr.bf16.mxu0 0
  %6960 = vmatpush2.bf16.msra.mxu0 0
  %6961 = vmatprep.subr.bf16.mxu0 0
  %6962 = vmatpush2.bf16.msra.mxu0 0
  %6963 = vmatprep.subr.bf16.mxu0 0
  %6964 = vmatpush2.bf16.msra.mxu0 0
  %6965 = vmatprep.subr.bf16.mxu0 0
  %6966 = vmatpush2.bf16.msra.mxu0 0
  %6967 = vmatprep.mubr.bf16.mxu0 0
  %6968 = vmatmul.mubr.bf16.gmra.mxu0 %v6879
  %v6969 = vpop.f32.mrf.mxu0
  %v6970 = vadd.f32 0.0, %v6969
  %v6971 = vpop.f32.mrf.mxu0
  %v6972 = vpop.f32.mrf.mxu0
  %v6973 = vadd.f32 0.0, %v6972
  %v6974 = vpop.f32.mrf.mxu0
  %6975 = vmatprep.mubr.bf16.mxu0 0
  %6976 = vmatmul.mubr.bf16.gmra.mxu0 %v6880
  %v6977 = vpop.f32.mrf.mxu0
  %v6978 = vadd.f32 0.0, %v6977
  %v6979 = vpop.f32.mrf.mxu0
  %v6980 = vpop.f32.mrf.mxu0
  %v6981 = vadd.f32 0.0, %v6980
  %v6982 = vpop.f32.mrf.mxu0
  %6983 = vmatprep.mubr.bf16.mxu0 0
  %6984 = vmatmul.mubr.bf16.gmra.mxu0 %v6881
  %v6985 = vpop.f32.mrf.mxu0
  %v6986 = vadd.f32 0.0, %v6985
  %v6987 = vpop.f32.mrf.mxu0
  %v6988 = vpop.f32.mrf.mxu0
  %v6989 = vadd.f32 0.0, %v6988
  %v6990 = vpop.f32.mrf.mxu0
  %6991 = vmatprep.mubr.bf16.mxu0 0
  %6992 = vmatmul.mubr.bf16.gmra.mxu0 %v6882
  %v6993 = vpop.f32.mrf.mxu0
  %v6994 = vadd.f32 0.0, %v6993
  %v6995 = vpop.f32.mrf.mxu0
  %v6996 = vpop.f32.mrf.mxu0
  %v6997 = vadd.f32 0.0, %v6996
  %v6998 = vpop.f32.mrf.mxu0
  %6999 = vmatprep.mubr.bf16.mxu0 0
  %7000 = vmatmul.mubr.bf16.gmra.mxu0 %v6883
  %v7001 = vpop.f32.mrf.mxu0
  %v7002 = vadd.f32 0.0, %v7001
  %v7003 = vpop.f32.mrf.mxu0
  %v7004 = vpop.f32.mrf.mxu0
  %v7005 = vadd.f32 0.0, %v7004
  %v7006 = vpop.f32.mrf.mxu0
  %7007 = vmatprep.mubr.bf16.mxu0 0
  %7008 = vmatmul.mubr.bf16.gmra.mxu0 %v6884
  %v7009 = vpop.f32.mrf.mxu0
  %v7010 = vadd.f32 0.0, %v7009
  %v7011 = vpop.f32.mrf.mxu0
  %v7012 = vpop.f32.mrf.mxu0
  %v7013 = vadd.f32 0.0, %v7012
  %v7014 = vpop.f32.mrf.mxu0
  %7015 = vmatprep.mubr.bf16.mxu0 0
  %7016 = vmatmul.mubr.bf16.gmra.mxu0 %v6885
  %v7017 = vpop.f32.mrf.mxu0
  %v7018 = vadd.f32 0.0, %v7017
  %v7019 = vpop.f32.mrf.mxu0
  %v7020 = vpop.f32.mrf.mxu0
  %v7021 = vadd.f32 0.0, %v7020
  %v7022 = vpop.f32.mrf.mxu0
  %7023 = vmatprep.mubr.bf16.mxu0 0
  %7024 = vmatmul.mubr.bf16.gmra.mxu0 %v6886
  %v7025 = vpop.f32.mrf.mxu0
  %v7026 = vadd.f32 0.0, %v7025
  %v7027 = vpop.f32.mrf.mxu0
  %v7028 = vpop.f32.mrf.mxu0
  %v7029 = vadd.f32 0.0, %v7028
  %v7030 = vpop.f32.mrf.mxu0
  %7031 = vdwg.mxu0
  %s7032 = scalar_lea.vmem %s14, 64
  %v7033 = vld [vmem:[%s7032] sm:$0xf]
  %v7034 = vld [vmem:[%s7032 + $0x4] sm:$0xf]
  %v7035 = vld [vmem:[%s7032 + $0x8] sm:$0xf]
  %v7036 = vld [vmem:[%s7032 + $0xc] sm:$0xf]
  %v7037 = vld [vmem:[%s7032 + $0x10] sm:$0xf]
  %v7038 = vld [vmem:[%s7032 + $0x14] sm:$0xf]
  %v7039 = vld [vmem:[%s7032 + $0x18] sm:$0xf]
  %v7040 = vld [vmem:[%s7032 + $0x1c] sm:$0xf]
  %v7041 = vld [vmem:[%s7032 + $0x20] sm:$0xf]
  %v7042 = vld [vmem:[%s7032 + $0x24] sm:$0xf]
  %v7043 = vld [vmem:[%s7032 + $0x28] sm:$0xf]
  %v7044 = vld [vmem:[%s7032 + $0x2c] sm:$0xf]
  %v7045 = vld [vmem:[%s7032 + $0x30] sm:$0xf]
  %v7046 = vld [vmem:[%s7032 + $0x34] sm:$0xf]
  %v7047 = vld [vmem:[%s7032 + $0x38] sm:$0xf]
  %v7048 = vld [vmem:[%s7032 + $0x3c] sm:$0xf]
  %s7049 = scalar_lea.vmem %s15, 1
  %v7050 = vld [vmem:[%s7049] sm:$0x1]
  %v7052 = vlaneseq
  %v7053 = vshrl.u32 %v7052, 7
  %v7054 = vsub.s32 0, %v7053
  %v7055 = vrot.slane %v7050, %v7054
  %v7073 = vunpack.c.l.b16 %v7033
  %v7074 = vunpack.c.l.b16 %v7034
  %v7075 = vunpack.c.l.b16 %v7035
  %v7076 = vunpack.c.l.b16 %v7036
  %v7077 = vunpack.c.l.b16 %v7037
  %v7078 = vunpack.c.l.b16 %v7038
  %v7079 = vunpack.c.l.b16 %v7039
  %v7080 = vunpack.c.l.b16 %v7040
  %v7081 = vunpack.c.l.b16 %v7041
  %v7082 = vunpack.c.l.b16 %v7042
  %v7083 = vunpack.c.l.b16 %v7043
  %v7084 = vunpack.c.l.b16 %v7044
  %v7085 = vunpack.c.l.b16 %v7045
  %v7086 = vunpack.c.l.b16 %v7046
  %v7087 = vunpack.c.l.b16 %v7047
  %v7088 = vunpack.c.l.b16 %v7048
  %v7089 = vpack.c.b16 %v7074, %v7073
  %v7090 = vpack.c.b16 %v7076, %v7075
  %v7091 = vpack.c.b16 %v7078, %v7077
  %v7092 = vpack.c.b16 %v7080, %v7079
  %v7093 = vpack.c.b16 %v7082, %v7081
  %v7094 = vpack.c.b16 %v7084, %v7083
  %v7095 = vpack.c.b16 %v7086, %v7085
  %v7096 = vpack.c.b16 %v7088, %v7087
  %7105 = vmatprep.subr.bf16.mxu0 0
  %7106 = vmatpush1.bf16.msra.mxu0 %v7096
  %7107 = vmatprep.subr.bf16.mxu0 0
  %7108 = vmatpush1.bf16.msra.mxu0 %v7095
  %7109 = vmatprep.subr.bf16.mxu0 0
  %7110 = vmatpush1.bf16.msra.mxu0 %v7094
  %7111 = vmatprep.subr.bf16.mxu0 0
  %7112 = vmatpush1.bf16.msra.mxu0 %v7093
  %7113 = vmatprep.subr.bf16.mxu0 0
  %7114 = vmatpush1.bf16.msra.mxu0 %v7092
  %7115 = vmatprep.subr.bf16.mxu0 0
  %7116 = vmatpush1.bf16.msra.mxu0 %v7091
  %7117 = vmatprep.subr.bf16.mxu0 0
  %7118 = vmatpush1.bf16.msra.mxu0 %v7090
  %7119 = vmatprep.subr.bf16.mxu0 0
  %7120 = vmatpush1.bf16.msra.mxu0 %v7089
  %7121 = vmatprep.subr.bf16.mxu0 0
  %7122 = vmatpush2.bf16.msra.mxu0 0
  %7123 = vmatprep.subr.bf16.mxu0 0
  %7124 = vmatpush2.bf16.msra.mxu0 0
  %7125 = vmatprep.subr.bf16.mxu0 0
  %7126 = vmatpush2.bf16.msra.mxu0 0
  %7127 = vmatprep.subr.bf16.mxu0 0
  %7128 = vmatpush2.bf16.msra.mxu0 0
  %7129 = vmatprep.subr.bf16.mxu0 0
  %7130 = vmatpush2.bf16.msra.mxu0 0
  %7131 = vmatprep.subr.bf16.mxu0 0
  %7132 = vmatpush2.bf16.msra.mxu0 0
  %7133 = vmatprep.subr.bf16.mxu0 0
  %7134 = vmatpush2.bf16.msra.mxu0 0
  %7135 = vmatprep.subr.bf16.mxu0 0
  %7136 = vmatpush2.bf16.msra.mxu0 0
  %7137 = vmatprep.mubr.bf16.mxu0 0
  %7138 = vmatmul.mubr.bf16.gmra.mxu0 %v5028
  %v7139 = vpop.f32.mrf.mxu0
  %v7140 = vadd.f32 %v7055, %v7139
  %v7141 = vpop.f32.mrf.mxu0
  %v7142 = vpop.f32.mrf.mxu0
  %v7143 = vadd.f32 %v7055, %v7142
  %v7144 = vpop.f32.mrf.mxu0
  %7145 = vmatprep.mubr.bf16.mxu0 0
  %7146 = vmatmul.mubr.bf16.gmra.mxu0 %v5029
  %v7147 = vpop.f32.mrf.mxu0
  %v7148 = vadd.f32 %v7055, %v7147
  %v7149 = vpop.f32.mrf.mxu0
  %v7150 = vpop.f32.mrf.mxu0
  %v7151 = vadd.f32 %v7055, %v7150
  %v7152 = vpop.f32.mrf.mxu0
  %7153 = vmatprep.mubr.bf16.mxu0 0
  %7154 = vmatmul.mubr.bf16.gmra.mxu0 %v5030
  %v7155 = vpop.f32.mrf.mxu0
  %v7156 = vadd.f32 %v7055, %v7155
  %v7157 = vpop.f32.mrf.mxu0
  %v7158 = vpop.f32.mrf.mxu0
  %v7159 = vadd.f32 %v7055, %v7158
  %v7160 = vpop.f32.mrf.mxu0
  %7161 = vmatprep.mubr.bf16.mxu0 0
  %7162 = vmatmul.mubr.bf16.gmra.mxu0 %v5031
  %v7163 = vpop.f32.mrf.mxu0
  %v7164 = vadd.f32 %v7055, %v7163
  %v7165 = vpop.f32.mrf.mxu0
  %v7166 = vpop.f32.mrf.mxu0
  %v7167 = vadd.f32 %v7055, %v7166
  %v7168 = vpop.f32.mrf.mxu0
  %7169 = vmatprep.mubr.bf16.mxu0 0
  %7170 = vmatmul.mubr.bf16.gmra.mxu0 %v5032
  %v7171 = vpop.f32.mrf.mxu0
  %v7172 = vadd.f32 %v7055, %v7171
  %v7173 = vpop.f32.mrf.mxu0
  %v7174 = vpop.f32.mrf.mxu0
  %v7175 = vadd.f32 %v7055, %v7174
  %v7176 = vpop.f32.mrf.mxu0
  %7177 = vmatprep.mubr.bf16.mxu0 0
  %7178 = vmatmul.mubr.bf16.gmra.mxu0 %v5033
  %v7179 = vpop.f32.mrf.mxu0
  %v7180 = vadd.f32 %v7055, %v7179
  %v7181 = vpop.f32.mrf.mxu0
  %v7182 = vpop.f32.mrf.mxu0
  %v7183 = vadd.f32 %v7055, %v7182
  %v7184 = vpop.f32.mrf.mxu0
  %7185 = vmatprep.mubr.bf16.mxu0 0
  %7186 = vmatmul.mubr.bf16.gmra.mxu0 %v5034
  %v7187 = vpop.f32.mrf.mxu0
  %v7188 = vadd.f32 %v7055, %v7187
  %v7189 = vpop.f32.mrf.mxu0
  %v7190 = vpop.f32.mrf.mxu0
  %v7191 = vadd.f32 %v7055, %v7190
  %v7192 = vpop.f32.mrf.mxu0
  %7193 = vmatprep.mubr.bf16.mxu0 0
  %7194 = vmatmul.mubr.bf16.gmra.mxu0 %v5035
  %v7195 = vpop.f32.mrf.mxu0
  %v7196 = vadd.f32 %v7055, %v7195
  %v7197 = vpop.f32.mrf.mxu0
  %v7198 = vpop.f32.mrf.mxu0
  %v7199 = vadd.f32 %v7055, %v7198
  %v7200 = vpop.f32.mrf.mxu0
  %7201 = vmatprep.mubr.bf16.mxu0 0
  %7202 = vmatmul.mubr.bf16.gmra.mxu0 %v5036
  %v7203 = vpop.f32.mrf.mxu0
  %v7204 = vadd.f32 %v7055, %v7203
  %v7205 = vpop.f32.mrf.mxu0
  %v7206 = vpop.f32.mrf.mxu0
  %v7207 = vadd.f32 %v7055, %v7206
  %v7208 = vpop.f32.mrf.mxu0
  %7209 = vmatprep.mubr.bf16.mxu0 0
  %7210 = vmatmul.mubr.bf16.gmra.mxu0 %v5037
  %v7211 = vpop.f32.mrf.mxu0
  %v7212 = vadd.f32 %v7055, %v7211
  %v7213 = vpop.f32.mrf.mxu0
  %v7214 = vpop.f32.mrf.mxu0
  %v7215 = vadd.f32 %v7055, %v7214
  %v7216 = vpop.f32.mrf.mxu0
  %7217 = vmatprep.mubr.bf16.mxu0 0
  %7218 = vmatmul.mubr.bf16.gmra.mxu0 %v5038
  %v7219 = vpop.f32.mrf.mxu0
  %v7220 = vadd.f32 %v7055, %v7219
  %v7221 = vpop.f32.mrf.mxu0
  %v7222 = vpop.f32.mrf.mxu0
  %v7223 = vadd.f32 %v7055, %v7222
  %v7224 = vpop.f32.mrf.mxu0
  %7225 = vmatprep.mubr.bf16.mxu0 0
  %7226 = vmatmul.mubr.bf16.gmra.mxu0 %v5039
  %v7227 = vpop.f32.mrf.mxu0
  %v7228 = vadd.f32 %v7055, %v7227
  %v7229 = vpop.f32.mrf.mxu0
  %v7230 = vpop.f32.mrf.mxu0
  %v7231 = vadd.f32 %v7055, %v7230
  %v7232 = vpop.f32.mrf.mxu0
  %7233 = vmatprep.mubr.bf16.mxu0 0
  %7234 = vmatmul.mubr.bf16.gmra.mxu0 %v5040
  %v7235 = vpop.f32.mrf.mxu0
  %v7236 = vadd.f32 %v7055, %v7235
  %v7237 = vpop.f32.mrf.mxu0
  %v7238 = vpop.f32.mrf.mxu0
  %v7239 = vadd.f32 %v7055, %v7238
  %v7240 = vpop.f32.mrf.mxu0
  %7241 = vmatprep.mubr.bf16.mxu0 0
  %7242 = vmatmul.mubr.bf16.gmra.mxu0 %v5041
  %v7243 = vpop.f32.mrf.mxu0
  %v7244 = vadd.f32 %v7055, %v7243
  %v7245 = vpop.f32.mrf.mxu0
  %v7246 = vpop.f32.mrf.mxu0
  %v7247 = vadd.f32 %v7055, %v7246
  %v7248 = vpop.f32.mrf.mxu0
  %7249 = vmatprep.mubr.bf16.mxu0 0
  %7250 = vmatmul.mubr.bf16.gmra.mxu0 %v5042
  %v7251 = vpop.f32.mrf.mxu0
  %v7252 = vadd.f32 %v7055, %v7251
  %v7253 = vpop.f32.mrf.mxu0
  %v7254 = vpop.f32.mrf.mxu0
  %v7255 = vadd.f32 %v7055, %v7254
  %v7256 = vpop.f32.mrf.mxu0
  %7257 = vmatprep.mubr.bf16.mxu0 0
  %7258 = vmatmul.mubr.bf16.gmra.mxu0 %v5043
  %v7259 = vpop.f32.mrf.mxu0
  %v7260 = vadd.f32 %v7055, %v7259
  %v7261 = vpop.f32.mrf.mxu0
  %v7262 = vpop.f32.mrf.mxu0
  %v7263 = vadd.f32 %v7055, %v7262
  %v7264 = vpop.f32.mrf.mxu0
  %7265 = vdwg.mxu0
  %v7266 = vmax.f32 %v7140, 0.0
  %v7267 = vmax.f32 %v7143, 0.0
  %v7268 = vmax.f32 %v7148, 0.0
  %v7269 = vmax.f32 %v7151, 0.0
  %v7270 = vmax.f32 %v7156, 0.0
  %v7271 = vmax.f32 %v7159, 0.0
  %v7272 = vmax.f32 %v7164, 0.0
  %v7273 = vmax.f32 %v7167, 0.0
  %v7274 = vmax.f32 %v7172, 0.0
  %v7275 = vmax.f32 %v7175, 0.0
  %v7276 = vmax.f32 %v7180, 0.0
  %v7277 = vmax.f32 %v7183, 0.0
  %v7278 = vmax.f32 %v7188, 0.0
  %v7279 = vmax.f32 %v7191, 0.0
  %v7280 = vmax.f32 %v7196, 0.0
  %v7281 = vmax.f32 %v7199, 0.0
  %v7282 = vmax.f32 %v7204, 0.0
  %v7283 = vmax.f32 %v7207, 0.0
  %v7284 = vmax.f32 %v7212, 0.0
  %v7285 = vmax.f32 %v7215, 0.0
  %v7286 = vmax.f32 %v7220, 0.0
  %v7287 = vmax.f32 %v7223, 0.0
  %v7288 = vmax.f32 %v7228, 0.0
  %v7289 = vmax.f32 %v7231, 0.0
  %v7290 = vmax.f32 %v7236, 0.0
  %v7291 = vmax.f32 %v7239, 0.0
  %v7292 = vmax.f32 %v7244, 0.0
  %v7293 = vmax.f32 %v7247, 0.0
  %v7294 = vmax.f32 %v7252, 0.0
  %v7295 = vmax.f32 %v7255, 0.0
  %v7296 = vmax.f32 %v7260, 0.0
  %v7297 = vmax.f32 %v7263, 0.0
  %v7298 = vand.u32 2147483647, %v7140
  %v7299 = vand.u32 2147483647, %v7143
  %v7300 = vand.u32 2147483647, %v7148
  %v7301 = vand.u32 2147483647, %v7151
  %v7302 = vand.u32 2147483647, %v7156
  %v7303 = vand.u32 2147483647, %v7159
  %v7304 = vand.u32 2147483647, %v7164
  %v7305 = vand.u32 2147483647, %v7167
  %v7306 = vand.u32 2147483647, %v7172
  %v7307 = vand.u32 2147483647, %v7175
  %v7308 = vand.u32 2147483647, %v7180
  %v7309 = vand.u32 2147483647, %v7183
  %v7310 = vand.u32 2147483647, %v7188
  %v7311 = vand.u32 2147483647, %v7191
  %v7312 = vand.u32 2147483647, %v7196
  %v7313 = vand.u32 2147483647, %v7199
  %v7314 = vand.u32 2147483647, %v7204
  %v7315 = vand.u32 2147483647, %v7207
  %v7316 = vand.u32 2147483647, %v7212
  %v7317 = vand.u32 2147483647, %v7215
  %v7318 = vand.u32 2147483647, %v7220
  %v7319 = vand.u32 2147483647, %v7223
  %v7320 = vand.u32 2147483647, %v7228
  %v7321 = vand.u32 2147483647, %v7231
  %v7322 = vand.u32 2147483647, %v7236
  %v7323 = vand.u32 2147483647, %v7239
  %v7324 = vand.u32 2147483647, %v7244
  %v7325 = vand.u32 2147483647, %v7247
  %v7326 = vand.u32 2147483647, %v7252
  %v7327 = vand.u32 2147483647, %v7255
  %v7328 = vand.u32 2147483647, %v7260
  %v7329 = vand.u32 2147483647, %v7263
  %v7330 = vsub.f32 0.0, %v7298
  %v7331 = vsub.f32 0.0, %v7299
  %v7332 = vsub.f32 0.0, %v7300
  %v7333 = vsub.f32 0.0, %v7301
  %v7334 = vsub.f32 0.0, %v7302
  %v7335 = vsub.f32 0.0, %v7303
  %v7336 = vsub.f32 0.0, %v7304
  %v7337 = vsub.f32 0.0, %v7305
  %v7338 = vsub.f32 0.0, %v7306
  %v7339 = vsub.f32 0.0, %v7307
  %v7340 = vsub.f32 0.0, %v7308
  %v7341 = vsub.f32 0.0, %v7309
  %v7342 = vsub.f32 0.0, %v7310
  %v7343 = vsub.f32 0.0, %v7311
  %v7344 = vsub.f32 0.0, %v7312
  %v7345 = vsub.f32 0.0, %v7313
  %v7346 = vsub.f32 0.0, %v7314
  %v7347 = vsub.f32 0.0, %v7315
  %v7348 = vsub.f32 0.0, %v7316
  %v7349 = vsub.f32 0.0, %v7317
  %v7350 = vsub.f32 0.0, %v7318
  %v7351 = vsub.f32 0.0, %v7319
  %v7352 = vsub.f32 0.0, %v7320
  %v7353 = vsub.f32 0.0, %v7321
  %v7354 = vsub.f32 0.0, %v7322
  %v7355 = vsub.f32 0.0, %v7323
  %v7356 = vsub.f32 0.0, %v7324
  %v7357 = vsub.f32 0.0, %v7325
  %v7358 = vsub.f32 0.0, %v7326
  %v7359 = vsub.f32 0.0, %v7327
  %v7360 = vsub.f32 0.0, %v7328
  %v7361 = vsub.f32 0.0, %v7329
  %v7362 = vmul.f32 %v7330, 1.442695
  %v7363 = vpow.pop %v7362
  %v7364 = vmul.f32 %v7331, 1.442695
  %v7365 = vpow.pop %v7364
  %v7366 = vmul.f32 %v7332, 1.442695
  %v7367 = vpow.pop %v7366
  %v7368 = vmul.f32 %v7333, 1.442695
  %v7369 = vpow.pop %v7368
  %v7370 = vmul.f32 %v7334, 1.442695
  %v7371 = vpow.pop %v7370
  %v7372 = vmul.f32 %v7335, 1.442695
  %v7373 = vpow.pop %v7372
  %v7374 = vmul.f32 %v7336, 1.442695
  %v7375 = vpow.pop %v7374
  %v7376 = vmul.f32 %v7337, 1.442695
  %v7377 = vpow.pop %v7376
  %v7378 = vmul.f32 %v7338, 1.442695
  %v7379 = vpow.pop %v7378
  %v7380 = vmul.f32 %v7339, 1.442695
  %v7381 = vpow.pop %v7380
  %v7382 = vmul.f32 %v7340, 1.442695
  %v7383 = vpow.pop %v7382
  %v7384 = vmul.f32 %v7341, 1.442695
  %v7385 = vpow.pop %v7384
  %v7386 = vmul.f32 %v7342, 1.442695
  %v7387 = vpow.pop %v7386
  %v7388 = vmul.f32 %v7343, 1.442695
  %v7389 = vpow.pop %v7388
  %v7390 = vmul.f32 %v7344, 1.442695
  %v7391 = vpow.pop %v7390
  %v7392 = vmul.f32 %v7345, 1.442695
  %v7393 = vpow.pop %v7392
  %v7394 = vmul.f32 %v7346, 1.442695
  %v7395 = vpow.pop %v7394
  %v7396 = vmul.f32 %v7347, 1.442695
  %v7397 = vpow.pop %v7396
  %v7398 = vmul.f32 %v7348, 1.442695
  %v7399 = vpow.pop %v7398
  %v7400 = vmul.f32 %v7349, 1.442695
  %v7401 = vpow.pop %v7400
  %v7402 = vmul.f32 %v7350, 1.442695
  %v7403 = vpow.pop %v7402
  %v7404 = vmul.f32 %v7351, 1.442695
  %v7405 = vpow.pop %v7404
  %v7406 = vmul.f32 %v7352, 1.442695
  %v7407 = vpow.pop %v7406
  %v7408 = vmul.f32 %v7353, 1.442695
  %v7409 = vpow.pop %v7408
  %v7410 = vmul.f32 %v7354, 1.442695
  %v7411 = vpow.pop %v7410
  %v7412 = vmul.f32 %v7355, 1.442695
  %v7413 = vpow.pop %v7412
  %v7414 = vmul.f32 %v7356, 1.442695
  %v7415 = vpow.pop %v7414
  %v7416 = vmul.f32 %v7357, 1.442695
  %v7417 = vpow.pop %v7416
  %v7418 = vmul.f32 %v7358, 1.442695
  %v7419 = vpow.pop %v7418
  %v7420 = vmul.f32 %v7359, 1.442695
  %v7421 = vpow.pop %v7420
  %v7422 = vmul.f32 %v7360, 1.442695
  %v7423 = vpow.pop %v7422
  %v7424 = vmul.f32 %v7361, 1.442695
  %v7425 = vpow.pop %v7424
  %v7426 = vadd.f32 %v7363, 1.0
  %v7427 = vadd.f32 %v7365, 1.0
  %v7428 = vadd.f32 %v7367, 1.0
  %v7429 = vadd.f32 %v7369, 1.0
  %v7430 = vadd.f32 %v7371, 1.0
  %v7431 = vadd.f32 %v7373, 1.0
  %v7432 = vadd.f32 %v7375, 1.0
  %v7433 = vadd.f32 %v7377, 1.0
  %v7434 = vadd.f32 %v7379, 1.0
  %v7435 = vadd.f32 %v7381, 1.0
  %v7436 = vadd.f32 %v7383, 1.0
  %v7437 = vadd.f32 %v7385, 1.0
  %v7438 = vadd.f32 %v7387, 1.0
  %v7439 = vadd.f32 %v7389, 1.0
  %v7440 = vadd.f32 %v7391, 1.0
  %v7441 = vadd.f32 %v7393, 1.0
  %v7442 = vadd.f32 %v7395, 1.0
  %v7443 = vadd.f32 %v7397, 1.0
  %v7444 = vadd.f32 %v7399, 1.0
  %v7445 = vadd.f32 %v7401, 1.0
  %v7446 = vadd.f32 %v7403, 1.0
  %v7447 = vadd.f32 %v7405, 1.0
  %v7448 = vadd.f32 %v7407, 1.0
  %v7449 = vadd.f32 %v7409, 1.0
  %v7450 = vadd.f32 %v7411, 1.0
  %v7451 = vadd.f32 %v7413, 1.0
  %v7452 = vadd.f32 %v7415, 1.0
  %v7453 = vadd.f32 %v7417, 1.0
  %v7454 = vadd.f32 %v7419, 1.0
  %v7455 = vadd.f32 %v7421, 1.0
  %v7456 = vadd.f32 %v7423, 1.0
  %v7457 = vadd.f32 %v7425, 1.0
  %v7458 = vlog2.pop %v7426
  %v7459 = vmul.f32 %v7458, 0.6931472
  %v7460 = vlog2.pop %v7427
  %v7461 = vmul.f32 %v7460, 0.6931472
  %v7462 = vlog2.pop %v7428
  %v7463 = vmul.f32 %v7462, 0.6931472
  %v7464 = vlog2.pop %v7429
  %v7465 = vmul.f32 %v7464, 0.6931472
  %v7466 = vlog2.pop %v7430
  %v7467 = vmul.f32 %v7466, 0.6931472
  %v7468 = vlog2.pop %v7431
  %v7469 = vmul.f32 %v7468, 0.6931472
  %v7470 = vlog2.pop %v7432
  %v7471 = vmul.f32 %v7470, 0.6931472
  %v7472 = vlog2.pop %v7433
  %v7473 = vmul.f32 %v7472, 0.6931472
  %v7474 = vlog2.pop %v7434
  %v7475 = vmul.f32 %v7474, 0.6931472
  %v7476 = vlog2.pop %v7435
  %v7477 = vmul.f32 %v7476, 0.6931472
  %v7478 = vlog2.pop %v7436
  %v7479 = vmul.f32 %v7478, 0.6931472
  %v7480 = vlog2.pop %v7437
  %v7481 = vmul.f32 %v7480, 0.6931472
  %v7482 = vlog2.pop %v7438
  %v7483 = vmul.f32 %v7482, 0.6931472
  %v7484 = vlog2.pop %v7439
  %v7485 = vmul.f32 %v7484, 0.6931472
  %v7486 = vlog2.pop %v7440
  %v7487 = vmul.f32 %v7486, 0.6931472
  %v7488 = vlog2.pop %v7441
  %v7489 = vmul.f32 %v7488, 0.6931472
  %v7490 = vlog2.pop %v7442
  %v7491 = vmul.f32 %v7490, 0.6931472
  %v7492 = vlog2.pop %v7443
  %v7493 = vmul.f32 %v7492, 0.6931472
  %v7494 = vlog2.pop %v7444
  %v7495 = vmul.f32 %v7494, 0.6931472
  %v7496 = vlog2.pop %v7445
  %v7497 = vmul.f32 %v7496, 0.6931472
  %v7498 = vlog2.pop %v7446
  %v7499 = vmul.f32 %v7498, 0.6931472
  %v7500 = vlog2.pop %v7447
  %v7501 = vmul.f32 %v7500, 0.6931472
  %v7502 = vlog2.pop %v7448
  %v7503 = vmul.f32 %v7502, 0.6931472
  %v7504 = vlog2.pop %v7449
  %v7505 = vmul.f32 %v7504, 0.6931472
  %v7506 = vlog2.pop %v7450
  %v7507 = vmul.f32 %v7506, 0.6931472
  %v7508 = vlog2.pop %v7451
  %v7509 = vmul.f32 %v7508, 0.6931472
  %v7510 = vlog2.pop %v7452
  %v7511 = vmul.f32 %v7510, 0.6931472
  %v7512 = vlog2.pop %v7453
  %v7513 = vmul.f32 %v7512, 0.6931472
  %v7514 = vlog2.pop %v7454
  %v7515 = vmul.f32 %v7514, 0.6931472
  %v7516 = vlog2.pop %v7455
  %v7517 = vmul.f32 %v7516, 0.6931472
  %v7518 = vlog2.pop %v7456
  %v7519 = vmul.f32 %v7518, 0.6931472
  %v7520 = vlog2.pop %v7457
  %v7521 = vmul.f32 %v7520, 0.6931472
  %v7522 = vadd.f32 %v7266, %v7459
  %v7523 = vadd.f32 %v7267, %v7461
  %v7524 = vadd.f32 %v7268, %v7463
  %v7525 = vadd.f32 %v7269, %v7465
  %v7526 = vadd.f32 %v7270, %v7467
  %v7527 = vadd.f32 %v7271, %v7469
  %v7528 = vadd.f32 %v7272, %v7471
  %v7529 = vadd.f32 %v7273, %v7473
  %v7530 = vadd.f32 %v7274, %v7475
  %v7531 = vadd.f32 %v7275, %v7477
  %v7532 = vadd.f32 %v7276, %v7479
  %v7533 = vadd.f32 %v7277, %v7481
  %v7534 = vadd.f32 %v7278, %v7483
  %v7535 = vadd.f32 %v7279, %v7485
  %v7536 = vadd.f32 %v7280, %v7487
  %v7537 = vadd.f32 %v7281, %v7489
  %v7538 = vadd.f32 %v7282, %v7491
  %v7539 = vadd.f32 %v7283, %v7493
  %v7540 = vadd.f32 %v7284, %v7495
  %v7541 = vadd.f32 %v7285, %v7497
  %v7542 = vadd.f32 %v7286, %v7499
  %v7543 = vadd.f32 %v7287, %v7501
  %v7544 = vadd.f32 %v7288, %v7503
  %v7545 = vadd.f32 %v7289, %v7505
  %v7546 = vadd.f32 %v7290, %v7507
  %v7547 = vadd.f32 %v7291, %v7509
  %v7548 = vadd.f32 %v7292, %v7511
  %v7549 = vadd.f32 %v7293, %v7513
  %v7550 = vadd.f32 %v7294, %v7515
  %v7551 = vadd.f32 %v7295, %v7517
  %v7552 = vadd.f32 %v7296, %v7519
  %v7553 = vadd.f32 %v7297, %v7521
  %v7554 = vsub.f32 %v7522, 0.6931472
  %v7555 = vsub.f32 %v7523, 0.6931472
  %v7556 = vsub.f32 %v7524, 0.6931472
  %v7557 = vsub.f32 %v7525, 0.6931472
  %v7558 = vsub.f32 %v7526, 0.6931472
  %v7559 = vsub.f32 %v7527, 0.6931472
  %v7560 = vsub.f32 %v7528, 0.6931472
  %v7561 = vsub.f32 %v7529, 0.6931472
  %v7562 = vsub.f32 %v7530, 0.6931472
  %v7563 = vsub.f32 %v7531, 0.6931472
  %v7564 = vsub.f32 %v7532, 0.6931472
  %v7565 = vsub.f32 %v7533, 0.6931472
  %v7566 = vsub.f32 %v7534, 0.6931472
  %v7567 = vsub.f32 %v7535, 0.6931472
  %v7568 = vsub.f32 %v7536, 0.6931472
  %v7569 = vsub.f32 %v7537, 0.6931472
  %v7570 = vsub.f32 %v7538, 0.6931472
  %v7571 = vsub.f32 %v7539, 0.6931472
  %v7572 = vsub.f32 %v7540, 0.6931472
  %v7573 = vsub.f32 %v7541, 0.6931472
  %v7574 = vsub.f32 %v7542, 0.6931472
  %v7575 = vsub.f32 %v7543, 0.6931472
  %v7576 = vsub.f32 %v7544, 0.6931472
  %v7577 = vsub.f32 %v7545, 0.6931472
  %v7578 = vsub.f32 %v7546, 0.6931472
  %v7579 = vsub.f32 %v7547, 0.6931472
  %v7580 = vsub.f32 %v7548, 0.6931472
  %v7581 = vsub.f32 %v7549, 0.6931472
  %v7582 = vsub.f32 %v7550, 0.6931472
  %v7583 = vsub.f32 %v7551, 0.6931472
  %v7584 = vsub.f32 %v7552, 0.6931472
  %v7585 = vsub.f32 %v7553, 0.6931472
  %s7586 = scalar_lea.vmem %s16, 64
  %v7587 = vld [vmem:[%s7586] sm:$0xf]
  %v7588 = vld [vmem:[%s7586 + $0x4] sm:$0xf]
  %v7589 = vld [vmem:[%s7586 + $0x8] sm:$0xf]
  %v7590 = vld [vmem:[%s7586 + $0xc] sm:$0xf]
  %v7591 = vld [vmem:[%s7586 + $0x10] sm:$0xf]
  %v7592 = vld [vmem:[%s7586 + $0x14] sm:$0xf]
  %v7593 = vld [vmem:[%s7586 + $0x18] sm:$0xf]
  %v7594 = vld [vmem:[%s7586 + $0x1c] sm:$0xf]
  %v7595 = vld [vmem:[%s7586 + $0x20] sm:$0xf]
  %v7596 = vld [vmem:[%s7586 + $0x24] sm:$0xf]
  %v7597 = vld [vmem:[%s7586 + $0x28] sm:$0xf]
  %v7598 = vld [vmem:[%s7586 + $0x2c] sm:$0xf]
  %v7599 = vld [vmem:[%s7586 + $0x30] sm:$0xf]
  %v7600 = vld [vmem:[%s7586 + $0x34] sm:$0xf]
  %v7601 = vld [vmem:[%s7586 + $0x38] sm:$0xf]
  %v7602 = vld [vmem:[%s7586 + $0x3c] sm:$0xf]
  %v7603 = vpack.c.bf16 %v7555, %v7554
  %v7604 = vpack.c.bf16 %v7557, %v7556
  %v7605 = vpack.c.bf16 %v7559, %v7558
  %v7606 = vpack.c.bf16 %v7561, %v7560
  %v7607 = vpack.c.bf16 %v7563, %v7562
  %v7608 = vpack.c.bf16 %v7565, %v7564
  %v7609 = vpack.c.bf16 %v7567, %v7566
  %v7610 = vpack.c.bf16 %v7569, %v7568
  %v7611 = vpack.c.bf16 %v7571, %v7570
  %v7612 = vpack.c.bf16 %v7573, %v7572
  %v7613 = vpack.c.bf16 %v7575, %v7574
  %v7614 = vpack.c.bf16 %v7577, %v7576
  %v7615 = vpack.c.bf16 %v7579, %v7578
  %v7616 = vpack.c.bf16 %v7581, %v7580
  %v7617 = vpack.c.bf16 %v7583, %v7582
  %v7618 = vpack.c.bf16 %v7585, %v7584
  %s7619 = scalar_lea.vmem %s17, 1
  %v7620 = vld [vmem:[%s7619] sm:$0x1]
  %v7622 = vlaneseq
  %v7623 = vshrl.u32 %v7622, 7
  %v7624 = vsub.s32 0, %v7623
  %v7625 = vrot.slane %v7620, %v7624
  %v7643 = vunpack.c.l.b16 %v7587
  %v7644 = vunpack.c.l.b16 %v7588
  %v7645 = vunpack.c.l.b16 %v7589
  %v7646 = vunpack.c.l.b16 %v7590
  %v7647 = vunpack.c.l.b16 %v7591
  %v7648 = vunpack.c.l.b16 %v7592
  %v7649 = vunpack.c.l.b16 %v7593
  %v7650 = vunpack.c.l.b16 %v7594
  %v7651 = vunpack.c.l.b16 %v7595
  %v7652 = vunpack.c.l.b16 %v7596
  %v7653 = vunpack.c.l.b16 %v7597
  %v7654 = vunpack.c.l.b16 %v7598
  %v7655 = vunpack.c.l.b16 %v7599
  %v7656 = vunpack.c.l.b16 %v7600
  %v7657 = vunpack.c.l.b16 %v7601
  %v7658 = vunpack.c.l.b16 %v7602
  %v7659 = vpack.c.b16 %v7644, %v7643
  %v7660 = vpack.c.b16 %v7646, %v7645
  %v7661 = vpack.c.b16 %v7648, %v7647
  %v7662 = vpack.c.b16 %v7650, %v7649
  %v7663 = vpack.c.b16 %v7652, %v7651
  %v7664 = vpack.c.b16 %v7654, %v7653
  %v7665 = vpack.c.b16 %v7656, %v7655
  %v7666 = vpack.c.b16 %v7658, %v7657
  %7675 = vmatprep.subr.bf16.mxu0 0
  %7676 = vmatpush1.bf16.msra.mxu0 %v7666
  %7677 = vmatprep.subr.bf16.mxu0 0
  %7678 = vmatpush1.bf16.msra.mxu0 %v7665
  %7679 = vmatprep.subr.bf16.mxu0 0
  %7680 = vmatpush1.bf16.msra.mxu0 %v7664
  %7681 = vmatprep.subr.bf16.mxu0 0
  %7682 = vmatpush1.bf16.msra.mxu0 %v7663
  %7683 = vmatprep.subr.bf16.mxu0 0
  %7684 = vmatpush1.bf16.msra.mxu0 %v7662
  %7685 = vmatprep.subr.bf16.mxu0 0
  %7686 = vmatpush1.bf16.msra.mxu0 %v7661
  %7687 = vmatprep.subr.bf16.mxu0 0
  %7688 = vmatpush1.bf16.msra.mxu0 %v7660
  %7689 = vmatprep.subr.bf16.mxu0 0
  %7690 = vmatpush1.bf16.msra.mxu0 %v7659
  %7691 = vmatprep.subr.bf16.mxu0 0
  %7692 = vmatpush2.bf16.msra.mxu0 0
  %7693 = vmatprep.subr.bf16.mxu0 0
  %7694 = vmatpush2.bf16.msra.mxu0 0
  %7695 = vmatprep.subr.bf16.mxu0 0
  %7696 = vmatpush2.bf16.msra.mxu0 0
  %7697 = vmatprep.subr.bf16.mxu0 0
  %7698 = vmatpush2.bf16.msra.mxu0 0
  %7699 = vmatprep.subr.bf16.mxu0 0
  %7700 = vmatpush2.bf16.msra.mxu0 0
  %7701 = vmatprep.subr.bf16.mxu0 0
  %7702 = vmatpush2.bf16.msra.mxu0 0
  %7703 = vmatprep.subr.bf16.mxu0 0
  %7704 = vmatpush2.bf16.msra.mxu0 0
  %7705 = vmatprep.subr.bf16.mxu0 0
  %7706 = vmatpush2.bf16.msra.mxu0 0
  %7707 = vmatprep.mubr.bf16.mxu0 0
  %7708 = vmatmul.mubr.bf16.gmra.mxu0 %v7603
  %v7709 = vpop.f32.mrf.mxu0
  %v7710 = vadd.f32 %v7625, %v7709
  %v7711 = vpop.f32.mrf.mxu0
  %v7712 = vpop.f32.mrf.mxu0
  %v7713 = vadd.f32 %v7625, %v7712
  %v7714 = vpop.f32.mrf.mxu0
  %7715 = vmatprep.mubr.bf16.mxu0 0
  %7716 = vmatmul.mubr.bf16.gmra.mxu0 %v7604
  %v7717 = vpop.f32.mrf.mxu0
  %v7718 = vadd.f32 %v7625, %v7717
  %v7719 = vpop.f32.mrf.mxu0
  %v7720 = vpop.f32.mrf.mxu0
  %v7721 = vadd.f32 %v7625, %v7720
  %v7722 = vpop.f32.mrf.mxu0
  %7723 = vmatprep.mubr.bf16.mxu0 0
  %7724 = vmatmul.mubr.bf16.gmra.mxu0 %v7605
  %v7725 = vpop.f32.mrf.mxu0
  %v7726 = vadd.f32 %v7625, %v7725
  %v7727 = vpop.f32.mrf.mxu0
  %v7728 = vpop.f32.mrf.mxu0
  %v7729 = vadd.f32 %v7625, %v7728
  %v7730 = vpop.f32.mrf.mxu0
  %7731 = vmatprep.mubr.bf16.mxu0 0
  %7732 = vmatmul.mubr.bf16.gmra.mxu0 %v7606
  %v7733 = vpop.f32.mrf.mxu0
  %v7734 = vadd.f32 %v7625, %v7733
  %v7735 = vpop.f32.mrf.mxu0
  %v7736 = vpop.f32.mrf.mxu0
  %v7737 = vadd.f32 %v7625, %v7736
  %v7738 = vpop.f32.mrf.mxu0
  %7739 = vmatprep.mubr.bf16.mxu0 0
  %7740 = vmatmul.mubr.bf16.gmra.mxu0 %v7607
  %v7741 = vpop.f32.mrf.mxu0
  %v7742 = vadd.f32 %v7625, %v7741
  %v7743 = vpop.f32.mrf.mxu0
  %v7744 = vpop.f32.mrf.mxu0
  %v7745 = vadd.f32 %v7625, %v7744
  %v7746 = vpop.f32.mrf.mxu0
  %7747 = vmatprep.mubr.bf16.mxu0 0
  %7748 = vmatmul.mubr.bf16.gmra.mxu0 %v7608
  %v7749 = vpop.f32.mrf.mxu0
  %v7750 = vadd.f32 %v7625, %v7749
  %v7751 = vpop.f32.mrf.mxu0
  %v7752 = vpop.f32.mrf.mxu0
  %v7753 = vadd.f32 %v7625, %v7752
  %v7754 = vpop.f32.mrf.mxu0
  %7755 = vmatprep.mubr.bf16.mxu0 0
  %7756 = vmatmul.mubr.bf16.gmra.mxu0 %v7609
  %v7757 = vpop.f32.mrf.mxu0
  %v7758 = vadd.f32 %v7625, %v7757
  %v7759 = vpop.f32.mrf.mxu0
  %v7760 = vpop.f32.mrf.mxu0
  %v7761 = vadd.f32 %v7625, %v7760
  %v7762 = vpop.f32.mrf.mxu0
  %7763 = vmatprep.mubr.bf16.mxu0 0
  %7764 = vmatmul.mubr.bf16.gmra.mxu0 %v7610
  %v7765 = vpop.f32.mrf.mxu0
  %v7766 = vadd.f32 %v7625, %v7765
  %v7767 = vpop.f32.mrf.mxu0
  %v7768 = vpop.f32.mrf.mxu0
  %v7769 = vadd.f32 %v7625, %v7768
  %v7770 = vpop.f32.mrf.mxu0
  %7771 = vmatprep.mubr.bf16.mxu0 0
  %7772 = vmatmul.mubr.bf16.gmra.mxu0 %v7611
  %v7773 = vpop.f32.mrf.mxu0
  %v7774 = vadd.f32 %v7625, %v7773
  %v7775 = vpop.f32.mrf.mxu0
  %v7776 = vpop.f32.mrf.mxu0
  %v7777 = vadd.f32 %v7625, %v7776
  %v7778 = vpop.f32.mrf.mxu0
  %7779 = vmatprep.mubr.bf16.mxu0 0
  %7780 = vmatmul.mubr.bf16.gmra.mxu0 %v7612
  %v7781 = vpop.f32.mrf.mxu0
  %v7782 = vadd.f32 %v7625, %v7781
  %v7783 = vpop.f32.mrf.mxu0
  %v7784 = vpop.f32.mrf.mxu0
  %v7785 = vadd.f32 %v7625, %v7784
  %v7786 = vpop.f32.mrf.mxu0
  %7787 = vmatprep.mubr.bf16.mxu0 0
  %7788 = vmatmul.mubr.bf16.gmra.mxu0 %v7613
  %v7789 = vpop.f32.mrf.mxu0
  %v7790 = vadd.f32 %v7625, %v7789
  %v7791 = vpop.f32.mrf.mxu0
  %v7792 = vpop.f32.mrf.mxu0
  %v7793 = vadd.f32 %v7625, %v7792
  %v7794 = vpop.f32.mrf.mxu0
  %7795 = vmatprep.mubr.bf16.mxu0 0
  %7796 = vmatmul.mubr.bf16.gmra.mxu0 %v7614
  %v7797 = vpop.f32.mrf.mxu0
  %v7798 = vadd.f32 %v7625, %v7797
  %v7799 = vpop.f32.mrf.mxu0
  %v7800 = vpop.f32.mrf.mxu0
  %v7801 = vadd.f32 %v7625, %v7800
  %v7802 = vpop.f32.mrf.mxu0
  %7803 = vmatprep.mubr.bf16.mxu0 0
  %7804 = vmatmul.mubr.bf16.gmra.mxu0 %v7615
  %v7805 = vpop.f32.mrf.mxu0
  %v7806 = vadd.f32 %v7625, %v7805
  %v7807 = vpop.f32.mrf.mxu0
  %v7808 = vpop.f32.mrf.mxu0
  %v7809 = vadd.f32 %v7625, %v7808
  %v7810 = vpop.f32.mrf.mxu0
  %7811 = vmatprep.mubr.bf16.mxu0 0
  %7812 = vmatmul.mubr.bf16.gmra.mxu0 %v7616
  %v7813 = vpop.f32.mrf.mxu0
  %v7814 = vadd.f32 %v7625, %v7813
  %v7815 = vpop.f32.mrf.mxu0
  %v7816 = vpop.f32.mrf.mxu0
  %v7817 = vadd.f32 %v7625, %v7816
  %v7818 = vpop.f32.mrf.mxu0
  %7819 = vmatprep.mubr.bf16.mxu0 0
  %7820 = vmatmul.mubr.bf16.gmra.mxu0 %v7617
  %v7821 = vpop.f32.mrf.mxu0
  %v7822 = vadd.f32 %v7625, %v7821
  %v7823 = vpop.f32.mrf.mxu0
  %v7824 = vpop.f32.mrf.mxu0
  %v7825 = vadd.f32 %v7625, %v7824
  %v7826 = vpop.f32.mrf.mxu0
  %7827 = vmatprep.mubr.bf16.mxu0 0
  %7828 = vmatmul.mubr.bf16.gmra.mxu0 %v7618
  %v7829 = vpop.f32.mrf.mxu0
  %v7830 = vadd.f32 %v7625, %v7829
  %v7831 = vpop.f32.mrf.mxu0
  %v7832 = vpop.f32.mrf.mxu0
  %v7833 = vadd.f32 %v7625, %v7832
  %v7834 = vpop.f32.mrf.mxu0
  %7835 = vdwg.mxu0
  %v7836 = vmul.f32 %v7710, %v4591
  %v7837 = vmul.f32 %v7713, %v4592
  %v7838 = vmul.f32 %v7718, %v4593
  %v7839 = vmul.f32 %v7721, %v4594
  %v7840 = vmul.f32 %v7726, %v4595
  %v7841 = vmul.f32 %v7729, %v4596
  %v7842 = vmul.f32 %v7734, %v4597
  %v7843 = vmul.f32 %v7737, %v4598
  %v7844 = vmul.f32 %v7742, %v4599
  %v7845 = vmul.f32 %v7745, %v4600
  %v7846 = vmul.f32 %v7750, %v4601
  %v7847 = vmul.f32 %v7753, %v4602
  %v7848 = vmul.f32 %v7758, %v4603
  %v7849 = vmul.f32 %v7761, %v4604
  %v7850 = vmul.f32 %v7766, %v4605
  %v7851 = vmul.f32 %v7769, %v4606
  %v7852 = vmul.f32 %v7774, %v4607
  %v7853 = vmul.f32 %v7777, %v4608
  %v7854 = vmul.f32 %v7782, %v4609
  %v7855 = vmul.f32 %v7785, %v4610
  %v7856 = vmul.f32 %v7790, %v4611
  %v7857 = vmul.f32 %v7793, %v4612
  %v7858 = vmul.f32 %v7798, %v4613
  %v7859 = vmul.f32 %v7801, %v4614
  %v7860 = vmul.f32 %v7806, %v4615
  %v7861 = vmul.f32 %v7809, %v4616
  %v7862 = vmul.f32 %v7814, %v4617
  %v7863 = vmul.f32 %v7817, %v4618
  %v7864 = vmul.f32 %v7822, %v4619
  %v7865 = vmul.f32 %v7825, %v4620
  %v7866 = vmul.f32 %v7830, %v4621
  %v7867 = vmul.f32 %v7833, %v4622
  %v7868 = vpack.c.bf16 %v6973, %v6970
  %v7869 = vpack.c.bf16 %v6981, %v6978
  %v7870 = vpack.c.bf16 %v6989, %v6986
  %v7871 = vpack.c.bf16 %v6997, %v6994
  %v7872 = vpack.c.bf16 %v7005, %v7002
  %v7873 = vpack.c.bf16 %v7013, %v7010
  %v7874 = vpack.c.bf16 %v7021, %v7018
  %v7875 = vpack.c.bf16 %v7029, %v7026
  %7876 = vmatprep.subr.bf16.mxu0 0
  %7877 = vmatpush1.bf16.msra.mxu0 %v7875
  %7878 = vmatprep.subr.bf16.mxu0 0
  %7879 = vmatpush1.bf16.msra.mxu0 %v7874
  %7880 = vmatprep.subr.bf16.mxu0 0
  %7881 = vmatpush1.bf16.msra.mxu0 %v7873
  %7882 = vmatprep.subr.bf16.mxu0 0
  %7883 = vmatpush1.bf16.msra.mxu0 %v7872
  %7884 = vmatprep.subr.bf16.mxu0 0
  %7885 = vmatpush1.bf16.msra.mxu0 %v7871
  %7886 = vmatprep.subr.bf16.mxu0 0
  %7887 = vmatpush1.bf16.msra.mxu0 %v7870
  %7888 = vmatprep.subr.bf16.mxu0 0
  %7889 = vmatpush1.bf16.msra.mxu0 %v7869
  %7890 = vmatprep.subr.bf16.mxu0 0
  %7891 = vmatpush1.bf16.msra.mxu0 %v7868
  %7892 = vmatprep.subr.bf16.mxu0 0
  %7893 = vmatpush2.bf16.msra.mxu0 0
  %7894 = vmatprep.subr.bf16.mxu0 0
  %7895 = vmatpush2.bf16.msra.mxu0 0
  %7896 = vmatprep.subr.bf16.mxu0 0
  %7897 = vmatpush2.bf16.msra.mxu0 0
  %7898 = vmatprep.subr.bf16.mxu0 0
  %7899 = vmatpush2.bf16.msra.mxu0 0
  %7900 = vmatprep.subr.bf16.mxu0 0
  %7901 = vmatpush2.bf16.msra.mxu0 0
  %7902 = vmatprep.subr.bf16.mxu0 0
  %7903 = vmatpush2.bf16.msra.mxu0 0
  %7904 = vmatprep.subr.bf16.mxu0 0
  %7905 = vmatpush2.bf16.msra.mxu0 0
  %7906 = vmatprep.subr.bf16.mxu0 0
  %7907 = vmatpush2.bf16.msra.mxu0 0
  %7908 = vmatprep.mubr.bf16.mxu0 0
  %7909 = vmatmul.mubr.bf16.gmra.mxu0 %v5924
  %v7910 = vpop.f32.mrf.mxu0
  %v7911 = vadd.f32 0.0, %v7910
  %v7912 = vpop.f32.mrf.mxu0
  %v7913 = vpop.f32.mrf.mxu0
  %v7914 = vadd.f32 0.0, %v7913
  %v7915 = vpop.f32.mrf.mxu0
  %7916 = vmatprep.mubr.bf16.mxu0 0
  %7917 = vmatmul.mubr.bf16.gmra.mxu0 %v5925
  %v7918 = vpop.f32.mrf.mxu0
  %v7919 = vadd.f32 0.0, %v7918
  %v7920 = vpop.f32.mrf.mxu0
  %v7921 = vpop.f32.mrf.mxu0
  %v7922 = vadd.f32 0.0, %v7921
  %v7923 = vpop.f32.mrf.mxu0
  %7924 = vmatprep.mubr.bf16.mxu0 0
  %7925 = vmatmul.mubr.bf16.gmra.mxu0 %v5926
  %v7926 = vpop.f32.mrf.mxu0
  %v7927 = vadd.f32 0.0, %v7926
  %v7928 = vpop.f32.mrf.mxu0
  %v7929 = vpop.f32.mrf.mxu0
  %v7930 = vadd.f32 0.0, %v7929
  %v7931 = vpop.f32.mrf.mxu0
  %7932 = vmatprep.mubr.bf16.mxu0 0
  %7933 = vmatmul.mubr.bf16.gmra.mxu0 %v5927
  %v7934 = vpop.f32.mrf.mxu0
  %v7935 = vadd.f32 0.0, %v7934
  %v7936 = vpop.f32.mrf.mxu0
  %v7937 = vpop.f32.mrf.mxu0
  %v7938 = vadd.f32 0.0, %v7937
  %v7939 = vpop.f32.mrf.mxu0
  %7940 = vmatprep.mubr.bf16.mxu0 0
  %7941 = vmatmul.mubr.bf16.gmra.mxu0 %v5928
  %v7942 = vpop.f32.mrf.mxu0
  %v7943 = vadd.f32 0.0, %v7942
  %v7944 = vpop.f32.mrf.mxu0
  %v7945 = vpop.f32.mrf.mxu0
  %v7946 = vadd.f32 0.0, %v7945
  %v7947 = vpop.f32.mrf.mxu0
  %7948 = vmatprep.mubr.bf16.mxu0 0
  %7949 = vmatmul.mubr.bf16.gmra.mxu0 %v5929
  %v7950 = vpop.f32.mrf.mxu0
  %v7951 = vadd.f32 0.0, %v7950
  %v7952 = vpop.f32.mrf.mxu0
  %v7953 = vpop.f32.mrf.mxu0
  %v7954 = vadd.f32 0.0, %v7953
  %v7955 = vpop.f32.mrf.mxu0
  %7956 = vmatprep.mubr.bf16.mxu0 0
  %7957 = vmatmul.mubr.bf16.gmra.mxu0 %v5930
  %v7958 = vpop.f32.mrf.mxu0
  %v7959 = vadd.f32 0.0, %v7958
  %v7960 = vpop.f32.mrf.mxu0
  %v7961 = vpop.f32.mrf.mxu0
  %v7962 = vadd.f32 0.0, %v7961
  %v7963 = vpop.f32.mrf.mxu0
  %7964 = vmatprep.mubr.bf16.mxu0 0
  %7965 = vmatmul.mubr.bf16.gmra.mxu0 %v5931
  %v7966 = vpop.f32.mrf.mxu0
  %v7967 = vadd.f32 0.0, %v7966
  %v7968 = vpop.f32.mrf.mxu0
  %v7969 = vpop.f32.mrf.mxu0
  %v7970 = vadd.f32 0.0, %v7969
  %v7971 = vpop.f32.mrf.mxu0
  %7972 = vmatprep.mubr.bf16.mxu0 0
  %7973 = vmatmul.mubr.bf16.gmra.mxu0 %v5932
  %v7974 = vpop.f32.mrf.mxu0
  %v7975 = vadd.f32 0.0, %v7974
  %v7976 = vpop.f32.mrf.mxu0
  %v7977 = vpop.f32.mrf.mxu0
  %v7978 = vadd.f32 0.0, %v7977
  %v7979 = vpop.f32.mrf.mxu0
  %7980 = vmatprep.mubr.bf16.mxu0 0
  %7981 = vmatmul.mubr.bf16.gmra.mxu0 %v5933
  %v7982 = vpop.f32.mrf.mxu0
  %v7983 = vadd.f32 0.0, %v7982
  %v7984 = vpop.f32.mrf.mxu0
  %v7985 = vpop.f32.mrf.mxu0
  %v7986 = vadd.f32 0.0, %v7985
  %v7987 = vpop.f32.mrf.mxu0
  %7988 = vmatprep.mubr.bf16.mxu0 0
  %7989 = vmatmul.mubr.bf16.gmra.mxu0 %v5934
  %v7990 = vpop.f32.mrf.mxu0
  %v7991 = vadd.f32 0.0, %v7990
  %v7992 = vpop.f32.mrf.mxu0
  %v7993 = vpop.f32.mrf.mxu0
  %v7994 = vadd.f32 0.0, %v7993
  %v7995 = vpop.f32.mrf.mxu0
  %7996 = vmatprep.mubr.bf16.mxu0 0
  %7997 = vmatmul.mubr.bf16.gmra.mxu0 %v5935
  %v7998 = vpop.f32.mrf.mxu0
  %v7999 = vadd.f32 0.0, %v7998
  %v8000 = vpop.f32.mrf.mxu0
  %v8001 = vpop.f32.mrf.mxu0
  %v8002 = vadd.f32 0.0, %v8001
  %v8003 = vpop.f32.mrf.mxu0
  %8004 = vmatprep.mubr.bf16.mxu0 0
  %8005 = vmatmul.mubr.bf16.gmra.mxu0 %v5936
  %v8006 = vpop.f32.mrf.mxu0
  %v8007 = vadd.f32 0.0, %v8006
  %v8008 = vpop.f32.mrf.mxu0
  %v8009 = vpop.f32.mrf.mxu0
  %v8010 = vadd.f32 0.0, %v8009
  %v8011 = vpop.f32.mrf.mxu0
  %8012 = vmatprep.mubr.bf16.mxu0 0
  %8013 = vmatmul.mubr.bf16.gmra.mxu0 %v5937
  %v8014 = vpop.f32.mrf.mxu0
  %v8015 = vadd.f32 0.0, %v8014
  %v8016 = vpop.f32.mrf.mxu0
  %v8017 = vpop.f32.mrf.mxu0
  %v8018 = vadd.f32 0.0, %v8017
  %v8019 = vpop.f32.mrf.mxu0
  %8020 = vmatprep.mubr.bf16.mxu0 0
  %8021 = vmatmul.mubr.bf16.gmra.mxu0 %v5938
  %v8022 = vpop.f32.mrf.mxu0
  %v8023 = vadd.f32 0.0, %v8022
  %v8024 = vpop.f32.mrf.mxu0
  %v8025 = vpop.f32.mrf.mxu0
  %v8026 = vadd.f32 0.0, %v8025
  %v8027 = vpop.f32.mrf.mxu0
  %8028 = vmatprep.mubr.bf16.mxu0 0
  %8029 = vmatmul.mubr.bf16.gmra.mxu0 %v5939
  %v8030 = vpop.f32.mrf.mxu0
  %v8031 = vadd.f32 0.0, %v8030
  %v8032 = vpop.f32.mrf.mxu0
  %v8033 = vpop.f32.mrf.mxu0
  %v8034 = vadd.f32 0.0, %v8033
  %v8035 = vpop.f32.mrf.mxu0
  %8036 = vdwg.mxu0
  %v8037 = vmul.f32 %v7911, %v7836
  %v8038 = vmul.f32 %v7914, %v7837
  %v8039 = vmul.f32 %v7919, %v7838
  %v8040 = vmul.f32 %v7922, %v7839
  %v8041 = vmul.f32 %v7927, %v7840
  %v8042 = vmul.f32 %v7930, %v7841
  %v8043 = vmul.f32 %v7935, %v7842
  %v8044 = vmul.f32 %v7938, %v7843
  %v8045 = vmul.f32 %v7943, %v7844
  %v8046 = vmul.f32 %v7946, %v7845
  %v8047 = vmul.f32 %v7951, %v7846
  %v8048 = vmul.f32 %v7954, %v7847
  %v8049 = vmul.f32 %v7959, %v7848
  %v8050 = vmul.f32 %v7962, %v7849
  %v8051 = vmul.f32 %v7967, %v7850
  %v8052 = vmul.f32 %v7970, %v7851
  %v8053 = vmul.f32 %v7975, %v7852
  %v8054 = vmul.f32 %v7978, %v7853
  %v8055 = vmul.f32 %v7983, %v7854
  %v8056 = vmul.f32 %v7986, %v7855
  %v8057 = vmul.f32 %v7991, %v7856
  %v8058 = vmul.f32 %v7994, %v7857
  %v8059 = vmul.f32 %v7999, %v7858
  %v8060 = vmul.f32 %v8002, %v7859
  %v8061 = vmul.f32 %v8007, %v7860
  %v8062 = vmul.f32 %v8010, %v7861
  %v8063 = vmul.f32 %v8015, %v7862
  %v8064 = vmul.f32 %v8018, %v7863
  %v8065 = vmul.f32 %v8023, %v7864
  %v8066 = vmul.f32 %v8026, %v7865
  %v8067 = vmul.f32 %v8031, %v7866
  %v8068 = vmul.f32 %v8034, %v7867
  %v8069 = vpack.c.bf16 %v8038, %v8037
  %v8070 = vpack.c.bf16 %v8040, %v8039
  %v8071 = vpack.c.bf16 %v8042, %v8041
  %v8072 = vpack.c.bf16 %v8044, %v8043
  %v8073 = vpack.c.bf16 %v8046, %v8045
  %v8074 = vpack.c.bf16 %v8048, %v8047
  %v8075 = vpack.c.bf16 %v8050, %v8049
  %v8076 = vpack.c.bf16 %v8052, %v8051
  %v8077 = vpack.c.bf16 %v8054, %v8053
  %v8078 = vpack.c.bf16 %v8056, %v8055
  %v8079 = vpack.c.bf16 %v8058, %v8057
  %v8080 = vpack.c.bf16 %v8060, %v8059
  %v8081 = vpack.c.bf16 %v8062, %v8061
  %v8082 = vpack.c.bf16 %v8064, %v8063
  %v8083 = vpack.c.bf16 %v8066, %v8065
  %v8084 = vpack.c.bf16 %v8068, %v8067
  %8085 = vmatprep.subr.bf16.mxu0 0
  %8086 = vmatpush1.bf16.msra.mxu0 %v8076
  %8087 = vmatprep.subr.bf16.mxu0 0
  %8088 = vmatpush1.bf16.msra.mxu0 %v8075
  %8089 = vmatprep.subr.bf16.mxu0 0
  %8090 = vmatpush1.bf16.msra.mxu0 %v8074
  %8091 = vmatprep.subr.bf16.mxu0 0
  %8092 = vmatpush1.bf16.msra.mxu0 %v8073
  %8093 = vmatprep.subr.bf16.mxu0 0
  %8094 = vmatpush1.bf16.msra.mxu0 %v8072
  %8095 = vmatprep.subr.bf16.mxu0 0
  %8096 = vmatpush1.bf16.msra.mxu0 %v8071
  %8097 = vmatprep.subr.bf16.mxu0 0
  %8098 = vmatpush1.bf16.msra.mxu0 %v8070
  %8099 = vmatprep.subr.bf16.mxu0 0
  %8100 = vmatpush1.bf16.msra.mxu0 %v8069
  %8101 = vmatprep.subr.bf16.mxu0 0
  %8102 = vmatpush2.bf16.msra.mxu0 %v8084
  %8103 = vmatprep.subr.bf16.mxu0 0
  %8104 = vmatpush2.bf16.msra.mxu0 %v8083
  %8105 = vmatprep.subr.bf16.mxu0 0
  %8106 = vmatpush2.bf16.msra.mxu0 %v8082
  %8107 = vmatprep.subr.bf16.mxu0 0
  %8108 = vmatpush2.bf16.msra.mxu0 %v8081
  %8109 = vmatprep.subr.bf16.mxu0 0
  %8110 = vmatpush2.bf16.msra.mxu0 %v8080
  %8111 = vmatprep.subr.bf16.mxu0 0
  %8112 = vmatpush2.bf16.msra.mxu0 %v8079
  %8113 = vmatprep.subr.bf16.mxu0 0
  %8114 = vmatpush2.bf16.msra.mxu0 %v8078
  %8115 = vmatprep.subr.bf16.mxu0 0
  %8116 = vmatpush2.bf16.msra.mxu0 %v8077
  %8117 = vmatprep.mubr.bf16.mxu0 %v6206
  %8118 = vmatmul.mubr.bf16.gmra.mxu0 %v6205
  %v8119 = vpop.f32.mrf.mxu0
  %v8120 = vadd.f32 0.0, %v8119
  %v8121 = vpop.f32.mrf.mxu0
  %v8122 = vpop.f32.mrf.mxu0
  %v8123 = vadd.f32 0.0, %v8122
  %v8124 = vpop.f32.mrf.mxu0
  %8125 = vmatprep.mubr.bf16.mxu0 %v6208
  %8126 = vmatmul.mubr.bf16.gmra.mxu0 %v6207
  %v8127 = vpop.f32.mrf.mxu0
  %v8128 = vadd.f32 0.0, %v8127
  %v8129 = vpop.f32.mrf.mxu0
  %v8130 = vpop.f32.mrf.mxu0
  %v8131 = vadd.f32 0.0, %v8130
  %v8132 = vpop.f32.mrf.mxu0
  %8133 = vmatprep.mubr.bf16.mxu0 %v6210
  %8134 = vmatmul.mubr.bf16.gmra.mxu0 %v6209
  %v8135 = vpop.f32.mrf.mxu0
  %v8136 = vadd.f32 0.0, %v8135
  %v8137 = vpop.f32.mrf.mxu0
  %v8138 = vpop.f32.mrf.mxu0
  %v8139 = vadd.f32 0.0, %v8138
  %v8140 = vpop.f32.mrf.mxu0
  %8141 = vmatprep.mubr.bf16.mxu0 %v6212
  %8142 = vmatmul.mubr.bf16.gmra.mxu0 %v6211
  %v8143 = vpop.f32.mrf.mxu0
  %v8144 = vadd.f32 0.0, %v8143
  %v8145 = vpop.f32.mrf.mxu0
  %v8146 = vpop.f32.mrf.mxu0
  %v8147 = vadd.f32 0.0, %v8146
  %v8148 = vpop.f32.mrf.mxu0
  %8149 = vmatprep.mubr.bf16.mxu0 %v6214
  %8150 = vmatmul.mubr.bf16.gmra.mxu0 %v6213
  %v8151 = vpop.f32.mrf.mxu0
  %v8152 = vadd.f32 0.0, %v8151
  %v8153 = vpop.f32.mrf.mxu0
  %v8154 = vpop.f32.mrf.mxu0
  %v8155 = vadd.f32 0.0, %v8154
  %v8156 = vpop.f32.mrf.mxu0
  %8157 = vmatprep.mubr.bf16.mxu0 %v6216
  %8158 = vmatmul.mubr.bf16.gmra.mxu0 %v6215
  %v8159 = vpop.f32.mrf.mxu0
  %v8160 = vadd.f32 0.0, %v8159
  %v8161 = vpop.f32.mrf.mxu0
  %v8162 = vpop.f32.mrf.mxu0
  %v8163 = vadd.f32 0.0, %v8162
  %v8164 = vpop.f32.mrf.mxu0
  %8165 = vmatprep.mubr.bf16.mxu0 %v6218
  %8166 = vmatmul.mubr.bf16.gmra.mxu0 %v6217
  %v8167 = vpop.f32.mrf.mxu0
  %v8168 = vadd.f32 0.0, %v8167
  %v8169 = vpop.f32.mrf.mxu0
  %v8170 = vpop.f32.mrf.mxu0
  %v8171 = vadd.f32 0.0, %v8170
  %v8172 = vpop.f32.mrf.mxu0
  %8173 = vmatprep.mubr.bf16.mxu0 %v6220
  %8174 = vmatmul.mubr.bf16.gmra.mxu0 %v6219
  %v8175 = vpop.f32.mrf.mxu0
  %v8176 = vadd.f32 0.0, %v8175
  %v8177 = vpop.f32.mrf.mxu0
  %v8178 = vpop.f32.mrf.mxu0
  %v8179 = vadd.f32 0.0, %v8178
  %v8180 = vpop.f32.mrf.mxu0
  %8181 = vdwg.mxu0
  %s8182 = scalar_lea.vmem %s18, 64
  %v8183 = vld [vmem:[%s8182] sm:$0xf]
  %v8184 = vld [vmem:[%s8182 + $0x4] sm:$0xf]
  %v8185 = vld [vmem:[%s8182 + $0x8] sm:$0xf]
  %v8186 = vld [vmem:[%s8182 + $0xc] sm:$0xf]
  %v8187 = vld [vmem:[%s8182 + $0x10] sm:$0xf]
  %v8188 = vld [vmem:[%s8182 + $0x14] sm:$0xf]
  %v8189 = vld [vmem:[%s8182 + $0x18] sm:$0xf]
  %v8190 = vld [vmem:[%s8182 + $0x1c] sm:$0xf]
  %v8191 = vld [vmem:[%s8182 + $0x20] sm:$0xf]
  %v8192 = vld [vmem:[%s8182 + $0x24] sm:$0xf]
  %v8193 = vld [vmem:[%s8182 + $0x28] sm:$0xf]
  %v8194 = vld [vmem:[%s8182 + $0x2c] sm:$0xf]
  %v8195 = vld [vmem:[%s8182 + $0x30] sm:$0xf]
  %v8196 = vld [vmem:[%s8182 + $0x34] sm:$0xf]
  %v8197 = vld [vmem:[%s8182 + $0x38] sm:$0xf]
  %v8198 = vld [vmem:[%s8182 + $0x3c] sm:$0xf]
  %v8199 = vpack.c.bf16 %v8123, %v8120
  %v8200 = vpack.c.bf16 %v8131, %v8128
  %v8201 = vpack.c.bf16 %v8139, %v8136
  %v8202 = vpack.c.bf16 %v8147, %v8144
  %v8203 = vpack.c.bf16 %v8155, %v8152
  %v8204 = vpack.c.bf16 %v8163, %v8160
  %v8205 = vpack.c.bf16 %v8171, %v8168
  %v8206 = vpack.c.bf16 %v8179, %v8176
  %s8207 = scalar_lea.vmem %s19, 1
  %v8208 = vld [vmem:[%s8207] sm:$0x1]
  %v8210 = vlaneseq
  %v8211 = vshrl.u32 %v8210, 7
  %v8212 = vsub.s32 0, %v8211
  %v8213 = vrot.slane %v8208, %v8212
  %v8231 = vunpack.c.l.b16 %v8183
  %v8232 = vunpack.c.l.b16 %v8184
  %v8233 = vunpack.c.l.b16 %v8185
  %v8234 = vunpack.c.l.b16 %v8186
  %v8235 = vunpack.c.l.b16 %v8187
  %v8236 = vunpack.c.l.b16 %v8188
  %v8237 = vunpack.c.l.b16 %v8189
  %v8238 = vunpack.c.l.b16 %v8190
  %v8239 = vunpack.c.l.b16 %v8191
  %v8240 = vunpack.c.l.b16 %v8192
  %v8241 = vunpack.c.l.b16 %v8193
  %v8242 = vunpack.c.l.b16 %v8194
  %v8243 = vunpack.c.l.b16 %v8195
  %v8244 = vunpack.c.l.b16 %v8196
  %v8245 = vunpack.c.l.b16 %v8197
  %v8246 = vunpack.c.l.b16 %v8198
  %v8247 = vpack.c.b16 %v8232, %v8231
  %v8248 = vpack.c.b16 %v8234, %v8233
  %v8249 = vpack.c.b16 %v8236, %v8235
  %v8250 = vpack.c.b16 %v8238, %v8237
  %v8251 = vpack.c.b16 %v8240, %v8239
  %v8252 = vpack.c.b16 %v8242, %v8241
  %v8253 = vpack.c.b16 %v8244, %v8243
  %v8254 = vpack.c.b16 %v8246, %v8245
  %8263 = vmatprep.subr.bf16.mxu0 0
  %8264 = vmatpush1.bf16.msra.mxu0 %v8254
  %8265 = vmatprep.subr.bf16.mxu0 0
  %8266 = vmatpush1.bf16.msra.mxu0 %v8253
  %8267 = vmatprep.subr.bf16.mxu0 0
  %8268 = vmatpush1.bf16.msra.mxu0 %v8252
  %8269 = vmatprep.subr.bf16.mxu0 0
  %8270 = vmatpush1.bf16.msra.mxu0 %v8251
  %8271 = vmatprep.subr.bf16.mxu0 0
  %8272 = vmatpush1.bf16.msra.mxu0 %v8250
  %8273 = vmatprep.subr.bf16.mxu0 0
  %8274 = vmatpush1.bf16.msra.mxu0 %v8249
  %8275 = vmatprep.subr.bf16.mxu0 0
  %8276 = vmatpush1.bf16.msra.mxu0 %v8248
  %8277 = vmatprep.subr.bf16.mxu0 0
  %8278 = vmatpush1.bf16.msra.mxu0 %v8247
  %8279 = vmatprep.subr.bf16.mxu0 0
  %8280 = vmatpush2.bf16.msra.mxu0 0
  %8281 = vmatprep.subr.bf16.mxu0 0
  %8282 = vmatpush2.bf16.msra.mxu0 0
  %8283 = vmatprep.subr.bf16.mxu0 0
  %8284 = vmatpush2.bf16.msra.mxu0 0
  %8285 = vmatprep.subr.bf16.mxu0 0
  %8286 = vmatpush2.bf16.msra.mxu0 0
  %8287 = vmatprep.subr.bf16.mxu0 0
  %8288 = vmatpush2.bf16.msra.mxu0 0
  %8289 = vmatprep.subr.bf16.mxu0 0
  %8290 = vmatpush2.bf16.msra.mxu0 0
  %8291 = vmatprep.subr.bf16.mxu0 0
  %8292 = vmatpush2.bf16.msra.mxu0 0
  %8293 = vmatprep.subr.bf16.mxu0 0
  %8294 = vmatpush2.bf16.msra.mxu0 0
  %8295 = vmatprep.mubr.bf16.mxu0 0
  %8296 = vmatmul.mubr.bf16.gmra.mxu0 %v8199
  %v8297 = vpop.f32.mrf.mxu0
  %v8298 = vadd.f32 %v8213, %v8297
  %v8299 = vpop.f32.mrf.mxu0
  %v8300 = vpop.f32.mrf.mxu0
  %v8301 = vadd.f32 %v8213, %v8300
  %v8302 = vpop.f32.mrf.mxu0
  %8303 = vmatprep.mubr.bf16.mxu0 0
  %8304 = vmatmul.mubr.bf16.gmra.mxu0 %v8200
  %v8305 = vpop.f32.mrf.mxu0
  %v8306 = vadd.f32 %v8213, %v8305
  %v8307 = vpop.f32.mrf.mxu0
  %v8308 = vpop.f32.mrf.mxu0
  %v8309 = vadd.f32 %v8213, %v8308
  %v8310 = vpop.f32.mrf.mxu0
  %8311 = vmatprep.mubr.bf16.mxu0 0
  %8312 = vmatmul.mubr.bf16.gmra.mxu0 %v8201
  %v8313 = vpop.f32.mrf.mxu0
  %v8314 = vadd.f32 %v8213, %v8313
  %v8315 = vpop.f32.mrf.mxu0
  %v8316 = vpop.f32.mrf.mxu0
  %v8317 = vadd.f32 %v8213, %v8316
  %v8318 = vpop.f32.mrf.mxu0
  %8319 = vmatprep.mubr.bf16.mxu0 0
  %8320 = vmatmul.mubr.bf16.gmra.mxu0 %v8202
  %v8321 = vpop.f32.mrf.mxu0
  %v8322 = vadd.f32 %v8213, %v8321
  %v8323 = vpop.f32.mrf.mxu0
  %v8324 = vpop.f32.mrf.mxu0
  %v8325 = vadd.f32 %v8213, %v8324
  %v8326 = vpop.f32.mrf.mxu0
  %8327 = vmatprep.mubr.bf16.mxu0 0
  %8328 = vmatmul.mubr.bf16.gmra.mxu0 %v8203
  %v8329 = vpop.f32.mrf.mxu0
  %v8330 = vadd.f32 %v8213, %v8329
  %v8331 = vpop.f32.mrf.mxu0
  %v8332 = vpop.f32.mrf.mxu0
  %v8333 = vadd.f32 %v8213, %v8332
  %v8334 = vpop.f32.mrf.mxu0
  %8335 = vmatprep.mubr.bf16.mxu0 0
  %8336 = vmatmul.mubr.bf16.gmra.mxu0 %v8204
  %v8337 = vpop.f32.mrf.mxu0
  %v8338 = vadd.f32 %v8213, %v8337
  %v8339 = vpop.f32.mrf.mxu0
  %v8340 = vpop.f32.mrf.mxu0
  %v8341 = vadd.f32 %v8213, %v8340
  %v8342 = vpop.f32.mrf.mxu0
  %8343 = vmatprep.mubr.bf16.mxu0 0
  %8344 = vmatmul.mubr.bf16.gmra.mxu0 %v8205
  %v8345 = vpop.f32.mrf.mxu0
  %v8346 = vadd.f32 %v8213, %v8345
  %v8347 = vpop.f32.mrf.mxu0
  %v8348 = vpop.f32.mrf.mxu0
  %v8349 = vadd.f32 %v8213, %v8348
  %v8350 = vpop.f32.mrf.mxu0
  %8351 = vmatprep.mubr.bf16.mxu0 0
  %8352 = vmatmul.mubr.bf16.gmra.mxu0 %v8206
  %v8353 = vpop.f32.mrf.mxu0
  %v8354 = vadd.f32 %v8213, %v8353
  %v8355 = vpop.f32.mrf.mxu0
  %v8356 = vpop.f32.mrf.mxu0
  %v8357 = vadd.f32 %v8213, %v8356
  %v8358 = vpop.f32.mrf.mxu0
  %8359 = vdwg.mxu0
  %v8360 = vmax.f32 %v8298, 0.0
  %v8361 = vmax.f32 %v8301, 0.0
  %v8362 = vmax.f32 %v8306, 0.0
  %v8363 = vmax.f32 %v8309, 0.0
  %v8364 = vmax.f32 %v8314, 0.0
  %v8365 = vmax.f32 %v8317, 0.0
  %v8366 = vmax.f32 %v8322, 0.0
  %v8367 = vmax.f32 %v8325, 0.0
  %v8368 = vmax.f32 %v8330, 0.0
  %v8369 = vmax.f32 %v8333, 0.0
  %v8370 = vmax.f32 %v8338, 0.0
  %v8371 = vmax.f32 %v8341, 0.0
  %v8372 = vmax.f32 %v8346, 0.0
  %v8373 = vmax.f32 %v8349, 0.0
  %v8374 = vmax.f32 %v8354, 0.0
  %v8375 = vmax.f32 %v8357, 0.0
  %v8376 = vand.u32 2147483647, %v8298
  %v8377 = vand.u32 2147483647, %v8301
  %v8378 = vand.u32 2147483647, %v8306
  %v8379 = vand.u32 2147483647, %v8309
  %v8380 = vand.u32 2147483647, %v8314
  %v8381 = vand.u32 2147483647, %v8317
  %v8382 = vand.u32 2147483647, %v8322
  %v8383 = vand.u32 2147483647, %v8325
  %v8384 = vand.u32 2147483647, %v8330
  %v8385 = vand.u32 2147483647, %v8333
  %v8386 = vand.u32 2147483647, %v8338
  %v8387 = vand.u32 2147483647, %v8341
  %v8388 = vand.u32 2147483647, %v8346
  %v8389 = vand.u32 2147483647, %v8349
  %v8390 = vand.u32 2147483647, %v8354
  %v8391 = vand.u32 2147483647, %v8357
  %v8392 = vsub.f32 0.0, %v8376
  %v8393 = vsub.f32 0.0, %v8377
  %v8394 = vsub.f32 0.0, %v8378
  %v8395 = vsub.f32 0.0, %v8379
  %v8396 = vsub.f32 0.0, %v8380
  %v8397 = vsub.f32 0.0, %v8381
  %v8398 = vsub.f32 0.0, %v8382
  %v8399 = vsub.f32 0.0, %v8383
  %v8400 = vsub.f32 0.0, %v8384
  %v8401 = vsub.f32 0.0, %v8385
  %v8402 = vsub.f32 0.0, %v8386
  %v8403 = vsub.f32 0.0, %v8387
  %v8404 = vsub.f32 0.0, %v8388
  %v8405 = vsub.f32 0.0, %v8389
  %v8406 = vsub.f32 0.0, %v8390
  %v8407 = vsub.f32 0.0, %v8391
  %v8408 = vmul.f32 %v8392, 1.442695
  %v8409 = vpow.pop %v8408
  %v8410 = vmul.f32 %v8393, 1.442695
  %v8411 = vpow.pop %v8410
  %v8412 = vmul.f32 %v8394, 1.442695
  %v8413 = vpow.pop %v8412
  %v8414 = vmul.f32 %v8395, 1.442695
  %v8415 = vpow.pop %v8414
  %v8416 = vmul.f32 %v8396, 1.442695
  %v8417 = vpow.pop %v8416
  %v8418 = vmul.f32 %v8397, 1.442695
  %v8419 = vpow.pop %v8418
  %v8420 = vmul.f32 %v8398, 1.442695
  %v8421 = vpow.pop %v8420
  %v8422 = vmul.f32 %v8399, 1.442695
  %v8423 = vpow.pop %v8422
  %v8424 = vmul.f32 %v8400, 1.442695
  %v8425 = vpow.pop %v8424
  %v8426 = vmul.f32 %v8401, 1.442695
  %v8427 = vpow.pop %v8426
  %v8428 = vmul.f32 %v8402, 1.442695
  %v8429 = vpow.pop %v8428
  %v8430 = vmul.f32 %v8403, 1.442695
  %v8431 = vpow.pop %v8430
  %v8432 = vmul.f32 %v8404, 1.442695
  %v8433 = vpow.pop %v8432
  %v8434 = vmul.f32 %v8405, 1.442695
  %v8435 = vpow.pop %v8434
  %v8436 = vmul.f32 %v8406, 1.442695
  %v8437 = vpow.pop %v8436
  %v8438 = vmul.f32 %v8407, 1.442695
  %v8439 = vpow.pop %v8438
  %v8440 = vadd.f32 %v8409, 1.0
  %v8441 = vadd.f32 %v8411, 1.0
  %v8442 = vadd.f32 %v8413, 1.0
  %v8443 = vadd.f32 %v8415, 1.0
  %v8444 = vadd.f32 %v8417, 1.0
  %v8445 = vadd.f32 %v8419, 1.0
  %v8446 = vadd.f32 %v8421, 1.0
  %v8447 = vadd.f32 %v8423, 1.0
  %v8448 = vadd.f32 %v8425, 1.0
  %v8449 = vadd.f32 %v8427, 1.0
  %v8450 = vadd.f32 %v8429, 1.0
  %v8451 = vadd.f32 %v8431, 1.0
  %v8452 = vadd.f32 %v8433, 1.0
  %v8453 = vadd.f32 %v8435, 1.0
  %v8454 = vadd.f32 %v8437, 1.0
  %v8455 = vadd.f32 %v8439, 1.0
  %v8456 = vlog2.pop %v8440
  %v8457 = vmul.f32 %v8456, 0.6931472
  %v8458 = vlog2.pop %v8441
  %v8459 = vmul.f32 %v8458, 0.6931472
  %v8460 = vlog2.pop %v8442
  %v8461 = vmul.f32 %v8460, 0.6931472
  %v8462 = vlog2.pop %v8443
  %v8463 = vmul.f32 %v8462, 0.6931472
  %v8464 = vlog2.pop %v8444
  %v8465 = vmul.f32 %v8464, 0.6931472
  %v8466 = vlog2.pop %v8445
  %v8467 = vmul.f32 %v8466, 0.6931472
  %v8468 = vlog2.pop %v8446
  %v8469 = vmul.f32 %v8468, 0.6931472
  %v8470 = vlog2.pop %v8447
  %v8471 = vmul.f32 %v8470, 0.6931472
  %v8472 = vlog2.pop %v8448
  %v8473 = vmul.f32 %v8472, 0.6931472
  %v8474 = vlog2.pop %v8449
  %v8475 = vmul.f32 %v8474, 0.6931472
  %v8476 = vlog2.pop %v8450
  %v8477 = vmul.f32 %v8476, 0.6931472
  %v8478 = vlog2.pop %v8451
  %v8479 = vmul.f32 %v8478, 0.6931472
  %v8480 = vlog2.pop %v8452
  %v8481 = vmul.f32 %v8480, 0.6931472
  %v8482 = vlog2.pop %v8453
  %v8483 = vmul.f32 %v8482, 0.6931472
  %v8484 = vlog2.pop %v8454
  %v8485 = vmul.f32 %v8484, 0.6931472
  %v8486 = vlog2.pop %v8455
  %v8487 = vmul.f32 %v8486, 0.6931472
  %v8488 = vadd.f32 %v8360, %v8457
  %v8489 = vadd.f32 %v8361, %v8459
  %v8490 = vadd.f32 %v8362, %v8461
  %v8491 = vadd.f32 %v8363, %v8463
  %v8492 = vadd.f32 %v8364, %v8465
  %v8493 = vadd.f32 %v8365, %v8467
  %v8494 = vadd.f32 %v8366, %v8469
  %v8495 = vadd.f32 %v8367, %v8471
  %v8496 = vadd.f32 %v8368, %v8473
  %v8497 = vadd.f32 %v8369, %v8475
  %v8498 = vadd.f32 %v8370, %v8477
  %v8499 = vadd.f32 %v8371, %v8479
  %v8500 = vadd.f32 %v8372, %v8481
  %v8501 = vadd.f32 %v8373, %v8483
  %v8502 = vadd.f32 %v8374, %v8485
  %v8503 = vadd.f32 %v8375, %v8487
  %v8504 = vsub.f32 %v8488, 0.6931472
  %v8505 = vsub.f32 %v8489, 0.6931472
  %v8506 = vsub.f32 %v8490, 0.6931472
  %v8507 = vsub.f32 %v8491, 0.6931472
  %v8508 = vsub.f32 %v8492, 0.6931472
  %v8509 = vsub.f32 %v8493, 0.6931472
  %v8510 = vsub.f32 %v8494, 0.6931472
  %v8511 = vsub.f32 %v8495, 0.6931472
  %v8512 = vsub.f32 %v8496, 0.6931472
  %v8513 = vsub.f32 %v8497, 0.6931472
  %v8514 = vsub.f32 %v8498, 0.6931472
  %v8515 = vsub.f32 %v8499, 0.6931472
  %v8516 = vsub.f32 %v8500, 0.6931472
  %v8517 = vsub.f32 %v8501, 0.6931472
  %v8518 = vsub.f32 %v8502, 0.6931472
  %v8519 = vsub.f32 %v8503, 0.6931472
  %s8520 = scalar_lea.vmem %s20, 64
  %v8521 = vld [vmem:[%s8520] sm:$0xf]
  %v8522 = vld [vmem:[%s8520 + $0x4] sm:$0xf]
  %v8523 = vld [vmem:[%s8520 + $0x8] sm:$0xf]
  %v8524 = vld [vmem:[%s8520 + $0xc] sm:$0xf]
  %v8525 = vld [vmem:[%s8520 + $0x10] sm:$0xf]
  %v8526 = vld [vmem:[%s8520 + $0x14] sm:$0xf]
  %v8527 = vld [vmem:[%s8520 + $0x18] sm:$0xf]
  %v8528 = vld [vmem:[%s8520 + $0x1c] sm:$0xf]
  %v8529 = vld [vmem:[%s8520 + $0x20] sm:$0xf]
  %v8530 = vld [vmem:[%s8520 + $0x24] sm:$0xf]
  %v8531 = vld [vmem:[%s8520 + $0x28] sm:$0xf]
  %v8532 = vld [vmem:[%s8520 + $0x2c] sm:$0xf]
  %v8533 = vld [vmem:[%s8520 + $0x30] sm:$0xf]
  %v8534 = vld [vmem:[%s8520 + $0x34] sm:$0xf]
  %v8535 = vld [vmem:[%s8520 + $0x38] sm:$0xf]
  %v8536 = vld [vmem:[%s8520 + $0x3c] sm:$0xf]
  %v8537 = vpack.c.bf16 %v8505, %v8504
  %v8538 = vpack.c.bf16 %v8507, %v8506
  %v8539 = vpack.c.bf16 %v8509, %v8508
  %v8540 = vpack.c.bf16 %v8511, %v8510
  %v8541 = vpack.c.bf16 %v8513, %v8512
  %v8542 = vpack.c.bf16 %v8515, %v8514
  %v8543 = vpack.c.bf16 %v8517, %v8516
  %v8544 = vpack.c.bf16 %v8519, %v8518
  %s8545 = scalar_lea.vmem %s21, 1
  %v8546 = vld [vmem:[%s8545] sm:$0x1]
  %v8548 = vlaneseq
  %v8549 = vshrl.u32 %v8548, 7
  %v8550 = vsub.s32 0, %v8549
  %v8551 = vrot.slane %v8546, %v8550
  %v8569 = vunpack.c.l.b16 %v8521
  %v8570 = vunpack.c.l.b16 %v8522
  %v8571 = vunpack.c.l.b16 %v8523
  %v8572 = vunpack.c.l.b16 %v8524
  %v8573 = vunpack.c.l.b16 %v8525
  %v8574 = vunpack.c.l.b16 %v8526
  %v8575 = vunpack.c.l.b16 %v8527
  %v8576 = vunpack.c.l.b16 %v8528
  %v8577 = vunpack.c.l.b16 %v8529
  %v8578 = vunpack.c.l.b16 %v8530
  %v8579 = vunpack.c.l.b16 %v8531
  %v8580 = vunpack.c.l.b16 %v8532
  %v8581 = vunpack.c.l.b16 %v8533
  %v8582 = vunpack.c.l.b16 %v8534
  %v8583 = vunpack.c.l.b16 %v8535
  %v8584 = vunpack.c.l.b16 %v8536
  %v8585 = vpack.c.b16 %v8570, %v8569
  %v8586 = vpack.c.b16 %v8572, %v8571
  %v8587 = vpack.c.b16 %v8574, %v8573
  %v8588 = vpack.c.b16 %v8576, %v8575
  %v8589 = vpack.c.b16 %v8578, %v8577
  %v8590 = vpack.c.b16 %v8580, %v8579
  %v8591 = vpack.c.b16 %v8582, %v8581
  %v8592 = vpack.c.b16 %v8584, %v8583
  %8601 = vmatprep.subr.bf16.mxu0 0
  %8602 = vmatpush1.bf16.msra.mxu0 %v8592
  %8603 = vmatprep.subr.bf16.mxu0 0
  %8604 = vmatpush1.bf16.msra.mxu0 %v8591
  %8605 = vmatprep.subr.bf16.mxu0 0
  %8606 = vmatpush1.bf16.msra.mxu0 %v8590
  %8607 = vmatprep.subr.bf16.mxu0 0
  %8608 = vmatpush1.bf16.msra.mxu0 %v8589
  %8609 = vmatprep.subr.bf16.mxu0 0
  %8610 = vmatpush1.bf16.msra.mxu0 %v8588
  %8611 = vmatprep.subr.bf16.mxu0 0
  %8612 = vmatpush1.bf16.msra.mxu0 %v8587
  %8613 = vmatprep.subr.bf16.mxu0 0
  %8614 = vmatpush1.bf16.msra.mxu0 %v8586
  %8615 = vmatprep.subr.bf16.mxu0 0
  %8616 = vmatpush1.bf16.msra.mxu0 %v8585
  %8617 = vmatprep.subr.bf16.mxu0 0
  %8618 = vmatpush2.bf16.msra.mxu0 0
  %8619 = vmatprep.subr.bf16.mxu0 0
  %8620 = vmatpush2.bf16.msra.mxu0 0
  %8621 = vmatprep.subr.bf16.mxu0 0
  %8622 = vmatpush2.bf16.msra.mxu0 0
  %8623 = vmatprep.subr.bf16.mxu0 0
  %8624 = vmatpush2.bf16.msra.mxu0 0
  %8625 = vmatprep.subr.bf16.mxu0 0
  %8626 = vmatpush2.bf16.msra.mxu0 0
  %8627 = vmatprep.subr.bf16.mxu0 0
  %8628 = vmatpush2.bf16.msra.mxu0 0
  %8629 = vmatprep.subr.bf16.mxu0 0
  %8630 = vmatpush2.bf16.msra.mxu0 0
  %8631 = vmatprep.subr.bf16.mxu0 0
  %8632 = vmatpush2.bf16.msra.mxu0 0
  %8633 = vmatprep.mubr.bf16.mxu0 0
  %8634 = vmatmul.mubr.bf16.gmra.mxu0 %v8537
  %v8635 = vpop.f32.mrf.mxu0
  %v8636 = vadd.f32 %v8551, %v8635
  %v8637 = vpop.f32.mrf.mxu0
  %v8638 = vpop.f32.mrf.mxu0
  %v8639 = vadd.f32 %v8551, %v8638
  %v8640 = vpop.f32.mrf.mxu0
  %8641 = vmatprep.mubr.bf16.mxu0 0
  %8642 = vmatmul.mubr.bf16.gmra.mxu0 %v8538
  %v8643 = vpop.f32.mrf.mxu0
  %v8644 = vadd.f32 %v8551, %v8643
  %v8645 = vpop.f32.mrf.mxu0
  %v8646 = vpop.f32.mrf.mxu0
  %v8647 = vadd.f32 %v8551, %v8646
  %v8648 = vpop.f32.mrf.mxu0
  %8649 = vmatprep.mubr.bf16.mxu0 0
  %8650 = vmatmul.mubr.bf16.gmra.mxu0 %v8539
  %v8651 = vpop.f32.mrf.mxu0
  %v8652 = vadd.f32 %v8551, %v8651
  %v8653 = vpop.f32.mrf.mxu0
  %v8654 = vpop.f32.mrf.mxu0
  %v8655 = vadd.f32 %v8551, %v8654
  %v8656 = vpop.f32.mrf.mxu0
  %8657 = vmatprep.mubr.bf16.mxu0 0
  %8658 = vmatmul.mubr.bf16.gmra.mxu0 %v8540
  %v8659 = vpop.f32.mrf.mxu0
  %v8660 = vadd.f32 %v8551, %v8659
  %v8661 = vpop.f32.mrf.mxu0
  %v8662 = vpop.f32.mrf.mxu0
  %v8663 = vadd.f32 %v8551, %v8662
  %v8664 = vpop.f32.mrf.mxu0
  %8665 = vmatprep.mubr.bf16.mxu0 0
  %8666 = vmatmul.mubr.bf16.gmra.mxu0 %v8541
  %v8667 = vpop.f32.mrf.mxu0
  %v8668 = vadd.f32 %v8551, %v8667
  %v8669 = vpop.f32.mrf.mxu0
  %v8670 = vpop.f32.mrf.mxu0
  %v8671 = vadd.f32 %v8551, %v8670
  %v8672 = vpop.f32.mrf.mxu0
  %8673 = vmatprep.mubr.bf16.mxu0 0
  %8674 = vmatmul.mubr.bf16.gmra.mxu0 %v8542
  %v8675 = vpop.f32.mrf.mxu0
  %v8676 = vadd.f32 %v8551, %v8675
  %v8677 = vpop.f32.mrf.mxu0
  %v8678 = vpop.f32.mrf.mxu0
  %v8679 = vadd.f32 %v8551, %v8678
  %v8680 = vpop.f32.mrf.mxu0
  %8681 = vmatprep.mubr.bf16.mxu0 0
  %8682 = vmatmul.mubr.bf16.gmra.mxu0 %v8543
  %v8683 = vpop.f32.mrf.mxu0
  %v8684 = vadd.f32 %v8551, %v8683
  %v8685 = vpop.f32.mrf.mxu0
  %v8686 = vpop.f32.mrf.mxu0
  %v8687 = vadd.f32 %v8551, %v8686
  %v8688 = vpop.f32.mrf.mxu0
  %8689 = vmatprep.mubr.bf16.mxu0 0
  %8690 = vmatmul.mubr.bf16.gmra.mxu0 %v8544
  %v8691 = vpop.f32.mrf.mxu0
  %v8692 = vadd.f32 %v8551, %v8691
  %v8693 = vpop.f32.mrf.mxu0
  %v8694 = vpop.f32.mrf.mxu0
  %v8695 = vadd.f32 %v8551, %v8694
  %v8696 = vpop.f32.mrf.mxu0
  %8697 = vdwg.mxu0
  %v8698 = vadd.f32 %v6846, %v8636
  %v8699 = vadd.f32 %v6847, %v8639
  %v8700 = vadd.f32 %v6848, %v8644
  %v8701 = vadd.f32 %v6849, %v8647
  %v8702 = vadd.f32 %v6850, %v8652
  %v8703 = vadd.f32 %v6851, %v8655
  %v8704 = vadd.f32 %v6852, %v8660
  %v8705 = vadd.f32 %v6853, %v8663
  %v8706 = vadd.f32 %v6854, %v8668
  %v8707 = vadd.f32 %v6855, %v8671
  %v8708 = vadd.f32 %v6856, %v8676
  %v8709 = vadd.f32 %v6857, %v8679
  %v8710 = vadd.f32 %v6858, %v8684
  %v8711 = vadd.f32 %v6859, %v8687
  %v8712 = vadd.f32 %v6860, %v8692
  %v8713 = vadd.f32 %v6861, %v8695
  %s8714 = scalar_lea.vmem %s13, 128
  %v8715 = vld [vmem:[%s8714] sm:$0xf]
  %v8716 = vld [vmem:[%s8714 + $0x4] sm:$0xf]
  %v8717 = vld [vmem:[%s8714 + $0x8] sm:$0xf]
  %v8718 = vld [vmem:[%s8714 + $0xc] sm:$0xf]
  %v8719 = vld [vmem:[%s8714 + $0x10] sm:$0xf]
  %v8720 = vld [vmem:[%s8714 + $0x14] sm:$0xf]
  %v8721 = vld [vmem:[%s8714 + $0x18] sm:$0xf]
  %v8722 = vld [vmem:[%s8714 + $0x1c] sm:$0xf]
  %v8723 = vld [vmem:[%s8714 + $0x20] sm:$0xf]
  %v8724 = vld [vmem:[%s8714 + $0x24] sm:$0xf]
  %v8725 = vld [vmem:[%s8714 + $0x28] sm:$0xf]
  %v8726 = vld [vmem:[%s8714 + $0x2c] sm:$0xf]
  %v8727 = vld [vmem:[%s8714 + $0x30] sm:$0xf]
  %v8728 = vld [vmem:[%s8714 + $0x34] sm:$0xf]
  %v8729 = vld [vmem:[%s8714 + $0x38] sm:$0xf]
  %v8730 = vld [vmem:[%s8714 + $0x3c] sm:$0xf]
  %v8731 = vpack.c.bf16 %v8699, %v8698
  %v8732 = vpack.c.bf16 %v8701, %v8700
  %v8733 = vpack.c.bf16 %v8703, %v8702
  %v8734 = vpack.c.bf16 %v8705, %v8704
  %v8735 = vpack.c.bf16 %v8707, %v8706
  %v8736 = vpack.c.bf16 %v8709, %v8708
  %v8737 = vpack.c.bf16 %v8711, %v8710
  %v8738 = vpack.c.bf16 %v8713, %v8712
  %v8755 = vunpack.c.l.b16 %v8715
  %v8756 = vunpack.c.l.b16 %v8716
  %v8757 = vunpack.c.l.b16 %v8717
  %v8758 = vunpack.c.l.b16 %v8718
  %v8759 = vunpack.c.l.b16 %v8719
  %v8760 = vunpack.c.l.b16 %v8720
  %v8761 = vunpack.c.l.b16 %v8721
  %v8762 = vunpack.c.l.b16 %v8722
  %v8763 = vunpack.c.l.b16 %v8723
  %v8764 = vunpack.c.l.b16 %v8724
  %v8765 = vunpack.c.l.b16 %v8725
  %v8766 = vunpack.c.l.b16 %v8726
  %v8767 = vunpack.c.l.b16 %v8727
  %v8768 = vunpack.c.l.b16 %v8728
  %v8769 = vunpack.c.l.b16 %v8729
  %v8770 = vunpack.c.l.b16 %v8730
  %v8771 = vpack.c.b16 %v8756, %v8755
  %v8772 = vpack.c.b16 %v8758, %v8757
  %v8773 = vpack.c.b16 %v8760, %v8759
  %v8774 = vpack.c.b16 %v8762, %v8761
  %v8775 = vpack.c.b16 %v8764, %v8763
  %v8776 = vpack.c.b16 %v8766, %v8765
  %v8777 = vpack.c.b16 %v8768, %v8767
  %v8778 = vpack.c.b16 %v8770, %v8769
  %8787 = vmatprep.subr.bf16.mxu0 0
  %8788 = vmatpush1.bf16.msra.mxu0 %v8778
  %8789 = vmatprep.subr.bf16.mxu0 0
  %8790 = vmatpush1.bf16.msra.mxu0 %v8777
  %8791 = vmatprep.subr.bf16.mxu0 0
  %8792 = vmatpush1.bf16.msra.mxu0 %v8776
  %8793 = vmatprep.subr.bf16.mxu0 0
  %8794 = vmatpush1.bf16.msra.mxu0 %v8775
  %8795 = vmatprep.subr.bf16.mxu0 0
  %8796 = vmatpush1.bf16.msra.mxu0 %v8774
  %8797 = vmatprep.subr.bf16.mxu0 0
  %8798 = vmatpush1.bf16.msra.mxu0 %v8773
  %8799 = vmatprep.subr.bf16.mxu0 0
  %8800 = vmatpush1.bf16.msra.mxu0 %v8772
  %8801 = vmatprep.subr.bf16.mxu0 0
  %8802 = vmatpush1.bf16.msra.mxu0 %v8771
  %8803 = vmatprep.subr.bf16.mxu0 0
  %8804 = vmatpush2.bf16.msra.mxu0 0
  %8805 = vmatprep.subr.bf16.mxu0 0
  %8806 = vmatpush2.bf16.msra.mxu0 0
  %8807 = vmatprep.subr.bf16.mxu0 0
  %8808 = vmatpush2.bf16.msra.mxu0 0
  %8809 = vmatprep.subr.bf16.mxu0 0
  %8810 = vmatpush2.bf16.msra.mxu0 0
  %8811 = vmatprep.subr.bf16.mxu0 0
  %8812 = vmatpush2.bf16.msra.mxu0 0
  %8813 = vmatprep.subr.bf16.mxu0 0
  %8814 = vmatpush2.bf16.msra.mxu0 0
  %8815 = vmatprep.subr.bf16.mxu0 0
  %8816 = vmatpush2.bf16.msra.mxu0 0
  %8817 = vmatprep.subr.bf16.mxu0 0
  %8818 = vmatpush2.bf16.msra.mxu0 0
  %8819 = vmatprep.mubr.bf16.mxu0 0
  %8820 = vmatmul.mubr.bf16.gmra.mxu0 %v8731
  %v8821 = vpop.f32.mrf.mxu0
  %v8822 = vadd.f32 0.0, %v8821
  %v8823 = vpop.f32.mrf.mxu0
  %v8824 = vpop.f32.mrf.mxu0
  %v8825 = vadd.f32 0.0, %v8824
  %v8826 = vpop.f32.mrf.mxu0
  %8827 = vmatprep.mubr.bf16.mxu0 0
  %8828 = vmatmul.mubr.bf16.gmra.mxu0 %v8732
  %v8829 = vpop.f32.mrf.mxu0
  %v8830 = vadd.f32 0.0, %v8829
  %v8831 = vpop.f32.mrf.mxu0
  %v8832 = vpop.f32.mrf.mxu0
  %v8833 = vadd.f32 0.0, %v8832
  %v8834 = vpop.f32.mrf.mxu0
  %8835 = vmatprep.mubr.bf16.mxu0 0
  %8836 = vmatmul.mubr.bf16.gmra.mxu0 %v8733
  %v8837 = vpop.f32.mrf.mxu0
  %v8838 = vadd.f32 0.0, %v8837
  %v8839 = vpop.f32.mrf.mxu0
  %v8840 = vpop.f32.mrf.mxu0
  %v8841 = vadd.f32 0.0, %v8840
  %v8842 = vpop.f32.mrf.mxu0
  %8843 = vmatprep.mubr.bf16.mxu0 0
  %8844 = vmatmul.mubr.bf16.gmra.mxu0 %v8734
  %v8845 = vpop.f32.mrf.mxu0
  %v8846 = vadd.f32 0.0, %v8845
  %v8847 = vpop.f32.mrf.mxu0
  %v8848 = vpop.f32.mrf.mxu0
  %v8849 = vadd.f32 0.0, %v8848
  %v8850 = vpop.f32.mrf.mxu0
  %8851 = vmatprep.mubr.bf16.mxu0 0
  %8852 = vmatmul.mubr.bf16.gmra.mxu0 %v8735
  %v8853 = vpop.f32.mrf.mxu0
  %v8854 = vadd.f32 0.0, %v8853
  %v8855 = vpop.f32.mrf.mxu0
  %v8856 = vpop.f32.mrf.mxu0
  %v8857 = vadd.f32 0.0, %v8856
  %v8858 = vpop.f32.mrf.mxu0
  %8859 = vmatprep.mubr.bf16.mxu0 0
  %8860 = vmatmul.mubr.bf16.gmra.mxu0 %v8736
  %v8861 = vpop.f32.mrf.mxu0
  %v8862 = vadd.f32 0.0, %v8861
  %v8863 = vpop.f32.mrf.mxu0
  %v8864 = vpop.f32.mrf.mxu0
  %v8865 = vadd.f32 0.0, %v8864
  %v8866 = vpop.f32.mrf.mxu0
  %8867 = vmatprep.mubr.bf16.mxu0 0
  %8868 = vmatmul.mubr.bf16.gmra.mxu0 %v8737
  %v8869 = vpop.f32.mrf.mxu0
  %v8870 = vadd.f32 0.0, %v8869
  %v8871 = vpop.f32.mrf.mxu0
  %v8872 = vpop.f32.mrf.mxu0
  %v8873 = vadd.f32 0.0, %v8872
  %v8874 = vpop.f32.mrf.mxu0
  %8875 = vmatprep.mubr.bf16.mxu0 0
  %8876 = vmatmul.mubr.bf16.gmra.mxu0 %v8738
  %v8877 = vpop.f32.mrf.mxu0
  %v8878 = vadd.f32 0.0, %v8877
  %v8879 = vpop.f32.mrf.mxu0
  %v8880 = vpop.f32.mrf.mxu0
  %v8881 = vadd.f32 0.0, %v8880
  %v8882 = vpop.f32.mrf.mxu0
  %8883 = vdwg.mxu0
  %s8884 = scalar_lea.vmem %s14, 128
  %v8885 = vld [vmem:[%s8884] sm:$0xf]
  %v8886 = vld [vmem:[%s8884 + $0x4] sm:$0xf]
  %v8887 = vld [vmem:[%s8884 + $0x8] sm:$0xf]
  %v8888 = vld [vmem:[%s8884 + $0xc] sm:$0xf]
  %v8889 = vld [vmem:[%s8884 + $0x10] sm:$0xf]
  %v8890 = vld [vmem:[%s8884 + $0x14] sm:$0xf]
  %v8891 = vld [vmem:[%s8884 + $0x18] sm:$0xf]
  %v8892 = vld [vmem:[%s8884 + $0x1c] sm:$0xf]
  %v8893 = vld [vmem:[%s8884 + $0x20] sm:$0xf]
  %v8894 = vld [vmem:[%s8884 + $0x24] sm:$0xf]
  %v8895 = vld [vmem:[%s8884 + $0x28] sm:$0xf]
  %v8896 = vld [vmem:[%s8884 + $0x2c] sm:$0xf]
  %v8897 = vld [vmem:[%s8884 + $0x30] sm:$0xf]
  %v8898 = vld [vmem:[%s8884 + $0x34] sm:$0xf]
  %v8899 = vld [vmem:[%s8884 + $0x38] sm:$0xf]
  %v8900 = vld [vmem:[%s8884 + $0x3c] sm:$0xf]
  %s8901 = scalar_lea.vmem %s15, 2
  %v8902 = vld [vmem:[%s8901] sm:$0x1]
  %v8904 = vlaneseq
  %v8905 = vshrl.u32 %v8904, 7
  %v8906 = vsub.s32 0, %v8905
  %v8907 = vrot.slane %v8902, %v8906
  %v8925 = vunpack.c.l.b16 %v8885
  %v8926 = vunpack.c.l.b16 %v8886
  %v8927 = vunpack.c.l.b16 %v8887
  %v8928 = vunpack.c.l.b16 %v8888
  %v8929 = vunpack.c.l.b16 %v8889
  %v8930 = vunpack.c.l.b16 %v8890
  %v8931 = vunpack.c.l.b16 %v8891
  %v8932 = vunpack.c.l.b16 %v8892
  %v8933 = vunpack.c.l.b16 %v8893
  %v8934 = vunpack.c.l.b16 %v8894
  %v8935 = vunpack.c.l.b16 %v8895
  %v8936 = vunpack.c.l.b16 %v8896
  %v8937 = vunpack.c.l.b16 %v8897
  %v8938 = vunpack.c.l.b16 %v8898
  %v8939 = vunpack.c.l.b16 %v8899
  %v8940 = vunpack.c.l.b16 %v8900
  %v8941 = vpack.c.b16 %v8926, %v8925
  %v8942 = vpack.c.b16 %v8928, %v8927
  %v8943 = vpack.c.b16 %v8930, %v8929
  %v8944 = vpack.c.b16 %v8932, %v8931
  %v8945 = vpack.c.b16 %v8934, %v8933
  %v8946 = vpack.c.b16 %v8936, %v8935
  %v8947 = vpack.c.b16 %v8938, %v8937
  %v8948 = vpack.c.b16 %v8940, %v8939
  %8957 = vmatprep.subr.bf16.mxu0 0
  %8958 = vmatpush1.bf16.msra.mxu0 %v8948
  %8959 = vmatprep.subr.bf16.mxu0 0
  %8960 = vmatpush1.bf16.msra.mxu0 %v8947
  %8961 = vmatprep.subr.bf16.mxu0 0
  %8962 = vmatpush1.bf16.msra.mxu0 %v8946
  %8963 = vmatprep.subr.bf16.mxu0 0
  %8964 = vmatpush1.bf16.msra.mxu0 %v8945
  %8965 = vmatprep.subr.bf16.mxu0 0
  %8966 = vmatpush1.bf16.msra.mxu0 %v8944
  %8967 = vmatprep.subr.bf16.mxu0 0
  %8968 = vmatpush1.bf16.msra.mxu0 %v8943
  %8969 = vmatprep.subr.bf16.mxu0 0
  %8970 = vmatpush1.bf16.msra.mxu0 %v8942
  %8971 = vmatprep.subr.bf16.mxu0 0
  %8972 = vmatpush1.bf16.msra.mxu0 %v8941
  %8973 = vmatprep.subr.bf16.mxu0 0
  %8974 = vmatpush2.bf16.msra.mxu0 0
  %8975 = vmatprep.subr.bf16.mxu0 0
  %8976 = vmatpush2.bf16.msra.mxu0 0
  %8977 = vmatprep.subr.bf16.mxu0 0
  %8978 = vmatpush2.bf16.msra.mxu0 0
  %8979 = vmatprep.subr.bf16.mxu0 0
  %8980 = vmatpush2.bf16.msra.mxu0 0
  %8981 = vmatprep.subr.bf16.mxu0 0
  %8982 = vmatpush2.bf16.msra.mxu0 0
  %8983 = vmatprep.subr.bf16.mxu0 0
  %8984 = vmatpush2.bf16.msra.mxu0 0
  %8985 = vmatprep.subr.bf16.mxu0 0
  %8986 = vmatpush2.bf16.msra.mxu0 0
  %8987 = vmatprep.subr.bf16.mxu0 0
  %8988 = vmatpush2.bf16.msra.mxu0 0
  %8989 = vmatprep.mubr.bf16.mxu0 0
  %8990 = vmatmul.mubr.bf16.gmra.mxu0 %v5028
  %v8991 = vpop.f32.mrf.mxu0
  %v8992 = vadd.f32 %v8907, %v8991
  %v8993 = vpop.f32.mrf.mxu0
  %v8994 = vpop.f32.mrf.mxu0
  %v8995 = vadd.f32 %v8907, %v8994
  %v8996 = vpop.f32.mrf.mxu0
  %8997 = vmatprep.mubr.bf16.mxu0 0
  %8998 = vmatmul.mubr.bf16.gmra.mxu0 %v5029
  %v8999 = vpop.f32.mrf.mxu0
  %v9000 = vadd.f32 %v8907, %v8999
  %v9001 = vpop.f32.mrf.mxu0
  %v9002 = vpop.f32.mrf.mxu0
  %v9003 = vadd.f32 %v8907, %v9002
  %v9004 = vpop.f32.mrf.mxu0
  %9005 = vmatprep.mubr.bf16.mxu0 0
  %9006 = vmatmul.mubr.bf16.gmra.mxu0 %v5030
  %v9007 = vpop.f32.mrf.mxu0
  %v9008 = vadd.f32 %v8907, %v9007
  %v9009 = vpop.f32.mrf.mxu0
  %v9010 = vpop.f32.mrf.mxu0
  %v9011 = vadd.f32 %v8907, %v9010
  %v9012 = vpop.f32.mrf.mxu0
  %9013 = vmatprep.mubr.bf16.mxu0 0
  %9014 = vmatmul.mubr.bf16.gmra.mxu0 %v5031
  %v9015 = vpop.f32.mrf.mxu0
  %v9016 = vadd.f32 %v8907, %v9015
  %v9017 = vpop.f32.mrf.mxu0
  %v9018 = vpop.f32.mrf.mxu0
  %v9019 = vadd.f32 %v8907, %v9018
  %v9020 = vpop.f32.mrf.mxu0
  %9021 = vmatprep.mubr.bf16.mxu0 0
  %9022 = vmatmul.mubr.bf16.gmra.mxu0 %v5032
  %v9023 = vpop.f32.mrf.mxu0
  %v9024 = vadd.f32 %v8907, %v9023
  %v9025 = vpop.f32.mrf.mxu0
  %v9026 = vpop.f32.mrf.mxu0
  %v9027 = vadd.f32 %v8907, %v9026
  %v9028 = vpop.f32.mrf.mxu0
  %9029 = vmatprep.mubr.bf16.mxu0 0
  %9030 = vmatmul.mubr.bf16.gmra.mxu0 %v5033
  %v9031 = vpop.f32.mrf.mxu0
  %v9032 = vadd.f32 %v8907, %v9031
  %v9033 = vpop.f32.mrf.mxu0
  %v9034 = vpop.f32.mrf.mxu0
  %v9035 = vadd.f32 %v8907, %v9034
  %v9036 = vpop.f32.mrf.mxu0
  %9037 = vmatprep.mubr.bf16.mxu0 0
  %9038 = vmatmul.mubr.bf16.gmra.mxu0 %v5034
  %v9039 = vpop.f32.mrf.mxu0
  %v9040 = vadd.f32 %v8907, %v9039
  %v9041 = vpop.f32.mrf.mxu0
  %v9042 = vpop.f32.mrf.mxu0
  %v9043 = vadd.f32 %v8907, %v9042
  %v9044 = vpop.f32.mrf.mxu0
  %9045 = vmatprep.mubr.bf16.mxu0 0
  %9046 = vmatmul.mubr.bf16.gmra.mxu0 %v5035
  %v9047 = vpop.f32.mrf.mxu0
  %v9048 = vadd.f32 %v8907, %v9047
  %v9049 = vpop.f32.mrf.mxu0
  %v9050 = vpop.f32.mrf.mxu0
  %v9051 = vadd.f32 %v8907, %v9050
  %v9052 = vpop.f32.mrf.mxu0
  %9053 = vmatprep.mubr.bf16.mxu0 0
  %9054 = vmatmul.mubr.bf16.gmra.mxu0 %v5036
  %v9055 = vpop.f32.mrf.mxu0
  %v9056 = vadd.f32 %v8907, %v9055
  %v9057 = vpop.f32.mrf.mxu0
  %v9058 = vpop.f32.mrf.mxu0
  %v9059 = vadd.f32 %v8907, %v9058
  %v9060 = vpop.f32.mrf.mxu0
  %9061 = vmatprep.mubr.bf16.mxu0 0
  %9062 = vmatmul.mubr.bf16.gmra.mxu0 %v5037
  %v9063 = vpop.f32.mrf.mxu0
  %v9064 = vadd.f32 %v8907, %v9063
  %v9065 = vpop.f32.mrf.mxu0
  %v9066 = vpop.f32.mrf.mxu0
  %v9067 = vadd.f32 %v8907, %v9066
  %v9068 = vpop.f32.mrf.mxu0
  %9069 = vmatprep.mubr.bf16.mxu0 0
  %9070 = vmatmul.mubr.bf16.gmra.mxu0 %v5038
  %v9071 = vpop.f32.mrf.mxu0
  %v9072 = vadd.f32 %v8907, %v9071
  %v9073 = vpop.f32.mrf.mxu0
  %v9074 = vpop.f32.mrf.mxu0
  %v9075 = vadd.f32 %v8907, %v9074
  %v9076 = vpop.f32.mrf.mxu0
  %9077 = vmatprep.mubr.bf16.mxu0 0
  %9078 = vmatmul.mubr.bf16.gmra.mxu0 %v5039
  %v9079 = vpop.f32.mrf.mxu0
  %v9080 = vadd.f32 %v8907, %v9079
  %v9081 = vpop.f32.mrf.mxu0
  %v9082 = vpop.f32.mrf.mxu0
  %v9083 = vadd.f32 %v8907, %v9082
  %v9084 = vpop.f32.mrf.mxu0
  %9085 = vmatprep.mubr.bf16.mxu0 0
  %9086 = vmatmul.mubr.bf16.gmra.mxu0 %v5040
  %v9087 = vpop.f32.mrf.mxu0
  %v9088 = vadd.f32 %v8907, %v9087
  %v9089 = vpop.f32.mrf.mxu0
  %v9090 = vpop.f32.mrf.mxu0
  %v9091 = vadd.f32 %v8907, %v9090
  %v9092 = vpop.f32.mrf.mxu0
  %9093 = vmatprep.mubr.bf16.mxu0 0
  %9094 = vmatmul.mubr.bf16.gmra.mxu0 %v5041
  %v9095 = vpop.f32.mrf.mxu0
  %v9096 = vadd.f32 %v8907, %v9095
  %v9097 = vpop.f32.mrf.mxu0
  %v9098 = vpop.f32.mrf.mxu0
  %v9099 = vadd.f32 %v8907, %v9098
  %v9100 = vpop.f32.mrf.mxu0
  %9101 = vmatprep.mubr.bf16.mxu0 0
  %9102 = vmatmul.mubr.bf16.gmra.mxu0 %v5042
  %v9103 = vpop.f32.mrf.mxu0
  %v9104 = vadd.f32 %v8907, %v9103
  %v9105 = vpop.f32.mrf.mxu0
  %v9106 = vpop.f32.mrf.mxu0
  %v9107 = vadd.f32 %v8907, %v9106
  %v9108 = vpop.f32.mrf.mxu0
  %9109 = vmatprep.mubr.bf16.mxu0 0
  %9110 = vmatmul.mubr.bf16.gmra.mxu0 %v5043
  %v9111 = vpop.f32.mrf.mxu0
  %v9112 = vadd.f32 %v8907, %v9111
  %v9113 = vpop.f32.mrf.mxu0
  %v9114 = vpop.f32.mrf.mxu0
  %v9115 = vadd.f32 %v8907, %v9114
  %v9116 = vpop.f32.mrf.mxu0
  %9117 = vdwg.mxu0
  %v9118 = vmax.f32 %v8992, 0.0
  %v9119 = vmax.f32 %v8995, 0.0
  %v9120 = vmax.f32 %v9000, 0.0
  %v9121 = vmax.f32 %v9003, 0.0
  %v9122 = vmax.f32 %v9008, 0.0
  %v9123 = vmax.f32 %v9011, 0.0
  %v9124 = vmax.f32 %v9016, 0.0
  %v9125 = vmax.f32 %v9019, 0.0
  %v9126 = vmax.f32 %v9024, 0.0
  %v9127 = vmax.f32 %v9027, 0.0
  %v9128 = vmax.f32 %v9032, 0.0
  %v9129 = vmax.f32 %v9035, 0.0
  %v9130 = vmax.f32 %v9040, 0.0
  %v9131 = vmax.f32 %v9043, 0.0
  %v9132 = vmax.f32 %v9048, 0.0
  %v9133 = vmax.f32 %v9051, 0.0
  %v9134 = vmax.f32 %v9056, 0.0
  %v9135 = vmax.f32 %v9059, 0.0
  %v9136 = vmax.f32 %v9064, 0.0
  %v9137 = vmax.f32 %v9067, 0.0
  %v9138 = vmax.f32 %v9072, 0.0
  %v9139 = vmax.f32 %v9075, 0.0
  %v9140 = vmax.f32 %v9080, 0.0
  %v9141 = vmax.f32 %v9083, 0.0
  %v9142 = vmax.f32 %v9088, 0.0
  %v9143 = vmax.f32 %v9091, 0.0
  %v9144 = vmax.f32 %v9096, 0.0
  %v9145 = vmax.f32 %v9099, 0.0
  %v9146 = vmax.f32 %v9104, 0.0
  %v9147 = vmax.f32 %v9107, 0.0
  %v9148 = vmax.f32 %v9112, 0.0
  %v9149 = vmax.f32 %v9115, 0.0
  %v9150 = vand.u32 2147483647, %v8992
  %v9151 = vand.u32 2147483647, %v8995
  %v9152 = vand.u32 2147483647, %v9000
  %v9153 = vand.u32 2147483647, %v9003
  %v9154 = vand.u32 2147483647, %v9008
  %v9155 = vand.u32 2147483647, %v9011
  %v9156 = vand.u32 2147483647, %v9016
  %v9157 = vand.u32 2147483647, %v9019
  %v9158 = vand.u32 2147483647, %v9024
  %v9159 = vand.u32 2147483647, %v9027
  %v9160 = vand.u32 2147483647, %v9032
  %v9161 = vand.u32 2147483647, %v9035
  %v9162 = vand.u32 2147483647, %v9040
  %v9163 = vand.u32 2147483647, %v9043
  %v9164 = vand.u32 2147483647, %v9048
  %v9165 = vand.u32 2147483647, %v9051
  %v9166 = vand.u32 2147483647, %v9056
  %v9167 = vand.u32 2147483647, %v9059
  %v9168 = vand.u32 2147483647, %v9064
  %v9169 = vand.u32 2147483647, %v9067
  %v9170 = vand.u32 2147483647, %v9072
  %v9171 = vand.u32 2147483647, %v9075
  %v9172 = vand.u32 2147483647, %v9080
  %v9173 = vand.u32 2147483647, %v9083
  %v9174 = vand.u32 2147483647, %v9088
  %v9175 = vand.u32 2147483647, %v9091
  %v9176 = vand.u32 2147483647, %v9096
  %v9177 = vand.u32 2147483647, %v9099
  %v9178 = vand.u32 2147483647, %v9104
  %v9179 = vand.u32 2147483647, %v9107
  %v9180 = vand.u32 2147483647, %v9112
  %v9181 = vand.u32 2147483647, %v9115
  %v9182 = vsub.f32 0.0, %v9150
  %v9183 = vsub.f32 0.0, %v9151
  %v9184 = vsub.f32 0.0, %v9152
  %v9185 = vsub.f32 0.0, %v9153
  %v9186 = vsub.f32 0.0, %v9154
  %v9187 = vsub.f32 0.0, %v9155
  %v9188 = vsub.f32 0.0, %v9156
  %v9189 = vsub.f32 0.0, %v9157
  %v9190 = vsub.f32 0.0, %v9158
  %v9191 = vsub.f32 0.0, %v9159
  %v9192 = vsub.f32 0.0, %v9160
  %v9193 = vsub.f32 0.0, %v9161
  %v9194 = vsub.f32 0.0, %v9162
  %v9195 = vsub.f32 0.0, %v9163
  %v9196 = vsub.f32 0.0, %v9164
  %v9197 = vsub.f32 0.0, %v9165
  %v9198 = vsub.f32 0.0, %v9166
  %v9199 = vsub.f32 0.0, %v9167
  %v9200 = vsub.f32 0.0, %v9168
  %v9201 = vsub.f32 0.0, %v9169
  %v9202 = vsub.f32 0.0, %v9170
  %v9203 = vsub.f32 0.0, %v9171
  %v9204 = vsub.f32 0.0, %v9172
  %v9205 = vsub.f32 0.0, %v9173
  %v9206 = vsub.f32 0.0, %v9174
  %v9207 = vsub.f32 0.0, %v9175
  %v9208 = vsub.f32 0.0, %v9176
  %v9209 = vsub.f32 0.0, %v9177
  %v9210 = vsub.f32 0.0, %v9178
  %v9211 = vsub.f32 0.0, %v9179
  %v9212 = vsub.f32 0.0, %v9180
  %v9213 = vsub.f32 0.0, %v9181
  %v9214 = vmul.f32 %v9182, 1.442695
  %v9215 = vpow.pop %v9214
  %v9216 = vmul.f32 %v9183, 1.442695
  %v9217 = vpow.pop %v9216
  %v9218 = vmul.f32 %v9184, 1.442695
  %v9219 = vpow.pop %v9218
  %v9220 = vmul.f32 %v9185, 1.442695
  %v9221 = vpow.pop %v9220
  %v9222 = vmul.f32 %v9186, 1.442695
  %v9223 = vpow.pop %v9222
  %v9224 = vmul.f32 %v9187, 1.442695
  %v9225 = vpow.pop %v9224
  %v9226 = vmul.f32 %v9188, 1.442695
  %v9227 = vpow.pop %v9226
  %v9228 = vmul.f32 %v9189, 1.442695
  %v9229 = vpow.pop %v9228
  %v9230 = vmul.f32 %v9190, 1.442695
  %v9231 = vpow.pop %v9230
  %v9232 = vmul.f32 %v9191, 1.442695
  %v9233 = vpow.pop %v9232
  %v9234 = vmul.f32 %v9192, 1.442695
  %v9235 = vpow.pop %v9234
  %v9236 = vmul.f32 %v9193, 1.442695
  %v9237 = vpow.pop %v9236
  %v9238 = vmul.f32 %v9194, 1.442695
  %v9239 = vpow.pop %v9238
  %v9240 = vmul.f32 %v9195, 1.442695
  %v9241 = vpow.pop %v9240
  %v9242 = vmul.f32 %v9196, 1.442695
  %v9243 = vpow.pop %v9242
  %v9244 = vmul.f32 %v9197, 1.442695
  %v9245 = vpow.pop %v9244
  %v9246 = vmul.f32 %v9198, 1.442695
  %v9247 = vpow.pop %v9246
  %v9248 = vmul.f32 %v9199, 1.442695
  %v9249 = vpow.pop %v9248
  %v9250 = vmul.f32 %v9200, 1.442695
  %v9251 = vpow.pop %v9250
  %v9252 = vmul.f32 %v9201, 1.442695
  %v9253 = vpow.pop %v9252
  %v9254 = vmul.f32 %v9202, 1.442695
  %v9255 = vpow.pop %v9254
  %v9256 = vmul.f32 %v9203, 1.442695
  %v9257 = vpow.pop %v9256
  %v9258 = vmul.f32 %v9204, 1.442695
  %v9259 = vpow.pop %v9258
  %v9260 = vmul.f32 %v9205, 1.442695
  %v9261 = vpow.pop %v9260
  %v9262 = vmul.f32 %v9206, 1.442695
  %v9263 = vpow.pop %v9262
  %v9264 = vmul.f32 %v9207, 1.442695
  %v9265 = vpow.pop %v9264
  %v9266 = vmul.f32 %v9208, 1.442695
  %v9267 = vpow.pop %v9266
  %v9268 = vmul.f32 %v9209, 1.442695
  %v9269 = vpow.pop %v9268
  %v9270 = vmul.f32 %v9210, 1.442695
  %v9271 = vpow.pop %v9270
  %v9272 = vmul.f32 %v9211, 1.442695
  %v9273 = vpow.pop %v9272
  %v9274 = vmul.f32 %v9212, 1.442695
  %v9275 = vpow.pop %v9274
  %v9276 = vmul.f32 %v9213, 1.442695
  %v9277 = vpow.pop %v9276
  %v9278 = vadd.f32 %v9215, 1.0
  %v9279 = vadd.f32 %v9217, 1.0
  %v9280 = vadd.f32 %v9219, 1.0
  %v9281 = vadd.f32 %v9221, 1.0
  %v9282 = vadd.f32 %v9223, 1.0
  %v9283 = vadd.f32 %v9225, 1.0
  %v9284 = vadd.f32 %v9227, 1.0
  %v9285 = vadd.f32 %v9229, 1.0
  %v9286 = vadd.f32 %v9231, 1.0
  %v9287 = vadd.f32 %v9233, 1.0
  %v9288 = vadd.f32 %v9235, 1.0
  %v9289 = vadd.f32 %v9237, 1.0
  %v9290 = vadd.f32 %v9239, 1.0
  %v9291 = vadd.f32 %v9241, 1.0
  %v9292 = vadd.f32 %v9243, 1.0
  %v9293 = vadd.f32 %v9245, 1.0
  %v9294 = vadd.f32 %v9247, 1.0
  %v9295 = vadd.f32 %v9249, 1.0
  %v9296 = vadd.f32 %v9251, 1.0
  %v9297 = vadd.f32 %v9253, 1.0
  %v9298 = vadd.f32 %v9255, 1.0
  %v9299 = vadd.f32 %v9257, 1.0
  %v9300 = vadd.f32 %v9259, 1.0
  %v9301 = vadd.f32 %v9261, 1.0
  %v9302 = vadd.f32 %v9263, 1.0
  %v9303 = vadd.f32 %v9265, 1.0
  %v9304 = vadd.f32 %v9267, 1.0
  %v9305 = vadd.f32 %v9269, 1.0
  %v9306 = vadd.f32 %v9271, 1.0
  %v9307 = vadd.f32 %v9273, 1.0
  %v9308 = vadd.f32 %v9275, 1.0
  %v9309 = vadd.f32 %v9277, 1.0
  %v9310 = vlog2.pop %v9278
  %v9311 = vmul.f32 %v9310, 0.6931472
  %v9312 = vlog2.pop %v9279
  %v9313 = vmul.f32 %v9312, 0.6931472
  %v9314 = vlog2.pop %v9280
  %v9315 = vmul.f32 %v9314, 0.6931472
  %v9316 = vlog2.pop %v9281
  %v9317 = vmul.f32 %v9316, 0.6931472
  %v9318 = vlog2.pop %v9282
  %v9319 = vmul.f32 %v9318, 0.6931472
  %v9320 = vlog2.pop %v9283
  %v9321 = vmul.f32 %v9320, 0.6931472
  %v9322 = vlog2.pop %v9284
  %v9323 = vmul.f32 %v9322, 0.6931472
  %v9324 = vlog2.pop %v9285
  %v9325 = vmul.f32 %v9324, 0.6931472
  %v9326 = vlog2.pop %v9286
  %v9327 = vmul.f32 %v9326, 0.6931472
  %v9328 = vlog2.pop %v9287
  %v9329 = vmul.f32 %v9328, 0.6931472
  %v9330 = vlog2.pop %v9288
  %v9331 = vmul.f32 %v9330, 0.6931472
  %v9332 = vlog2.pop %v9289
  %v9333 = vmul.f32 %v9332, 0.6931472
  %v9334 = vlog2.pop %v9290
  %v9335 = vmul.f32 %v9334, 0.6931472
  %v9336 = vlog2.pop %v9291
  %v9337 = vmul.f32 %v9336, 0.6931472
  %v9338 = vlog2.pop %v9292
  %v9339 = vmul.f32 %v9338, 0.6931472
  %v9340 = vlog2.pop %v9293
  %v9341 = vmul.f32 %v9340, 0.6931472
  %v9342 = vlog2.pop %v9294
  %v9343 = vmul.f32 %v9342, 0.6931472
  %v9344 = vlog2.pop %v9295
  %v9345 = vmul.f32 %v9344, 0.6931472
  %v9346 = vlog2.pop %v9296
  %v9347 = vmul.f32 %v9346, 0.6931472
  %v9348 = vlog2.pop %v9297
  %v9349 = vmul.f32 %v9348, 0.6931472
  %v9350 = vlog2.pop %v9298
  %v9351 = vmul.f32 %v9350, 0.6931472
  %v9352 = vlog2.pop %v9299
  %v9353 = vmul.f32 %v9352, 0.6931472
  %v9354 = vlog2.pop %v9300
  %v9355 = vmul.f32 %v9354, 0.6931472
  %v9356 = vlog2.pop %v9301
  %v9357 = vmul.f32 %v9356, 0.6931472
  %v9358 = vlog2.pop %v9302
  %v9359 = vmul.f32 %v9358, 0.6931472
  %v9360 = vlog2.pop %v9303
  %v9361 = vmul.f32 %v9360, 0.6931472
  %v9362 = vlog2.pop %v9304
  %v9363 = vmul.f32 %v9362, 0.6931472
  %v9364 = vlog2.pop %v9305
  %v9365 = vmul.f32 %v9364, 0.6931472
  %v9366 = vlog2.pop %v9306
  %v9367 = vmul.f32 %v9366, 0.6931472
  %v9368 = vlog2.pop %v9307
  %v9369 = vmul.f32 %v9368, 0.6931472
  %v9370 = vlog2.pop %v9308
  %v9371 = vmul.f32 %v9370, 0.6931472
  %v9372 = vlog2.pop %v9309
  %v9373 = vmul.f32 %v9372, 0.6931472
  %v9374 = vadd.f32 %v9118, %v9311
  %v9375 = vadd.f32 %v9119, %v9313
  %v9376 = vadd.f32 %v9120, %v9315
  %v9377 = vadd.f32 %v9121, %v9317
  %v9378 = vadd.f32 %v9122, %v9319
  %v9379 = vadd.f32 %v9123, %v9321
  %v9380 = vadd.f32 %v9124, %v9323
  %v9381 = vadd.f32 %v9125, %v9325
  %v9382 = vadd.f32 %v9126, %v9327
  %v9383 = vadd.f32 %v9127, %v9329
  %v9384 = vadd.f32 %v9128, %v9331
  %v9385 = vadd.f32 %v9129, %v9333
  %v9386 = vadd.f32 %v9130, %v9335
  %v9387 = vadd.f32 %v9131, %v9337
  %v9388 = vadd.f32 %v9132, %v9339
  %v9389 = vadd.f32 %v9133, %v9341
  %v9390 = vadd.f32 %v9134, %v9343
  %v9391 = vadd.f32 %v9135, %v9345
  %v9392 = vadd.f32 %v9136, %v9347
  %v9393 = vadd.f32 %v9137, %v9349
  %v9394 = vadd.f32 %v9138, %v9351
  %v9395 = vadd.f32 %v9139, %v9353
  %v9396 = vadd.f32 %v9140, %v9355
  %v9397 = vadd.f32 %v9141, %v9357
  %v9398 = vadd.f32 %v9142, %v9359
  %v9399 = vadd.f32 %v9143, %v9361
  %v9400 = vadd.f32 %v9144, %v9363
  %v9401 = vadd.f32 %v9145, %v9365
  %v9402 = vadd.f32 %v9146, %v9367
  %v9403 = vadd.f32 %v9147, %v9369
  %v9404 = vadd.f32 %v9148, %v9371
  %v9405 = vadd.f32 %v9149, %v9373
  %v9406 = vsub.f32 %v9374, 0.6931472
  %v9407 = vsub.f32 %v9375, 0.6931472
  %v9408 = vsub.f32 %v9376, 0.6931472
  %v9409 = vsub.f32 %v9377, 0.6931472
  %v9410 = vsub.f32 %v9378, 0.6931472
  %v9411 = vsub.f32 %v9379, 0.6931472
  %v9412 = vsub.f32 %v9380, 0.6931472
  %v9413 = vsub.f32 %v9381, 0.6931472
  %v9414 = vsub.f32 %v9382, 0.6931472
  %v9415 = vsub.f32 %v9383, 0.6931472
  %v9416 = vsub.f32 %v9384, 0.6931472
  %v9417 = vsub.f32 %v9385, 0.6931472
  %v9418 = vsub.f32 %v9386, 0.6931472
  %v9419 = vsub.f32 %v9387, 0.6931472
  %v9420 = vsub.f32 %v9388, 0.6931472
  %v9421 = vsub.f32 %v9389, 0.6931472
  %v9422 = vsub.f32 %v9390, 0.6931472
  %v9423 = vsub.f32 %v9391, 0.6931472
  %v9424 = vsub.f32 %v9392, 0.6931472
  %v9425 = vsub.f32 %v9393, 0.6931472
  %v9426 = vsub.f32 %v9394, 0.6931472
  %v9427 = vsub.f32 %v9395, 0.6931472
  %v9428 = vsub.f32 %v9396, 0.6931472
  %v9429 = vsub.f32 %v9397, 0.6931472
  %v9430 = vsub.f32 %v9398, 0.6931472
  %v9431 = vsub.f32 %v9399, 0.6931472
  %v9432 = vsub.f32 %v9400, 0.6931472
  %v9433 = vsub.f32 %v9401, 0.6931472
  %v9434 = vsub.f32 %v9402, 0.6931472
  %v9435 = vsub.f32 %v9403, 0.6931472
  %v9436 = vsub.f32 %v9404, 0.6931472
  %v9437 = vsub.f32 %v9405, 0.6931472
  %s9438 = scalar_lea.vmem %s16, 128
  %v9439 = vld [vmem:[%s9438] sm:$0xf]
  %v9440 = vld [vmem:[%s9438 + $0x4] sm:$0xf]
  %v9441 = vld [vmem:[%s9438 + $0x8] sm:$0xf]
  %v9442 = vld [vmem:[%s9438 + $0xc] sm:$0xf]
  %v9443 = vld [vmem:[%s9438 + $0x10] sm:$0xf]
  %v9444 = vld [vmem:[%s9438 + $0x14] sm:$0xf]
  %v9445 = vld [vmem:[%s9438 + $0x18] sm:$0xf]
  %v9446 = vld [vmem:[%s9438 + $0x1c] sm:$0xf]
  %v9447 = vld [vmem:[%s9438 + $0x20] sm:$0xf]
  %v9448 = vld [vmem:[%s9438 + $0x24] sm:$0xf]
  %v9449 = vld [vmem:[%s9438 + $0x28] sm:$0xf]
  %v9450 = vld [vmem:[%s9438 + $0x2c] sm:$0xf]
  %v9451 = vld [vmem:[%s9438 + $0x30] sm:$0xf]
  %v9452 = vld [vmem:[%s9438 + $0x34] sm:$0xf]
  %v9453 = vld [vmem:[%s9438 + $0x38] sm:$0xf]
  %v9454 = vld [vmem:[%s9438 + $0x3c] sm:$0xf]
  %v9455 = vpack.c.bf16 %v9407, %v9406
  %v9456 = vpack.c.bf16 %v9409, %v9408
  %v9457 = vpack.c.bf16 %v9411, %v9410
  %v9458 = vpack.c.bf16 %v9413, %v9412
  %v9459 = vpack.c.bf16 %v9415, %v9414
  %v9460 = vpack.c.bf16 %v9417, %v9416
  %v9461 = vpack.c.bf16 %v9419, %v9418
  %v9462 = vpack.c.bf16 %v9421, %v9420
  %v9463 = vpack.c.bf16 %v9423, %v9422
  %v9464 = vpack.c.bf16 %v9425, %v9424
  %v9465 = vpack.c.bf16 %v9427, %v9426
  %v9466 = vpack.c.bf16 %v9429, %v9428
  %v9467 = vpack.c.bf16 %v9431, %v9430
  %v9468 = vpack.c.bf16 %v9433, %v9432
  %v9469 = vpack.c.bf16 %v9435, %v9434
  %v9470 = vpack.c.bf16 %v9437, %v9436
  %s9471 = scalar_lea.vmem %s17, 2
  %v9472 = vld [vmem:[%s9471] sm:$0x1]
  %v9474 = vlaneseq
  %v9475 = vshrl.u32 %v9474, 7
  %v9476 = vsub.s32 0, %v9475
  %v9477 = vrot.slane %v9472, %v9476
  %v9495 = vunpack.c.l.b16 %v9439
  %v9496 = vunpack.c.l.b16 %v9440
  %v9497 = vunpack.c.l.b16 %v9441
  %v9498 = vunpack.c.l.b16 %v9442
  %v9499 = vunpack.c.l.b16 %v9443
  %v9500 = vunpack.c.l.b16 %v9444
  %v9501 = vunpack.c.l.b16 %v9445
  %v9502 = vunpack.c.l.b16 %v9446
  %v9503 = vunpack.c.l.b16 %v9447
  %v9504 = vunpack.c.l.b16 %v9448
  %v9505 = vunpack.c.l.b16 %v9449
  %v9506 = vunpack.c.l.b16 %v9450
  %v9507 = vunpack.c.l.b16 %v9451
  %v9508 = vunpack.c.l.b16 %v9452
  %v9509 = vunpack.c.l.b16 %v9453
  %v9510 = vunpack.c.l.b16 %v9454
  %v9511 = vpack.c.b16 %v9496, %v9495
  %v9512 = vpack.c.b16 %v9498, %v9497
  %v9513 = vpack.c.b16 %v9500, %v9499
  %v9514 = vpack.c.b16 %v9502, %v9501
  %v9515 = vpack.c.b16 %v9504, %v9503
  %v9516 = vpack.c.b16 %v9506, %v9505
  %v9517 = vpack.c.b16 %v9508, %v9507
  %v9518 = vpack.c.b16 %v9510, %v9509
  %9527 = vmatprep.subr.bf16.mxu0 0
  %9528 = vmatpush1.bf16.msra.mxu0 %v9518
  %9529 = vmatprep.subr.bf16.mxu0 0
  %9530 = vmatpush1.bf16.msra.mxu0 %v9517
  %9531 = vmatprep.subr.bf16.mxu0 0
  %9532 = vmatpush1.bf16.msra.mxu0 %v9516
  %9533 = vmatprep.subr.bf16.mxu0 0
  %9534 = vmatpush1.bf16.msra.mxu0 %v9515
  %9535 = vmatprep.subr.bf16.mxu0 0
  %9536 = vmatpush1.bf16.msra.mxu0 %v9514
  %9537 = vmatprep.subr.bf16.mxu0 0
  %9538 = vmatpush1.bf16.msra.mxu0 %v9513
  %9539 = vmatprep.subr.bf16.mxu0 0
  %9540 = vmatpush1.bf16.msra.mxu0 %v9512
  %9541 = vmatprep.subr.bf16.mxu0 0
  %9542 = vmatpush1.bf16.msra.mxu0 %v9511
  %9543 = vmatprep.subr.bf16.mxu0 0
  %9544 = vmatpush2.bf16.msra.mxu0 0
  %9545 = vmatprep.subr.bf16.mxu0 0
  %9546 = vmatpush2.bf16.msra.mxu0 0
  %9547 = vmatprep.subr.bf16.mxu0 0
  %9548 = vmatpush2.bf16.msra.mxu0 0
  %9549 = vmatprep.subr.bf16.mxu0 0
  %9550 = vmatpush2.bf16.msra.mxu0 0
  %9551 = vmatprep.subr.bf16.mxu0 0
  %9552 = vmatpush2.bf16.msra.mxu0 0
  %9553 = vmatprep.subr.bf16.mxu0 0
  %9554 = vmatpush2.bf16.msra.mxu0 0
  %9555 = vmatprep.subr.bf16.mxu0 0
  %9556 = vmatpush2.bf16.msra.mxu0 0
  %9557 = vmatprep.subr.bf16.mxu0 0
  %9558 = vmatpush2.bf16.msra.mxu0 0
  %9559 = vmatprep.mubr.bf16.mxu0 0
  %9560 = vmatmul.mubr.bf16.gmra.mxu0 %v9455
  %v9561 = vpop.f32.mrf.mxu0
  %v9562 = vadd.f32 %v9477, %v9561
  %v9563 = vpop.f32.mrf.mxu0
  %v9564 = vpop.f32.mrf.mxu0
  %v9565 = vadd.f32 %v9477, %v9564
  %v9566 = vpop.f32.mrf.mxu0
  %9567 = vmatprep.mubr.bf16.mxu0 0
  %9568 = vmatmul.mubr.bf16.gmra.mxu0 %v9456
  %v9569 = vpop.f32.mrf.mxu0
  %v9570 = vadd.f32 %v9477, %v9569
  %v9571 = vpop.f32.mrf.mxu0
  %v9572 = vpop.f32.mrf.mxu0
  %v9573 = vadd.f32 %v9477, %v9572
  %v9574 = vpop.f32.mrf.mxu0
  %9575 = vmatprep.mubr.bf16.mxu0 0
  %9576 = vmatmul.mubr.bf16.gmra.mxu0 %v9457
  %v9577 = vpop.f32.mrf.mxu0
  %v9578 = vadd.f32 %v9477, %v9577
  %v9579 = vpop.f32.mrf.mxu0
  %v9580 = vpop.f32.mrf.mxu0
  %v9581 = vadd.f32 %v9477, %v9580
  %v9582 = vpop.f32.mrf.mxu0
  %9583 = vmatprep.mubr.bf16.mxu0 0
  %9584 = vmatmul.mubr.bf16.gmra.mxu0 %v9458
  %v9585 = vpop.f32.mrf.mxu0
  %v9586 = vadd.f32 %v9477, %v9585
  %v9587 = vpop.f32.mrf.mxu0
  %v9588 = vpop.f32.mrf.mxu0
  %v9589 = vadd.f32 %v9477, %v9588
  %v9590 = vpop.f32.mrf.mxu0
  %9591 = vmatprep.mubr.bf16.mxu0 0
  %9592 = vmatmul.mubr.bf16.gmra.mxu0 %v9459
  %v9593 = vpop.f32.mrf.mxu0
  %v9594 = vadd.f32 %v9477, %v9593
  %v9595 = vpop.f32.mrf.mxu0
  %v9596 = vpop.f32.mrf.mxu0
  %v9597 = vadd.f32 %v9477, %v9596
  %v9598 = vpop.f32.mrf.mxu0
  %9599 = vmatprep.mubr.bf16.mxu0 0
  %9600 = vmatmul.mubr.bf16.gmra.mxu0 %v9460
  %v9601 = vpop.f32.mrf.mxu0
  %v9602 = vadd.f32 %v9477, %v9601
  %v9603 = vpop.f32.mrf.mxu0
  %v9604 = vpop.f32.mrf.mxu0
  %v9605 = vadd.f32 %v9477, %v9604
  %v9606 = vpop.f32.mrf.mxu0
  %9607 = vmatprep.mubr.bf16.mxu0 0
  %9608 = vmatmul.mubr.bf16.gmra.mxu0 %v9461
  %v9609 = vpop.f32.mrf.mxu0
  %v9610 = vadd.f32 %v9477, %v9609
  %v9611 = vpop.f32.mrf.mxu0
  %v9612 = vpop.f32.mrf.mxu0
  %v9613 = vadd.f32 %v9477, %v9612
  %v9614 = vpop.f32.mrf.mxu0
  %9615 = vmatprep.mubr.bf16.mxu0 0
  %9616 = vmatmul.mubr.bf16.gmra.mxu0 %v9462
  %v9617 = vpop.f32.mrf.mxu0
  %v9618 = vadd.f32 %v9477, %v9617
  %v9619 = vpop.f32.mrf.mxu0
  %v9620 = vpop.f32.mrf.mxu0
  %v9621 = vadd.f32 %v9477, %v9620
  %v9622 = vpop.f32.mrf.mxu0
  %9623 = vmatprep.mubr.bf16.mxu0 0
  %9624 = vmatmul.mubr.bf16.gmra.mxu0 %v9463
  %v9625 = vpop.f32.mrf.mxu0
  %v9626 = vadd.f32 %v9477, %v9625
  %v9627 = vpop.f32.mrf.mxu0
  %v9628 = vpop.f32.mrf.mxu0
  %v9629 = vadd.f32 %v9477, %v9628
  %v9630 = vpop.f32.mrf.mxu0
  %9631 = vmatprep.mubr.bf16.mxu0 0
  %9632 = vmatmul.mubr.bf16.gmra.mxu0 %v9464
  %v9633 = vpop.f32.mrf.mxu0
  %v9634 = vadd.f32 %v9477, %v9633
  %v9635 = vpop.f32.mrf.mxu0
  %v9636 = vpop.f32.mrf.mxu0
  %v9637 = vadd.f32 %v9477, %v9636
  %v9638 = vpop.f32.mrf.mxu0
  %9639 = vmatprep.mubr.bf16.mxu0 0
  %9640 = vmatmul.mubr.bf16.gmra.mxu0 %v9465
  %v9641 = vpop.f32.mrf.mxu0
  %v9642 = vadd.f32 %v9477, %v9641
  %v9643 = vpop.f32.mrf.mxu0
  %v9644 = vpop.f32.mrf.mxu0
  %v9645 = vadd.f32 %v9477, %v9644
  %v9646 = vpop.f32.mrf.mxu0
  %9647 = vmatprep.mubr.bf16.mxu0 0
  %9648 = vmatmul.mubr.bf16.gmra.mxu0 %v9466
  %v9649 = vpop.f32.mrf.mxu0
  %v9650 = vadd.f32 %v9477, %v9649
  %v9651 = vpop.f32.mrf.mxu0
  %v9652 = vpop.f32.mrf.mxu0
  %v9653 = vadd.f32 %v9477, %v9652
  %v9654 = vpop.f32.mrf.mxu0
  %9655 = vmatprep.mubr.bf16.mxu0 0
  %9656 = vmatmul.mubr.bf16.gmra.mxu0 %v9467
  %v9657 = vpop.f32.mrf.mxu0
  %v9658 = vadd.f32 %v9477, %v9657
  %v9659 = vpop.f32.mrf.mxu0
  %v9660 = vpop.f32.mrf.mxu0
  %v9661 = vadd.f32 %v9477, %v9660
  %v9662 = vpop.f32.mrf.mxu0
  %9663 = vmatprep.mubr.bf16.mxu0 0
  %9664 = vmatmul.mubr.bf16.gmra.mxu0 %v9468
  %v9665 = vpop.f32.mrf.mxu0
  %v9666 = vadd.f32 %v9477, %v9665
  %v9667 = vpop.f32.mrf.mxu0
  %v9668 = vpop.f32.mrf.mxu0
  %v9669 = vadd.f32 %v9477, %v9668
  %v9670 = vpop.f32.mrf.mxu0
  %9671 = vmatprep.mubr.bf16.mxu0 0
  %9672 = vmatmul.mubr.bf16.gmra.mxu0 %v9469
  %v9673 = vpop.f32.mrf.mxu0
  %v9674 = vadd.f32 %v9477, %v9673
  %v9675 = vpop.f32.mrf.mxu0
  %v9676 = vpop.f32.mrf.mxu0
  %v9677 = vadd.f32 %v9477, %v9676
  %v9678 = vpop.f32.mrf.mxu0
  %9679 = vmatprep.mubr.bf16.mxu0 0
  %9680 = vmatmul.mubr.bf16.gmra.mxu0 %v9470
  %v9681 = vpop.f32.mrf.mxu0
  %v9682 = vadd.f32 %v9477, %v9681
  %v9683 = vpop.f32.mrf.mxu0
  %v9684 = vpop.f32.mrf.mxu0
  %v9685 = vadd.f32 %v9477, %v9684
  %v9686 = vpop.f32.mrf.mxu0
  %9687 = vdwg.mxu0
  %v9688 = vmul.f32 %v9562, %v4591
  %v9689 = vmul.f32 %v9565, %v4592
  %v9690 = vmul.f32 %v9570, %v4593
  %v9691 = vmul.f32 %v9573, %v4594
  %v9692 = vmul.f32 %v9578, %v4595
  %v9693 = vmul.f32 %v9581, %v4596
  %v9694 = vmul.f32 %v9586, %v4597
  %v9695 = vmul.f32 %v9589, %v4598
  %v9696 = vmul.f32 %v9594, %v4599
  %v9697 = vmul.f32 %v9597, %v4600
  %v9698 = vmul.f32 %v9602, %v4601
  %v9699 = vmul.f32 %v9605, %v4602
  %v9700 = vmul.f32 %v9610, %v4603
  %v9701 = vmul.f32 %v9613, %v4604
  %v9702 = vmul.f32 %v9618, %v4605
  %v9703 = vmul.f32 %v9621, %v4606
  %v9704 = vmul.f32 %v9626, %v4607
  %v9705 = vmul.f32 %v9629, %v4608
  %v9706 = vmul.f32 %v9634, %v4609
  %v9707 = vmul.f32 %v9637, %v4610
  %v9708 = vmul.f32 %v9642, %v4611
  %v9709 = vmul.f32 %v9645, %v4612
  %v9710 = vmul.f32 %v9650, %v4613
  %v9711 = vmul.f32 %v9653, %v4614
  %v9712 = vmul.f32 %v9658, %v4615
  %v9713 = vmul.f32 %v9661, %v4616
  %v9714 = vmul.f32 %v9666, %v4617
  %v9715 = vmul.f32 %v9669, %v4618
  %v9716 = vmul.f32 %v9674, %v4619
  %v9717 = vmul.f32 %v9677, %v4620
  %v9718 = vmul.f32 %v9682, %v4621
  %v9719 = vmul.f32 %v9685, %v4622
  %v9720 = vpack.c.bf16 %v8825, %v8822
  %v9721 = vpack.c.bf16 %v8833, %v8830
  %v9722 = vpack.c.bf16 %v8841, %v8838
  %v9723 = vpack.c.bf16 %v8849, %v8846
  %v9724 = vpack.c.bf16 %v8857, %v8854
  %v9725 = vpack.c.bf16 %v8865, %v8862
  %v9726 = vpack.c.bf16 %v8873, %v8870
  %v9727 = vpack.c.bf16 %v8881, %v8878
  %9728 = vmatprep.subr.bf16.mxu0 0
  %9729 = vmatpush1.bf16.msra.mxu0 %v9727
  %9730 = vmatprep.subr.bf16.mxu0 0
  %9731 = vmatpush1.bf16.msra.mxu0 %v9726
  %9732 = vmatprep.subr.bf16.mxu0 0
  %9733 = vmatpush1.bf16.msra.mxu0 %v9725
  %9734 = vmatprep.subr.bf16.mxu0 0
  %9735 = vmatpush1.bf16.msra.mxu0 %v9724
  %9736 = vmatprep.subr.bf16.mxu0 0
  %9737 = vmatpush1.bf16.msra.mxu0 %v9723
  %9738 = vmatprep.subr.bf16.mxu0 0
  %9739 = vmatpush1.bf16.msra.mxu0 %v9722
  %9740 = vmatprep.subr.bf16.mxu0 0
  %9741 = vmatpush1.bf16.msra.mxu0 %v9721
  %9742 = vmatprep.subr.bf16.mxu0 0
  %9743 = vmatpush1.bf16.msra.mxu0 %v9720
  %9744 = vmatprep.subr.bf16.mxu0 0
  %9745 = vmatpush2.bf16.msra.mxu0 0
  %9746 = vmatprep.subr.bf16.mxu0 0
  %9747 = vmatpush2.bf16.msra.mxu0 0
  %9748 = vmatprep.subr.bf16.mxu0 0
  %9749 = vmatpush2.bf16.msra.mxu0 0
  %9750 = vmatprep.subr.bf16.mxu0 0
  %9751 = vmatpush2.bf16.msra.mxu0 0
  %9752 = vmatprep.subr.bf16.mxu0 0
  %9753 = vmatpush2.bf16.msra.mxu0 0
  %9754 = vmatprep.subr.bf16.mxu0 0
  %9755 = vmatpush2.bf16.msra.mxu0 0
  %9756 = vmatprep.subr.bf16.mxu0 0
  %9757 = vmatpush2.bf16.msra.mxu0 0
  %9758 = vmatprep.subr.bf16.mxu0 0
  %9759 = vmatpush2.bf16.msra.mxu0 0
  %9760 = vmatprep.mubr.bf16.mxu0 0
  %9761 = vmatmul.mubr.bf16.gmra.mxu0 %v5924
  %v9762 = vpop.f32.mrf.mxu0
  %v9763 = vadd.f32 0.0, %v9762
  %v9764 = vpop.f32.mrf.mxu0
  %v9765 = vpop.f32.mrf.mxu0
  %v9766 = vadd.f32 0.0, %v9765
  %v9767 = vpop.f32.mrf.mxu0
  %9768 = vmatprep.mubr.bf16.mxu0 0
  %9769 = vmatmul.mubr.bf16.gmra.mxu0 %v5925
  %v9770 = vpop.f32.mrf.mxu0
  %v9771 = vadd.f32 0.0, %v9770
  %v9772 = vpop.f32.mrf.mxu0
  %v9773 = vpop.f32.mrf.mxu0
  %v9774 = vadd.f32 0.0, %v9773
  %v9775 = vpop.f32.mrf.mxu0
  %9776 = vmatprep.mubr.bf16.mxu0 0
  %9777 = vmatmul.mubr.bf16.gmra.mxu0 %v5926
  %v9778 = vpop.f32.mrf.mxu0
  %v9779 = vadd.f32 0.0, %v9778
  %v9780 = vpop.f32.mrf.mxu0
  %v9781 = vpop.f32.mrf.mxu0
  %v9782 = vadd.f32 0.0, %v9781
  %v9783 = vpop.f32.mrf.mxu0
  %9784 = vmatprep.mubr.bf16.mxu0 0
  %9785 = vmatmul.mubr.bf16.gmra.mxu0 %v5927
  %v9786 = vpop.f32.mrf.mxu0
  %v9787 = vadd.f32 0.0, %v9786
  %v9788 = vpop.f32.mrf.mxu0
  %v9789 = vpop.f32.mrf.mxu0
  %v9790 = vadd.f32 0.0, %v9789
  %v9791 = vpop.f32.mrf.mxu0
  %9792 = vmatprep.mubr.bf16.mxu0 0
  %9793 = vmatmul.mubr.bf16.gmra.mxu0 %v5928
  %v9794 = vpop.f32.mrf.mxu0
  %v9795 = vadd.f32 0.0, %v9794
  %v9796 = vpop.f32.mrf.mxu0
  %v9797 = vpop.f32.mrf.mxu0
  %v9798 = vadd.f32 0.0, %v9797
  %v9799 = vpop.f32.mrf.mxu0
  %9800 = vmatprep.mubr.bf16.mxu0 0
  %9801 = vmatmul.mubr.bf16.gmra.mxu0 %v5929
  %v9802 = vpop.f32.mrf.mxu0
  %v9803 = vadd.f32 0.0, %v9802
  %v9804 = vpop.f32.mrf.mxu0
  %v9805 = vpop.f32.mrf.mxu0
  %v9806 = vadd.f32 0.0, %v9805
  %v9807 = vpop.f32.mrf.mxu0
  %9808 = vmatprep.mubr.bf16.mxu0 0
  %9809 = vmatmul.mubr.bf16.gmra.mxu0 %v5930
  %v9810 = vpop.f32.mrf.mxu0
  %v9811 = vadd.f32 0.0, %v9810
  %v9812 = vpop.f32.mrf.mxu0
  %v9813 = vpop.f32.mrf.mxu0
  %v9814 = vadd.f32 0.0, %v9813
  %v9815 = vpop.f32.mrf.mxu0
  %9816 = vmatprep.mubr.bf16.mxu0 0
  %9817 = vmatmul.mubr.bf16.gmra.mxu0 %v5931
  %v9818 = vpop.f32.mrf.mxu0
  %v9819 = vadd.f32 0.0, %v9818
  %v9820 = vpop.f32.mrf.mxu0
  %v9821 = vpop.f32.mrf.mxu0
  %v9822 = vadd.f32 0.0, %v9821
  %v9823 = vpop.f32.mrf.mxu0
  %9824 = vmatprep.mubr.bf16.mxu0 0
  %9825 = vmatmul.mubr.bf16.gmra.mxu0 %v5932
  %v9826 = vpop.f32.mrf.mxu0
  %v9827 = vadd.f32 0.0, %v9826
  %v9828 = vpop.f32.mrf.mxu0
  %v9829 = vpop.f32.mrf.mxu0
  %v9830 = vadd.f32 0.0, %v9829
  %v9831 = vpop.f32.mrf.mxu0
  %9832 = vmatprep.mubr.bf16.mxu0 0
  %9833 = vmatmul.mubr.bf16.gmra.mxu0 %v5933
  %v9834 = vpop.f32.mrf.mxu0
  %v9835 = vadd.f32 0.0, %v9834
  %v9836 = vpop.f32.mrf.mxu0
  %v9837 = vpop.f32.mrf.mxu0
  %v9838 = vadd.f32 0.0, %v9837
  %v9839 = vpop.f32.mrf.mxu0
  %9840 = vmatprep.mubr.bf16.mxu0 0
  %9841 = vmatmul.mubr.bf16.gmra.mxu0 %v5934
  %v9842 = vpop.f32.mrf.mxu0
  %v9843 = vadd.f32 0.0, %v9842
  %v9844 = vpop.f32.mrf.mxu0
  %v9845 = vpop.f32.mrf.mxu0
  %v9846 = vadd.f32 0.0, %v9845
  %v9847 = vpop.f32.mrf.mxu0
  %9848 = vmatprep.mubr.bf16.mxu0 0
  %9849 = vmatmul.mubr.bf16.gmra.mxu0 %v5935
  %v9850 = vpop.f32.mrf.mxu0
  %v9851 = vadd.f32 0.0, %v9850
  %v9852 = vpop.f32.mrf.mxu0
  %v9853 = vpop.f32.mrf.mxu0
  %v9854 = vadd.f32 0.0, %v9853
  %v9855 = vpop.f32.mrf.mxu0
  %9856 = vmatprep.mubr.bf16.mxu0 0
  %9857 = vmatmul.mubr.bf16.gmra.mxu0 %v5936
  %v9858 = vpop.f32.mrf.mxu0
  %v9859 = vadd.f32 0.0, %v9858
  %v9860 = vpop.f32.mrf.mxu0
  %v9861 = vpop.f32.mrf.mxu0
  %v9862 = vadd.f32 0.0, %v9861
  %v9863 = vpop.f32.mrf.mxu0
  %9864 = vmatprep.mubr.bf16.mxu0 0
  %9865 = vmatmul.mubr.bf16.gmra.mxu0 %v5937
  %v9866 = vpop.f32.mrf.mxu0
  %v9867 = vadd.f32 0.0, %v9866
  %v9868 = vpop.f32.mrf.mxu0
  %v9869 = vpop.f32.mrf.mxu0
  %v9870 = vadd.f32 0.0, %v9869
  %v9871 = vpop.f32.mrf.mxu0
  %9872 = vmatprep.mubr.bf16.mxu0 0
  %9873 = vmatmul.mubr.bf16.gmra.mxu0 %v5938
  %v9874 = vpop.f32.mrf.mxu0
  %v9875 = vadd.f32 0.0, %v9874
  %v9876 = vpop.f32.mrf.mxu0
  %v9877 = vpop.f32.mrf.mxu0
  %v9878 = vadd.f32 0.0, %v9877
  %v9879 = vpop.f32.mrf.mxu0
  %9880 = vmatprep.mubr.bf16.mxu0 0
  %9881 = vmatmul.mubr.bf16.gmra.mxu0 %v5939
  %v9882 = vpop.f32.mrf.mxu0
  %v9883 = vadd.f32 0.0, %v9882
  %v9884 = vpop.f32.mrf.mxu0
  %v9885 = vpop.f32.mrf.mxu0
  %v9886 = vadd.f32 0.0, %v9885
  %v9887 = vpop.f32.mrf.mxu0
  %9888 = vdwg.mxu0
  %v9889 = vmul.f32 %v9763, %v9688
  %v9890 = vmul.f32 %v9766, %v9689
  %v9891 = vmul.f32 %v9771, %v9690
  %v9892 = vmul.f32 %v9774, %v9691
  %v9893 = vmul.f32 %v9779, %v9692
  %v9894 = vmul.f32 %v9782, %v9693
  %v9895 = vmul.f32 %v9787, %v9694
  %v9896 = vmul.f32 %v9790, %v9695
  %v9897 = vmul.f32 %v9795, %v9696
  %v9898 = vmul.f32 %v9798, %v9697
  %v9899 = vmul.f32 %v9803, %v9698
  %v9900 = vmul.f32 %v9806, %v9699
  %v9901 = vmul.f32 %v9811, %v9700
  %v9902 = vmul.f32 %v9814, %v9701
  %v9903 = vmul.f32 %v9819, %v9702
  %v9904 = vmul.f32 %v9822, %v9703
  %v9905 = vmul.f32 %v9827, %v9704
  %v9906 = vmul.f32 %v9830, %v9705
  %v9907 = vmul.f32 %v9835, %v9706
  %v9908 = vmul.f32 %v9838, %v9707
  %v9909 = vmul.f32 %v9843, %v9708
  %v9910 = vmul.f32 %v9846, %v9709
  %v9911 = vmul.f32 %v9851, %v9710
  %v9912 = vmul.f32 %v9854, %v9711
  %v9913 = vmul.f32 %v9859, %v9712
  %v9914 = vmul.f32 %v9862, %v9713
  %v9915 = vmul.f32 %v9867, %v9714
  %v9916 = vmul.f32 %v9870, %v9715
  %v9917 = vmul.f32 %v9875, %v9716
  %v9918 = vmul.f32 %v9878, %v9717
  %v9919 = vmul.f32 %v9883, %v9718
  %v9920 = vmul.f32 %v9886, %v9719
  %v9921 = vpack.c.bf16 %v9890, %v9889
  %v9922 = vpack.c.bf16 %v9892, %v9891
  %v9923 = vpack.c.bf16 %v9894, %v9893
  %v9924 = vpack.c.bf16 %v9896, %v9895
  %v9925 = vpack.c.bf16 %v9898, %v9897
  %v9926 = vpack.c.bf16 %v9900, %v9899
  %v9927 = vpack.c.bf16 %v9902, %v9901
  %v9928 = vpack.c.bf16 %v9904, %v9903
  %v9929 = vpack.c.bf16 %v9906, %v9905
  %v9930 = vpack.c.bf16 %v9908, %v9907
  %v9931 = vpack.c.bf16 %v9910, %v9909
  %v9932 = vpack.c.bf16 %v9912, %v9911
  %v9933 = vpack.c.bf16 %v9914, %v9913
  %v9934 = vpack.c.bf16 %v9916, %v9915
  %v9935 = vpack.c.bf16 %v9918, %v9917
  %v9936 = vpack.c.bf16 %v9920, %v9919
  %9937 = vmatprep.subr.bf16.mxu0 0
  %9938 = vmatpush1.bf16.msra.mxu0 %v9928
  %9939 = vmatprep.subr.bf16.mxu0 0
  %9940 = vmatpush1.bf16.msra.mxu0 %v9927
  %9941 = vmatprep.subr.bf16.mxu0 0
  %9942 = vmatpush1.bf16.msra.mxu0 %v9926
  %9943 = vmatprep.subr.bf16.mxu0 0
  %9944 = vmatpush1.bf16.msra.mxu0 %v9925
  %9945 = vmatprep.subr.bf16.mxu0 0
  %9946 = vmatpush1.bf16.msra.mxu0 %v9924
  %9947 = vmatprep.subr.bf16.mxu0 0
  %9948 = vmatpush1.bf16.msra.mxu0 %v9923
  %9949 = vmatprep.subr.bf16.mxu0 0
  %9950 = vmatpush1.bf16.msra.mxu0 %v9922
  %9951 = vmatprep.subr.bf16.mxu0 0
  %9952 = vmatpush1.bf16.msra.mxu0 %v9921
  %9953 = vmatprep.subr.bf16.mxu0 0
  %9954 = vmatpush2.bf16.msra.mxu0 %v9936
  %9955 = vmatprep.subr.bf16.mxu0 0
  %9956 = vmatpush2.bf16.msra.mxu0 %v9935
  %9957 = vmatprep.subr.bf16.mxu0 0
  %9958 = vmatpush2.bf16.msra.mxu0 %v9934
  %9959 = vmatprep.subr.bf16.mxu0 0
  %9960 = vmatpush2.bf16.msra.mxu0 %v9933
  %9961 = vmatprep.subr.bf16.mxu0 0
  %9962 = vmatpush2.bf16.msra.mxu0 %v9932
  %9963 = vmatprep.subr.bf16.mxu0 0
  %9964 = vmatpush2.bf16.msra.mxu0 %v9931
  %9965 = vmatprep.subr.bf16.mxu0 0
  %9966 = vmatpush2.bf16.msra.mxu0 %v9930
  %9967 = vmatprep.subr.bf16.mxu0 0
  %9968 = vmatpush2.bf16.msra.mxu0 %v9929
  %9969 = vmatprep.mubr.bf16.mxu0 %v6206
  %9970 = vmatmul.mubr.bf16.gmra.mxu0 %v6205
  %v9971 = vpop.f32.mrf.mxu0
  %v9972 = vadd.f32 0.0, %v9971
  %v9973 = vpop.f32.mrf.mxu0
  %v9974 = vpop.f32.mrf.mxu0
  %v9975 = vadd.f32 0.0, %v9974
  %v9976 = vpop.f32.mrf.mxu0
  %9977 = vmatprep.mubr.bf16.mxu0 %v6208
  %9978 = vmatmul.mubr.bf16.gmra.mxu0 %v6207
  %v9979 = vpop.f32.mrf.mxu0
  %v9980 = vadd.f32 0.0, %v9979
  %v9981 = vpop.f32.mrf.mxu0
  %v9982 = vpop.f32.mrf.mxu0
  %v9983 = vadd.f32 0.0, %v9982
  %v9984 = vpop.f32.mrf.mxu0
  %9985 = vmatprep.mubr.bf16.mxu0 %v6210
  %9986 = vmatmul.mubr.bf16.gmra.mxu0 %v6209
  %v9987 = vpop.f32.mrf.mxu0
  %v9988 = vadd.f32 0.0, %v9987
  %v9989 = vpop.f32.mrf.mxu0
  %v9990 = vpop.f32.mrf.mxu0
  %v9991 = vadd.f32 0.0, %v9990
  %v9992 = vpop.f32.mrf.mxu0
  %9993 = vmatprep.mubr.bf16.mxu0 %v6212
  %9994 = vmatmul.mubr.bf16.gmra.mxu0 %v6211
  %v9995 = vpop.f32.mrf.mxu0
  %v9996 = vadd.f32 0.0, %v9995
  %v9997 = vpop.f32.mrf.mxu0
  %v9998 = vpop.f32.mrf.mxu0
  %v9999 = vadd.f32 0.0, %v9998
  %v10000 = vpop.f32.mrf.mxu0
  %10001 = vmatprep.mubr.bf16.mxu0 %v6214
  %10002 = vmatmul.mubr.bf16.gmra.mxu0 %v6213
  %v10003 = vpop.f32.mrf.mxu0
  %v10004 = vadd.f32 0.0, %v10003
  %v10005 = vpop.f32.mrf.mxu0
  %v10006 = vpop.f32.mrf.mxu0
  %v10007 = vadd.f32 0.0, %v10006
  %v10008 = vpop.f32.mrf.mxu0
  %10009 = vmatprep.mubr.bf16.mxu0 %v6216
  %10010 = vmatmul.mubr.bf16.gmra.mxu0 %v6215
  %v10011 = vpop.f32.mrf.mxu0
  %v10012 = vadd.f32 0.0, %v10011
  %v10013 = vpop.f32.mrf.mxu0
  %v10014 = vpop.f32.mrf.mxu0
  %v10015 = vadd.f32 0.0, %v10014
  %v10016 = vpop.f32.mrf.mxu0
  %10017 = vmatprep.mubr.bf16.mxu0 %v6218
  %10018 = vmatmul.mubr.bf16.gmra.mxu0 %v6217
  %v10019 = vpop.f32.mrf.mxu0
  %v10020 = vadd.f32 0.0, %v10019
  %v10021 = vpop.f32.mrf.mxu0
  %v10022 = vpop.f32.mrf.mxu0
  %v10023 = vadd.f32 0.0, %v10022
  %v10024 = vpop.f32.mrf.mxu0
  %10025 = vmatprep.mubr.bf16.mxu0 %v6220
  %10026 = vmatmul.mubr.bf16.gmra.mxu0 %v6219
  %v10027 = vpop.f32.mrf.mxu0
  %v10028 = vadd.f32 0.0, %v10027
  %v10029 = vpop.f32.mrf.mxu0
  %v10030 = vpop.f32.mrf.mxu0
  %v10031 = vadd.f32 0.0, %v10030
  %v10032 = vpop.f32.mrf.mxu0
  %10033 = vdwg.mxu0
  %s10034 = scalar_lea.vmem %s18, 128
  %v10035 = vld [vmem:[%s10034] sm:$0xf]
  %v10036 = vld [vmem:[%s10034 + $0x4] sm:$0xf]
  %v10037 = vld [vmem:[%s10034 + $0x8] sm:$0xf]
  %v10038 = vld [vmem:[%s10034 + $0xc] sm:$0xf]
  %v10039 = vld [vmem:[%s10034 + $0x10] sm:$0xf]
  %v10040 = vld [vmem:[%s10034 + $0x14] sm:$0xf]
  %v10041 = vld [vmem:[%s10034 + $0x18] sm:$0xf]
  %v10042 = vld [vmem:[%s10034 + $0x1c] sm:$0xf]
  %v10043 = vld [vmem:[%s10034 + $0x20] sm:$0xf]
  %v10044 = vld [vmem:[%s10034 + $0x24] sm:$0xf]
  %v10045 = vld [vmem:[%s10034 + $0x28] sm:$0xf]
  %v10046 = vld [vmem:[%s10034 + $0x2c] sm:$0xf]
  %v10047 = vld [vmem:[%s10034 + $0x30] sm:$0xf]
  %v10048 = vld [vmem:[%s10034 + $0x34] sm:$0xf]
  %v10049 = vld [vmem:[%s10034 + $0x38] sm:$0xf]
  %v10050 = vld [vmem:[%s10034 + $0x3c] sm:$0xf]
  %v10051 = vpack.c.bf16 %v9975, %v9972
  %v10052 = vpack.c.bf16 %v9983, %v9980
  %v10053 = vpack.c.bf16 %v9991, %v9988
  %v10054 = vpack.c.bf16 %v9999, %v9996
  %v10055 = vpack.c.bf16 %v10007, %v10004
  %v10056 = vpack.c.bf16 %v10015, %v10012
  %v10057 = vpack.c.bf16 %v10023, %v10020
  %v10058 = vpack.c.bf16 %v10031, %v10028
  %s10059 = scalar_lea.vmem %s19, 2
  %v10060 = vld [vmem:[%s10059] sm:$0x1]
  %v10062 = vlaneseq
  %v10063 = vshrl.u32 %v10062, 7
  %v10064 = vsub.s32 0, %v10063
  %v10065 = vrot.slane %v10060, %v10064
  %v10083 = vunpack.c.l.b16 %v10035
  %v10084 = vunpack.c.l.b16 %v10036
  %v10085 = vunpack.c.l.b16 %v10037
  %v10086 = vunpack.c.l.b16 %v10038
  %v10087 = vunpack.c.l.b16 %v10039
  %v10088 = vunpack.c.l.b16 %v10040
  %v10089 = vunpack.c.l.b16 %v10041
  %v10090 = vunpack.c.l.b16 %v10042
  %v10091 = vunpack.c.l.b16 %v10043
  %v10092 = vunpack.c.l.b16 %v10044
  %v10093 = vunpack.c.l.b16 %v10045
  %v10094 = vunpack.c.l.b16 %v10046
  %v10095 = vunpack.c.l.b16 %v10047
  %v10096 = vunpack.c.l.b16 %v10048
  %v10097 = vunpack.c.l.b16 %v10049
  %v10098 = vunpack.c.l.b16 %v10050
  %v10099 = vpack.c.b16 %v10084, %v10083
  %v10100 = vpack.c.b16 %v10086, %v10085
  %v10101 = vpack.c.b16 %v10088, %v10087
  %v10102 = vpack.c.b16 %v10090, %v10089
  %v10103 = vpack.c.b16 %v10092, %v10091
  %v10104 = vpack.c.b16 %v10094, %v10093
  %v10105 = vpack.c.b16 %v10096, %v10095
  %v10106 = vpack.c.b16 %v10098, %v10097
  %10115 = vmatprep.subr.bf16.mxu0 0
  %10116 = vmatpush1.bf16.msra.mxu0 %v10106
  %10117 = vmatprep.subr.bf16.mxu0 0
  %10118 = vmatpush1.bf16.msra.mxu0 %v10105
  %10119 = vmatprep.subr.bf16.mxu0 0
  %10120 = vmatpush1.bf16.msra.mxu0 %v10104
  %10121 = vmatprep.subr.bf16.mxu0 0
  %10122 = vmatpush1.bf16.msra.mxu0 %v10103
  %10123 = vmatprep.subr.bf16.mxu0 0
  %10124 = vmatpush1.bf16.msra.mxu0 %v10102
  %10125 = vmatprep.subr.bf16.mxu0 0
  %10126 = vmatpush1.bf16.msra.mxu0 %v10101
  %10127 = vmatprep.subr.bf16.mxu0 0
  %10128 = vmatpush1.bf16.msra.mxu0 %v10100
  %10129 = vmatprep.subr.bf16.mxu0 0
  %10130 = vmatpush1.bf16.msra.mxu0 %v10099
  %10131 = vmatprep.subr.bf16.mxu0 0
  %10132 = vmatpush2.bf16.msra.mxu0 0
  %10133 = vmatprep.subr.bf16.mxu0 0
  %10134 = vmatpush2.bf16.msra.mxu0 0
  %10135 = vmatprep.subr.bf16.mxu0 0
  %10136 = vmatpush2.bf16.msra.mxu0 0
  %10137 = vmatprep.subr.bf16.mxu0 0
  %10138 = vmatpush2.bf16.msra.mxu0 0
  %10139 = vmatprep.subr.bf16.mxu0 0
  %10140 = vmatpush2.bf16.msra.mxu0 0
  %10141 = vmatprep.subr.bf16.mxu0 0
  %10142 = vmatpush2.bf16.msra.mxu0 0
  %10143 = vmatprep.subr.bf16.mxu0 0
  %10144 = vmatpush2.bf16.msra.mxu0 0
  %10145 = vmatprep.subr.bf16.mxu0 0
  %10146 = vmatpush2.bf16.msra.mxu0 0
  %10147 = vmatprep.mubr.bf16.mxu0 0
  %10148 = vmatmul.mubr.bf16.gmra.mxu0 %v10051
  %v10149 = vpop.f32.mrf.mxu0
  %v10150 = vadd.f32 %v10065, %v10149
  %v10151 = vpop.f32.mrf.mxu0
  %v10152 = vpop.f32.mrf.mxu0
  %v10153 = vadd.f32 %v10065, %v10152
  %v10154 = vpop.f32.mrf.mxu0
  %10155 = vmatprep.mubr.bf16.mxu0 0
  %10156 = vmatmul.mubr.bf16.gmra.mxu0 %v10052
  %v10157 = vpop.f32.mrf.mxu0
  %v10158 = vadd.f32 %v10065, %v10157
  %v10159 = vpop.f32.mrf.mxu0
  %v10160 = vpop.f32.mrf.mxu0
  %v10161 = vadd.f32 %v10065, %v10160
  %v10162 = vpop.f32.mrf.mxu0
  %10163 = vmatprep.mubr.bf16.mxu0 0
  %10164 = vmatmul.mubr.bf16.gmra.mxu0 %v10053
  %v10165 = vpop.f32.mrf.mxu0
  %v10166 = vadd.f32 %v10065, %v10165
  %v10167 = vpop.f32.mrf.mxu0
  %v10168 = vpop.f32.mrf.mxu0
  %v10169 = vadd.f32 %v10065, %v10168
  %v10170 = vpop.f32.mrf.mxu0
  %10171 = vmatprep.mubr.bf16.mxu0 0
  %10172 = vmatmul.mubr.bf16.gmra.mxu0 %v10054
  %v10173 = vpop.f32.mrf.mxu0
  %v10174 = vadd.f32 %v10065, %v10173
  %v10175 = vpop.f32.mrf.mxu0
  %v10176 = vpop.f32.mrf.mxu0
  %v10177 = vadd.f32 %v10065, %v10176
  %v10178 = vpop.f32.mrf.mxu0
  %10179 = vmatprep.mubr.bf16.mxu0 0
  %10180 = vmatmul.mubr.bf16.gmra.mxu0 %v10055
  %v10181 = vpop.f32.mrf.mxu0
  %v10182 = vadd.f32 %v10065, %v10181
  %v10183 = vpop.f32.mrf.mxu0
  %v10184 = vpop.f32.mrf.mxu0
  %v10185 = vadd.f32 %v10065, %v10184
  %v10186 = vpop.f32.mrf.mxu0
  %10187 = vmatprep.mubr.bf16.mxu0 0
  %10188 = vmatmul.mubr.bf16.gmra.mxu0 %v10056
  %v10189 = vpop.f32.mrf.mxu0
  %v10190 = vadd.f32 %v10065, %v10189
  %v10191 = vpop.f32.mrf.mxu0
  %v10192 = vpop.f32.mrf.mxu0
  %v10193 = vadd.f32 %v10065, %v10192
  %v10194 = vpop.f32.mrf.mxu0
  %10195 = vmatprep.mubr.bf16.mxu0 0
  %10196 = vmatmul.mubr.bf16.gmra.mxu0 %v10057
  %v10197 = vpop.f32.mrf.mxu0
  %v10198 = vadd.f32 %v10065, %v10197
  %v10199 = vpop.f32.mrf.mxu0
  %v10200 = vpop.f32.mrf.mxu0
  %v10201 = vadd.f32 %v10065, %v10200
  %v10202 = vpop.f32.mrf.mxu0
  %10203 = vmatprep.mubr.bf16.mxu0 0
  %10204 = vmatmul.mubr.bf16.gmra.mxu0 %v10058
  %v10205 = vpop.f32.mrf.mxu0
  %v10206 = vadd.f32 %v10065, %v10205
  %v10207 = vpop.f32.mrf.mxu0
  %v10208 = vpop.f32.mrf.mxu0
  %v10209 = vadd.f32 %v10065, %v10208
  %v10210 = vpop.f32.mrf.mxu0
  %10211 = vdwg.mxu0
  %v10212 = vmax.f32 %v10150, 0.0
  %v10213 = vmax.f32 %v10153, 0.0
  %v10214 = vmax.f32 %v10158, 0.0
  %v10215 = vmax.f32 %v10161, 0.0
  %v10216 = vmax.f32 %v10166, 0.0
  %v10217 = vmax.f32 %v10169, 0.0
  %v10218 = vmax.f32 %v10174, 0.0
  %v10219 = vmax.f32 %v10177, 0.0
  %v10220 = vmax.f32 %v10182, 0.0
  %v10221 = vmax.f32 %v10185, 0.0
  %v10222 = vmax.f32 %v10190, 0.0
  %v10223 = vmax.f32 %v10193, 0.0
  %v10224 = vmax.f32 %v10198, 0.0
  %v10225 = vmax.f32 %v10201, 0.0
  %v10226 = vmax.f32 %v10206, 0.0
  %v10227 = vmax.f32 %v10209, 0.0
  %v10228 = vand.u32 2147483647, %v10150
  %v10229 = vand.u32 2147483647, %v10153
  %v10230 = vand.u32 2147483647, %v10158
  %v10231 = vand.u32 2147483647, %v10161
  %v10232 = vand.u32 2147483647, %v10166
  %v10233 = vand.u32 2147483647, %v10169
  %v10234 = vand.u32 2147483647, %v10174
  %v10235 = vand.u32 2147483647, %v10177
  %v10236 = vand.u32 2147483647, %v10182
  %v10237 = vand.u32 2147483647, %v10185
  %v10238 = vand.u32 2147483647, %v10190
  %v10239 = vand.u32 2147483647, %v10193
  %v10240 = vand.u32 2147483647, %v10198
  %v10241 = vand.u32 2147483647, %v10201
  %v10242 = vand.u32 2147483647, %v10206
  %v10243 = vand.u32 2147483647, %v10209
  %v10244 = vsub.f32 0.0, %v10228
  %v10245 = vsub.f32 0.0, %v10229
  %v10246 = vsub.f32 0.0, %v10230
  %v10247 = vsub.f32 0.0, %v10231
  %v10248 = vsub.f32 0.0, %v10232
  %v10249 = vsub.f32 0.0, %v10233
  %v10250 = vsub.f32 0.0, %v10234
  %v10251 = vsub.f32 0.0, %v10235
  %v10252 = vsub.f32 0.0, %v10236
  %v10253 = vsub.f32 0.0, %v10237
  %v10254 = vsub.f32 0.0, %v10238
  %v10255 = vsub.f32 0.0, %v10239
  %v10256 = vsub.f32 0.0, %v10240
  %v10257 = vsub.f32 0.0, %v10241
  %v10258 = vsub.f32 0.0, %v10242
  %v10259 = vsub.f32 0.0, %v10243
  %v10260 = vmul.f32 %v10244, 1.442695
  %v10261 = vpow.pop %v10260
  %v10262 = vmul.f32 %v10245, 1.442695
  %v10263 = vpow.pop %v10262
  %v10264 = vmul.f32 %v10246, 1.442695
  %v10265 = vpow.pop %v10264
  %v10266 = vmul.f32 %v10247, 1.442695
  %v10267 = vpow.pop %v10266
  %v10268 = vmul.f32 %v10248, 1.442695
  %v10269 = vpow.pop %v10268
  %v10270 = vmul.f32 %v10249, 1.442695
  %v10271 = vpow.pop %v10270
  %v10272 = vmul.f32 %v10250, 1.442695
  %v10273 = vpow.pop %v10272
  %v10274 = vmul.f32 %v10251, 1.442695
  %v10275 = vpow.pop %v10274
  %v10276 = vmul.f32 %v10252, 1.442695
  %v10277 = vpow.pop %v10276
  %v10278 = vmul.f32 %v10253, 1.442695
  %v10279 = vpow.pop %v10278
  %v10280 = vmul.f32 %v10254, 1.442695
  %v10281 = vpow.pop %v10280
  %v10282 = vmul.f32 %v10255, 1.442695
  %v10283 = vpow.pop %v10282
  %v10284 = vmul.f32 %v10256, 1.442695
  %v10285 = vpow.pop %v10284
  %v10286 = vmul.f32 %v10257, 1.442695
  %v10287 = vpow.pop %v10286
  %v10288 = vmul.f32 %v10258, 1.442695
  %v10289 = vpow.pop %v10288
  %v10290 = vmul.f32 %v10259, 1.442695
  %v10291 = vpow.pop %v10290
  %v10292 = vadd.f32 %v10261, 1.0
  %v10293 = vadd.f32 %v10263, 1.0
  %v10294 = vadd.f32 %v10265, 1.0
  %v10295 = vadd.f32 %v10267, 1.0
  %v10296 = vadd.f32 %v10269, 1.0
  %v10297 = vadd.f32 %v10271, 1.0
  %v10298 = vadd.f32 %v10273, 1.0
  %v10299 = vadd.f32 %v10275, 1.0
  %v10300 = vadd.f32 %v10277, 1.0
  %v10301 = vadd.f32 %v10279, 1.0
  %v10302 = vadd.f32 %v10281, 1.0
  %v10303 = vadd.f32 %v10283, 1.0
  %v10304 = vadd.f32 %v10285, 1.0
  %v10305 = vadd.f32 %v10287, 1.0
  %v10306 = vadd.f32 %v10289, 1.0
  %v10307 = vadd.f32 %v10291, 1.0
  %v10308 = vlog2.pop %v10292
  %v10309 = vmul.f32 %v10308, 0.6931472
  %v10310 = vlog2.pop %v10293
  %v10311 = vmul.f32 %v10310, 0.6931472
  %v10312 = vlog2.pop %v10294
  %v10313 = vmul.f32 %v10312, 0.6931472
  %v10314 = vlog2.pop %v10295
  %v10315 = vmul.f32 %v10314, 0.6931472
  %v10316 = vlog2.pop %v10296
  %v10317 = vmul.f32 %v10316, 0.6931472
  %v10318 = vlog2.pop %v10297
  %v10319 = vmul.f32 %v10318, 0.6931472
  %v10320 = vlog2.pop %v10298
  %v10321 = vmul.f32 %v10320, 0.6931472
  %v10322 = vlog2.pop %v10299
  %v10323 = vmul.f32 %v10322, 0.6931472
  %v10324 = vlog2.pop %v10300
  %v10325 = vmul.f32 %v10324, 0.6931472
  %v10326 = vlog2.pop %v10301
  %v10327 = vmul.f32 %v10326, 0.6931472
  %v10328 = vlog2.pop %v10302
  %v10329 = vmul.f32 %v10328, 0.6931472
  %v10330 = vlog2.pop %v10303
  %v10331 = vmul.f32 %v10330, 0.6931472
  %v10332 = vlog2.pop %v10304
  %v10333 = vmul.f32 %v10332, 0.6931472
  %v10334 = vlog2.pop %v10305
  %v10335 = vmul.f32 %v10334, 0.6931472
  %v10336 = vlog2.pop %v10306
  %v10337 = vmul.f32 %v10336, 0.6931472
  %v10338 = vlog2.pop %v10307
  %v10339 = vmul.f32 %v10338, 0.6931472
  %v10340 = vadd.f32 %v10212, %v10309
  %v10341 = vadd.f32 %v10213, %v10311
  %v10342 = vadd.f32 %v10214, %v10313
  %v10343 = vadd.f32 %v10215, %v10315
  %v10344 = vadd.f32 %v10216, %v10317
  %v10345 = vadd.f32 %v10217, %v10319
  %v10346 = vadd.f32 %v10218, %v10321
  %v10347 = vadd.f32 %v10219, %v10323
  %v10348 = vadd.f32 %v10220, %v10325
  %v10349 = vadd.f32 %v10221, %v10327
  %v10350 = vadd.f32 %v10222, %v10329
  %v10351 = vadd.f32 %v10223, %v10331
  %v10352 = vadd.f32 %v10224, %v10333
  %v10353 = vadd.f32 %v10225, %v10335
  %v10354 = vadd.f32 %v10226, %v10337
  %v10355 = vadd.f32 %v10227, %v10339
  %v10356 = vsub.f32 %v10340, 0.6931472
  %v10357 = vsub.f32 %v10341, 0.6931472
  %v10358 = vsub.f32 %v10342, 0.6931472
  %v10359 = vsub.f32 %v10343, 0.6931472
  %v10360 = vsub.f32 %v10344, 0.6931472
  %v10361 = vsub.f32 %v10345, 0.6931472
  %v10362 = vsub.f32 %v10346, 0.6931472
  %v10363 = vsub.f32 %v10347, 0.6931472
  %v10364 = vsub.f32 %v10348, 0.6931472
  %v10365 = vsub.f32 %v10349, 0.6931472
  %v10366 = vsub.f32 %v10350, 0.6931472
  %v10367 = vsub.f32 %v10351, 0.6931472
  %v10368 = vsub.f32 %v10352, 0.6931472
  %v10369 = vsub.f32 %v10353, 0.6931472
  %v10370 = vsub.f32 %v10354, 0.6931472
  %v10371 = vsub.f32 %v10355, 0.6931472
  %s10372 = scalar_lea.vmem %s20, 128
  %v10373 = vld [vmem:[%s10372] sm:$0xf]
  %v10374 = vld [vmem:[%s10372 + $0x4] sm:$0xf]
  %v10375 = vld [vmem:[%s10372 + $0x8] sm:$0xf]
  %v10376 = vld [vmem:[%s10372 + $0xc] sm:$0xf]
  %v10377 = vld [vmem:[%s10372 + $0x10] sm:$0xf]
  %v10378 = vld [vmem:[%s10372 + $0x14] sm:$0xf]
  %v10379 = vld [vmem:[%s10372 + $0x18] sm:$0xf]
  %v10380 = vld [vmem:[%s10372 + $0x1c] sm:$0xf]
  %v10381 = vld [vmem:[%s10372 + $0x20] sm:$0xf]
  %v10382 = vld [vmem:[%s10372 + $0x24] sm:$0xf]
  %v10383 = vld [vmem:[%s10372 + $0x28] sm:$0xf]
  %v10384 = vld [vmem:[%s10372 + $0x2c] sm:$0xf]
  %v10385 = vld [vmem:[%s10372 + $0x30] sm:$0xf]
  %v10386 = vld [vmem:[%s10372 + $0x34] sm:$0xf]
  %v10387 = vld [vmem:[%s10372 + $0x38] sm:$0xf]
  %v10388 = vld [vmem:[%s10372 + $0x3c] sm:$0xf]
  %v10389 = vpack.c.bf16 %v10357, %v10356
  %v10390 = vpack.c.bf16 %v10359, %v10358
  %v10391 = vpack.c.bf16 %v10361, %v10360
  %v10392 = vpack.c.bf16 %v10363, %v10362
  %v10393 = vpack.c.bf16 %v10365, %v10364
  %v10394 = vpack.c.bf16 %v10367, %v10366
  %v10395 = vpack.c.bf16 %v10369, %v10368
  %v10396 = vpack.c.bf16 %v10371, %v10370
  %s10397 = scalar_lea.vmem %s21, 2
  %v10398 = vld [vmem:[%s10397] sm:$0x1]
  %v10400 = vlaneseq
  %v10401 = vshrl.u32 %v10400, 7
  %v10402 = vsub.s32 0, %v10401
  %v10403 = vrot.slane %v10398, %v10402
  %v10421 = vunpack.c.l.b16 %v10373
  %v10422 = vunpack.c.l.b16 %v10374
  %v10423 = vunpack.c.l.b16 %v10375
  %v10424 = vunpack.c.l.b16 %v10376
  %v10425 = vunpack.c.l.b16 %v10377
  %v10426 = vunpack.c.l.b16 %v10378
  %v10427 = vunpack.c.l.b16 %v10379
  %v10428 = vunpack.c.l.b16 %v10380
  %v10429 = vunpack.c.l.b16 %v10381
  %v10430 = vunpack.c.l.b16 %v10382
  %v10431 = vunpack.c.l.b16 %v10383
  %v10432 = vunpack.c.l.b16 %v10384
  %v10433 = vunpack.c.l.b16 %v10385
  %v10434 = vunpack.c.l.b16 %v10386
  %v10435 = vunpack.c.l.b16 %v10387
  %v10436 = vunpack.c.l.b16 %v10388
  %v10437 = vpack.c.b16 %v10422, %v10421
  %v10438 = vpack.c.b16 %v10424, %v10423
  %v10439 = vpack.c.b16 %v10426, %v10425
  %v10440 = vpack.c.b16 %v10428, %v10427
  %v10441 = vpack.c.b16 %v10430, %v10429
  %v10442 = vpack.c.b16 %v10432, %v10431
  %v10443 = vpack.c.b16 %v10434, %v10433
  %v10444 = vpack.c.b16 %v10436, %v10435
  %10453 = vmatprep.subr.bf16.mxu0 0
  %10454 = vmatpush1.bf16.msra.mxu0 %v10444
  %10455 = vmatprep.subr.bf16.mxu0 0
  %10456 = vmatpush1.bf16.msra.mxu0 %v10443
  %10457 = vmatprep.subr.bf16.mxu0 0
  %10458 = vmatpush1.bf16.msra.mxu0 %v10442
  %10459 = vmatprep.subr.bf16.mxu0 0
  %10460 = vmatpush1.bf16.msra.mxu0 %v10441
  %10461 = vmatprep.subr.bf16.mxu0 0
  %10462 = vmatpush1.bf16.msra.mxu0 %v10440
  %10463 = vmatprep.subr.bf16.mxu0 0
  %10464 = vmatpush1.bf16.msra.mxu0 %v10439
  %10465 = vmatprep.subr.bf16.mxu0 0
  %10466 = vmatpush1.bf16.msra.mxu0 %v10438
  %10467 = vmatprep.subr.bf16.mxu0 0
  %10468 = vmatpush1.bf16.msra.mxu0 %v10437
  %10469 = vmatprep.subr.bf16.mxu0 0
  %10470 = vmatpush2.bf16.msra.mxu0 0
  %10471 = vmatprep.subr.bf16.mxu0 0
  %10472 = vmatpush2.bf16.msra.mxu0 0
  %10473 = vmatprep.subr.bf16.mxu0 0
  %10474 = vmatpush2.bf16.msra.mxu0 0
  %10475 = vmatprep.subr.bf16.mxu0 0
  %10476 = vmatpush2.bf16.msra.mxu0 0
  %10477 = vmatprep.subr.bf16.mxu0 0
  %10478 = vmatpush2.bf16.msra.mxu0 0
  %10479 = vmatprep.subr.bf16.mxu0 0
  %10480 = vmatpush2.bf16.msra.mxu0 0
  %10481 = vmatprep.subr.bf16.mxu0 0
  %10482 = vmatpush2.bf16.msra.mxu0 0
  %10483 = vmatprep.subr.bf16.mxu0 0
  %10484 = vmatpush2.bf16.msra.mxu0 0
  %10485 = vmatprep.mubr.bf16.mxu0 0
  %10486 = vmatmul.mubr.bf16.gmra.mxu0 %v10389
  %v10487 = vpop.f32.mrf.mxu0
  %v10488 = vadd.f32 %v10403, %v10487
  %v10489 = vpop.f32.mrf.mxu0
  %v10490 = vpop.f32.mrf.mxu0
  %v10491 = vadd.f32 %v10403, %v10490
  %v10492 = vpop.f32.mrf.mxu0
  %10493 = vmatprep.mubr.bf16.mxu0 0
  %10494 = vmatmul.mubr.bf16.gmra.mxu0 %v10390
  %v10495 = vpop.f32.mrf.mxu0
  %v10496 = vadd.f32 %v10403, %v10495
  %v10497 = vpop.f32.mrf.mxu0
  %v10498 = vpop.f32.mrf.mxu0
  %v10499 = vadd.f32 %v10403, %v10498
  %v10500 = vpop.f32.mrf.mxu0
  %10501 = vmatprep.mubr.bf16.mxu0 0
  %10502 = vmatmul.mubr.bf16.gmra.mxu0 %v10391
  %v10503 = vpop.f32.mrf.mxu0
  %v10504 = vadd.f32 %v10403, %v10503
  %v10505 = vpop.f32.mrf.mxu0
  %v10506 = vpop.f32.mrf.mxu0
  %v10507 = vadd.f32 %v10403, %v10506
  %v10508 = vpop.f32.mrf.mxu0
  %10509 = vmatprep.mubr.bf16.mxu0 0
  %10510 = vmatmul.mubr.bf16.gmra.mxu0 %v10392
  %v10511 = vpop.f32.mrf.mxu0
  %v10512 = vadd.f32 %v10403, %v10511
  %v10513 = vpop.f32.mrf.mxu0
  %v10514 = vpop.f32.mrf.mxu0
  %v10515 = vadd.f32 %v10403, %v10514
  %v10516 = vpop.f32.mrf.mxu0
  %10517 = vmatprep.mubr.bf16.mxu0 0
  %10518 = vmatmul.mubr.bf16.gmra.mxu0 %v10393
  %v10519 = vpop.f32.mrf.mxu0
  %v10520 = vadd.f32 %v10403, %v10519
  %v10521 = vpop.f32.mrf.mxu0
  %v10522 = vpop.f32.mrf.mxu0
  %v10523 = vadd.f32 %v10403, %v10522
  %v10524 = vpop.f32.mrf.mxu0
  %10525 = vmatprep.mubr.bf16.mxu0 0
  %10526 = vmatmul.mubr.bf16.gmra.mxu0 %v10394
  %v10527 = vpop.f32.mrf.mxu0
  %v10528 = vadd.f32 %v10403, %v10527
  %v10529 = vpop.f32.mrf.mxu0
  %v10530 = vpop.f32.mrf.mxu0
  %v10531 = vadd.f32 %v10403, %v10530
  %v10532 = vpop.f32.mrf.mxu0
  %10533 = vmatprep.mubr.bf16.mxu0 0
  %10534 = vmatmul.mubr.bf16.gmra.mxu0 %v10395
  %v10535 = vpop.f32.mrf.mxu0
  %v10536 = vadd.f32 %v10403, %v10535
  %v10537 = vpop.f32.mrf.mxu0
  %v10538 = vpop.f32.mrf.mxu0
  %v10539 = vadd.f32 %v10403, %v10538
  %v10540 = vpop.f32.mrf.mxu0
  %10541 = vmatprep.mubr.bf16.mxu0 0
  %10542 = vmatmul.mubr.bf16.gmra.mxu0 %v10396
  %v10543 = vpop.f32.mrf.mxu0
  %v10544 = vadd.f32 %v10403, %v10543
  %v10545 = vpop.f32.mrf.mxu0
  %v10546 = vpop.f32.mrf.mxu0
  %v10547 = vadd.f32 %v10403, %v10546
  %v10548 = vpop.f32.mrf.mxu0
  %10549 = vdwg.mxu0
  %v10550 = vadd.f32 %v8698, %v10488
  %v10551 = vadd.f32 %v8699, %v10491
  %v10552 = vadd.f32 %v8700, %v10496
  %v10553 = vadd.f32 %v8701, %v10499
  %v10554 = vadd.f32 %v8702, %v10504
  %v10555 = vadd.f32 %v8703, %v10507
  %v10556 = vadd.f32 %v8704, %v10512
  %v10557 = vadd.f32 %v8705, %v10515
  %v10558 = vadd.f32 %v8706, %v10520
  %v10559 = vadd.f32 %v8707, %v10523
  %v10560 = vadd.f32 %v8708, %v10528
  %v10561 = vadd.f32 %v8709, %v10531
  %v10562 = vadd.f32 %v8710, %v10536
  %v10563 = vadd.f32 %v8711, %v10539
  %v10564 = vadd.f32 %v8712, %v10544
  %v10565 = vadd.f32 %v8713, %v10547
  %v10566 = vld [vmem:[%s9] sm:$0xf]
  %v10567 = vld [vmem:[%s9 + $0x4] sm:$0xf]
  %v10568 = vld [vmem:[%s9 + $0x8] sm:$0xf]
  %v10569 = vld [vmem:[%s9 + $0xc] sm:$0xf]
  %v10570 = vld [vmem:[%s9 + $0x10] sm:$0xf]
  %v10571 = vld [vmem:[%s9 + $0x14] sm:$0xf]
  %v10572 = vld [vmem:[%s9 + $0x18] sm:$0xf]
  %v10573 = vld [vmem:[%s9 + $0x1c] sm:$0xf]
  %v10574 = vld [vmem:[%s9 + $0x20] sm:$0xf]
  %v10575 = vld [vmem:[%s9 + $0x24] sm:$0xf]
  %v10576 = vld [vmem:[%s9 + $0x28] sm:$0xf]
  %v10577 = vld [vmem:[%s9 + $0x2c] sm:$0xf]
  %v10578 = vld [vmem:[%s9 + $0x30] sm:$0xf]
  %v10579 = vld [vmem:[%s9 + $0x34] sm:$0xf]
  %v10580 = vld [vmem:[%s9 + $0x38] sm:$0xf]
  %v10581 = vld [vmem:[%s9 + $0x3c] sm:$0xf]
  %v10582 = vpack.c.bf16 %v10551, %v10550
  %v10583 = vpack.c.bf16 %v10553, %v10552
  %v10584 = vpack.c.bf16 %v10555, %v10554
  %v10585 = vpack.c.bf16 %v10557, %v10556
  %v10586 = vpack.c.bf16 %v10559, %v10558
  %v10587 = vpack.c.bf16 %v10561, %v10560
  %v10588 = vpack.c.bf16 %v10563, %v10562
  %v10589 = vpack.c.bf16 %v10565, %v10564
  %v10590 = vld [vmem:[%s10] sm:$0x1]
  %v10592 = vlaneseq
  %v10593 = vshrl.u32 %v10592, 7
  %v10594 = vsub.s32 0, %v10593
  %v10595 = vrot.slane %v10590, %v10594
  %v10613 = vunpack.c.l.b16 %v10566
  %v10614 = vunpack.c.l.b16 %v10567
  %v10615 = vunpack.c.l.b16 %v10568
  %v10616 = vunpack.c.l.b16 %v10569
  %v10617 = vunpack.c.l.b16 %v10570
  %v10618 = vunpack.c.l.b16 %v10571
  %v10619 = vunpack.c.l.b16 %v10572
  %v10620 = vunpack.c.l.b16 %v10573
  %v10621 = vunpack.c.l.b16 %v10574
  %v10622 = vunpack.c.l.b16 %v10575
  %v10623 = vunpack.c.l.b16 %v10576
  %v10624 = vunpack.c.l.b16 %v10577
  %v10625 = vunpack.c.l.b16 %v10578
  %v10626 = vunpack.c.l.b16 %v10579
  %v10627 = vunpack.c.l.b16 %v10580
  %v10628 = vunpack.c.l.b16 %v10581
  %v10629 = vpack.c.b16 %v10614, %v10613
  %v10630 = vpack.c.b16 %v10616, %v10615
  %v10631 = vpack.c.b16 %v10618, %v10617
  %v10632 = vpack.c.b16 %v10620, %v10619
  %v10633 = vpack.c.b16 %v10622, %v10621
  %v10634 = vpack.c.b16 %v10624, %v10623
  %v10635 = vpack.c.b16 %v10626, %v10625
  %v10636 = vpack.c.b16 %v10628, %v10627
  %10645 = vmatprep.subr.bf16.mxu0 0
  %10646 = vmatpush1.bf16.msra.mxu0 %v10636
  %10647 = vmatprep.subr.bf16.mxu0 0
  %10648 = vmatpush1.bf16.msra.mxu0 %v10635
  %10649 = vmatprep.subr.bf16.mxu0 0
  %10650 = vmatpush1.bf16.msra.mxu0 %v10634
  %10651 = vmatprep.subr.bf16.mxu0 0
  %10652 = vmatpush1.bf16.msra.mxu0 %v10633
  %10653 = vmatprep.subr.bf16.mxu0 0
  %10654 = vmatpush1.bf16.msra.mxu0 %v10632
  %10655 = vmatprep.subr.bf16.mxu0 0
  %10656 = vmatpush1.bf16.msra.mxu0 %v10631
  %10657 = vmatprep.subr.bf16.mxu0 0
  %10658 = vmatpush1.bf16.msra.mxu0 %v10630
  %10659 = vmatprep.subr.bf16.mxu0 0
  %10660 = vmatpush1.bf16.msra.mxu0 %v10629
  %10661 = vmatprep.subr.bf16.mxu0 0
  %10662 = vmatpush2.bf16.msra.mxu0 0
  %10663 = vmatprep.subr.bf16.mxu0 0
  %10664 = vmatpush2.bf16.msra.mxu0 0
  %10665 = vmatprep.subr.bf16.mxu0 0
  %10666 = vmatpush2.bf16.msra.mxu0 0
  %10667 = vmatprep.subr.bf16.mxu0 0
  %10668 = vmatpush2.bf16.msra.mxu0 0
  %10669 = vmatprep.subr.bf16.mxu0 0
  %10670 = vmatpush2.bf16.msra.mxu0 0
  %10671 = vmatprep.subr.bf16.mxu0 0
  %10672 = vmatpush2.bf16.msra.mxu0 0
  %10673 = vmatprep.subr.bf16.mxu0 0
  %10674 = vmatpush2.bf16.msra.mxu0 0
  %10675 = vmatprep.subr.bf16.mxu0 0
  %10676 = vmatpush2.bf16.msra.mxu0 0
  %10677 = vmatprep.mubr.bf16.mxu0 0
  %10678 = vmatmul.mubr.bf16.gmra.mxu0 %v10582
  %v10679 = vpop.f32.mrf.mxu0
  %v10680 = vadd.f32 %v10595, %v10679
  %v10681 = vpop.f32.mrf.mxu0
  %v10682 = vpop.f32.mrf.mxu0
  %v10683 = vadd.f32 %v10595, %v10682
  %v10684 = vpop.f32.mrf.mxu0
  %10685 = vmatprep.mubr.bf16.mxu0 0
  %10686 = vmatmul.mubr.bf16.gmra.mxu0 %v10583
  %v10687 = vpop.f32.mrf.mxu0
  %v10688 = vadd.f32 %v10595, %v10687
  %v10689 = vpop.f32.mrf.mxu0
  %v10690 = vpop.f32.mrf.mxu0
  %v10691 = vadd.f32 %v10595, %v10690
  %v10692 = vpop.f32.mrf.mxu0
  %10693 = vmatprep.mubr.bf16.mxu0 0
  %10694 = vmatmul.mubr.bf16.gmra.mxu0 %v10584
  %v10695 = vpop.f32.mrf.mxu0
  %v10696 = vadd.f32 %v10595, %v10695
  %v10697 = vpop.f32.mrf.mxu0
  %v10698 = vpop.f32.mrf.mxu0
  %v10699 = vadd.f32 %v10595, %v10698
  %v10700 = vpop.f32.mrf.mxu0
  %10701 = vmatprep.mubr.bf16.mxu0 0
  %10702 = vmatmul.mubr.bf16.gmra.mxu0 %v10585
  %v10703 = vpop.f32.mrf.mxu0
  %v10704 = vadd.f32 %v10595, %v10703
  %v10705 = vpop.f32.mrf.mxu0
  %v10706 = vpop.f32.mrf.mxu0
  %v10707 = vadd.f32 %v10595, %v10706
  %v10708 = vpop.f32.mrf.mxu0
  %10709 = vmatprep.mubr.bf16.mxu0 0
  %10710 = vmatmul.mubr.bf16.gmra.mxu0 %v10586
  %v10711 = vpop.f32.mrf.mxu0
  %v10712 = vadd.f32 %v10595, %v10711
  %v10713 = vpop.f32.mrf.mxu0
  %v10714 = vpop.f32.mrf.mxu0
  %v10715 = vadd.f32 %v10595, %v10714
  %v10716 = vpop.f32.mrf.mxu0
  %10717 = vmatprep.mubr.bf16.mxu0 0
  %10718 = vmatmul.mubr.bf16.gmra.mxu0 %v10587
  %v10719 = vpop.f32.mrf.mxu0
  %v10720 = vadd.f32 %v10595, %v10719
  %v10721 = vpop.f32.mrf.mxu0
  %v10722 = vpop.f32.mrf.mxu0
  %v10723 = vadd.f32 %v10595, %v10722
  %v10724 = vpop.f32.mrf.mxu0
  %10725 = vmatprep.mubr.bf16.mxu0 0
  %10726 = vmatmul.mubr.bf16.gmra.mxu0 %v10588
  %v10727 = vpop.f32.mrf.mxu0
  %v10728 = vadd.f32 %v10595, %v10727
  %v10729 = vpop.f32.mrf.mxu0
  %v10730 = vpop.f32.mrf.mxu0
  %v10731 = vadd.f32 %v10595, %v10730
  %v10732 = vpop.f32.mrf.mxu0
  %10733 = vmatprep.mubr.bf16.mxu0 0
  %10734 = vmatmul.mubr.bf16.gmra.mxu0 %v10589
  %v10735 = vpop.f32.mrf.mxu0
  %v10736 = vadd.f32 %v10595, %v10735
  %v10737 = vpop.f32.mrf.mxu0
  %v10738 = vpop.f32.mrf.mxu0
  %v10739 = vadd.f32 %v10595, %v10738
  %v10740 = vpop.f32.mrf.mxu0
  %10741 = vdwg.mxu0
  %v10742 = vmul.f32 %v10680, 0.5
  %v10743 = vmul.f32 %v10683, 0.5
  %v10744 = vmul.f32 %v10688, 0.5
  %v10745 = vmul.f32 %v10691, 0.5
  %v10746 = vmul.f32 %v10696, 0.5
  %v10747 = vmul.f32 %v10699, 0.5
  %v10748 = vmul.f32 %v10704, 0.5
  %v10749 = vmul.f32 %v10707, 0.5
  %v10750 = vmul.f32 %v10712, 0.5
  %v10751 = vmul.f32 %v10715, 0.5
  %v10752 = vmul.f32 %v10720, 0.5
  %v10753 = vmul.f32 %v10723, 0.5
  %v10754 = vmul.f32 %v10728, 0.5
  %v10755 = vmul.f32 %v10731, 0.5
  %v10756 = vmul.f32 %v10736, 0.5
  %v10757 = vmul.f32 %v10739, 0.5
  %v10758 = vmul.f32 %v10680, 0.044715
  %v10759 = vmul.f32 %v10683, 0.044715
  %v10760 = vmul.f32 %v10688, 0.044715
  %v10761 = vmul.f32 %v10691, 0.044715
  %v10762 = vmul.f32 %v10696, 0.044715
  %v10763 = vmul.f32 %v10699, 0.044715
  %v10764 = vmul.f32 %v10704, 0.044715
  %v10765 = vmul.f32 %v10707, 0.044715
  %v10766 = vmul.f32 %v10712, 0.044715
  %v10767 = vmul.f32 %v10715, 0.044715
  %v10768 = vmul.f32 %v10720, 0.044715
  %v10769 = vmul.f32 %v10723, 0.044715
  %v10770 = vmul.f32 %v10728, 0.044715
  %v10771 = vmul.f32 %v10731, 0.044715
  %v10772 = vmul.f32 %v10736, 0.044715
  %v10773 = vmul.f32 %v10739, 0.044715
  %v10774 = vmul.f32 %v10758, %v10680
  %v10775 = vmul.f32 %v10759, %v10683
  %v10776 = vmul.f32 %v10760, %v10688
  %v10777 = vmul.f32 %v10761, %v10691
  %v10778 = vmul.f32 %v10762, %v10696
  %v10779 = vmul.f32 %v10763, %v10699
  %v10780 = vmul.f32 %v10764, %v10704
  %v10781 = vmul.f32 %v10765, %v10707
  %v10782 = vmul.f32 %v10766, %v10712
  %v10783 = vmul.f32 %v10767, %v10715
  %v10784 = vmul.f32 %v10768, %v10720
  %v10785 = vmul.f32 %v10769, %v10723
  %v10786 = vmul.f32 %v10770, %v10728
  %v10787 = vmul.f32 %v10771, %v10731
  %v10788 = vmul.f32 %v10772, %v10736
  %v10789 = vmul.f32 %v10773, %v10739
  %v10790 = vmul.f32 %v10774, %v10680
  %v10791 = vmul.f32 %v10775, %v10683
  %v10792 = vmul.f32 %v10776, %v10688
  %v10793 = vmul.f32 %v10777, %v10691
  %v10794 = vmul.f32 %v10778, %v10696
  %v10795 = vmul.f32 %v10779, %v10699
  %v10796 = vmul.f32 %v10780, %v10704
  %v10797 = vmul.f32 %v10781, %v10707
  %v10798 = vmul.f32 %v10782, %v10712
  %v10799 = vmul.f32 %v10783, %v10715
  %v10800 = vmul.f32 %v10784, %v10720
  %v10801 = vmul.f32 %v10785, %v10723
  %v10802 = vmul.f32 %v10786, %v10728
  %v10803 = vmul.f32 %v10787, %v10731
  %v10804 = vmul.f32 %v10788, %v10736
  %v10805 = vmul.f32 %v10789, %v10739
  %v10806 = vadd.f32 %v10680, %v10790
  %v10807 = vadd.f32 %v10683, %v10791
  %v10808 = vadd.f32 %v10688, %v10792
  %v10809 = vadd.f32 %v10691, %v10793
  %v10810 = vadd.f32 %v10696, %v10794
  %v10811 = vadd.f32 %v10699, %v10795
  %v10812 = vadd.f32 %v10704, %v10796
  %v10813 = vadd.f32 %v10707, %v10797
  %v10814 = vadd.f32 %v10712, %v10798
  %v10815 = vadd.f32 %v10715, %v10799
  %v10816 = vadd.f32 %v10720, %v10800
  %v10817 = vadd.f32 %v10723, %v10801
  %v10818 = vadd.f32 %v10728, %v10802
  %v10819 = vadd.f32 %v10731, %v10803
  %v10820 = vadd.f32 %v10736, %v10804
  %v10821 = vadd.f32 %v10739, %v10805
  %v10822 = vmul.f32 %v10806, 0.7978846
  %v10823 = vmul.f32 %v10807, 0.7978846
  %v10824 = vmul.f32 %v10808, 0.7978846
  %v10825 = vmul.f32 %v10809, 0.7978846
  %v10826 = vmul.f32 %v10810, 0.7978846
  %v10827 = vmul.f32 %v10811, 0.7978846
  %v10828 = vmul.f32 %v10812, 0.7978846
  %v10829 = vmul.f32 %v10813, 0.7978846
  %v10830 = vmul.f32 %v10814, 0.7978846
  %v10831 = vmul.f32 %v10815, 0.7978846
  %v10832 = vmul.f32 %v10816, 0.7978846
  %v10833 = vmul.f32 %v10817, 0.7978846
  %v10834 = vmul.f32 %v10818, 0.7978846
  %v10835 = vmul.f32 %v10819, 0.7978846
  %v10836 = vmul.f32 %v10820, 0.7978846
  %v10837 = vmul.f32 %v10821, 0.7978846
  %v10838 = vtanh.pop %v10822
  %v10839 = vtanh.pop %v10823
  %v10840 = vtanh.pop %v10824
  %v10841 = vtanh.pop %v10825
  %v10842 = vtanh.pop %v10826
  %v10843 = vtanh.pop %v10827
  %v10844 = vtanh.pop %v10828
  %v10845 = vtanh.pop %v10829
  %v10846 = vtanh.pop %v10830
  %v10847 = vtanh.pop %v10831
  %v10848 = vtanh.pop %v10832
  %v10849 = vtanh.pop %v10833
  %v10850 = vtanh.pop %v10834
  %v10851 = vtanh.pop %v10835
  %v10852 = vtanh.pop %v10836
  %v10853 = vtanh.pop %v10837
  %v10854 = vadd.f32 %v10838, 1.0
  %v10855 = vadd.f32 %v10839, 1.0
  %v10856 = vadd.f32 %v10840, 1.0
  %v10857 = vadd.f32 %v10841, 1.0
  %v10858 = vadd.f32 %v10842, 1.0
  %v10859 = vadd.f32 %v10843, 1.0
  %v10860 = vadd.f32 %v10844, 1.0
  %v10861 = vadd.f32 %v10845, 1.0
  %v10862 = vadd.f32 %v10846, 1.0
  %v10863 = vadd.f32 %v10847, 1.0
  %v10864 = vadd.f32 %v10848, 1.0
  %v10865 = vadd.f32 %v10849, 1.0
  %v10866 = vadd.f32 %v10850, 1.0
  %v10867 = vadd.f32 %v10851, 1.0
  %v10868 = vadd.f32 %v10852, 1.0
  %v10869 = vadd.f32 %v10853, 1.0
  %v10870 = vmul.f32 %v10742, %v10854
  %v10871 = vmul.f32 %v10743, %v10855
  %v10872 = vmul.f32 %v10744, %v10856
  %v10873 = vmul.f32 %v10745, %v10857
  %v10874 = vmul.f32 %v10746, %v10858
  %v10875 = vmul.f32 %v10747, %v10859
  %v10876 = vmul.f32 %v10748, %v10860
  %v10877 = vmul.f32 %v10749, %v10861
  %v10878 = vmul.f32 %v10750, %v10862
  %v10879 = vmul.f32 %v10751, %v10863
  %v10880 = vmul.f32 %v10752, %v10864
  %v10881 = vmul.f32 %v10753, %v10865
  %v10882 = vmul.f32 %v10754, %v10866
  %v10883 = vmul.f32 %v10755, %v10867
  %v10884 = vmul.f32 %v10756, %v10868
  %v10885 = vmul.f32 %v10757, %v10869
  %v10886 = vld [vmem:[%s11] sm:$0xf]
  %v10887 = vld [vmem:[%s11 + $0x4] sm:$0xf]
  %v10888 = vld [vmem:[%s11 + $0x8] sm:$0xf]
  %v10889 = vld [vmem:[%s11 + $0xc] sm:$0xf]
  %v10890 = vld [vmem:[%s11 + $0x10] sm:$0xf]
  %v10891 = vld [vmem:[%s11 + $0x14] sm:$0xf]
  %v10892 = vld [vmem:[%s11 + $0x18] sm:$0xf]
  %v10893 = vld [vmem:[%s11 + $0x1c] sm:$0xf]
  %v10894 = vld [vmem:[%s11 + $0x20] sm:$0xf]
  %v10895 = vld [vmem:[%s11 + $0x24] sm:$0xf]
  %v10896 = vld [vmem:[%s11 + $0x28] sm:$0xf]
  %v10897 = vld [vmem:[%s11 + $0x2c] sm:$0xf]
  %v10898 = vld [vmem:[%s11 + $0x30] sm:$0xf]
  %v10899 = vld [vmem:[%s11 + $0x34] sm:$0xf]
  %v10900 = vld [vmem:[%s11 + $0x38] sm:$0xf]
  %v10901 = vld [vmem:[%s11 + $0x3c] sm:$0xf]
  %v10902 = vpack.c.bf16 %v10871, %v10870
  %v10903 = vpack.c.bf16 %v10873, %v10872
  %v10904 = vpack.c.bf16 %v10875, %v10874
  %v10905 = vpack.c.bf16 %v10877, %v10876
  %v10906 = vpack.c.bf16 %v10879, %v10878
  %v10907 = vpack.c.bf16 %v10881, %v10880
  %v10908 = vpack.c.bf16 %v10883, %v10882
  %v10909 = vpack.c.bf16 %v10885, %v10884
  %v10910 = vld [vmem:[%s12] sm:$0x1]
  %v10912 = vlaneseq
  %v10913 = vshrl.u32 %v10912, 7
  %v10914 = vsub.s32 0, %v10913
  %v10915 = vrot.slane %v10910, %v10914
  %v10933 = vunpack.c.l.b16 %v10886
  %v10934 = vunpack.c.l.b16 %v10887
  %v10935 = vunpack.c.l.b16 %v10888
  %v10936 = vunpack.c.l.b16 %v10889
  %v10937 = vunpack.c.l.b16 %v10890
  %v10938 = vunpack.c.l.b16 %v10891
  %v10939 = vunpack.c.l.b16 %v10892
  %v10940 = vunpack.c.l.b16 %v10893
  %v10941 = vunpack.c.l.b16 %v10894
  %v10942 = vunpack.c.l.b16 %v10895
  %v10943 = vunpack.c.l.b16 %v10896
  %v10944 = vunpack.c.l.b16 %v10897
  %v10945 = vunpack.c.l.b16 %v10898
  %v10946 = vunpack.c.l.b16 %v10899
  %v10947 = vunpack.c.l.b16 %v10900
  %v10948 = vunpack.c.l.b16 %v10901
  %v10949 = vpack.c.b16 %v10934, %v10933
  %v10950 = vpack.c.b16 %v10936, %v10935
  %v10951 = vpack.c.b16 %v10938, %v10937
  %v10952 = vpack.c.b16 %v10940, %v10939
  %v10953 = vpack.c.b16 %v10942, %v10941
  %v10954 = vpack.c.b16 %v10944, %v10943
  %v10955 = vpack.c.b16 %v10946, %v10945
  %v10956 = vpack.c.b16 %v10948, %v10947
  %10965 = vmatprep.subr.bf16.mxu0 0
  %10966 = vmatpush1.bf16.msra.mxu0 %v10956
  %10967 = vmatprep.subr.bf16.mxu0 0
  %10968 = vmatpush1.bf16.msra.mxu0 %v10955
  %10969 = vmatprep.subr.bf16.mxu0 0
  %10970 = vmatpush1.bf16.msra.mxu0 %v10954
  %10971 = vmatprep.subr.bf16.mxu0 0
  %10972 = vmatpush1.bf16.msra.mxu0 %v10953
  %10973 = vmatprep.subr.bf16.mxu0 0
  %10974 = vmatpush1.bf16.msra.mxu0 %v10952
  %10975 = vmatprep.subr.bf16.mxu0 0
  %10976 = vmatpush1.bf16.msra.mxu0 %v10951
  %10977 = vmatprep.subr.bf16.mxu0 0
  %10978 = vmatpush1.bf16.msra.mxu0 %v10950
  %10979 = vmatprep.subr.bf16.mxu0 0
  %10980 = vmatpush1.bf16.msra.mxu0 %v10949
  %10981 = vmatprep.subr.bf16.mxu0 0
  %10982 = vmatpush2.bf16.msra.mxu0 0
  %10983 = vmatprep.subr.bf16.mxu0 0
  %10984 = vmatpush2.bf16.msra.mxu0 0
  %10985 = vmatprep.subr.bf16.mxu0 0
  %10986 = vmatpush2.bf16.msra.mxu0 0
  %10987 = vmatprep.subr.bf16.mxu0 0
  %10988 = vmatpush2.bf16.msra.mxu0 0
  %10989 = vmatprep.subr.bf16.mxu0 0
  %10990 = vmatpush2.bf16.msra.mxu0 0
  %10991 = vmatprep.subr.bf16.mxu0 0
  %10992 = vmatpush2.bf16.msra.mxu0 0
  %10993 = vmatprep.subr.bf16.mxu0 0
  %10994 = vmatpush2.bf16.msra.mxu0 0
  %10995 = vmatprep.subr.bf16.mxu0 0
  %10996 = vmatpush2.bf16.msra.mxu0 0
  %10997 = vmatprep.mubr.bf16.mxu0 0
  %10998 = vmatmul.mubr.bf16.gmra.mxu0 %v10902
  %v10999 = vpop.f32.mrf.mxu0
  %v11000 = vadd.f32 %v10915, %v10999
  %v11001 = vpop.f32.mrf.mxu0
  %v11002 = vpop.f32.mrf.mxu0
  %v11003 = vadd.f32 %v10915, %v11002
  %v11004 = vpop.f32.mrf.mxu0
  %11005 = vmatprep.mubr.bf16.mxu0 0
  %11006 = vmatmul.mubr.bf16.gmra.mxu0 %v10903
  %v11007 = vpop.f32.mrf.mxu0
  %v11008 = vadd.f32 %v10915, %v11007
  %v11009 = vpop.f32.mrf.mxu0
  %v11010 = vpop.f32.mrf.mxu0
  %v11011 = vadd.f32 %v10915, %v11010
  %v11012 = vpop.f32.mrf.mxu0
  %11013 = vmatprep.mubr.bf16.mxu0 0
  %11014 = vmatmul.mubr.bf16.gmra.mxu0 %v10904
  %v11015 = vpop.f32.mrf.mxu0
  %v11016 = vadd.f32 %v10915, %v11015
  %v11017 = vpop.f32.mrf.mxu0
  %v11018 = vpop.f32.mrf.mxu0
  %v11019 = vadd.f32 %v10915, %v11018
  %v11020 = vpop.f32.mrf.mxu0
  %11021 = vmatprep.mubr.bf16.mxu0 0
  %11022 = vmatmul.mubr.bf16.gmra.mxu0 %v10905
  %v11023 = vpop.f32.mrf.mxu0
  %v11024 = vadd.f32 %v10915, %v11023
  %v11025 = vpop.f32.mrf.mxu0
  %v11026 = vpop.f32.mrf.mxu0
  %v11027 = vadd.f32 %v10915, %v11026
  %v11028 = vpop.f32.mrf.mxu0
  %11029 = vmatprep.mubr.bf16.mxu0 0
  %11030 = vmatmul.mubr.bf16.gmra.mxu0 %v10906
  %v11031 = vpop.f32.mrf.mxu0
  %v11032 = vadd.f32 %v10915, %v11031
  %v11033 = vpop.f32.mrf.mxu0
  %v11034 = vpop.f32.mrf.mxu0
  %v11035 = vadd.f32 %v10915, %v11034
  %v11036 = vpop.f32.mrf.mxu0
  %11037 = vmatprep.mubr.bf16.mxu0 0
  %11038 = vmatmul.mubr.bf16.gmra.mxu0 %v10907
  %v11039 = vpop.f32.mrf.mxu0
  %v11040 = vadd.f32 %v10915, %v11039
  %v11041 = vpop.f32.mrf.mxu0
  %v11042 = vpop.f32.mrf.mxu0
  %v11043 = vadd.f32 %v10915, %v11042
  %v11044 = vpop.f32.mrf.mxu0
  %11045 = vmatprep.mubr.bf16.mxu0 0
  %11046 = vmatmul.mubr.bf16.gmra.mxu0 %v10908
  %v11047 = vpop.f32.mrf.mxu0
  %v11048 = vadd.f32 %v10915, %v11047
  %v11049 = vpop.f32.mrf.mxu0
  %v11050 = vpop.f32.mrf.mxu0
  %v11051 = vadd.f32 %v10915, %v11050
  %v11052 = vpop.f32.mrf.mxu0
  %11053 = vmatprep.mubr.bf16.mxu0 0
  %11054 = vmatmul.mubr.bf16.gmra.mxu0 %v10909
  %v11055 = vpop.f32.mrf.mxu0
  %v11056 = vadd.f32 %v10915, %v11055
  %v11057 = vpop.f32.mrf.mxu0
  %v11058 = vpop.f32.mrf.mxu0
  %v11059 = vadd.f32 %v10915, %v11058
  %v11060 = vpop.f32.mrf.mxu0
  %11061 = vdwg.mxu0
  %11062 = vst [vmem:[%s22] sm:$0xff] %v11000
  %11063 = vst [vmem:[%s22 + $0x8] sm:$0xff] %v11003
  %11064 = vst [vmem:[%s22 + $0x10] sm:$0xff] %v11008
  %11065 = vst [vmem:[%s22 + $0x18] sm:$0xff] %v11011
  %11066 = vst [vmem:[%s22 + $0x20] sm:$0xff] %v11016
  %11067 = vst [vmem:[%s22 + $0x28] sm:$0xff] %v11019
  %11068 = vst [vmem:[%s22 + $0x30] sm:$0xff] %v11024
  %11069 = vst [vmem:[%s22 + $0x38] sm:$0xff] %v11027
  %11070 = vst [vmem:[%s22 + $0x40] sm:$0xff] %v11032
  %11071 = vst [vmem:[%s22 + $0x48] sm:$0xff] %v11035
  %11072 = vst [vmem:[%s22 + $0x50] sm:$0xff] %v11040
  %11073 = vst [vmem:[%s22 + $0x58] sm:$0xff] %v11043
  %11074 = vst [vmem:[%s22 + $0x60] sm:$0xff] %v11048
  %11075 = vst [vmem:[%s22 + $0x68] sm:$0xff] %v11051
  %11076 = vst [vmem:[%s22 + $0x70] sm:$0xff] %v11056
  %11077 = vst [vmem:[%s22 + $0x78] sm:$0xff] %v11059
  // Predicated region
  $region90: #{pbgnn_forward.1} parent=0 // pred_check
    _
  $region91: #{pbgnn_forward.1} parent=0 // pred_check_branch
    %11079 = sbr.rel (0) target = $region93
  $region92: #{pbgnn_forward.1} parent=0 // pred_region
    _
  $region93: #{pbgnn_forward.1} parent=0 // pred_fallthru
    _
  // Predicated region
  $region94: #{pbgnn_forward.1} parent=0 // pred_check
    _
  $region95: #{pbgnn_forward.1} parent=0 // pred_check_branch
    %11081 = sbr.rel (0) target = $region97
  $region96: #{pbgnn_forward.1} parent=0 // pred_region
    _
  $region97: #{pbgnn_forward.1} parent=0 // pred_fallthru
    _

</llo_original>
